<compile_context>
chip_gen: v7x
topology: tpu7x:2x2x1
jax: 0.10.0
libtpu: 0.0.40
codegen_flags: <defaults>
</compile_context>

<pallas_src>
import functools
import math

import jax
import jax.numpy as jnp
from jax import lax
from jax.experimental import pallas as pl

# ---------------------------------------------------------------- config ----
EMBED_DIM = 256
NUM_HEADS = 8
HEAD_DIM = EMBED_DIM // NUM_HEADS          # 32
FF_DIM = 512
LN_EPS = 1e-5                              # torch.nn.LayerNorm default

# Packed layout for all small (1, width) parameter vectors (biases + LN).
# Every offset is a multiple of 256 -> lane-aligned static slices in-kernel.
_VEC_FIELDS = (
    ("sa_bqkv", 3 * EMBED_DIM),
    ("sa_bo", EMBED_DIM),
    ("ca_bq", EMBED_DIM),
    ("ca_bkv", 2 * EMBED_DIM),
    ("ca_bo", EMBED_DIM),
    ("ff_b1", FF_DIM),
    ("ff_b2", EMBED_DIM),
    ("ln1_g", EMBED_DIM),
    ("ln1_b", EMBED_DIM),
    ("ln2_g", EMBED_DIM),
    ("ln2_b", EMBED_DIM),
    ("ln3_g", EMBED_DIM),
    ("ln3_b", EMBED_DIM),
)
_VEC_OFFSETS = {}
_off = 0
for _name, _w in _VEC_FIELDS:
    _VEC_OFFSETS[_name] = (_off, _w)
    _off += _w
_VEC_TOTAL = _off                           # 4352 = 34 * 128

_WEIGHT_NAMES = ("sa_wqkv", "sa_wo", "ca_wq", "ca_wkv", "ca_wo",
                 "ff_w1", "ff_w2")


# ---------------------------------------------------------- fused kernel ----
def _layernorm(z, g, b):
    mean = jnp.mean(z, axis=-1, keepdims=True)
    zc = z - mean
    var = jnp.mean(zc * zc, axis=-1, keepdims=True)
    return zc * lax.rsqrt(var + LN_EPS) * g + b


def _mha(q, k, v, wo_ref, bo, n_batch, s_q, s_kv):
    """q (n_batch*s_q, E) f32 pre-scaled; k, v (n_batch*s_kv, E) f32."""
    qb = q.astype(jnp.bfloat16)
    kb = k.astype(jnp.bfloat16)
    vb = v.astype(jnp.bfloat16)
    ctx_rows = []
    for b in range(n_batch):                       # static unroll over batch
        q_b = qb[b * s_q:(b + 1) * s_q, :]
        k_b = kb[b * s_kv:(b + 1) * s_kv, :]
        v_b = vb[b * s_kv:(b + 1) * s_kv, :]
        heads = []
        for h in range(NUM_HEADS):                 # static unroll over heads
            sl = slice(h * HEAD_DIM, (h + 1) * HEAD_DIM)
            # Contract the last axes directly: MXU consumes the transposed
            # operand, no explicit kh.T relayout through the XLU.
            s = lax.dot_general(q_b[:, sl], k_b[:, sl],
                                (((1,), (1,)), ((), ())),
                                preferred_element_type=jnp.float32)
            s = s - jnp.max(s, axis=-1, keepdims=True)
            p = jnp.exp(s)
            # Softmax normalisation on the (otherwise idle) EUP slot.
            p = p * pl.reciprocal(jnp.sum(p, axis=-1, keepdims=True),
                                  approx=True)
            heads.append(jnp.dot(p.astype(jnp.bfloat16), v_b[:, sl],
                                 preferred_element_type=jnp.float32))
        ctx_rows.append(jnp.concatenate(heads, axis=-1))   # (s_q, E)
    ctx = jnp.concatenate(ctx_rows, axis=0)                # (n_batch*s_q, E)
    # Single lane-dense K=E output projection for all heads / all batch rows.
    return jnp.dot(ctx.astype(jnp.bfloat16), wo_ref[...],
                   preferred_element_type=jnp.float32) + bo


def _decoder_kernel(x_ref, enc_ref,
                    sa_wqkv_ref, sa_wo_ref,
                    ca_wq_ref, ca_wkv_ref, ca_wo_ref,
                    ff_w1_ref, ff_w2_ref,
                    vec_ref, o_ref, *, n_batch, s_dec, s_enc):
    """Full decoder block for the whole (flattened) batch, all in VMEM."""
    E = EMBED_DIM
    scale = 1.0 / math.sqrt(HEAD_DIM)

    def vec(name):
        off, width = _VEC_OFFSETS[name]
        return vec_ref[:, off:off + width]     # (1, width) f32, 256-aligned

    x = x_ref[...]                             # (B*S, E) f32

    # ------------------- self-attention + residual + LN1 -------------------
    qkv = jnp.dot(x.astype(jnp.bfloat16), sa_wqkv_ref[...],
                  preferred_element_type=jnp.float32) + vec("sa_bqkv")
    q = qkv[:, :E] * scale                     # fold softmax scale into Q
    sa = _mha(q, qkv[:, E:2 * E], qkv[:, 2 * E:],
              sa_wo_ref, vec("sa_bo"), n_batch, s_dec, s_dec)
    x = _layernorm(x + sa, vec("ln1_g"), vec("ln1_b"))

    # ------------------ cross-attention + residual + LN2 -------------------
    q = (jnp.dot(x.astype(jnp.bfloat16), ca_wq_ref[...],
                 preferred_element_type=jnp.float32) + vec("ca_bq")) * scale
    kv = jnp.dot(enc_ref[...].astype(jnp.bfloat16), ca_wkv_ref[...],
                 preferred_element_type=jnp.float32) + vec("ca_bkv")
    ca = _mha(q, kv[:, :E], kv[:, E:],
              ca_wo_ref, vec("ca_bo"), n_batch, s_dec, s_enc)
    x = _layernorm(x + ca, vec("ln2_g"), vec("ln2_b"))

    # -------------------- feed-forward + residual + LN3 --------------------
    h = jnp.dot(x.astype(jnp.bfloat16), ff_w1_ref[...],
                preferred_element_type=jnp.float32) + vec("ff_b1")
    h = jnp.maximum(h, 0.0)
    ff = jnp.dot(h.astype(jnp.bfloat16), ff_w2_ref[...],
                 preferred_element_type=jnp.float32) + vec("ff_b2")
    x = _layernorm(x + ff, vec("ln3_g"), vec("ln3_b"))

    o_ref[...] = x


@jax.jit
def decoder_forward(x, enc, params):
    B, S, E = x.shape
    Skv = enc.shape[1]
    # Flatten the batch: projections see (B*S, E) rows; attention loops over
    # batch (static) only for the tiny score/softmax/ctx part.
    x2d = x.reshape(B * S, E)
    enc2d = enc.reshape(B * Skv, E)

    # Pack all small bias / LayerNorm vectors into a single (1, 4352) array.
    vec = jnp.concatenate(
        [params[name].reshape(1, -1).astype(jnp.float32)
         for name, _ in _VEC_FIELDS], axis=-1)
    mats = [params[name].astype(jnp.bfloat16) for name in _WEIGHT_NAMES]

    out2d = pl.pallas_call(
        functools.partial(_decoder_kernel, n_batch=B, s_dec=S, s_enc=Skv),
        out_shape=jax.ShapeDtypeStruct((B * S, E), jnp.float32),
        # Grid-less single step: the 10 inputs (~1.6 MB bf16 weights + packed
        # vector + tiny activations) are DMA'd once into VMEM; no per-step
        # pipeline overhead, no weight-DMA duplication across TensorCores.
    )(x2d, enc2d, *mats, vec)
    return out2d.reshape(B, S, E)


# ---------------------------------------------------- pure-JAX reference ----
def _ref_mha(x, kv, wq, bq, wk, bk, wv, bv, wo, bo):
    B, S, E = x.shape
    Skv = kv.shape[1]
    q = x @ wq + bq
    k = kv @ wk + bk
    v = kv @ wv + bv
    q = q.reshape(B, S, NUM_HEADS, HEAD_DIM).transpose(0, 2, 1, 3)
    k = k.reshape(B, Skv, NUM_HEADS, HEAD_DIM).transpose(0, 2, 1, 3)
    v = v.reshape(B, Skv, NUM_HEADS, HEAD_DIM).transpose(0, 2, 1, 3)
    s = jnp.einsum("bhqd,bhkd->bhqk", q, k) / math.sqrt(HEAD_DIM)
    p = jax.nn.softmax(s, axis=-1)
    ctx = jnp.einsum("bhqk,bhkd->bhqd", p, v).transpose(0, 2, 1, 3).reshape(B, S, E)
    return ctx @ wo + bo


def _ref_ln(z, g, b):
    mean = jnp.mean(z, axis=-1, keepdims=True)
    var = jnp.mean((z - mean) ** 2, axis=-1, keepdims=True)
    return (z - mean) * lax.rsqrt(var + LN_EPS) * g + b


def decoder_reference(x, enc, p):
    E = EMBED_DIM
    f32 = lambda a: a.astype(jnp.float32)
    sa = _ref_mha(x, x,
                  f32(p["sa_wqkv"])[:, :E], p["sa_bqkv"][:, :E],
                  f32(p["sa_wqkv"])[:, E:2 * E], p["sa_bqkv"][:, E:2 * E],
                  f32(p["sa_wqkv"])[:, 2 * E:], p["sa_bqkv"][:, 2 * E:],
                  f32(p["sa_wo"]), p["sa_bo"])
    x = _ref_ln(x + sa, p["ln1_g"], p["ln1_b"])
    ca = _ref_mha(x, enc,
                  f32(p["ca_wq"]), p["ca_bq"],
                  f32(p["ca_wkv"])[:, :E], p["ca_bkv"][:, :E],
                  f32(p["ca_wkv"])[:, E:], p["ca_bkv"][:, E:],
                  f32(p["ca_wo"]), p["ca_bo"])
    x = _ref_ln(x + ca, p["ln2_g"], p["ln2_b"])
    ff = (jnp.maximum(x @ f32(p["ff_w1"]) + p["ff_b1"], 0.0)
          @ f32(p["ff_w2"]) + p["ff_b2"])
    x = _ref_ln(x + ff, p["ln3_g"], p["ln3_b"])
    return x


# ---------------------------------------------------------------- params ----
def init_params(key):
    keys = jax.random.split(key, 14)
    E, F = EMBED_DIM, FF_DIM

    def mat(k, shape, s=0.02):   # weight matrices live in HBM as bf16
        return (jax.random.normal(k, shape, jnp.float32) * s).astype(jnp.bfloat16)

    def vecp(k, shape, s=0.02):  # biases / LN params stay f32
        return jax.random.normal(k, shape, jnp.float32) * s

    p = {}
    # self-attention: packed Q|K|V projection, weights stored (in, out)
    p["sa_wqkv"] = mat(keys[0], (E, 3 * E))
    p["sa_bqkv"] = vecp(keys[1], (1, 3 * E))
    p["sa_wo"] = mat(keys[2], (E, E))
    p["sa_bo"] = vecp(keys[3], (1, E))
    # cross-attention: Q from x, packed K|V from encoder output
    p["ca_wq"] = mat(keys[4], (E, E))
    p["ca_bq"] = vecp(keys[5], (1, E))
    p["ca_wkv"] = mat(keys[6], (E, 2 * E))
    p["ca_bkv"] = vecp(keys[7], (1, 2 * E))
    p["ca_wo"] = mat(keys[8], (E, E))
    p["ca_bo"] = vecp(keys[9], (1, E))
    # feed-forward
    p["ff_w1"] = mat(keys[10], (E, F))
    p["ff_b1"] = vecp(keys[11], (1, F))
    p["ff_w2"] = mat(keys[12], (F, E))
    p["ff_b2"] = vecp(keys[13], (1, E))
    # LayerNorms (torch default: gamma=1, beta=0)
    for i in (1, 2, 3):
        p[f"ln{i}_g"] = jnp.ones((1, E), jnp.float32)
        p[f"ln{i}_b"] = jnp.zeros((1, E), jnp.float32)
    return p


# ------------------------------------------------------------------ main ----
if __name__ == "__main__":
    key = jax.random.PRNGKey(0)
    k_x, k_enc, k_p = jax.random.split(key, 3)

    B, S_DEC, S_ENC = 2, 8, 8
    x = jax.random.normal(k_x, (B, S_DEC, EMBED_DIM), jnp.float32)
    enc = jax.random.normal(k_enc, (B, S_ENC, EMBED_DIM), jnp.float32)
    params = init_params(k_p)

    out = jax.block_until_ready(decoder_forward(x, enc, params))
    ref = jax.block_until_ready(decoder_reference(x, enc, params))

    assert out.shape == (B, S_DEC, EMBED_DIM), out.shape
    max_err = float(jnp.max(jnp.abs(out - ref)))
    # bf16 matmul operands (f32 accumulation / softmax / LayerNorm) -> looser
    # tolerance vs the f32 reference, per review guidance.
    assert jnp.allclose(out, ref, atol=2e-2, rtol=2e-2), max_err
    print("KERNEL_OK")
</pallas_src>

<mosaic_0001>
module attributes {stable_mosaic.version = 11 : i64} {
  func.func @_decoder_kernel(%arg0: memref<16x256xf32, #tpu.memory_space<vmem>>, %arg1: memref<16x256xf32, #tpu.memory_space<vmem>>, %arg2: memref<256x768xbf16, #tpu.memory_space<vmem>>, %arg3: memref<256x256xbf16, #tpu.memory_space<vmem>>, %arg4: memref<256x256xbf16, #tpu.memory_space<vmem>>, %arg5: memref<256x512xbf16, #tpu.memory_space<vmem>>, %arg6: memref<256x256xbf16, #tpu.memory_space<vmem>>, %arg7: memref<256x512xbf16, #tpu.memory_space<vmem>>, %arg8: memref<512x256xbf16, #tpu.memory_space<vmem>>, %arg9: memref<1x4352xf32, #tpu.memory_space<vmem>>, %arg10: memref<16x256xf32, #tpu.memory_space<vmem>>) attributes {dimension_semantics = [], scalar_prefetch = 0 : i64, scratch_operands = 0 : i64, tpu.core_type = #tpu.core_type<tc>} {
    %c0 = arith.constant 0 : index
    %c0_0 = arith.constant 0 : index
    %0 = vector.load %arg0[%c0, %c0_0] : memref<16x256xf32, #tpu.memory_space<vmem>>, vector<16x256xf32>
    %1 = arith.truncf %0 : vector<16x256xf32> to vector<16x256xbf16>
    %c0_1 = arith.constant 0 : index
    %c0_2 = arith.constant 0 : index
    %2 = vector.load %arg2[%c0_1, %c0_2] : memref<256x768xbf16, #tpu.memory_space<vmem>>, vector<256x768xbf16>
    %cst = arith.constant dense<0.000000e+00> : vector<16x768xf32>
    %3 = tpu.matmul %1, %2, %cst {dimension_numbers = #tpu.dot_dimension_numbers<[1], [0], [0], [1], [0, 0, 1, 1], [], []>} : vector<16x256xbf16>, vector<256x768xbf16>, vector<16x768xf32> -> vector<16x768xf32>
    %c0_3 = arith.constant 0 : index
    %c0_4 = arith.constant 0 : index
    %4 = vector.load %arg9[%c0_3, %c0_4] : memref<1x4352xf32, #tpu.memory_space<vmem>>, vector<1x768xf32>
    %5 = vector.broadcast %4 : vector<1x768xf32> to vector<16x768xf32>
    %6 = arith.addf %3, %5 : vector<16x768xf32>
    %7 = vector.extract_strided_slice %6 {offsets = [0, 0], sizes = [16, 256], strides = [1, 1]} : vector<16x768xf32> to vector<16x256xf32>
    %cst_5 = arith.constant 0.176776692 : f32
    %8 = vector.broadcast %cst_5 : f32 to vector<16x256xf32>
    %9 = arith.mulf %7, %8 : vector<16x256xf32>
    %10 = vector.extract_strided_slice %6 {offsets = [0, 256], sizes = [16, 256], strides = [1, 1]} : vector<16x768xf32> to vector<16x256xf32>
    %11 = vector.extract_strided_slice %6 {offsets = [0, 512], sizes = [16, 256], strides = [1, 1]} : vector<16x768xf32> to vector<16x256xf32>
    %c0_6 = arith.constant 0 : index
    %c768 = arith.constant 768 : index
    %12 = vector.load %arg9[%c0_6, %c768] : memref<1x4352xf32, #tpu.memory_space<vmem>>, vector<1x256xf32>
    %13 = arith.truncf %9 : vector<16x256xf32> to vector<16x256xbf16>
    %14 = arith.truncf %10 : vector<16x256xf32> to vector<16x256xbf16>
    %15 = arith.truncf %11 : vector<16x256xf32> to vector<16x256xbf16>
    %16 = vector.extract_strided_slice %13 {offsets = [0, 0], sizes = [8, 256], strides = [1, 1]} : vector<16x256xbf16> to vector<8x256xbf16>
    %17 = vector.extract_strided_slice %14 {offsets = [0, 0], sizes = [8, 256], strides = [1, 1]} : vector<16x256xbf16> to vector<8x256xbf16>
    %18 = vector.extract_strided_slice %15 {offsets = [0, 0], sizes = [8, 256], strides = [1, 1]} : vector<16x256xbf16> to vector<8x256xbf16>
    %19 = vector.extract_strided_slice %16 {offsets = [0, 0], sizes = [8, 32], strides = [1, 1]} : vector<8x256xbf16> to vector<8x32xbf16>
    %20 = vector.extract_strided_slice %17 {offsets = [0, 0], sizes = [8, 32], strides = [1, 1]} : vector<8x256xbf16> to vector<8x32xbf16>
    %cst_7 = arith.constant dense<0.000000e+00> : vector<8x8xf32>
    %21 = tpu.matmul %19, %20, %cst_7 {dimension_numbers = #tpu.dot_dimension_numbers<[1], [1], [0], [0], [0, 0, 1, 0], [], []>} : vector<8x32xbf16>, vector<8x32xbf16>, vector<8x8xf32> -> vector<8x8xf32>
    %cst_8 = arith.constant dense<0xFF800000> : vector<8xf32>
    %22 = vector.multi_reduction <maximumf>, %21, %cst_8 [1] : vector<8x8xf32> to vector<8xf32>
    %23 = vector.shape_cast %22 : vector<8xf32> to vector<8x1xf32>
    %24 = vector.broadcast %23 : vector<8x1xf32> to vector<8x8xf32>
    %25 = arith.subf %21, %24 : vector<8x8xf32>
    %26 = math.exp %25 : vector<8x8xf32>
    %cst_9 = arith.constant dense<0.000000e+00> : vector<8xf32>
    %27 = vector.multi_reduction <add>, %26, %cst_9 [1] : vector<8x8xf32> to vector<8xf32>
    %28 = vector.shape_cast %27 : vector<8xf32> to vector<8x1xf32>
    %29 = tpu.reciprocal %28 {approx = true} : vector<8x1xf32> -> vector<8x1xf32>
    %30 = vector.broadcast %29 : vector<8x1xf32> to vector<8x8xf32>
    %31 = arith.mulf %26, %30 : vector<8x8xf32>
    %32 = arith.truncf %31 : vector<8x8xf32> to vector<8x8xbf16>
    %33 = vector.extract_strided_slice %18 {offsets = [0, 0], sizes = [8, 32], strides = [1, 1]} : vector<8x256xbf16> to vector<8x32xbf16>
    %cst_10 = arith.constant dense<0.000000e+00> : vector<8x32xf32>
    %34 = tpu.matmul %32, %33, %cst_10 {dimension_numbers = #tpu.dot_dimension_numbers<[1], [0], [0], [1], [0, 0, 1, 1], [], []>} : vector<8x8xbf16>, vector<8x32xbf16>, vector<8x32xf32> -> vector<8x32xf32>
    %35 = vector.extract_strided_slice %16 {offsets = [0, 32], sizes = [8, 32], strides = [1, 1]} : vector<8x256xbf16> to vector<8x32xbf16>
    %36 = vector.extract_strided_slice %17 {offsets = [0, 32], sizes = [8, 32], strides = [1, 1]} : vector<8x256xbf16> to vector<8x32xbf16>
    %cst_11 = arith.constant dense<0.000000e+00> : vector<8x8xf32>
    %37 = tpu.matmul %35, %36, %cst_11 {dimension_numbers = #tpu.dot_dimension_numbers<[1], [1], [0], [0], [0, 0, 1, 0], [], []>} : vector<8x32xbf16>, vector<8x32xbf16>, vector<8x8xf32> -> vector<8x8xf32>
    %cst_12 = arith.constant dense<0xFF800000> : vector<8xf32>
    %38 = vector.multi_reduction <maximumf>, %37, %cst_12 [1] : vector<8x8xf32> to vector<8xf32>
    %39 = vector.shape_cast %38 : vector<8xf32> to vector<8x1xf32>
    %40 = vector.broadcast %39 : vector<8x1xf32> to vector<8x8xf32>
    %41 = arith.subf %37, %40 : vector<8x8xf32>
    %42 = math.exp %41 : vector<8x8xf32>
    %cst_13 = arith.constant dense<0.000000e+00> : vector<8xf32>
    %43 = vector.multi_reduction <add>, %42, %cst_13 [1] : vector<8x8xf32> to vector<8xf32>
    %44 = vector.shape_cast %43 : vector<8xf32> to vector<8x1xf32>
    %45 = tpu.reciprocal %44 {approx = true} : vector<8x1xf32> -> vector<8x1xf32>
    %46 = vector.broadcast %45 : vector<8x1xf32> to vector<8x8xf32>
    %47 = arith.mulf %42, %46 : vector<8x8xf32>
    %48 = arith.truncf %47 : vector<8x8xf32> to vector<8x8xbf16>
    %49 = vector.extract_strided_slice %18 {offsets = [0, 32], sizes = [8, 32], strides = [1, 1]} : vector<8x256xbf16> to vector<8x32xbf16>
    %cst_14 = arith.constant dense<0.000000e+00> : vector<8x32xf32>
    %50 = tpu.matmul %48, %49, %cst_14 {dimension_numbers = #tpu.dot_dimension_numbers<[1], [0], [0], [1], [0, 0, 1, 1], [], []>} : vector<8x8xbf16>, vector<8x32xbf16>, vector<8x32xf32> -> vector<8x32xf32>
    %51 = vector.extract_strided_slice %16 {offsets = [0, 64], sizes = [8, 32], strides = [1, 1]} : vector<8x256xbf16> to vector<8x32xbf16>
    %52 = vector.extract_strided_slice %17 {offsets = [0, 64], sizes = [8, 32], strides = [1, 1]} : vector<8x256xbf16> to vector<8x32xbf16>
    %cst_15 = arith.constant dense<0.000000e+00> : vector<8x8xf32>
    %53 = tpu.matmul %51, %52, %cst_15 {dimension_numbers = #tpu.dot_dimension_numbers<[1], [1], [0], [0], [0, 0, 1, 0], [], []>} : vector<8x32xbf16>, vector<8x32xbf16>, vector<8x8xf32> -> vector<8x8xf32>
    %cst_16 = arith.constant dense<0xFF800000> : vector<8xf32>
    %54 = vector.multi_reduction <maximumf>, %53, %cst_16 [1] : vector<8x8xf32> to vector<8xf32>
    %55 = vector.shape_cast %54 : vector<8xf32> to vector<8x1xf32>
    %56 = vector.broadcast %55 : vector<8x1xf32> to vector<8x8xf32>
    %57 = arith.subf %53, %56 : vector<8x8xf32>
    %58 = math.exp %57 : vector<8x8xf32>
    %cst_17 = arith.constant dense<0.000000e+00> : vector<8xf32>
    %59 = vector.multi_reduction <add>, %58, %cst_17 [1] : vector<8x8xf32> to vector<8xf32>
    %60 = vector.shape_cast %59 : vector<8xf32> to vector<8x1xf32>
    %61 = tpu.reciprocal %60 {approx = true} : vector<8x1xf32> -> vector<8x1xf32>
    %62 = vector.broadcast %61 : vector<8x1xf32> to vector<8x8xf32>
    %63 = arith.mulf %58, %62 : vector<8x8xf32>
    %64 = arith.truncf %63 : vector<8x8xf32> to vector<8x8xbf16>
    %65 = vector.extract_strided_slice %18 {offsets = [0, 64], sizes = [8, 32], strides = [1, 1]} : vector<8x256xbf16> to vector<8x32xbf16>
    %cst_18 = arith.constant dense<0.000000e+00> : vector<8x32xf32>
    %66 = tpu.matmul %64, %65, %cst_18 {dimension_numbers = #tpu.dot_dimension_numbers<[1], [0], [0], [1], [0, 0, 1, 1], [], []>} : vector<8x8xbf16>, vector<8x32xbf16>, vector<8x32xf32> -> vector<8x32xf32>
    %67 = vector.extract_strided_slice %16 {offsets = [0, 96], sizes = [8, 32], strides = [1, 1]} : vector<8x256xbf16> to vector<8x32xbf16>
    %68 = vector.extract_strided_slice %17 {offsets = [0, 96], sizes = [8, 32], strides = [1, 1]} : vector<8x256xbf16> to vector<8x32xbf16>
    %cst_19 = arith.constant dense<0.000000e+00> : vector<8x8xf32>
    %69 = tpu.matmul %67, %68, %cst_19 {dimension_numbers = #tpu.dot_dimension_numbers<[1], [1], [0], [0], [0, 0, 1, 0], [], []>} : vector<8x32xbf16>, vector<8x32xbf16>, vector<8x8xf32> -> vector<8x8xf32>
    %cst_20 = arith.constant dense<0xFF800000> : vector<8xf32>
    %70 = vector.multi_reduction <maximumf>, %69, %cst_20 [1] : vector<8x8xf32> to vector<8xf32>
    %71 = vector.shape_cast %70 : vector<8xf32> to vector<8x1xf32>
    %72 = vector.broadcast %71 : vector<8x1xf32> to vector<8x8xf32>
    %73 = arith.subf %69, %72 : vector<8x8xf32>
    %74 = math.exp %73 : vector<8x8xf32>
    %cst_21 = arith.constant dense<0.000000e+00> : vector<8xf32>
    %75 = vector.multi_reduction <add>, %74, %cst_21 [1] : vector<8x8xf32> to vector<8xf32>
    %76 = vector.shape_cast %75 : vector<8xf32> to vector<8x1xf32>
    %77 = tpu.reciprocal %76 {approx = true} : vector<8x1xf32> -> vector<8x1xf32>
    %78 = vector.broadcast %77 : vector<8x1xf32> to vector<8x8xf32>
    %79 = arith.mulf %74, %78 : vector<8x8xf32>
    %80 = arith.truncf %79 : vector<8x8xf32> to vector<8x8xbf16>
    %81 = vector.extract_strided_slice %18 {offsets = [0, 96], sizes = [8, 32], strides = [1, 1]} : vector<8x256xbf16> to vector<8x32xbf16>
    %cst_22 = arith.constant dense<0.000000e+00> : vector<8x32xf32>
    %82 = tpu.matmul %80, %81, %cst_22 {dimension_numbers = #tpu.dot_dimension_numbers<[1], [0], [0], [1], [0, 0, 1, 1], [], []>} : vector<8x8xbf16>, vector<8x32xbf16>, vector<8x32xf32> -> vector<8x32xf32>
    %83 = vector.extract_strided_slice %16 {offsets = [0, 128], sizes = [8, 32], strides = [1, 1]} : vector<8x256xbf16> to vector<8x32xbf16>
    %84 = vector.extract_strided_slice %17 {offsets = [0, 128], sizes = [8, 32], strides = [1, 1]} : vector<8x256xbf16> to vector<8x32xbf16>
    %cst_23 = arith.constant dense<0.000000e+00> : vector<8x8xf32>
    %85 = tpu.matmul %83, %84, %cst_23 {dimension_numbers = #tpu.dot_dimension_numbers<[1], [1], [0], [0], [0, 0, 1, 0], [], []>} : vector<8x32xbf16>, vector<8x32xbf16>, vector<8x8xf32> -> vector<8x8xf32>
    %cst_24 = arith.constant dense<0xFF800000> : vector<8xf32>
    %86 = vector.multi_reduction <maximumf>, %85, %cst_24 [1] : vector<8x8xf32> to vector<8xf32>
    %87 = vector.shape_cast %86 : vector<8xf32> to vector<8x1xf32>
    %88 = vector.broadcast %87 : vector<8x1xf32> to vector<8x8xf32>
    %89 = arith.subf %85, %88 : vector<8x8xf32>
    %90 = math.exp %89 : vector<8x8xf32>
    %cst_25 = arith.constant dense<0.000000e+00> : vector<8xf32>
    %91 = vector.multi_reduction <add>, %90, %cst_25 [1] : vector<8x8xf32> to vector<8xf32>
    %92 = vector.shape_cast %91 : vector<8xf32> to vector<8x1xf32>
    %93 = tpu.reciprocal %92 {approx = true} : vector<8x1xf32> -> vector<8x1xf32>
    %94 = vector.broadcast %93 : vector<8x1xf32> to vector<8x8xf32>
    %95 = arith.mulf %90, %94 : vector<8x8xf32>
    %96 = arith.truncf %95 : vector<8x8xf32> to vector<8x8xbf16>
    %97 = vector.extract_strided_slice %18 {offsets = [0, 128], sizes = [8, 32], strides = [1, 1]} : vector<8x256xbf16> to vector<8x32xbf16>
    %cst_26 = arith.constant dense<0.000000e+00> : vector<8x32xf32>
    %98 = tpu.matmul %96, %97, %cst_26 {dimension_numbers = #tpu.dot_dimension_numbers<[1], [0], [0], [1], [0, 0, 1, 1], [], []>} : vector<8x8xbf16>, vector<8x32xbf16>, vector<8x32xf32> -> vector<8x32xf32>
    %99 = vector.extract_strided_slice %16 {offsets = [0, 160], sizes = [8, 32], strides = [1, 1]} : vector<8x256xbf16> to vector<8x32xbf16>
    %100 = vector.extract_strided_slice %17 {offsets = [0, 160], sizes = [8, 32], strides = [1, 1]} : vector<8x256xbf16> to vector<8x32xbf16>
    %cst_27 = arith.constant dense<0.000000e+00> : vector<8x8xf32>
    %101 = tpu.matmul %99, %100, %cst_27 {dimension_numbers = #tpu.dot_dimension_numbers<[1], [1], [0], [0], [0, 0, 1, 0], [], []>} : vector<8x32xbf16>, vector<8x32xbf16>, vector<8x8xf32> -> vector<8x8xf32>
    %cst_28 = arith.constant dense<0xFF800000> : vector<8xf32>
    %102 = vector.multi_reduction <maximumf>, %101, %cst_28 [1] : vector<8x8xf32> to vector<8xf32>
    %103 = vector.shape_cast %102 : vector<8xf32> to vector<8x1xf32>
    %104 = vector.broadcast %103 : vector<8x1xf32> to vector<8x8xf32>
    %105 = arith.subf %101, %104 : vector<8x8xf32>
    %106 = math.exp %105 : vector<8x8xf32>
    %cst_29 = arith.constant dense<0.000000e+00> : vector<8xf32>
    %107 = vector.multi_reduction <add>, %106, %cst_29 [1] : vector<8x8xf32> to vector<8xf32>
    %108 = vector.shape_cast %107 : vector<8xf32> to vector<8x1xf32>
    %109 = tpu.reciprocal %108 {approx = true} : vector<8x1xf32> -> vector<8x1xf32>
    %110 = vector.broadcast %109 : vector<8x1xf32> to vector<8x8xf32>
    %111 = arith.mulf %106, %110 : vector<8x8xf32>
    %112 = arith.truncf %111 : vector<8x8xf32> to vector<8x8xbf16>
    %113 = vector.extract_strided_slice %18 {offsets = [0, 160], sizes = [8, 32], strides = [1, 1]} : vector<8x256xbf16> to vector<8x32xbf16>
    %cst_30 = arith.constant dense<0.000000e+00> : vector<8x32xf32>
    %114 = tpu.matmul %112, %113, %cst_30 {dimension_numbers = #tpu.dot_dimension_numbers<[1], [0], [0], [1], [0, 0, 1, 1], [], []>} : vector<8x8xbf16>, vector<8x32xbf16>, vector<8x32xf32> -> vector<8x32xf32>
    %115 = vector.extract_strided_slice %16 {offsets = [0, 192], sizes = [8, 32], strides = [1, 1]} : vector<8x256xbf16> to vector<8x32xbf16>
    %116 = vector.extract_strided_slice %17 {offsets = [0, 192], sizes = [8, 32], strides = [1, 1]} : vector<8x256xbf16> to vector<8x32xbf16>
    %cst_31 = arith.constant dense<0.000000e+00> : vector<8x8xf32>
    %117 = tpu.matmul %115, %116, %cst_31 {dimension_numbers = #tpu.dot_dimension_numbers<[1], [1], [0], [0], [0, 0, 1, 0], [], []>} : vector<8x32xbf16>, vector<8x32xbf16>, vector<8x8xf32> -> vector<8x8xf32>
    %cst_32 = arith.constant dense<0xFF800000> : vector<8xf32>
    %118 = vector.multi_reduction <maximumf>, %117, %cst_32 [1] : vector<8x8xf32> to vector<8xf32>
    %119 = vector.shape_cast %118 : vector<8xf32> to vector<8x1xf32>
    %120 = vector.broadcast %119 : vector<8x1xf32> to vector<8x8xf32>
    %121 = arith.subf %117, %120 : vector<8x8xf32>
    %122 = math.exp %121 : vector<8x8xf32>
    %cst_33 = arith.constant dense<0.000000e+00> : vector<8xf32>
    %123 = vector.multi_reduction <add>, %122, %cst_33 [1] : vector<8x8xf32> to vector<8xf32>
    %124 = vector.shape_cast %123 : vector<8xf32> to vector<8x1xf32>
    %125 = tpu.reciprocal %124 {approx = true} : vector<8x1xf32> -> vector<8x1xf32>
    %126 = vector.broadcast %125 : vector<8x1xf32> to vector<8x8xf32>
    %127 = arith.mulf %122, %126 : vector<8x8xf32>
    %128 = arith.truncf %127 : vector<8x8xf32> to vector<8x8xbf16>
    %129 = vector.extract_strided_slice %18 {offsets = [0, 192], sizes = [8, 32], strides = [1, 1]} : vector<8x256xbf16> to vector<8x32xbf16>
    %cst_34 = arith.constant dense<0.000000e+00> : vector<8x32xf32>
    %130 = tpu.matmul %128, %129, %cst_34 {dimension_numbers = #tpu.dot_dimension_numbers<[1], [0], [0], [1], [0, 0, 1, 1], [], []>} : vector<8x8xbf16>, vector<8x32xbf16>, vector<8x32xf32> -> vector<8x32xf32>
    %131 = vector.extract_strided_slice %16 {offsets = [0, 224], sizes = [8, 32], strides = [1, 1]} : vector<8x256xbf16> to vector<8x32xbf16>
    %132 = vector.extract_strided_slice %17 {offsets = [0, 224], sizes = [8, 32], strides = [1, 1]} : vector<8x256xbf16> to vector<8x32xbf16>
    %cst_35 = arith.constant dense<0.000000e+00> : vector<8x8xf32>
    %133 = tpu.matmul %131, %132, %cst_35 {dimension_numbers = #tpu.dot_dimension_numbers<[1], [1], [0], [0], [0, 0, 1, 0], [], []>} : vector<8x32xbf16>, vector<8x32xbf16>, vector<8x8xf32> -> vector<8x8xf32>
    %cst_36 = arith.constant dense<0xFF800000> : vector<8xf32>
    %134 = vector.multi_reduction <maximumf>, %133, %cst_36 [1] : vector<8x8xf32> to vector<8xf32>
    %135 = vector.shape_cast %134 : vector<8xf32> to vector<8x1xf32>
    %136 = vector.broadcast %135 : vector<8x1xf32> to vector<8x8xf32>
    %137 = arith.subf %133, %136 : vector<8x8xf32>
    %138 = math.exp %137 : vector<8x8xf32>
    %cst_37 = arith.constant dense<0.000000e+00> : vector<8xf32>
    %139 = vector.multi_reduction <add>, %138, %cst_37 [1] : vector<8x8xf32> to vector<8xf32>
    %140 = vector.shape_cast %139 : vector<8xf32> to vector<8x1xf32>
    %141 = tpu.reciprocal %140 {approx = true} : vector<8x1xf32> -> vector<8x1xf32>
    %142 = vector.broadcast %141 : vector<8x1xf32> to vector<8x8xf32>
    %143 = arith.mulf %138, %142 : vector<8x8xf32>
    %144 = arith.truncf %143 : vector<8x8xf32> to vector<8x8xbf16>
    %145 = vector.extract_strided_slice %18 {offsets = [0, 224], sizes = [8, 32], strides = [1, 1]} : vector<8x256xbf16> to vector<8x32xbf16>
    %cst_38 = arith.constant dense<0.000000e+00> : vector<8x32xf32>
    %146 = tpu.matmul %144, %145, %cst_38 {dimension_numbers = #tpu.dot_dimension_numbers<[1], [0], [0], [1], [0, 0, 1, 1], [], []>} : vector<8x8xbf16>, vector<8x32xbf16>, vector<8x32xf32> -> vector<8x32xf32>
    %147 = tpu.concatenate %34, %50, %66, %82, %98, %114, %130, %146 in 1 : vector<8x32xf32>, vector<8x32xf32>, vector<8x32xf32>, vector<8x32xf32>, vector<8x32xf32>, vector<8x32xf32>, vector<8x32xf32>, vector<8x32xf32> -> vector<8x256xf32>
    %148 = vector.extract_strided_slice %13 {offsets = [8, 0], sizes = [8, 256], strides = [1, 1]} : vector<16x256xbf16> to vector<8x256xbf16>
    %149 = vector.extract_strided_slice %14 {offsets = [8, 0], sizes = [8, 256], strides = [1, 1]} : vector<16x256xbf16> to vector<8x256xbf16>
    %150 = vector.extract_strided_slice %15 {offsets = [8, 0], sizes = [8, 256], strides = [1, 1]} : vector<16x256xbf16> to vector<8x256xbf16>
    %151 = vector.extract_strided_slice %148 {offsets = [0, 0], sizes = [8, 32], strides = [1, 1]} : vector<8x256xbf16> to vector<8x32xbf16>
    %152 = vector.extract_strided_slice %149 {offsets = [0, 0], sizes = [8, 32], strides = [1, 1]} : vector<8x256xbf16> to vector<8x32xbf16>
    %cst_39 = arith.constant dense<0.000000e+00> : vector<8x8xf32>
    %153 = tpu.matmul %151, %152, %cst_39 {dimension_numbers = #tpu.dot_dimension_numbers<[1], [1], [0], [0], [0, 0, 1, 0], [], []>} : vector<8x32xbf16>, vector<8x32xbf16>, vector<8x8xf32> -> vector<8x8xf32>
    %cst_40 = arith.constant dense<0xFF800000> : vector<8xf32>
    %154 = vector.multi_reduction <maximumf>, %153, %cst_40 [1] : vector<8x8xf32> to vector<8xf32>
    %155 = vector.shape_cast %154 : vector<8xf32> to vector<8x1xf32>
    %156 = vector.broadcast %155 : vector<8x1xf32> to vector<8x8xf32>
    %157 = arith.subf %153, %156 : vector<8x8xf32>
    %158 = math.exp %157 : vector<8x8xf32>
    %cst_41 = arith.constant dense<0.000000e+00> : vector<8xf32>
    %159 = vector.multi_reduction <add>, %158, %cst_41 [1] : vector<8x8xf32> to vector<8xf32>
    %160 = vector.shape_cast %159 : vector<8xf32> to vector<8x1xf32>
    %161 = tpu.reciprocal %160 {approx = true} : vector<8x1xf32> -> vector<8x1xf32>
    %162 = vector.broadcast %161 : vector<8x1xf32> to vector<8x8xf32>
    %163 = arith.mulf %158, %162 : vector<8x8xf32>
    %164 = arith.truncf %163 : vector<8x8xf32> to vector<8x8xbf16>
    %165 = vector.extract_strided_slice %150 {offsets = [0, 0], sizes = [8, 32], strides = [1, 1]} : vector<8x256xbf16> to vector<8x32xbf16>
    %cst_42 = arith.constant dense<0.000000e+00> : vector<8x32xf32>
    %166 = tpu.matmul %164, %165, %cst_42 {dimension_numbers = #tpu.dot_dimension_numbers<[1], [0], [0], [1], [0, 0, 1, 1], [], []>} : vector<8x8xbf16>, vector<8x32xbf16>, vector<8x32xf32> -> vector<8x32xf32>
    %167 = vector.extract_strided_slice %148 {offsets = [0, 32], sizes = [8, 32], strides = [1, 1]} : vector<8x256xbf16> to vector<8x32xbf16>
    %168 = vector.extract_strided_slice %149 {offsets = [0, 32], sizes = [8, 32], strides = [1, 1]} : vector<8x256xbf16> to vector<8x32xbf16>
    %cst_43 = arith.constant dense<0.000000e+00> : vector<8x8xf32>
    %169 = tpu.matmul %167, %168, %cst_43 {dimension_numbers = #tpu.dot_dimension_numbers<[1], [1], [0], [0], [0, 0, 1, 0], [], []>} : vector<8x32xbf16>, vector<8x32xbf16>, vector<8x8xf32> -> vector<8x8xf32>
    %cst_44 = arith.constant dense<0xFF800000> : vector<8xf32>
    %170 = vector.multi_reduction <maximumf>, %169, %cst_44 [1] : vector<8x8xf32> to vector<8xf32>
    %171 = vector.shape_cast %170 : vector<8xf32> to vector<8x1xf32>
    %172 = vector.broadcast %171 : vector<8x1xf32> to vector<8x8xf32>
    %173 = arith.subf %169, %172 : vector<8x8xf32>
    %174 = math.exp %173 : vector<8x8xf32>
    %cst_45 = arith.constant dense<0.000000e+00> : vector<8xf32>
    %175 = vector.multi_reduction <add>, %174, %cst_45 [1] : vector<8x8xf32> to vector<8xf32>
    %176 = vector.shape_cast %175 : vector<8xf32> to vector<8x1xf32>
    %177 = tpu.reciprocal %176 {approx = true} : vector<8x1xf32> -> vector<8x1xf32>
    %178 = vector.broadcast %177 : vector<8x1xf32> to vector<8x8xf32>
    %179 = arith.mulf %174, %178 : vector<8x8xf32>
    %180 = arith.truncf %179 : vector<8x8xf32> to vector<8x8xbf16>
    %181 = vector.extract_strided_slice %150 {offsets = [0, 32], sizes = [8, 32], strides = [1, 1]} : vector<8x256xbf16> to vector<8x32xbf16>
    %cst_46 = arith.constant dense<0.000000e+00> : vector<8x32xf32>
    %182 = tpu.matmul %180, %181, %cst_46 {dimension_numbers = #tpu.dot_dimension_numbers<[1], [0], [0], [1], [0, 0, 1, 1], [], []>} : vector<8x8xbf16>, vector<8x32xbf16>, vector<8x32xf32> -> vector<8x32xf32>
    %183 = vector.extract_strided_slice %148 {offsets = [0, 64], sizes = [8, 32], strides = [1, 1]} : vector<8x256xbf16> to vector<8x32xbf16>
    %184 = vector.extract_strided_slice %149 {offsets = [0, 64], sizes = [8, 32], strides = [1, 1]} : vector<8x256xbf16> to vector<8x32xbf16>
    %cst_47 = arith.constant dense<0.000000e+00> : vector<8x8xf32>
    %185 = tpu.matmul %183, %184, %cst_47 {dimension_numbers = #tpu.dot_dimension_numbers<[1], [1], [0], [0], [0, 0, 1, 0], [], []>} : vector<8x32xbf16>, vector<8x32xbf16>, vector<8x8xf32> -> vector<8x8xf32>
    %cst_48 = arith.constant dense<0xFF800000> : vector<8xf32>
    %186 = vector.multi_reduction <maximumf>, %185, %cst_48 [1] : vector<8x8xf32> to vector<8xf32>
    %187 = vector.shape_cast %186 : vector<8xf32> to vector<8x1xf32>
    %188 = vector.broadcast %187 : vector<8x1xf32> to vector<8x8xf32>
    %189 = arith.subf %185, %188 : vector<8x8xf32>
    %190 = math.exp %189 : vector<8x8xf32>
    %cst_49 = arith.constant dense<0.000000e+00> : vector<8xf32>
    %191 = vector.multi_reduction <add>, %190, %cst_49 [1] : vector<8x8xf32> to vector<8xf32>
    %192 = vector.shape_cast %191 : vector<8xf32> to vector<8x1xf32>
    %193 = tpu.reciprocal %192 {approx = true} : vector<8x1xf32> -> vector<8x1xf32>
    %194 = vector.broadcast %193 : vector<8x1xf32> to vector<8x8xf32>
    %195 = arith.mulf %190, %194 : vector<8x8xf32>
    %196 = arith.truncf %195 : vector<8x8xf32> to vector<8x8xbf16>
    %197 = vector.extract_strided_slice %150 {offsets = [0, 64], sizes = [8, 32], strides = [1, 1]} : vector<8x256xbf16> to vector<8x32xbf16>
    %cst_50 = arith.constant dense<0.000000e+00> : vector<8x32xf32>
    %198 = tpu.matmul %196, %197, %cst_50 {dimension_numbers = #tpu.dot_dimension_numbers<[1], [0], [0], [1], [0, 0, 1, 1], [], []>} : vector<8x8xbf16>, vector<8x32xbf16>, vector<8x32xf32> -> vector<8x32xf32>
    %199 = vector.extract_strided_slice %148 {offsets = [0, 96], sizes = [8, 32], strides = [1, 1]} : vector<8x256xbf16> to vector<8x32xbf16>
    %200 = vector.extract_strided_slice %149 {offsets = [0, 96], sizes = [8, 32], strides = [1, 1]} : vector<8x256xbf16> to vector<8x32xbf16>
    %cst_51 = arith.constant dense<0.000000e+00> : vector<8x8xf32>
    %201 = tpu.matmul %199, %200, %cst_51 {dimension_numbers = #tpu.dot_dimension_numbers<[1], [1], [0], [0], [0, 0, 1, 0], [], []>} : vector<8x32xbf16>, vector<8x32xbf16>, vector<8x8xf32> -> vector<8x8xf32>
    %cst_52 = arith.constant dense<0xFF800000> : vector<8xf32>
    %202 = vector.multi_reduction <maximumf>, %201, %cst_52 [1] : vector<8x8xf32> to vector<8xf32>
    %203 = vector.shape_cast %202 : vector<8xf32> to vector<8x1xf32>
    %204 = vector.broadcast %203 : vector<8x1xf32> to vector<8x8xf32>
    %205 = arith.subf %201, %204 : vector<8x8xf32>
    %206 = math.exp %205 : vector<8x8xf32>
    %cst_53 = arith.constant dense<0.000000e+00> : vector<8xf32>
    %207 = vector.multi_reduction <add>, %206, %cst_53 [1] : vector<8x8xf32> to vector<8xf32>
    %208 = vector.shape_cast %207 : vector<8xf32> to vector<8x1xf32>
    %209 = tpu.reciprocal %208 {approx = true} : vector<8x1xf32> -> vector<8x1xf32>
    %210 = vector.broadcast %209 : vector<8x1xf32> to vector<8x8xf32>
    %211 = arith.mulf %206, %210 : vector<8x8xf32>
    %212 = arith.truncf %211 : vector<8x8xf32> to vector<8x8xbf16>
    %213 = vector.extract_strided_slice %150 {offsets = [0, 96], sizes = [8, 32], strides = [1, 1]} : vector<8x256xbf16> to vector<8x32xbf16>
    %cst_54 = arith.constant dense<0.000000e+00> : vector<8x32xf32>
    %214 = tpu.matmul %212, %213, %cst_54 {dimension_numbers = #tpu.dot_dimension_numbers<[1], [0], [0], [1], [0, 0, 1, 1], [], []>} : vector<8x8xbf16>, vector<8x32xbf16>, vector<8x32xf32> -> vector<8x32xf32>
    %215 = vector.extract_strided_slice %148 {offsets = [0, 128], sizes = [8, 32], strides = [1, 1]} : vector<8x256xbf16> to vector<8x32xbf16>
    %216 = vector.extract_strided_slice %149 {offsets = [0, 128], sizes = [8, 32], strides = [1, 1]} : vector<8x256xbf16> to vector<8x32xbf16>
    %cst_55 = arith.constant dense<0.000000e+00> : vector<8x8xf32>
    %217 = tpu.matmul %215, %216, %cst_55 {dimension_numbers = #tpu.dot_dimension_numbers<[1], [1], [0], [0], [0, 0, 1, 0], [], []>} : vector<8x32xbf16>, vector<8x32xbf16>, vector<8x8xf32> -> vector<8x8xf32>
    %cst_56 = arith.constant dense<0xFF800000> : vector<8xf32>
    %218 = vector.multi_reduction <maximumf>, %217, %cst_56 [1] : vector<8x8xf32> to vector<8xf32>
    %219 = vector.shape_cast %218 : vector<8xf32> to vector<8x1xf32>
    %220 = vector.broadcast %219 : vector<8x1xf32> to vector<8x8xf32>
    %221 = arith.subf %217, %220 : vector<8x8xf32>
    %222 = math.exp %221 : vector<8x8xf32>
    %cst_57 = arith.constant dense<0.000000e+00> : vector<8xf32>
    %223 = vector.multi_reduction <add>, %222, %cst_57 [1] : vector<8x8xf32> to vector<8xf32>
    %224 = vector.shape_cast %223 : vector<8xf32> to vector<8x1xf32>
    %225 = tpu.reciprocal %224 {approx = true} : vector<8x1xf32> -> vector<8x1xf32>
    %226 = vector.broadcast %225 : vector<8x1xf32> to vector<8x8xf32>
    %227 = arith.mulf %222, %226 : vector<8x8xf32>
    %228 = arith.truncf %227 : vector<8x8xf32> to vector<8x8xbf16>
    %229 = vector.extract_strided_slice %150 {offsets = [0, 128], sizes = [8, 32], strides = [1, 1]} : vector<8x256xbf16> to vector<8x32xbf16>
    %cst_58 = arith.constant dense<0.000000e+00> : vector<8x32xf32>
    %230 = tpu.matmul %228, %229, %cst_58 {dimension_numbers = #tpu.dot_dimension_numbers<[1], [0], [0], [1], [0, 0, 1, 1], [], []>} : vector<8x8xbf16>, vector<8x32xbf16>, vector<8x32xf32> -> vector<8x32xf32>
    %231 = vector.extract_strided_slice %148 {offsets = [0, 160], sizes = [8, 32], strides = [1, 1]} : vector<8x256xbf16> to vector<8x32xbf16>
    %232 = vector.extract_strided_slice %149 {offsets = [0, 160], sizes = [8, 32], strides = [1, 1]} : vector<8x256xbf16> to vector<8x32xbf16>
    %cst_59 = arith.constant dense<0.000000e+00> : vector<8x8xf32>
    %233 = tpu.matmul %231, %232, %cst_59 {dimension_numbers = #tpu.dot_dimension_numbers<[1], [1], [0], [0], [0, 0, 1, 0], [], []>} : vector<8x32xbf16>, vector<8x32xbf16>, vector<8x8xf32> -> vector<8x8xf32>
    %cst_60 = arith.constant dense<0xFF800000> : vector<8xf32>
    %234 = vector.multi_reduction <maximumf>, %233, %cst_60 [1] : vector<8x8xf32> to vector<8xf32>
    %235 = vector.shape_cast %234 : vector<8xf32> to vector<8x1xf32>
    %236 = vector.broadcast %235 : vector<8x1xf32> to vector<8x8xf32>
    %237 = arith.subf %233, %236 : vector<8x8xf32>
    %238 = math.exp %237 : vector<8x8xf32>
    %cst_61 = arith.constant dense<0.000000e+00> : vector<8xf32>
    %239 = vector.multi_reduction <add>, %238, %cst_61 [1] : vector<8x8xf32> to vector<8xf32>
    %240 = vector.shape_cast %239 : vector<8xf32> to vector<8x1xf32>
    %241 = tpu.reciprocal %240 {approx = true} : vector<8x1xf32> -> vector<8x1xf32>
    %242 = vector.broadcast %241 : vector<8x1xf32> to vector<8x8xf32>
    %243 = arith.mulf %238, %242 : vector<8x8xf32>
    %244 = arith.truncf %243 : vector<8x8xf32> to vector<8x8xbf16>
    %245 = vector.extract_strided_slice %150 {offsets = [0, 160], sizes = [8, 32], strides = [1, 1]} : vector<8x256xbf16> to vector<8x32xbf16>
    %cst_62 = arith.constant dense<0.000000e+00> : vector<8x32xf32>
    %246 = tpu.matmul %244, %245, %cst_62 {dimension_numbers = #tpu.dot_dimension_numbers<[1], [0], [0], [1], [0, 0, 1, 1], [], []>} : vector<8x8xbf16>, vector<8x32xbf16>, vector<8x32xf32> -> vector<8x32xf32>
    %247 = vector.extract_strided_slice %148 {offsets = [0, 192], sizes = [8, 32], strides = [1, 1]} : vector<8x256xbf16> to vector<8x32xbf16>
    %248 = vector.extract_strided_slice %149 {offsets = [0, 192], sizes = [8, 32], strides = [1, 1]} : vector<8x256xbf16> to vector<8x32xbf16>
    %cst_63 = arith.constant dense<0.000000e+00> : vector<8x8xf32>
    %249 = tpu.matmul %247, %248, %cst_63 {dimension_numbers = #tpu.dot_dimension_numbers<[1], [1], [0], [0], [0, 0, 1, 0], [], []>} : vector<8x32xbf16>, vector<8x32xbf16>, vector<8x8xf32> -> vector<8x8xf32>
    %cst_64 = arith.constant dense<0xFF800000> : vector<8xf32>
    %250 = vector.multi_reduction <maximumf>, %249, %cst_64 [1] : vector<8x8xf32> to vector<8xf32>
    %251 = vector.shape_cast %250 : vector<8xf32> to vector<8x1xf32>
    %252 = vector.broadcast %251 : vector<8x1xf32> to vector<8x8xf32>
    %253 = arith.subf %249, %252 : vector<8x8xf32>
    %254 = math.exp %253 : vector<8x8xf32>
    %cst_65 = arith.constant dense<0.000000e+00> : vector<8xf32>
    %255 = vector.multi_reduction <add>, %254, %cst_65 [1] : vector<8x8xf32> to vector<8xf32>
    %256 = vector.shape_cast %255 : vector<8xf32> to vector<8x1xf32>
    %257 = tpu.reciprocal %256 {approx = true} : vector<8x1xf32> -> vector<8x1xf32>
    %258 = vector.broadcast %257 : vector<8x1xf32> to vector<8x8xf32>
    %259 = arith.mulf %254, %258 : vector<8x8xf32>
    %260 = arith.truncf %259 : vector<8x8xf32> to vector<8x8xbf16>
    %261 = vector.extract_strided_slice %150 {offsets = [0, 192], sizes = [8, 32], strides = [1, 1]} : vector<8x256xbf16> to vector<8x32xbf16>
    %cst_66 = arith.constant dense<0.000000e+00> : vector<8x32xf32>
    %262 = tpu.matmul %260, %261, %cst_66 {dimension_numbers = #tpu.dot_dimension_numbers<[1], [0], [0], [1], [0, 0, 1, 1], [], []>} : vector<8x8xbf16>, vector<8x32xbf16>, vector<8x32xf32> -> vector<8x32xf32>
    %263 = vector.extract_strided_slice %148 {offsets = [0, 224], sizes = [8, 32], strides = [1, 1]} : vector<8x256xbf16> to vector<8x32xbf16>
    %264 = vector.extract_strided_slice %149 {offsets = [0, 224], sizes = [8, 32], strides = [1, 1]} : vector<8x256xbf16> to vector<8x32xbf16>
    %cst_67 = arith.constant dense<0.000000e+00> : vector<8x8xf32>
    %265 = tpu.matmul %263, %264, %cst_67 {dimension_numbers = #tpu.dot_dimension_numbers<[1], [1], [0], [0], [0, 0, 1, 0], [], []>} : vector<8x32xbf16>, vector<8x32xbf16>, vector<8x8xf32> -> vector<8x8xf32>
    %cst_68 = arith.constant dense<0xFF800000> : vector<8xf32>
    %266 = vector.multi_reduction <maximumf>, %265, %cst_68 [1] : vector<8x8xf32> to vector<8xf32>
    %267 = vector.shape_cast %266 : vector<8xf32> to vector<8x1xf32>
    %268 = vector.broadcast %267 : vector<8x1xf32> to vector<8x8xf32>
    %269 = arith.subf %265, %268 : vector<8x8xf32>
    %270 = math.exp %269 : vector<8x8xf32>
    %cst_69 = arith.constant dense<0.000000e+00> : vector<8xf32>
    %271 = vector.multi_reduction <add>, %270, %cst_69 [1] : vector<8x8xf32> to vector<8xf32>
    %272 = vector.shape_cast %271 : vector<8xf32> to vector<8x1xf32>
    %273 = tpu.reciprocal %272 {approx = true} : vector<8x1xf32> -> vector<8x1xf32>
    %274 = vector.broadcast %273 : vector<8x1xf32> to vector<8x8xf32>
    %275 = arith.mulf %270, %274 : vector<8x8xf32>
    %276 = arith.truncf %275 : vector<8x8xf32> to vector<8x8xbf16>
    %277 = vector.extract_strided_slice %150 {offsets = [0, 224], sizes = [8, 32], strides = [1, 1]} : vector<8x256xbf16> to vector<8x32xbf16>
    %cst_70 = arith.constant dense<0.000000e+00> : vector<8x32xf32>
    %278 = tpu.matmul %276, %277, %cst_70 {dimension_numbers = #tpu.dot_dimension_numbers<[1], [0], [0], [1], [0, 0, 1, 1], [], []>} : vector<8x8xbf16>, vector<8x32xbf16>, vector<8x32xf32> -> vector<8x32xf32>
    %279 = tpu.concatenate %166, %182, %198, %214, %230, %246, %262, %278 in 1 : vector<8x32xf32>, vector<8x32xf32>, vector<8x32xf32>, vector<8x32xf32>, vector<8x32xf32>, vector<8x32xf32>, vector<8x32xf32>, vector<8x32xf32> -> vector<8x256xf32>
    %280 = tpu.concatenate %147, %279 in 0 : vector<8x256xf32>, vector<8x256xf32> -> vector<16x256xf32>
    %281 = arith.truncf %280 : vector<16x256xf32> to vector<16x256xbf16>
    %c0_71 = arith.constant 0 : index
    %c0_72 = arith.constant 0 : index
    %282 = vector.load %arg3[%c0_71, %c0_72] : memref<256x256xbf16, #tpu.memory_space<vmem>>, vector<256x256xbf16>
    %cst_73 = arith.constant dense<0.000000e+00> : vector<16x256xf32>
    %283 = tpu.matmul %281, %282, %cst_73 {dimension_numbers = #tpu.dot_dimension_numbers<[1], [0], [0], [1], [0, 0, 1, 1], [], []>} : vector<16x256xbf16>, vector<256x256xbf16>, vector<16x256xf32> -> vector<16x256xf32>
    %284 = vector.broadcast %12 : vector<1x256xf32> to vector<16x256xf32>
    %285 = arith.addf %283, %284 : vector<16x256xf32>
    %286 = arith.addf %0, %285 : vector<16x256xf32>
    %c0_74 = arith.constant 0 : index
    %c2816 = arith.constant 2816 : index
    %287 = vector.load %arg9[%c0_74, %c2816] : memref<1x4352xf32, #tpu.memory_space<vmem>>, vector<1x256xf32>
    %c0_75 = arith.constant 0 : index
    %c3072 = arith.constant 3072 : index
    %288 = vector.load %arg9[%c0_75, %c3072] : memref<1x4352xf32, #tpu.memory_space<vmem>>, vector<1x256xf32>
    %cst_76 = arith.constant dense<0.000000e+00> : vector<16xf32>
    %289 = vector.multi_reduction <add>, %286, %cst_76 [1] : vector<16x256xf32> to vector<16xf32>
    %290 = vector.shape_cast %289 : vector<16xf32> to vector<16x1xf32>
    %cst_77 = arith.constant 2.560000e+02 : f32
    %291 = vector.broadcast %cst_77 : f32 to vector<16x1xf32>
    %292 = arith.divf %290, %291 : vector<16x1xf32>
    %293 = vector.broadcast %292 : vector<16x1xf32> to vector<16x256xf32>
    %294 = arith.subf %286, %293 : vector<16x256xf32>
    %295 = arith.mulf %294, %294 : vector<16x256xf32>
    %cst_78 = arith.constant dense<0.000000e+00> : vector<16xf32>
    %296 = vector.multi_reduction <add>, %295, %cst_78 [1] : vector<16x256xf32> to vector<16xf32>
    %297 = vector.shape_cast %296 : vector<16xf32> to vector<16x1xf32>
    %cst_79 = arith.constant 2.560000e+02 : f32
    %298 = vector.broadcast %cst_79 : f32 to vector<16x1xf32>
    %299 = arith.divf %297, %298 : vector<16x1xf32>
    %cst_80 = arith.constant 9.99999974E-6 : f32
    %300 = vector.broadcast %cst_80 : f32 to vector<16x1xf32>
    %301 = arith.addf %299, %300 : vector<16x1xf32>
    %302 = math.rsqrt %301 : vector<16x1xf32>
    %303 = vector.broadcast %302 : vector<16x1xf32> to vector<16x256xf32>
    %304 = arith.mulf %294, %303 : vector<16x256xf32>
    %305 = vector.broadcast %287 : vector<1x256xf32> to vector<16x256xf32>
    %306 = arith.mulf %304, %305 : vector<16x256xf32>
    %307 = vector.broadcast %288 : vector<1x256xf32> to vector<16x256xf32>
    %308 = arith.addf %306, %307 : vector<16x256xf32>
    %309 = arith.truncf %308 : vector<16x256xf32> to vector<16x256xbf16>
    %c0_81 = arith.constant 0 : index
    %c0_82 = arith.constant 0 : index
    %310 = vector.load %arg4[%c0_81, %c0_82] : memref<256x256xbf16, #tpu.memory_space<vmem>>, vector<256x256xbf16>
    %cst_83 = arith.constant dense<0.000000e+00> : vector<16x256xf32>
    %311 = tpu.matmul %309, %310, %cst_83 {dimension_numbers = #tpu.dot_dimension_numbers<[1], [0], [0], [1], [0, 0, 1, 1], [], []>} : vector<16x256xbf16>, vector<256x256xbf16>, vector<16x256xf32> -> vector<16x256xf32>
    %c0_84 = arith.constant 0 : index
    %c1024 = arith.constant 1024 : index
    %312 = vector.load %arg9[%c0_84, %c1024] : memref<1x4352xf32, #tpu.memory_space<vmem>>, vector<1x256xf32>
    %313 = vector.broadcast %312 : vector<1x256xf32> to vector<16x256xf32>
    %314 = arith.addf %311, %313 : vector<16x256xf32>
    %cst_85 = arith.constant 0.176776692 : f32
    %315 = vector.broadcast %cst_85 : f32 to vector<16x256xf32>
    %316 = arith.mulf %314, %315 : vector<16x256xf32>
    %c0_86 = arith.constant 0 : index
    %c0_87 = arith.constant 0 : index
    %317 = vector.load %arg1[%c0_86, %c0_87] : memref<16x256xf32, #tpu.memory_space<vmem>>, vector<16x256xf32>
    %318 = arith.truncf %317 : vector<16x256xf32> to vector<16x256xbf16>
    %c0_88 = arith.constant 0 : index
    %c0_89 = arith.constant 0 : index
    %319 = vector.load %arg5[%c0_88, %c0_89] : memref<256x512xbf16, #tpu.memory_space<vmem>>, vector<256x512xbf16>
    %cst_90 = arith.constant dense<0.000000e+00> : vector<16x512xf32>
    %320 = tpu.matmul %318, %319, %cst_90 {dimension_numbers = #tpu.dot_dimension_numbers<[1], [0], [0], [1], [0, 0, 1, 1], [], []>} : vector<16x256xbf16>, vector<256x512xbf16>, vector<16x512xf32> -> vector<16x512xf32>
    %c0_91 = arith.constant 0 : index
    %c1280 = arith.constant 1280 : index
    %321 = vector.load %arg9[%c0_91, %c1280] : memref<1x4352xf32, #tpu.memory_space<vmem>>, vector<1x512xf32>
    %322 = vector.broadcast %321 : vector<1x512xf32> to vector<16x512xf32>
    %323 = arith.addf %320, %322 : vector<16x512xf32>
    %324 = vector.extract_strided_slice %323 {offsets = [0, 0], sizes = [16, 256], strides = [1, 1]} : vector<16x512xf32> to vector<16x256xf32>
    %325 = vector.extract_strided_slice %323 {offsets = [0, 256], sizes = [16, 256], strides = [1, 1]} : vector<16x512xf32> to vector<16x256xf32>
    %c0_92 = arith.constant 0 : index
    %c1792 = arith.constant 1792 : index
    %326 = vector.load %arg9[%c0_92, %c1792] : memref<1x4352xf32, #tpu.memory_space<vmem>>, vector<1x256xf32>
    %327 = arith.truncf %316 : vector<16x256xf32> to vector<16x256xbf16>
    %328 = arith.truncf %324 : vector<16x256xf32> to vector<16x256xbf16>
    %329 = arith.truncf %325 : vector<16x256xf32> to vector<16x256xbf16>
    %330 = vector.extract_strided_slice %327 {offsets = [0, 0], sizes = [8, 256], strides = [1, 1]} : vector<16x256xbf16> to vector<8x256xbf16>
    %331 = vector.extract_strided_slice %328 {offsets = [0, 0], sizes = [8, 256], strides = [1, 1]} : vector<16x256xbf16> to vector<8x256xbf16>
    %332 = vector.extract_strided_slice %329 {offsets = [0, 0], sizes = [8, 256], strides = [1, 1]} : vector<16x256xbf16> to vector<8x256xbf16>
    %333 = vector.extract_strided_slice %330 {offsets = [0, 0], sizes = [8, 32], strides = [1, 1]} : vector<8x256xbf16> to vector<8x32xbf16>
    %334 = vector.extract_strided_slice %331 {offsets = [0, 0], sizes = [8, 32], strides = [1, 1]} : vector<8x256xbf16> to vector<8x32xbf16>
    %cst_93 = arith.constant dense<0.000000e+00> : vector<8x8xf32>
    %335 = tpu.matmul %333, %334, %cst_93 {dimension_numbers = #tpu.dot_dimension_numbers<[1], [1], [0], [0], [0, 0, 1, 0], [], []>} : vector<8x32xbf16>, vector<8x32xbf16>, vector<8x8xf32> -> vector<8x8xf32>
    %cst_94 = arith.constant dense<0xFF800000> : vector<8xf32>
    %336 = vector.multi_reduction <maximumf>, %335, %cst_94 [1] : vector<8x8xf32> to vector<8xf32>
    %337 = vector.shape_cast %336 : vector<8xf32> to vector<8x1xf32>
    %338 = vector.broadcast %337 : vector<8x1xf32> to vector<8x8xf32>
    %339 = arith.subf %335, %338 : vector<8x8xf32>
    %340 = math.exp %339 : vector<8x8xf32>
    %cst_95 = arith.constant dense<0.000000e+00> : vector<8xf32>
    %341 = vector.multi_reduction <add>, %340, %cst_95 [1] : vector<8x8xf32> to vector<8xf32>
    %342 = vector.shape_cast %341 : vector<8xf32> to vector<8x1xf32>
    %343 = tpu.reciprocal %342 {approx = true} : vector<8x1xf32> -> vector<8x1xf32>
    %344 = vector.broadcast %343 : vector<8x1xf32> to vector<8x8xf32>
    %345 = arith.mulf %340, %344 : vector<8x8xf32>
    %346 = arith.truncf %345 : vector<8x8xf32> to vector<8x8xbf16>
    %347 = vector.extract_strided_slice %332 {offsets = [0, 0], sizes = [8, 32], strides = [1, 1]} : vector<8x256xbf16> to vector<8x32xbf16>
    %cst_96 = arith.constant dense<0.000000e+00> : vector<8x32xf32>
    %348 = tpu.matmul %346, %347, %cst_96 {dimension_numbers = #tpu.dot_dimension_numbers<[1], [0], [0], [1], [0, 0, 1, 1], [], []>} : vector<8x8xbf16>, vector<8x32xbf16>, vector<8x32xf32> -> vector<8x32xf32>
    %349 = vector.extract_strided_slice %330 {offsets = [0, 32], sizes = [8, 32], strides = [1, 1]} : vector<8x256xbf16> to vector<8x32xbf16>
    %350 = vector.extract_strided_slice %331 {offsets = [0, 32], sizes = [8, 32], strides = [1, 1]} : vector<8x256xbf16> to vector<8x32xbf16>
    %cst_97 = arith.constant dense<0.000000e+00> : vector<8x8xf32>
    %351 = tpu.matmul %349, %350, %cst_97 {dimension_numbers = #tpu.dot_dimension_numbers<[1], [1], [0], [0], [0, 0, 1, 0], [], []>} : vector<8x32xbf16>, vector<8x32xbf16>, vector<8x8xf32> -> vector<8x8xf32>
    %cst_98 = arith.constant dense<0xFF800000> : vector<8xf32>
    %352 = vector.multi_reduction <maximumf>, %351, %cst_98 [1] : vector<8x8xf32> to vector<8xf32>
    %353 = vector.shape_cast %352 : vector<8xf32> to vector<8x1xf32>
    %354 = vector.broadcast %353 : vector<8x1xf32> to vector<8x8xf32>
    %355 = arith.subf %351, %354 : vector<8x8xf32>
    %356 = math.exp %355 : vector<8x8xf32>
    %cst_99 = arith.constant dense<0.000000e+00> : vector<8xf32>
    %357 = vector.multi_reduction <add>, %356, %cst_99 [1] : vector<8x8xf32> to vector<8xf32>
    %358 = vector.shape_cast %357 : vector<8xf32> to vector<8x1xf32>
    %359 = tpu.reciprocal %358 {approx = true} : vector<8x1xf32> -> vector<8x1xf32>
    %360 = vector.broadcast %359 : vector<8x1xf32> to vector<8x8xf32>
    %361 = arith.mulf %356, %360 : vector<8x8xf32>
    %362 = arith.truncf %361 : vector<8x8xf32> to vector<8x8xbf16>
    %363 = vector.extract_strided_slice %332 {offsets = [0, 32], sizes = [8, 32], strides = [1, 1]} : vector<8x256xbf16> to vector<8x32xbf16>
    %cst_100 = arith.constant dense<0.000000e+00> : vector<8x32xf32>
    %364 = tpu.matmul %362, %363, %cst_100 {dimension_numbers = #tpu.dot_dimension_numbers<[1], [0], [0], [1], [0, 0, 1, 1], [], []>} : vector<8x8xbf16>, vector<8x32xbf16>, vector<8x32xf32> -> vector<8x32xf32>
    %365 = vector.extract_strided_slice %330 {offsets = [0, 64], sizes = [8, 32], strides = [1, 1]} : vector<8x256xbf16> to vector<8x32xbf16>
    %366 = vector.extract_strided_slice %331 {offsets = [0, 64], sizes = [8, 32], strides = [1, 1]} : vector<8x256xbf16> to vector<8x32xbf16>
    %cst_101 = arith.constant dense<0.000000e+00> : vector<8x8xf32>
    %367 = tpu.matmul %365, %366, %cst_101 {dimension_numbers = #tpu.dot_dimension_numbers<[1], [1], [0], [0], [0, 0, 1, 0], [], []>} : vector<8x32xbf16>, vector<8x32xbf16>, vector<8x8xf32> -> vector<8x8xf32>
    %cst_102 = arith.constant dense<0xFF800000> : vector<8xf32>
    %368 = vector.multi_reduction <maximumf>, %367, %cst_102 [1] : vector<8x8xf32> to vector<8xf32>
    %369 = vector.shape_cast %368 : vector<8xf32> to vector<8x1xf32>
    %370 = vector.broadcast %369 : vector<8x1xf32> to vector<8x8xf32>
    %371 = arith.subf %367, %370 : vector<8x8xf32>
    %372 = math.exp %371 : vector<8x8xf32>
    %cst_103 = arith.constant dense<0.000000e+00> : vector<8xf32>
    %373 = vector.multi_reduction <add>, %372, %cst_103 [1] : vector<8x8xf32> to vector<8xf32>
    %374 = vector.shape_cast %373 : vector<8xf32> to vector<8x1xf32>
    %375 = tpu.reciprocal %374 {approx = true} : vector<8x1xf32> -> vector<8x1xf32>
    %376 = vector.broadcast %375 : vector<8x1xf32> to vector<8x8xf32>
    %377 = arith.mulf %372, %376 : vector<8x8xf32>
    %378 = arith.truncf %377 : vector<8x8xf32> to vector<8x8xbf16>
    %379 = vector.extract_strided_slice %332 {offsets = [0, 64], sizes = [8, 32], strides = [1, 1]} : vector<8x256xbf16> to vector<8x32xbf16>
    %cst_104 = arith.constant dense<0.000000e+00> : vector<8x32xf32>
    %380 = tpu.matmul %378, %379, %cst_104 {dimension_numbers = #tpu.dot_dimension_numbers<[1], [0], [0], [1], [0, 0, 1, 1], [], []>} : vector<8x8xbf16>, vector<8x32xbf16>, vector<8x32xf32> -> vector<8x32xf32>
    %381 = vector.extract_strided_slice %330 {offsets = [0, 96], sizes = [8, 32], strides = [1, 1]} : vector<8x256xbf16> to vector<8x32xbf16>
    %382 = vector.extract_strided_slice %331 {offsets = [0, 96], sizes = [8, 32], strides = [1, 1]} : vector<8x256xbf16> to vector<8x32xbf16>
    %cst_105 = arith.constant dense<0.000000e+00> : vector<8x8xf32>
    %383 = tpu.matmul %381, %382, %cst_105 {dimension_numbers = #tpu.dot_dimension_numbers<[1], [1], [0], [0], [0, 0, 1, 0], [], []>} : vector<8x32xbf16>, vector<8x32xbf16>, vector<8x8xf32> -> vector<8x8xf32>
    %cst_106 = arith.constant dense<0xFF800000> : vector<8xf32>
    %384 = vector.multi_reduction <maximumf>, %383, %cst_106 [1] : vector<8x8xf32> to vector<8xf32>
    %385 = vector.shape_cast %384 : vector<8xf32> to vector<8x1xf32>
    %386 = vector.broadcast %385 : vector<8x1xf32> to vector<8x8xf32>
    %387 = arith.subf %383, %386 : vector<8x8xf32>
    %388 = math.exp %387 : vector<8x8xf32>
    %cst_107 = arith.constant dense<0.000000e+00> : vector<8xf32>
    %389 = vector.multi_reduction <add>, %388, %cst_107 [1] : vector<8x8xf32> to vector<8xf32>
    %390 = vector.shape_cast %389 : vector<8xf32> to vector<8x1xf32>
    %391 = tpu.reciprocal %390 {approx = true} : vector<8x1xf32> -> vector<8x1xf32>
    %392 = vector.broadcast %391 : vector<8x1xf32> to vector<8x8xf32>
    %393 = arith.mulf %388, %392 : vector<8x8xf32>
    %394 = arith.truncf %393 : vector<8x8xf32> to vector<8x8xbf16>
    %395 = vector.extract_strided_slice %332 {offsets = [0, 96], sizes = [8, 32], strides = [1, 1]} : vector<8x256xbf16> to vector<8x32xbf16>
    %cst_108 = arith.constant dense<0.000000e+00> : vector<8x32xf32>
    %396 = tpu.matmul %394, %395, %cst_108 {dimension_numbers = #tpu.dot_dimension_numbers<[1], [0], [0], [1], [0, 0, 1, 1], [], []>} : vector<8x8xbf16>, vector<8x32xbf16>, vector<8x32xf32> -> vector<8x32xf32>
    %397 = vector.extract_strided_slice %330 {offsets = [0, 128], sizes = [8, 32], strides = [1, 1]} : vector<8x256xbf16> to vector<8x32xbf16>
    %398 = vector.extract_strided_slice %331 {offsets = [0, 128], sizes = [8, 32], strides = [1, 1]} : vector<8x256xbf16> to vector<8x32xbf16>
    %cst_109 = arith.constant dense<0.000000e+00> : vector<8x8xf32>
    %399 = tpu.matmul %397, %398, %cst_109 {dimension_numbers = #tpu.dot_dimension_numbers<[1], [1], [0], [0], [0, 0, 1, 0], [], []>} : vector<8x32xbf16>, vector<8x32xbf16>, vector<8x8xf32> -> vector<8x8xf32>
    %cst_110 = arith.constant dense<0xFF800000> : vector<8xf32>
    %400 = vector.multi_reduction <maximumf>, %399, %cst_110 [1] : vector<8x8xf32> to vector<8xf32>
    %401 = vector.shape_cast %400 : vector<8xf32> to vector<8x1xf32>
    %402 = vector.broadcast %401 : vector<8x1xf32> to vector<8x8xf32>
    %403 = arith.subf %399, %402 : vector<8x8xf32>
    %404 = math.exp %403 : vector<8x8xf32>
    %cst_111 = arith.constant dense<0.000000e+00> : vector<8xf32>
    %405 = vector.multi_reduction <add>, %404, %cst_111 [1] : vector<8x8xf32> to vector<8xf32>
    %406 = vector.shape_cast %405 : vector<8xf32> to vector<8x1xf32>
    %407 = tpu.reciprocal %406 {approx = true} : vector<8x1xf32> -> vector<8x1xf32>
    %408 = vector.broadcast %407 : vector<8x1xf32> to vector<8x8xf32>
    %409 = arith.mulf %404, %408 : vector<8x8xf32>
    %410 = arith.truncf %409 : vector<8x8xf32> to vector<8x8xbf16>
    %411 = vector.extract_strided_slice %332 {offsets = [0, 128], sizes = [8, 32], strides = [1, 1]} : vector<8x256xbf16> to vector<8x32xbf16>
    %cst_112 = arith.constant dense<0.000000e+00> : vector<8x32xf32>
    %412 = tpu.matmul %410, %411, %cst_112 {dimension_numbers = #tpu.dot_dimension_numbers<[1], [0], [0], [1], [0, 0, 1, 1], [], []>} : vector<8x8xbf16>, vector<8x32xbf16>, vector<8x32xf32> -> vector<8x32xf32>
    %413 = vector.extract_strided_slice %330 {offsets = [0, 160], sizes = [8, 32], strides = [1, 1]} : vector<8x256xbf16> to vector<8x32xbf16>
    %414 = vector.extract_strided_slice %331 {offsets = [0, 160], sizes = [8, 32], strides = [1, 1]} : vector<8x256xbf16> to vector<8x32xbf16>
    %cst_113 = arith.constant dense<0.000000e+00> : vector<8x8xf32>
    %415 = tpu.matmul %413, %414, %cst_113 {dimension_numbers = #tpu.dot_dimension_numbers<[1], [1], [0], [0], [0, 0, 1, 0], [], []>} : vector<8x32xbf16>, vector<8x32xbf16>, vector<8x8xf32> -> vector<8x8xf32>
    %cst_114 = arith.constant dense<0xFF800000> : vector<8xf32>
    %416 = vector.multi_reduction <maximumf>, %415, %cst_114 [1] : vector<8x8xf32> to vector<8xf32>
    %417 = vector.shape_cast %416 : vector<8xf32> to vector<8x1xf32>
    %418 = vector.broadcast %417 : vector<8x1xf32> to vector<8x8xf32>
    %419 = arith.subf %415, %418 : vector<8x8xf32>
    %420 = math.exp %419 : vector<8x8xf32>
    %cst_115 = arith.constant dense<0.000000e+00> : vector<8xf32>
    %421 = vector.multi_reduction <add>, %420, %cst_115 [1] : vector<8x8xf32> to vector<8xf32>
    %422 = vector.shape_cast %421 : vector<8xf32> to vector<8x1xf32>
    %423 = tpu.reciprocal %422 {approx = true} : vector<8x1xf32> -> vector<8x1xf32>
    %424 = vector.broadcast %423 : vector<8x1xf32> to vector<8x8xf32>
    %425 = arith.mulf %420, %424 : vector<8x8xf32>
    %426 = arith.truncf %425 : vector<8x8xf32> to vector<8x8xbf16>
    %427 = vector.extract_strided_slice %332 {offsets = [0, 160], sizes = [8, 32], strides = [1, 1]} : vector<8x256xbf16> to vector<8x32xbf16>
    %cst_116 = arith.constant dense<0.000000e+00> : vector<8x32xf32>
    %428 = tpu.matmul %426, %427, %cst_116 {dimension_numbers = #tpu.dot_dimension_numbers<[1], [0], [0], [1], [0, 0, 1, 1], [], []>} : vector<8x8xbf16>, vector<8x32xbf16>, vector<8x32xf32> -> vector<8x32xf32>
    %429 = vector.extract_strided_slice %330 {offsets = [0, 192], sizes = [8, 32], strides = [1, 1]} : vector<8x256xbf16> to vector<8x32xbf16>
    %430 = vector.extract_strided_slice %331 {offsets = [0, 192], sizes = [8, 32], strides = [1, 1]} : vector<8x256xbf16> to vector<8x32xbf16>
    %cst_117 = arith.constant dense<0.000000e+00> : vector<8x8xf32>
    %431 = tpu.matmul %429, %430, %cst_117 {dimension_numbers = #tpu.dot_dimension_numbers<[1], [1], [0], [0], [0, 0, 1, 0], [], []>} : vector<8x32xbf16>, vector<8x32xbf16>, vector<8x8xf32> -> vector<8x8xf32>
    %cst_118 = arith.constant dense<0xFF800000> : vector<8xf32>
    %432 = vector.multi_reduction <maximumf>, %431, %cst_118 [1] : vector<8x8xf32> to vector<8xf32>
    %433 = vector.shape_cast %432 : vector<8xf32> to vector<8x1xf32>
    %434 = vector.broadcast %433 : vector<8x1xf32> to vector<8x8xf32>
    %435 = arith.subf %431, %434 : vector<8x8xf32>
    %436 = math.exp %435 : vector<8x8xf32>
    %cst_119 = arith.constant dense<0.000000e+00> : vector<8xf32>
    %437 = vector.multi_reduction <add>, %436, %cst_119 [1] : vector<8x8xf32> to vector<8xf32>
    %438 = vector.shape_cast %437 : vector<8xf32> to vector<8x1xf32>
    %439 = tpu.reciprocal %438 {approx = true} : vector<8x1xf32> -> vector<8x1xf32>
    %440 = vector.broadcast %439 : vector<8x1xf32> to vector<8x8xf32>
    %441 = arith.mulf %436, %440 : vector<8x8xf32>
    %442 = arith.truncf %441 : vector<8x8xf32> to vector<8x8xbf16>
    %443 = vector.extract_strided_slice %332 {offsets = [0, 192], sizes = [8, 32], strides = [1, 1]} : vector<8x256xbf16> to vector<8x32xbf16>
    %cst_120 = arith.constant dense<0.000000e+00> : vector<8x32xf32>
    %444 = tpu.matmul %442, %443, %cst_120 {dimension_numbers = #tpu.dot_dimension_numbers<[1], [0], [0], [1], [0, 0, 1, 1], [], []>} : vector<8x8xbf16>, vector<8x32xbf16>, vector<8x32xf32> -> vector<8x32xf32>
    %445 = vector.extract_strided_slice %330 {offsets = [0, 224], sizes = [8, 32], strides = [1, 1]} : vector<8x256xbf16> to vector<8x32xbf16>
    %446 = vector.extract_strided_slice %331 {offsets = [0, 224], sizes = [8, 32], strides = [1, 1]} : vector<8x256xbf16> to vector<8x32xbf16>
    %cst_121 = arith.constant dense<0.000000e+00> : vector<8x8xf32>
    %447 = tpu.matmul %445, %446, %cst_121 {dimension_numbers = #tpu.dot_dimension_numbers<[1], [1], [0], [0], [0, 0, 1, 0], [], []>} : vector<8x32xbf16>, vector<8x32xbf16>, vector<8x8xf32> -> vector<8x8xf32>
    %cst_122 = arith.constant dense<0xFF800000> : vector<8xf32>
    %448 = vector.multi_reduction <maximumf>, %447, %cst_122 [1] : vector<8x8xf32> to vector<8xf32>
    %449 = vector.shape_cast %448 : vector<8xf32> to vector<8x1xf32>
    %450 = vector.broadcast %449 : vector<8x1xf32> to vector<8x8xf32>
    %451 = arith.subf %447, %450 : vector<8x8xf32>
    %452 = math.exp %451 : vector<8x8xf32>
    %cst_123 = arith.constant dense<0.000000e+00> : vector<8xf32>
    %453 = vector.multi_reduction <add>, %452, %cst_123 [1] : vector<8x8xf32> to vector<8xf32>
    %454 = vector.shape_cast %453 : vector<8xf32> to vector<8x1xf32>
    %455 = tpu.reciprocal %454 {approx = true} : vector<8x1xf32> -> vector<8x1xf32>
    %456 = vector.broadcast %455 : vector<8x1xf32> to vector<8x8xf32>
    %457 = arith.mulf %452, %456 : vector<8x8xf32>
    %458 = arith.truncf %457 : vector<8x8xf32> to vector<8x8xbf16>
    %459 = vector.extract_strided_slice %332 {offsets = [0, 224], sizes = [8, 32], strides = [1, 1]} : vector<8x256xbf16> to vector<8x32xbf16>
    %cst_124 = arith.constant dense<0.000000e+00> : vector<8x32xf32>
    %460 = tpu.matmul %458, %459, %cst_124 {dimension_numbers = #tpu.dot_dimension_numbers<[1], [0], [0], [1], [0, 0, 1, 1], [], []>} : vector<8x8xbf16>, vector<8x32xbf16>, vector<8x32xf32> -> vector<8x32xf32>
    %461 = tpu.concatenate %348, %364, %380, %396, %412, %428, %444, %460 in 1 : vector<8x32xf32>, vector<8x32xf32>, vector<8x32xf32>, vector<8x32xf32>, vector<8x32xf32>, vector<8x32xf32>, vector<8x32xf32>, vector<8x32xf32> -> vector<8x256xf32>
    %462 = vector.extract_strided_slice %327 {offsets = [8, 0], sizes = [8, 256], strides = [1, 1]} : vector<16x256xbf16> to vector<8x256xbf16>
    %463 = vector.extract_strided_slice %328 {offsets = [8, 0], sizes = [8, 256], strides = [1, 1]} : vector<16x256xbf16> to vector<8x256xbf16>
    %464 = vector.extract_strided_slice %329 {offsets = [8, 0], sizes = [8, 256], strides = [1, 1]} : vector<16x256xbf16> to vector<8x256xbf16>
    %465 = vector.extract_strided_slice %462 {offsets = [0, 0], sizes = [8, 32], strides = [1, 1]} : vector<8x256xbf16> to vector<8x32xbf16>
    %466 = vector.extract_strided_slice %463 {offsets = [0, 0], sizes = [8, 32], strides = [1, 1]} : vector<8x256xbf16> to vector<8x32xbf16>
    %cst_125 = arith.constant dense<0.000000e+00> : vector<8x8xf32>
    %467 = tpu.matmul %465, %466, %cst_125 {dimension_numbers = #tpu.dot_dimension_numbers<[1], [1], [0], [0], [0, 0, 1, 0], [], []>} : vector<8x32xbf16>, vector<8x32xbf16>, vector<8x8xf32> -> vector<8x8xf32>
    %cst_126 = arith.constant dense<0xFF800000> : vector<8xf32>
    %468 = vector.multi_reduction <maximumf>, %467, %cst_126 [1] : vector<8x8xf32> to vector<8xf32>
    %469 = vector.shape_cast %468 : vector<8xf32> to vector<8x1xf32>
    %470 = vector.broadcast %469 : vector<8x1xf32> to vector<8x8xf32>
    %471 = arith.subf %467, %470 : vector<8x8xf32>
    %472 = math.exp %471 : vector<8x8xf32>
    %cst_127 = arith.constant dense<0.000000e+00> : vector<8xf32>
    %473 = vector.multi_reduction <add>, %472, %cst_127 [1] : vector<8x8xf32> to vector<8xf32>
    %474 = vector.shape_cast %473 : vector<8xf32> to vector<8x1xf32>
    %475 = tpu.reciprocal %474 {approx = true} : vector<8x1xf32> -> vector<8x1xf32>
    %476 = vector.broadcast %475 : vector<8x1xf32> to vector<8x8xf32>
    %477 = arith.mulf %472, %476 : vector<8x8xf32>
    %478 = arith.truncf %477 : vector<8x8xf32> to vector<8x8xbf16>
    %479 = vector.extract_strided_slice %464 {offsets = [0, 0], sizes = [8, 32], strides = [1, 1]} : vector<8x256xbf16> to vector<8x32xbf16>
    %cst_128 = arith.constant dense<0.000000e+00> : vector<8x32xf32>
    %480 = tpu.matmul %478, %479, %cst_128 {dimension_numbers = #tpu.dot_dimension_numbers<[1], [0], [0], [1], [0, 0, 1, 1], [], []>} : vector<8x8xbf16>, vector<8x32xbf16>, vector<8x32xf32> -> vector<8x32xf32>
    %481 = vector.extract_strided_slice %462 {offsets = [0, 32], sizes = [8, 32], strides = [1, 1]} : vector<8x256xbf16> to vector<8x32xbf16>
    %482 = vector.extract_strided_slice %463 {offsets = [0, 32], sizes = [8, 32], strides = [1, 1]} : vector<8x256xbf16> to vector<8x32xbf16>
    %cst_129 = arith.constant dense<0.000000e+00> : vector<8x8xf32>
    %483 = tpu.matmul %481, %482, %cst_129 {dimension_numbers = #tpu.dot_dimension_numbers<[1], [1], [0], [0], [0, 0, 1, 0], [], []>} : vector<8x32xbf16>, vector<8x32xbf16>, vector<8x8xf32> -> vector<8x8xf32>
    %cst_130 = arith.constant dense<0xFF800000> : vector<8xf32>
    %484 = vector.multi_reduction <maximumf>, %483, %cst_130 [1] : vector<8x8xf32> to vector<8xf32>
    %485 = vector.shape_cast %484 : vector<8xf32> to vector<8x1xf32>
    %486 = vector.broadcast %485 : vector<8x1xf32> to vector<8x8xf32>
    %487 = arith.subf %483, %486 : vector<8x8xf32>
    %488 = math.exp %487 : vector<8x8xf32>
    %cst_131 = arith.constant dense<0.000000e+00> : vector<8xf32>
    %489 = vector.multi_reduction <add>, %488, %cst_131 [1] : vector<8x8xf32> to vector<8xf32>
    %490 = vector.shape_cast %489 : vector<8xf32> to vector<8x1xf32>
    %491 = tpu.reciprocal %490 {approx = true} : vector<8x1xf32> -> vector<8x1xf32>
    %492 = vector.broadcast %491 : vector<8x1xf32> to vector<8x8xf32>
    %493 = arith.mulf %488, %492 : vector<8x8xf32>
    %494 = arith.truncf %493 : vector<8x8xf32> to vector<8x8xbf16>
    %495 = vector.extract_strided_slice %464 {offsets = [0, 32], sizes = [8, 32], strides = [1, 1]} : vector<8x256xbf16> to vector<8x32xbf16>
    %cst_132 = arith.constant dense<0.000000e+00> : vector<8x32xf32>
    %496 = tpu.matmul %494, %495, %cst_132 {dimension_numbers = #tpu.dot_dimension_numbers<[1], [0], [0], [1], [0, 0, 1, 1], [], []>} : vector<8x8xbf16>, vector<8x32xbf16>, vector<8x32xf32> -> vector<8x32xf32>
    %497 = vector.extract_strided_slice %462 {offsets = [0, 64], sizes = [8, 32], strides = [1, 1]} : vector<8x256xbf16> to vector<8x32xbf16>
    %498 = vector.extract_strided_slice %463 {offsets = [0, 64], sizes = [8, 32], strides = [1, 1]} : vector<8x256xbf16> to vector<8x32xbf16>
    %cst_133 = arith.constant dense<0.000000e+00> : vector<8x8xf32>
    %499 = tpu.matmul %497, %498, %cst_133 {dimension_numbers = #tpu.dot_dimension_numbers<[1], [1], [0], [0], [0, 0, 1, 0], [], []>} : vector<8x32xbf16>, vector<8x32xbf16>, vector<8x8xf32> -> vector<8x8xf32>
    %cst_134 = arith.constant dense<0xFF800000> : vector<8xf32>
    %500 = vector.multi_reduction <maximumf>, %499, %cst_134 [1] : vector<8x8xf32> to vector<8xf32>
    %501 = vector.shape_cast %500 : vector<8xf32> to vector<8x1xf32>
    %502 = vector.broadcast %501 : vector<8x1xf32> to vector<8x8xf32>
    %503 = arith.subf %499, %502 : vector<8x8xf32>
    %504 = math.exp %503 : vector<8x8xf32>
    %cst_135 = arith.constant dense<0.000000e+00> : vector<8xf32>
    %505 = vector.multi_reduction <add>, %504, %cst_135 [1] : vector<8x8xf32> to vector<8xf32>
    %506 = vector.shape_cast %505 : vector<8xf32> to vector<8x1xf32>
    %507 = tpu.reciprocal %506 {approx = true} : vector<8x1xf32> -> vector<8x1xf32>
    %508 = vector.broadcast %507 : vector<8x1xf32> to vector<8x8xf32>
    %509 = arith.mulf %504, %508 : vector<8x8xf32>
    %510 = arith.truncf %509 : vector<8x8xf32> to vector<8x8xbf16>
    %511 = vector.extract_strided_slice %464 {offsets = [0, 64], sizes = [8, 32], strides = [1, 1]} : vector<8x256xbf16> to vector<8x32xbf16>
    %cst_136 = arith.constant dense<0.000000e+00> : vector<8x32xf32>
    %512 = tpu.matmul %510, %511, %cst_136 {dimension_numbers = #tpu.dot_dimension_numbers<[1], [0], [0], [1], [0, 0, 1, 1], [], []>} : vector<8x8xbf16>, vector<8x32xbf16>, vector<8x32xf32> -> vector<8x32xf32>
    %513 = vector.extract_strided_slice %462 {offsets = [0, 96], sizes = [8, 32], strides = [1, 1]} : vector<8x256xbf16> to vector<8x32xbf16>
    %514 = vector.extract_strided_slice %463 {offsets = [0, 96], sizes = [8, 32], strides = [1, 1]} : vector<8x256xbf16> to vector<8x32xbf16>
    %cst_137 = arith.constant dense<0.000000e+00> : vector<8x8xf32>
    %515 = tpu.matmul %513, %514, %cst_137 {dimension_numbers = #tpu.dot_dimension_numbers<[1], [1], [0], [0], [0, 0, 1, 0], [], []>} : vector<8x32xbf16>, vector<8x32xbf16>, vector<8x8xf32> -> vector<8x8xf32>
    %cst_138 = arith.constant dense<0xFF800000> : vector<8xf32>
    %516 = vector.multi_reduction <maximumf>, %515, %cst_138 [1] : vector<8x8xf32> to vector<8xf32>
    %517 = vector.shape_cast %516 : vector<8xf32> to vector<8x1xf32>
    %518 = vector.broadcast %517 : vector<8x1xf32> to vector<8x8xf32>
    %519 = arith.subf %515, %518 : vector<8x8xf32>
    %520 = math.exp %519 : vector<8x8xf32>
    %cst_139 = arith.constant dense<0.000000e+00> : vector<8xf32>
    %521 = vector.multi_reduction <add>, %520, %cst_139 [1] : vector<8x8xf32> to vector<8xf32>
    %522 = vector.shape_cast %521 : vector<8xf32> to vector<8x1xf32>
    %523 = tpu.reciprocal %522 {approx = true} : vector<8x1xf32> -> vector<8x1xf32>
    %524 = vector.broadcast %523 : vector<8x1xf32> to vector<8x8xf32>
    %525 = arith.mulf %520, %524 : vector<8x8xf32>
    %526 = arith.truncf %525 : vector<8x8xf32> to vector<8x8xbf16>
    %527 = vector.extract_strided_slice %464 {offsets = [0, 96], sizes = [8, 32], strides = [1, 1]} : vector<8x256xbf16> to vector<8x32xbf16>
    %cst_140 = arith.constant dense<0.000000e+00> : vector<8x32xf32>
    %528 = tpu.matmul %526, %527, %cst_140 {dimension_numbers = #tpu.dot_dimension_numbers<[1], [0], [0], [1], [0, 0, 1, 1], [], []>} : vector<8x8xbf16>, vector<8x32xbf16>, vector<8x32xf32> -> vector<8x32xf32>
    %529 = vector.extract_strided_slice %462 {offsets = [0, 128], sizes = [8, 32], strides = [1, 1]} : vector<8x256xbf16> to vector<8x32xbf16>
    %530 = vector.extract_strided_slice %463 {offsets = [0, 128], sizes = [8, 32], strides = [1, 1]} : vector<8x256xbf16> to vector<8x32xbf16>
    %cst_141 = arith.constant dense<0.000000e+00> : vector<8x8xf32>
    %531 = tpu.matmul %529, %530, %cst_141 {dimension_numbers = #tpu.dot_dimension_numbers<[1], [1], [0], [0], [0, 0, 1, 0], [], []>} : vector<8x32xbf16>, vector<8x32xbf16>, vector<8x8xf32> -> vector<8x8xf32>
    %cst_142 = arith.constant dense<0xFF800000> : vector<8xf32>
    %532 = vector.multi_reduction <maximumf>, %531, %cst_142 [1] : vector<8x8xf32> to vector<8xf32>
    %533 = vector.shape_cast %532 : vector<8xf32> to vector<8x1xf32>
    %534 = vector.broadcast %533 : vector<8x1xf32> to vector<8x8xf32>
    %535 = arith.subf %531, %534 : vector<8x8xf32>
    %536 = math.exp %535 : vector<8x8xf32>
    %cst_143 = arith.constant dense<0.000000e+00> : vector<8xf32>
    %537 = vector.multi_reduction <add>, %536, %cst_143 [1] : vector<8x8xf32> to vector<8xf32>
    %538 = vector.shape_cast %537 : vector<8xf32> to vector<8x1xf32>
    %539 = tpu.reciprocal %538 {approx = true} : vector<8x1xf32> -> vector<8x1xf32>
    %540 = vector.broadcast %539 : vector<8x1xf32> to vector<8x8xf32>
    %541 = arith.mulf %536, %540 : vector<8x8xf32>
    %542 = arith.truncf %541 : vector<8x8xf32> to vector<8x8xbf16>
    %543 = vector.extract_strided_slice %464 {offsets = [0, 128], sizes = [8, 32], strides = [1, 1]} : vector<8x256xbf16> to vector<8x32xbf16>
    %cst_144 = arith.constant dense<0.000000e+00> : vector<8x32xf32>
    %544 = tpu.matmul %542, %543, %cst_144 {dimension_numbers = #tpu.dot_dimension_numbers<[1], [0], [0], [1], [0, 0, 1, 1], [], []>} : vector<8x8xbf16>, vector<8x32xbf16>, vector<8x32xf32> -> vector<8x32xf32>
    %545 = vector.extract_strided_slice %462 {offsets = [0, 160], sizes = [8, 32], strides = [1, 1]} : vector<8x256xbf16> to vector<8x32xbf16>
    %546 = vector.extract_strided_slice %463 {offsets = [0, 160], sizes = [8, 32], strides = [1, 1]} : vector<8x256xbf16> to vector<8x32xbf16>
    %cst_145 = arith.constant dense<0.000000e+00> : vector<8x8xf32>
    %547 = tpu.matmul %545, %546, %cst_145 {dimension_numbers = #tpu.dot_dimension_numbers<[1], [1], [0], [0], [0, 0, 1, 0], [], []>} : vector<8x32xbf16>, vector<8x32xbf16>, vector<8x8xf32> -> vector<8x8xf32>
    %cst_146 = arith.constant dense<0xFF800000> : vector<8xf32>
    %548 = vector.multi_reduction <maximumf>, %547, %cst_146 [1] : vector<8x8xf32> to vector<8xf32>
    %549 = vector.shape_cast %548 : vector<8xf32> to vector<8x1xf32>
    %550 = vector.broadcast %549 : vector<8x1xf32> to vector<8x8xf32>
    %551 = arith.subf %547, %550 : vector<8x8xf32>
    %552 = math.exp %551 : vector<8x8xf32>
    %cst_147 = arith.constant dense<0.000000e+00> : vector<8xf32>
    %553 = vector.multi_reduction <add>, %552, %cst_147 [1] : vector<8x8xf32> to vector<8xf32>
    %554 = vector.shape_cast %553 : vector<8xf32> to vector<8x1xf32>
    %555 = tpu.reciprocal %554 {approx = true} : vector<8x1xf32> -> vector<8x1xf32>
    %556 = vector.broadcast %555 : vector<8x1xf32> to vector<8x8xf32>
    %557 = arith.mulf %552, %556 : vector<8x8xf32>
    %558 = arith.truncf %557 : vector<8x8xf32> to vector<8x8xbf16>
    %559 = vector.extract_strided_slice %464 {offsets = [0, 160], sizes = [8, 32], strides = [1, 1]} : vector<8x256xbf16> to vector<8x32xbf16>
    %cst_148 = arith.constant dense<0.000000e+00> : vector<8x32xf32>
    %560 = tpu.matmul %558, %559, %cst_148 {dimension_numbers = #tpu.dot_dimension_numbers<[1], [0], [0], [1], [0, 0, 1, 1], [], []>} : vector<8x8xbf16>, vector<8x32xbf16>, vector<8x32xf32> -> vector<8x32xf32>
    %561 = vector.extract_strided_slice %462 {offsets = [0, 192], sizes = [8, 32], strides = [1, 1]} : vector<8x256xbf16> to vector<8x32xbf16>
    %562 = vector.extract_strided_slice %463 {offsets = [0, 192], sizes = [8, 32], strides = [1, 1]} : vector<8x256xbf16> to vector<8x32xbf16>
    %cst_149 = arith.constant dense<0.000000e+00> : vector<8x8xf32>
    %563 = tpu.matmul %561, %562, %cst_149 {dimension_numbers = #tpu.dot_dimension_numbers<[1], [1], [0], [0], [0, 0, 1, 0], [], []>} : vector<8x32xbf16>, vector<8x32xbf16>, vector<8x8xf32> -> vector<8x8xf32>
    %cst_150 = arith.constant dense<0xFF800000> : vector<8xf32>
    %564 = vector.multi_reduction <maximumf>, %563, %cst_150 [1] : vector<8x8xf32> to vector<8xf32>
    %565 = vector.shape_cast %564 : vector<8xf32> to vector<8x1xf32>
    %566 = vector.broadcast %565 : vector<8x1xf32> to vector<8x8xf32>
    %567 = arith.subf %563, %566 : vector<8x8xf32>
    %568 = math.exp %567 : vector<8x8xf32>
    %cst_151 = arith.constant dense<0.000000e+00> : vector<8xf32>
    %569 = vector.multi_reduction <add>, %568, %cst_151 [1] : vector<8x8xf32> to vector<8xf32>
    %570 = vector.shape_cast %569 : vector<8xf32> to vector<8x1xf32>
    %571 = tpu.reciprocal %570 {approx = true} : vector<8x1xf32> -> vector<8x1xf32>
    %572 = vector.broadcast %571 : vector<8x1xf32> to vector<8x8xf32>
    %573 = arith.mulf %568, %572 : vector<8x8xf32>
    %574 = arith.truncf %573 : vector<8x8xf32> to vector<8x8xbf16>
    %575 = vector.extract_strided_slice %464 {offsets = [0, 192], sizes = [8, 32], strides = [1, 1]} : vector<8x256xbf16> to vector<8x32xbf16>
    %cst_152 = arith.constant dense<0.000000e+00> : vector<8x32xf32>
    %576 = tpu.matmul %574, %575, %cst_152 {dimension_numbers = #tpu.dot_dimension_numbers<[1], [0], [0], [1], [0, 0, 1, 1], [], []>} : vector<8x8xbf16>, vector<8x32xbf16>, vector<8x32xf32> -> vector<8x32xf32>
    %577 = vector.extract_strided_slice %462 {offsets = [0, 224], sizes = [8, 32], strides = [1, 1]} : vector<8x256xbf16> to vector<8x32xbf16>
    %578 = vector.extract_strided_slice %463 {offsets = [0, 224], sizes = [8, 32], strides = [1, 1]} : vector<8x256xbf16> to vector<8x32xbf16>
    %cst_153 = arith.constant dense<0.000000e+00> : vector<8x8xf32>
    %579 = tpu.matmul %577, %578, %cst_153 {dimension_numbers = #tpu.dot_dimension_numbers<[1], [1], [0], [0], [0, 0, 1, 0], [], []>} : vector<8x32xbf16>, vector<8x32xbf16>, vector<8x8xf32> -> vector<8x8xf32>
    %cst_154 = arith.constant dense<0xFF800000> : vector<8xf32>
    %580 = vector.multi_reduction <maximumf>, %579, %cst_154 [1] : vector<8x8xf32> to vector<8xf32>
    %581 = vector.shape_cast %580 : vector<8xf32> to vector<8x1xf32>
    %582 = vector.broadcast %581 : vector<8x1xf32> to vector<8x8xf32>
    %583 = arith.subf %579, %582 : vector<8x8xf32>
    %584 = math.exp %583 : vector<8x8xf32>
    %cst_155 = arith.constant dense<0.000000e+00> : vector<8xf32>
    %585 = vector.multi_reduction <add>, %584, %cst_155 [1] : vector<8x8xf32> to vector<8xf32>
    %586 = vector.shape_cast %585 : vector<8xf32> to vector<8x1xf32>
    %587 = tpu.reciprocal %586 {approx = true} : vector<8x1xf32> -> vector<8x1xf32>
    %588 = vector.broadcast %587 : vector<8x1xf32> to vector<8x8xf32>
    %589 = arith.mulf %584, %588 : vector<8x8xf32>
    %590 = arith.truncf %589 : vector<8x8xf32> to vector<8x8xbf16>
    %591 = vector.extract_strided_slice %464 {offsets = [0, 224], sizes = [8, 32], strides = [1, 1]} : vector<8x256xbf16> to vector<8x32xbf16>
    %cst_156 = arith.constant dense<0.000000e+00> : vector<8x32xf32>
    %592 = tpu.matmul %590, %591, %cst_156 {dimension_numbers = #tpu.dot_dimension_numbers<[1], [0], [0], [1], [0, 0, 1, 1], [], []>} : vector<8x8xbf16>, vector<8x32xbf16>, vector<8x32xf32> -> vector<8x32xf32>
    %593 = tpu.concatenate %480, %496, %512, %528, %544, %560, %576, %592 in 1 : vector<8x32xf32>, vector<8x32xf32>, vector<8x32xf32>, vector<8x32xf32>, vector<8x32xf32>, vector<8x32xf32>, vector<8x32xf32>, vector<8x32xf32> -> vector<8x256xf32>
    %594 = tpu.concatenate %461, %593 in 0 : vector<8x256xf32>, vector<8x256xf32> -> vector<16x256xf32>
    %595 = arith.truncf %594 : vector<16x256xf32> to vector<16x256xbf16>
    %c0_157 = arith.constant 0 : index
    %c0_158 = arith.constant 0 : index
    %596 = vector.load %arg6[%c0_157, %c0_158] : memref<256x256xbf16, #tpu.memory_space<vmem>>, vector<256x256xbf16>
    %cst_159 = arith.constant dense<0.000000e+00> : vector<16x256xf32>
    %597 = tpu.matmul %595, %596, %cst_159 {dimension_numbers = #tpu.dot_dimension_numbers<[1], [0], [0], [1], [0, 0, 1, 1], [], []>} : vector<16x256xbf16>, vector<256x256xbf16>, vector<16x256xf32> -> vector<16x256xf32>
    %598 = vector.broadcast %326 : vector<1x256xf32> to vector<16x256xf32>
    %599 = arith.addf %597, %598 : vector<16x256xf32>
    %600 = arith.addf %308, %599 : vector<16x256xf32>
    %c0_160 = arith.constant 0 : index
    %c3328 = arith.constant 3328 : index
    %601 = vector.load %arg9[%c0_160, %c3328] : memref<1x4352xf32, #tpu.memory_space<vmem>>, vector<1x256xf32>
    %c0_161 = arith.constant 0 : index
    %c3584 = arith.constant 3584 : index
    %602 = vector.load %arg9[%c0_161, %c3584] : memref<1x4352xf32, #tpu.memory_space<vmem>>, vector<1x256xf32>
    %cst_162 = arith.constant dense<0.000000e+00> : vector<16xf32>
    %603 = vector.multi_reduction <add>, %600, %cst_162 [1] : vector<16x256xf32> to vector<16xf32>
    %604 = vector.shape_cast %603 : vector<16xf32> to vector<16x1xf32>
    %cst_163 = arith.constant 2.560000e+02 : f32
    %605 = vector.broadcast %cst_163 : f32 to vector<16x1xf32>
    %606 = arith.divf %604, %605 : vector<16x1xf32>
    %607 = vector.broadcast %606 : vector<16x1xf32> to vector<16x256xf32>
    %608 = arith.subf %600, %607 : vector<16x256xf32>
    %609 = arith.mulf %608, %608 : vector<16x256xf32>
    %cst_164 = arith.constant dense<0.000000e+00> : vector<16xf32>
    %610 = vector.multi_reduction <add>, %609, %cst_164 [1] : vector<16x256xf32> to vector<16xf32>
    %611 = vector.shape_cast %610 : vector<16xf32> to vector<16x1xf32>
    %cst_165 = arith.constant 2.560000e+02 : f32
    %612 = vector.broadcast %cst_165 : f32 to vector<16x1xf32>
    %613 = arith.divf %611, %612 : vector<16x1xf32>
    %cst_166 = arith.constant 9.99999974E-6 : f32
    %614 = vector.broadcast %cst_166 : f32 to vector<16x1xf32>
    %615 = arith.addf %613, %614 : vector<16x1xf32>
    %616 = math.rsqrt %615 : vector<16x1xf32>
    %617 = vector.broadcast %616 : vector<16x1xf32> to vector<16x256xf32>
    %618 = arith.mulf %608, %617 : vector<16x256xf32>
    %619 = vector.broadcast %601 : vector<1x256xf32> to vector<16x256xf32>
    %620 = arith.mulf %618, %619 : vector<16x256xf32>
    %621 = vector.broadcast %602 : vector<1x256xf32> to vector<16x256xf32>
    %622 = arith.addf %620, %621 : vector<16x256xf32>
    %623 = arith.truncf %622 : vector<16x256xf32> to vector<16x256xbf16>
    %c0_167 = arith.constant 0 : index
    %c0_168 = arith.constant 0 : index
    %624 = vector.load %arg7[%c0_167, %c0_168] : memref<256x512xbf16, #tpu.memory_space<vmem>>, vector<256x512xbf16>
    %cst_169 = arith.constant dense<0.000000e+00> : vector<16x512xf32>
    %625 = tpu.matmul %623, %624, %cst_169 {dimension_numbers = #tpu.dot_dimension_numbers<[1], [0], [0], [1], [0, 0, 1, 1], [], []>} : vector<16x256xbf16>, vector<256x512xbf16>, vector<16x512xf32> -> vector<16x512xf32>
    %c0_170 = arith.constant 0 : index
    %c2048 = arith.constant 2048 : index
    %626 = vector.load %arg9[%c0_170, %c2048] : memref<1x4352xf32, #tpu.memory_space<vmem>>, vector<1x512xf32>
    %627 = vector.broadcast %626 : vector<1x512xf32> to vector<16x512xf32>
    %628 = arith.addf %625, %627 : vector<16x512xf32>
    %cst_171 = arith.constant 0.000000e+00 : f32
    %629 = vector.broadcast %cst_171 : f32 to vector<16x512xf32>
    %630 = arith.maximumf %628, %629 : vector<16x512xf32>
    %631 = arith.truncf %630 : vector<16x512xf32> to vector<16x512xbf16>
    %c0_172 = arith.constant 0 : index
    %c0_173 = arith.constant 0 : index
    %632 = vector.load %arg8[%c0_172, %c0_173] : memref<512x256xbf16, #tpu.memory_space<vmem>>, vector<512x256xbf16>
    %cst_174 = arith.constant dense<0.000000e+00> : vector<16x256xf32>
    %633 = tpu.matmul %631, %632, %cst_174 {dimension_numbers = #tpu.dot_dimension_numbers<[1], [0], [0], [1], [0, 0, 1, 1], [], []>} : vector<16x512xbf16>, vector<512x256xbf16>, vector<16x256xf32> -> vector<16x256xf32>
    %c0_175 = arith.constant 0 : index
    %c2560 = arith.constant 2560 : index
    %634 = vector.load %arg9[%c0_175, %c2560] : memref<1x4352xf32, #tpu.memory_space<vmem>>, vector<1x256xf32>
    %635 = vector.broadcast %634 : vector<1x256xf32> to vector<16x256xf32>
    %636 = arith.addf %633, %635 : vector<16x256xf32>
    %637 = arith.addf %622, %636 : vector<16x256xf32>
    %c0_176 = arith.constant 0 : index
    %c3840 = arith.constant 3840 : index
    %638 = vector.load %arg9[%c0_176, %c3840] : memref<1x4352xf32, #tpu.memory_space<vmem>>, vector<1x256xf32>
    %c0_177 = arith.constant 0 : index
    %c4096 = arith.constant 4096 : index
    %639 = vector.load %arg9[%c0_177, %c4096] : memref<1x4352xf32, #tpu.memory_space<vmem>>, vector<1x256xf32>
    %cst_178 = arith.constant dense<0.000000e+00> : vector<16xf32>
    %640 = vector.multi_reduction <add>, %637, %cst_178 [1] : vector<16x256xf32> to vector<16xf32>
    %641 = vector.shape_cast %640 : vector<16xf32> to vector<16x1xf32>
    %cst_179 = arith.constant 2.560000e+02 : f32
    %642 = vector.broadcast %cst_179 : f32 to vector<16x1xf32>
    %643 = arith.divf %641, %642 : vector<16x1xf32>
    %644 = vector.broadcast %643 : vector<16x1xf32> to vector<16x256xf32>
    %645 = arith.subf %637, %644 : vector<16x256xf32>
    %646 = arith.mulf %645, %645 : vector<16x256xf32>
    %cst_180 = arith.constant dense<0.000000e+00> : vector<16xf32>
    %647 = vector.multi_reduction <add>, %646, %cst_180 [1] : vector<16x256xf32> to vector<16xf32>
    %648 = vector.shape_cast %647 : vector<16xf32> to vector<16x1xf32>
    %cst_181 = arith.constant 2.560000e+02 : f32
    %649 = vector.broadcast %cst_181 : f32 to vector<16x1xf32>
    %650 = arith.divf %648, %649 : vector<16x1xf32>
    %cst_182 = arith.constant 9.99999974E-6 : f32
    %651 = vector.broadcast %cst_182 : f32 to vector<16x1xf32>
    %652 = arith.addf %650, %651 : vector<16x1xf32>
    %653 = math.rsqrt %652 : vector<16x1xf32>
    %654 = vector.broadcast %653 : vector<16x1xf32> to vector<16x256xf32>
    %655 = arith.mulf %645, %654 : vector<16x256xf32>
    %656 = vector.broadcast %638 : vector<1x256xf32> to vector<16x256xf32>
    %657 = arith.mulf %655, %656 : vector<16x256xf32>
    %658 = vector.broadcast %639 : vector<1x256xf32> to vector<16x256xf32>
    %659 = arith.addf %657, %658 : vector<16x256xf32>
    %c0_183 = arith.constant 0 : index
    %c0_184 = arith.constant 0 : index
    %660 = vector.load %arg10[%c0_183, %c0_184] : memref<16x256xf32, #tpu.memory_space<vmem>>, vector<16x256xf32>
    tpu.vector_store %arg10[%c0_183, %c0_184], %659 {strides = array<i32>} : memref<16x256xf32, #tpu.memory_space<vmem>>, vector<16x256xf32>,
    return
  }
}

</mosaic_0001>

<llo_original>
// kernel: decoder_forward.1
$region0: #{decoder_forward.1}
  #allocation0 [shape = 'u32[]', space=smem, size = 0x4, offset = 0x4, fixed_abs, tag = 'smem constant byte address 0x4 - core index']
  #allocation1 [shape = 'u32[144,128]{1,0:T(1,128)}', space=vmem, size = 0x12000, scoped, tag = 'internal scratch']
  %s0 = inlined_call_operand.vmem [shape: f32[16,256], index: 0, kind: input, shape index: {}]
  %s1 = inlined_call_operand.vmem [shape: f32[16,256], index: 1, kind: input, shape index: {}]
  %s2 = inlined_call_operand.hbm [shape: bf16[256,768], index: 2, kind: input, shape index: {}]
  %s3 = inlined_call_operand.hbm [shape: bf16[256,256], index: 3, kind: input, shape index: {}]
  %s4 = inlined_call_operand.hbm [shape: bf16[256,256], index: 4, kind: input, shape index: {}]
  %s5 = inlined_call_operand.hbm [shape: bf16[256,512], index: 5, kind: input, shape index: {}]
  %s6 = inlined_call_operand.hbm [shape: bf16[256,256], index: 6, kind: input, shape index: {}]
  %s7 = inlined_call_operand.hbm [shape: bf16[256,512], index: 7, kind: input, shape index: {}]
  %s8 = inlined_call_operand.hbm [shape: bf16[512,256], index: 8, kind: input, shape index: {}]
  %s9 = inlined_call_operand.vmem [shape: f32[1,4352], index: 9, kind: input, shape index: {}]
  %s10 = inlined_call_operand.hbm [shape: f32[16,256], index: 10, kind: output, shape index: {}]
  %s11 = sld [smem:[#allocation0]]
  $region78: #{decoder_forward.1} parent=0
    _
  %s13 = ssub.s32 1, %s11
  %s14 = scalar_select 0, %s13, %s11
  $region1: #{decoder_forward.1} parent=0
    #allocation2 [shape = 'u8[393216]{0}', space=vmem, size = 0x60000, scoped, tag = 'input window, operand 2, single buffered']
    #allocation3 [shape = 's32[1]{0}', space=sflag, size = 0x4, scoped, tag = 'scoped memory for decoder_forward.1']
    #allocation4 [shape = 's32[1]{0}', space=sflag, size = 0x4, scoped, tag = 'scoped memory for decoder_forward.1']
    #allocation5 [shape = 'u8[131072]{0}', space=vmem, size = 0x20000, scoped, tag = 'input window, operand 3, single buffered']
    #allocation6 [shape = 's32[1]{0}', space=sflag, size = 0x4, scoped, tag = 'scoped memory for decoder_forward.1']
    #allocation7 [shape = 'u8[131072]{0}', space=vmem, size = 0x20000, scoped, tag = 'input window, operand 4, single buffered']
    #allocation8 [shape = 'u8[262144]{0}', space=vmem, size = 0x40000, scoped, tag = 'input window, operand 5, single buffered']
    #allocation9 [shape = 's32[1]{0}', space=sflag, size = 0x4, scoped, tag = 'scoped memory for decoder_forward.1']
    #allocation10 [shape = 'u8[131072]{0}', space=vmem, size = 0x20000, scoped, tag = 'input window, operand 6, single buffered']
    #allocation11 [shape = 'u8[262144]{0}', space=vmem, size = 0x40000, scoped, tag = 'input window, operand 7, single buffered']
    #allocation12 [shape = 's32[1]{0}', space=sflag, size = 0x4, scoped, tag = 'scoped memory for decoder_forward.1']
    #allocation13 [shape = 'u8[262144]{0}', space=vmem, size = 0x40000, scoped, tag = 'input window, operand 8, single buffered']
    #allocation14 [shape = 'u8[16384]{0}', space=vmem, size = 0x4000, scoped, tag = 'output window, operand 0, single buffered']
    %15 = vsyncpa [#allocation3], 0
    %16 = vsyncpa [#allocation6], 0
    %17 = vsyncpa [#allocation9], 0
    %18 = vsyncpa [#allocation12], 0
    %19 = vsyncpa [#allocation4], 0
    // Predicated region
    $region2: #{decoder_forward.1} parent=1 // pred_check
      _
    $region3: #{decoder_forward.1} parent=1 // pred_check_branch
      %21 = sbr.rel (0) target = $region5
    $region4: #{decoder_forward.1} parent=1 // pred_region
      _
    $region5: #{decoder_forward.1} parent=1 // pred_fallthru
      _
    // Predicated region
    $region6: #{decoder_forward.1} parent=1 // pred_check
      _
    $region7: #{decoder_forward.1} parent=1 // pred_check_branch
      %23 = sbr.rel (0) target = $region9
    $region8: #{decoder_forward.1} parent=1 // pred_region
      _
    $region9: #{decoder_forward.1} parent=1 // pred_fallthru
      _
    // Predicated region
    $region10: #{decoder_forward.1} parent=1 // pred_check
      _
    $region11: #{decoder_forward.1} parent=1 // pred_check_branch
      %25 = sbr.rel (0) target = $region13
    $region12: #{decoder_forward.1} parent=1 // pred_region
      %s27 = ssub.s32 12288, 12288
      %28 = vsyncadd [#allocation3], %s27
      %s29 = sshll.u32 [#allocation2], 4
      %s30 = int_to_ptr.vmem [resolvable:$true] %s29
      %35 = dma.hbm_to_vmem [thread:$0]  %s2, 12288, %s30, [#allocation3], 384, 384, 24
    $region13: #{decoder_forward.1} parent=1 // pred_fallthru
      _
    // Predicated region
    $region14: #{decoder_forward.1} parent=1 // pred_check
      _
    $region15: #{decoder_forward.1} parent=1 // pred_check_branch
      %37 = sbr.rel (0) target = $region17
    $region16: #{decoder_forward.1} parent=1 // pred_region
      %s39 = ssub.s32 4096, 4096
      %40 = vsyncadd [#allocation6], %s39
      %s41 = sshll.u32 [#allocation5], 4
      %s42 = int_to_ptr.vmem [resolvable:$true] %s41
      %47 = dma.hbm_to_vmem [thread:$0]  %s3, 4096, %s42, [#allocation6], 128, 128, 8
    $region17: #{decoder_forward.1} parent=1 // pred_fallthru
      _
    // Predicated region
    $region18: #{decoder_forward.1} parent=1 // pred_check
      _
    $region19: #{decoder_forward.1} parent=1 // pred_check_branch
      %49 = sbr.rel (0) target = $region21
    $region20: #{decoder_forward.1} parent=1 // pred_region
      %s51 = ssub.s32 4096, 4096
      %52 = vsyncadd [#allocation6], %s51
      %s53 = sshll.u32 [#allocation7], 4
      %s54 = int_to_ptr.vmem [resolvable:$true] %s53
      %59 = dma.hbm_to_vmem [thread:$0]  %s4, 4096, %s54, [#allocation6], 128, 128, 8
    $region21: #{decoder_forward.1} parent=1 // pred_fallthru
      _
    // Predicated region
    $region22: #{decoder_forward.1} parent=1 // pred_check
      _
    $region23: #{decoder_forward.1} parent=1 // pred_check_branch
      %61 = sbr.rel (0) target = $region25
    $region24: #{decoder_forward.1} parent=1 // pred_region
      %s63 = ssub.s32 8192, 8192
      %64 = vsyncadd [#allocation9], %s63
      %s65 = sshll.u32 [#allocation8], 4
      %s66 = int_to_ptr.vmem [resolvable:$true] %s65
      %71 = dma.hbm_to_vmem [thread:$0]  %s5, 8192, %s66, [#allocation9], 256, 256, 16
    $region25: #{decoder_forward.1} parent=1 // pred_fallthru
      _
    // Predicated region
    $region26: #{decoder_forward.1} parent=1 // pred_check
      _
    $region27: #{decoder_forward.1} parent=1 // pred_check_branch
      %73 = sbr.rel (0) target = $region29
    $region28: #{decoder_forward.1} parent=1 // pred_region
      %s75 = ssub.s32 4096, 4096
      %76 = vsyncadd [#allocation9], %s75
      %s77 = sshll.u32 [#allocation10], 4
      %s78 = int_to_ptr.vmem [resolvable:$true] %s77
      %83 = dma.hbm_to_vmem [thread:$0]  %s6, 4096, %s78, [#allocation9], 128, 128, 8
    $region29: #{decoder_forward.1} parent=1 // pred_fallthru
      _
    // Predicated region
    $region30: #{decoder_forward.1} parent=1 // pred_check
      _
    $region31: #{decoder_forward.1} parent=1 // pred_check_branch
      %85 = sbr.rel (0) target = $region33
    $region32: #{decoder_forward.1} parent=1 // pred_region
      %s87 = ssub.s32 8192, 8192
      %88 = vsyncadd [#allocation12], %s87
      %s89 = sshll.u32 [#allocation11], 4
      %s90 = int_to_ptr.vmem [resolvable:$true] %s89
      %95 = dma.hbm_to_vmem [thread:$0]  %s7, 8192, %s90, [#allocation12], 256, 256, 16
    $region33: #{decoder_forward.1} parent=1 // pred_fallthru
      _
    // Predicated region
    $region34: #{decoder_forward.1} parent=1 // pred_check
      _
    $region35: #{decoder_forward.1} parent=1 // pred_check_branch
      %97 = sbr.rel (0) target = $region37
    $region36: #{decoder_forward.1} parent=1 // pred_region
      %s99 = ssub.s32 8192, 8192
      %100 = vsyncadd [#allocation12], %s99
      %s101 = sshll.u32 [#allocation13], 4
      %s102 = int_to_ptr.vmem [resolvable:$true] %s101
      %107 = dma.hbm_to_vmem [thread:$0]  %s8, 8192, %s102, [#allocation12], 128, 128, 8
    $region37: #{decoder_forward.1} parent=1 // pred_fallthru
      _
    // Predicated region
    $region38: #{decoder_forward.1} parent=1 // pred_check
      _
    $region39: #{decoder_forward.1} parent=1 // pred_check_branch
      %109 = sbr.rel (0) target = $region41
    $region40: #{decoder_forward.1} parent=1 // pred_region
      _
    $region41: #{decoder_forward.1} parent=1 // pred_fallthru
      _
    // Predicated region
    $region42: #{decoder_forward.1} parent=1 // pred_check
      _
    $region43: #{decoder_forward.1} parent=1 // pred_check_branch
      %111 = sbr.rel (0) target = $region45
    $region44: #{decoder_forward.1} parent=1 // pred_region
      %112 = dma.done [#allocation3], 12288
    $region45: #{decoder_forward.1} parent=1 // pred_fallthru
      _
    // Predicated region
    $region46: #{decoder_forward.1} parent=1 // pred_check
      _
    $region47: #{decoder_forward.1} parent=1 // pred_check_branch
      %114 = sbr.rel (0) target = $region49
    $region48: #{decoder_forward.1} parent=1 // pred_region
      %115 = dma.done [#allocation6], 4096
    $region49: #{decoder_forward.1} parent=1 // pred_fallthru
      _
    // Predicated region
    $region50: #{decoder_forward.1} parent=1 // pred_check
      _
    $region51: #{decoder_forward.1} parent=1 // pred_check_branch
      %117 = sbr.rel (0) target = $region53
    $region52: #{decoder_forward.1} parent=1 // pred_region
      %118 = dma.done [#allocation6], 4096
    $region53: #{decoder_forward.1} parent=1 // pred_fallthru
      _
    // Predicated region
    $region54: #{decoder_forward.1} parent=1 // pred_check
      _
    $region55: #{decoder_forward.1} parent=1 // pred_check_branch
      %120 = sbr.rel (0) target = $region57
    $region56: #{decoder_forward.1} parent=1 // pred_region
      %121 = dma.done [#allocation9], 8192
    $region57: #{decoder_forward.1} parent=1 // pred_fallthru
      _
    // Predicated region
    $region58: #{decoder_forward.1} parent=1 // pred_check
      _
    $region59: #{decoder_forward.1} parent=1 // pred_check_branch
      %123 = sbr.rel (0) target = $region61
    $region60: #{decoder_forward.1} parent=1 // pred_region
      %124 = dma.done [#allocation9], 4096
    $region61: #{decoder_forward.1} parent=1 // pred_fallthru
      _
    // Predicated region
    $region62: #{decoder_forward.1} parent=1 // pred_check
      _
    $region63: #{decoder_forward.1} parent=1 // pred_check_branch
      %126 = sbr.rel (0) target = $region65
    $region64: #{decoder_forward.1} parent=1 // pred_region
      %127 = dma.done [#allocation12], 8192
    $region65: #{decoder_forward.1} parent=1 // pred_fallthru
      _
    // Predicated region
    $region66: #{decoder_forward.1} parent=1 // pred_check
      _
    $region67: #{decoder_forward.1} parent=1 // pred_check_branch
      %129 = sbr.rel (0) target = $region69
    $region68: #{decoder_forward.1} parent=1 // pred_region
      %130 = dma.done [#allocation12], 8192
    $region69: #{decoder_forward.1} parent=1 // pred_fallthru
      _
    %v132 = vld [vmem:[%s0] sm:$0xff]
    %v133 = vld [vmem:[%s0 + $0x8] sm:$0xff]
    %v134 = vld [vmem:[%s0 + $0x10] sm:$0xff]
    %v135 = vld [vmem:[%s0 + $0x18] sm:$0xff]
    %v136 = vpack.c.bf16 %v134, %v132
    %v137 = vpack.c.bf16 %v135, %v133
    %v138 = vld [vmem:[#allocation2] sm:$0xff]
    %v139 = vld [vmem:[#allocation2 + $0x8] sm:$0xff]
    %v140 = vld [vmem:[#allocation2 + $0x10] sm:$0xff]
    %v141 = vld [vmem:[#allocation2 + $0x18] sm:$0xff]
    %v142 = vld [vmem:[#allocation2 + $0x20] sm:$0xff]
    %v143 = vld [vmem:[#allocation2 + $0x28] sm:$0xff]
    %v144 = vld [vmem:[#allocation2 + $0x30] sm:$0xff]
    %v145 = vld [vmem:[#allocation2 + $0x38] sm:$0xff]
    %v146 = vld [vmem:[#allocation2 + $0x40] sm:$0xff]
    %v147 = vld [vmem:[#allocation2 + $0x48] sm:$0xff]
    %v148 = vld [vmem:[#allocation2 + $0x50] sm:$0xff]
    %v149 = vld [vmem:[#allocation2 + $0x58] sm:$0xff]
    %v150 = vld [vmem:[#allocation2 + $0x60] sm:$0xff]
    %v151 = vld [vmem:[#allocation2 + $0x68] sm:$0xff]
    %v152 = vld [vmem:[#allocation2 + $0x70] sm:$0xff]
    %v153 = vld [vmem:[#allocation2 + $0x78] sm:$0xff]
    %v154 = vld [vmem:[#allocation2 + $0x80] sm:$0xff]
    %v155 = vld [vmem:[#allocation2 + $0x88] sm:$0xff]
    %v156 = vld [vmem:[#allocation2 + $0x90] sm:$0xff]
    %v157 = vld [vmem:[#allocation2 + $0x98] sm:$0xff]
    %v158 = vld [vmem:[#allocation2 + $0xa0] sm:$0xff]
    %v159 = vld [vmem:[#allocation2 + $0xa8] sm:$0xff]
    %v160 = vld [vmem:[#allocation2 + $0xb0] sm:$0xff]
    %v161 = vld [vmem:[#allocation2 + $0xb8] sm:$0xff]
    %v162 = vld [vmem:[#allocation2 + $0xc0] sm:$0xff]
    %v163 = vld [vmem:[#allocation2 + $0xc8] sm:$0xff]
    %v164 = vld [vmem:[#allocation2 + $0xd0] sm:$0xff]
    %v165 = vld [vmem:[#allocation2 + $0xd8] sm:$0xff]
    %v166 = vld [vmem:[#allocation2 + $0xe0] sm:$0xff]
    %v167 = vld [vmem:[#allocation2 + $0xe8] sm:$0xff]
    %v168 = vld [vmem:[#allocation2 + $0xf0] sm:$0xff]
    %v169 = vld [vmem:[#allocation2 + $0xf8] sm:$0xff]
    %v170 = vld [vmem:[#allocation2 + $0x100] sm:$0xff]
    %v171 = vld [vmem:[#allocation2 + $0x108] sm:$0xff]
    %v172 = vld [vmem:[#allocation2 + $0x110] sm:$0xff]
    %v173 = vld [vmem:[#allocation2 + $0x118] sm:$0xff]
    %v174 = vld [vmem:[#allocation2 + $0x120] sm:$0xff]
    %v175 = vld [vmem:[#allocation2 + $0x128] sm:$0xff]
    %v176 = vld [vmem:[#allocation2 + $0x130] sm:$0xff]
    %v177 = vld [vmem:[#allocation2 + $0x138] sm:$0xff]
    %v178 = vld [vmem:[#allocation2 + $0x140] sm:$0xff]
    %v179 = vld [vmem:[#allocation2 + $0x148] sm:$0xff]
    %v180 = vld [vmem:[#allocation2 + $0x150] sm:$0xff]
    %v181 = vld [vmem:[#allocation2 + $0x158] sm:$0xff]
    %v182 = vld [vmem:[#allocation2 + $0x160] sm:$0xff]
    %v183 = vld [vmem:[#allocation2 + $0x168] sm:$0xff]
    %v184 = vld [vmem:[#allocation2 + $0x170] sm:$0xff]
    %v185 = vld [vmem:[#allocation2 + $0x178] sm:$0xff]
    %v186 = vld [vmem:[#allocation2 + $0x180] sm:$0xff]
    %v187 = vld [vmem:[#allocation2 + $0x188] sm:$0xff]
    %v188 = vld [vmem:[#allocation2 + $0x190] sm:$0xff]
    %v189 = vld [vmem:[#allocation2 + $0x198] sm:$0xff]
    %v190 = vld [vmem:[#allocation2 + $0x1a0] sm:$0xff]
    %v191 = vld [vmem:[#allocation2 + $0x1a8] sm:$0xff]
    %v192 = vld [vmem:[#allocation2 + $0x1b0] sm:$0xff]
    %v193 = vld [vmem:[#allocation2 + $0x1b8] sm:$0xff]
    %v194 = vld [vmem:[#allocation2 + $0x1c0] sm:$0xff]
    %v195 = vld [vmem:[#allocation2 + $0x1c8] sm:$0xff]
    %v196 = vld [vmem:[#allocation2 + $0x1d0] sm:$0xff]
    %v197 = vld [vmem:[#allocation2 + $0x1d8] sm:$0xff]
    %v198 = vld [vmem:[#allocation2 + $0x1e0] sm:$0xff]
    %v199 = vld [vmem:[#allocation2 + $0x1e8] sm:$0xff]
    %v200 = vld [vmem:[#allocation2 + $0x1f0] sm:$0xff]
    %v201 = vld [vmem:[#allocation2 + $0x1f8] sm:$0xff]
    %v202 = vld [vmem:[#allocation2 + $0x200] sm:$0xff]
    %v203 = vld [vmem:[#allocation2 + $0x208] sm:$0xff]
    %v204 = vld [vmem:[#allocation2 + $0x210] sm:$0xff]
    %v205 = vld [vmem:[#allocation2 + $0x218] sm:$0xff]
    %v206 = vld [vmem:[#allocation2 + $0x220] sm:$0xff]
    %v207 = vld [vmem:[#allocation2 + $0x228] sm:$0xff]
    %v208 = vld [vmem:[#allocation2 + $0x230] sm:$0xff]
    %v209 = vld [vmem:[#allocation2 + $0x238] sm:$0xff]
    %v210 = vld [vmem:[#allocation2 + $0x240] sm:$0xff]
    %v211 = vld [vmem:[#allocation2 + $0x248] sm:$0xff]
    %v212 = vld [vmem:[#allocation2 + $0x250] sm:$0xff]
    %v213 = vld [vmem:[#allocation2 + $0x258] sm:$0xff]
    %v214 = vld [vmem:[#allocation2 + $0x260] sm:$0xff]
    %v215 = vld [vmem:[#allocation2 + $0x268] sm:$0xff]
    %v216 = vld [vmem:[#allocation2 + $0x270] sm:$0xff]
    %v217 = vld [vmem:[#allocation2 + $0x278] sm:$0xff]
    %v218 = vld [vmem:[#allocation2 + $0x280] sm:$0xff]
    %v219 = vld [vmem:[#allocation2 + $0x288] sm:$0xff]
    %v220 = vld [vmem:[#allocation2 + $0x290] sm:$0xff]
    %v221 = vld [vmem:[#allocation2 + $0x298] sm:$0xff]
    %v222 = vld [vmem:[#allocation2 + $0x2a0] sm:$0xff]
    %v223 = vld [vmem:[#allocation2 + $0x2a8] sm:$0xff]
    %v224 = vld [vmem:[#allocation2 + $0x2b0] sm:$0xff]
    %v225 = vld [vmem:[#allocation2 + $0x2b8] sm:$0xff]
    %v226 = vld [vmem:[#allocation2 + $0x2c0] sm:$0xff]
    %v227 = vld [vmem:[#allocation2 + $0x2c8] sm:$0xff]
    %v228 = vld [vmem:[#allocation2 + $0x2d0] sm:$0xff]
    %v229 = vld [vmem:[#allocation2 + $0x2d8] sm:$0xff]
    %v230 = vld [vmem:[#allocation2 + $0x2e0] sm:$0xff]
    %v231 = vld [vmem:[#allocation2 + $0x2e8] sm:$0xff]
    %v232 = vld [vmem:[#allocation2 + $0x2f0] sm:$0xff]
    %v233 = vld [vmem:[#allocation2 + $0x2f8] sm:$0xff]
    %v234 = vld [vmem:[%s9] sm:$0x3f]
    %v236 = vlaneseq
    %v237 = vshrl.u32 %v236, 7
    %v238 = vsub.s32 0, %v237
    %v239 = vrot.slane %v234, %v238
    %v240 = vlaneseq
    %v241 = vshrl.u32 %v240, 7
    %v242 = vsub.s32 1, %v241
    %v243 = vrot.slane %v234, %v242
    %v244 = vlaneseq
    %v245 = vshrl.u32 %v244, 7
    %v246 = vsub.s32 2, %v245
    %v247 = vrot.slane %v234, %v246
    %v248 = vlaneseq
    %v249 = vshrl.u32 %v248, 7
    %v250 = vsub.s32 3, %v249
    %v251 = vrot.slane %v234, %v250
    %v252 = vlaneseq
    %v253 = vshrl.u32 %v252, 7
    %v254 = vsub.s32 4, %v253
    %v255 = vrot.slane %v234, %v254
    %v256 = vlaneseq
    %v257 = vshrl.u32 %v256, 7
    %v258 = vsub.s32 5, %v257
    %v259 = vrot.slane %v234, %v258
    %v362 = vunpack.c.l.b16 %v138
    %v363 = vunpack.c.h.b16 %v138
    %v364 = vunpack.c.l.b16 %v139
    %v365 = vunpack.c.h.b16 %v139
    %v366 = vunpack.c.l.b16 %v140
    %v367 = vunpack.c.h.b16 %v140
    %v368 = vunpack.c.l.b16 %v141
    %v369 = vunpack.c.h.b16 %v141
    %v370 = vunpack.c.l.b16 %v142
    %v371 = vunpack.c.h.b16 %v142
    %v372 = vunpack.c.l.b16 %v143
    %v373 = vunpack.c.h.b16 %v143
    %v374 = vunpack.c.l.b16 %v144
    %v375 = vunpack.c.h.b16 %v144
    %v376 = vunpack.c.l.b16 %v145
    %v377 = vunpack.c.h.b16 %v145
    %v378 = vunpack.c.l.b16 %v146
    %v379 = vunpack.c.h.b16 %v146
    %v380 = vunpack.c.l.b16 %v147
    %v381 = vunpack.c.h.b16 %v147
    %v382 = vunpack.c.l.b16 %v148
    %v383 = vunpack.c.h.b16 %v148
    %v384 = vunpack.c.l.b16 %v149
    %v385 = vunpack.c.h.b16 %v149
    %v386 = vunpack.c.l.b16 %v150
    %v387 = vunpack.c.h.b16 %v150
    %v388 = vunpack.c.l.b16 %v151
    %v389 = vunpack.c.h.b16 %v151
    %v390 = vunpack.c.l.b16 %v152
    %v391 = vunpack.c.h.b16 %v152
    %v392 = vunpack.c.l.b16 %v153
    %v393 = vunpack.c.h.b16 %v153
    %v394 = vunpack.c.l.b16 %v154
    %v395 = vunpack.c.h.b16 %v154
    %v396 = vunpack.c.l.b16 %v155
    %v397 = vunpack.c.h.b16 %v155
    %v398 = vunpack.c.l.b16 %v156
    %v399 = vunpack.c.h.b16 %v156
    %v400 = vunpack.c.l.b16 %v157
    %v401 = vunpack.c.h.b16 %v157
    %v402 = vunpack.c.l.b16 %v158
    %v403 = vunpack.c.h.b16 %v158
    %v404 = vunpack.c.l.b16 %v159
    %v405 = vunpack.c.h.b16 %v159
    %v406 = vunpack.c.l.b16 %v160
    %v407 = vunpack.c.h.b16 %v160
    %v408 = vunpack.c.l.b16 %v161
    %v409 = vunpack.c.h.b16 %v161
    %v410 = vunpack.c.l.b16 %v162
    %v411 = vunpack.c.h.b16 %v162
    %v412 = vunpack.c.l.b16 %v163
    %v413 = vunpack.c.h.b16 %v163
    %v414 = vunpack.c.l.b16 %v164
    %v415 = vunpack.c.h.b16 %v164
    %v416 = vunpack.c.l.b16 %v165
    %v417 = vunpack.c.h.b16 %v165
    %v418 = vunpack.c.l.b16 %v166
    %v419 = vunpack.c.h.b16 %v166
    %v420 = vunpack.c.l.b16 %v167
    %v421 = vunpack.c.h.b16 %v167
    %v422 = vunpack.c.l.b16 %v168
    %v423 = vunpack.c.h.b16 %v168
    %v424 = vunpack.c.l.b16 %v169
    %v425 = vunpack.c.h.b16 %v169
    %v426 = vunpack.c.l.b16 %v170
    %v427 = vunpack.c.h.b16 %v170
    %v428 = vunpack.c.l.b16 %v171
    %v429 = vunpack.c.h.b16 %v171
    %v430 = vunpack.c.l.b16 %v172
    %v431 = vunpack.c.h.b16 %v172
    %v432 = vunpack.c.l.b16 %v173
    %v433 = vunpack.c.h.b16 %v173
    %v434 = vunpack.c.l.b16 %v174
    %v435 = vunpack.c.h.b16 %v174
    %v436 = vunpack.c.l.b16 %v175
    %v437 = vunpack.c.h.b16 %v175
    %v438 = vunpack.c.l.b16 %v176
    %v439 = vunpack.c.h.b16 %v176
    %v440 = vunpack.c.l.b16 %v177
    %v441 = vunpack.c.h.b16 %v177
    %v442 = vunpack.c.l.b16 %v178
    %v443 = vunpack.c.h.b16 %v178
    %v444 = vunpack.c.l.b16 %v179
    %v445 = vunpack.c.h.b16 %v179
    %v446 = vunpack.c.l.b16 %v180
    %v447 = vunpack.c.h.b16 %v180
    %v448 = vunpack.c.l.b16 %v181
    %v449 = vunpack.c.h.b16 %v181
    %v450 = vunpack.c.l.b16 %v182
    %v451 = vunpack.c.h.b16 %v182
    %v452 = vunpack.c.l.b16 %v183
    %v453 = vunpack.c.h.b16 %v183
    %v454 = vunpack.c.l.b16 %v184
    %v455 = vunpack.c.h.b16 %v184
    %v456 = vunpack.c.l.b16 %v185
    %v457 = vunpack.c.h.b16 %v185
    %v458 = vunpack.c.l.b16 %v186
    %v459 = vunpack.c.h.b16 %v186
    %v460 = vunpack.c.l.b16 %v187
    %v461 = vunpack.c.h.b16 %v187
    %v462 = vunpack.c.l.b16 %v188
    %v463 = vunpack.c.h.b16 %v188
    %v464 = vunpack.c.l.b16 %v189
    %v465 = vunpack.c.h.b16 %v189
    %v466 = vunpack.c.l.b16 %v190
    %v467 = vunpack.c.h.b16 %v190
    %v468 = vunpack.c.l.b16 %v191
    %v469 = vunpack.c.h.b16 %v191
    %v470 = vunpack.c.l.b16 %v192
    %v471 = vunpack.c.h.b16 %v192
    %v472 = vunpack.c.l.b16 %v193
    %v473 = vunpack.c.h.b16 %v193
    %v474 = vunpack.c.l.b16 %v194
    %v475 = vunpack.c.h.b16 %v194
    %v476 = vunpack.c.l.b16 %v195
    %v477 = vunpack.c.h.b16 %v195
    %v478 = vunpack.c.l.b16 %v196
    %v479 = vunpack.c.h.b16 %v196
    %v480 = vunpack.c.l.b16 %v197
    %v481 = vunpack.c.h.b16 %v197
    %v482 = vunpack.c.l.b16 %v198
    %v483 = vunpack.c.h.b16 %v198
    %v484 = vunpack.c.l.b16 %v199
    %v485 = vunpack.c.h.b16 %v199
    %v486 = vunpack.c.l.b16 %v200
    %v487 = vunpack.c.h.b16 %v200
    %v488 = vunpack.c.l.b16 %v201
    %v489 = vunpack.c.h.b16 %v201
    %v490 = vunpack.c.l.b16 %v202
    %v491 = vunpack.c.h.b16 %v202
    %v492 = vunpack.c.l.b16 %v203
    %v493 = vunpack.c.h.b16 %v203
    %v494 = vunpack.c.l.b16 %v204
    %v495 = vunpack.c.h.b16 %v204
    %v496 = vunpack.c.l.b16 %v205
    %v497 = vunpack.c.h.b16 %v205
    %v498 = vunpack.c.l.b16 %v206
    %v499 = vunpack.c.h.b16 %v206
    %v500 = vunpack.c.l.b16 %v207
    %v501 = vunpack.c.h.b16 %v207
    %v502 = vunpack.c.l.b16 %v208
    %v503 = vunpack.c.h.b16 %v208
    %v504 = vunpack.c.l.b16 %v209
    %v505 = vunpack.c.h.b16 %v209
    %v506 = vunpack.c.l.b16 %v210
    %v507 = vunpack.c.h.b16 %v210
    %v508 = vunpack.c.l.b16 %v211
    %v509 = vunpack.c.h.b16 %v211
    %v510 = vunpack.c.l.b16 %v212
    %v511 = vunpack.c.h.b16 %v212
    %v512 = vunpack.c.l.b16 %v213
    %v513 = vunpack.c.h.b16 %v213
    %v514 = vunpack.c.l.b16 %v214
    %v515 = vunpack.c.h.b16 %v214
    %v516 = vunpack.c.l.b16 %v215
    %v517 = vunpack.c.h.b16 %v215
    %v518 = vunpack.c.l.b16 %v216
    %v519 = vunpack.c.h.b16 %v216
    %v520 = vunpack.c.l.b16 %v217
    %v521 = vunpack.c.h.b16 %v217
    %v522 = vunpack.c.l.b16 %v218
    %v523 = vunpack.c.h.b16 %v218
    %v524 = vunpack.c.l.b16 %v219
    %v525 = vunpack.c.h.b16 %v219
    %v526 = vunpack.c.l.b16 %v220
    %v527 = vunpack.c.h.b16 %v220
    %v528 = vunpack.c.l.b16 %v221
    %v529 = vunpack.c.h.b16 %v221
    %v530 = vunpack.c.l.b16 %v222
    %v531 = vunpack.c.h.b16 %v222
    %v532 = vunpack.c.l.b16 %v223
    %v533 = vunpack.c.h.b16 %v223
    %v534 = vunpack.c.l.b16 %v224
    %v535 = vunpack.c.h.b16 %v224
    %v536 = vunpack.c.l.b16 %v225
    %v537 = vunpack.c.h.b16 %v225
    %v538 = vunpack.c.l.b16 %v226
    %v539 = vunpack.c.h.b16 %v226
    %v540 = vunpack.c.l.b16 %v227
    %v541 = vunpack.c.h.b16 %v227
    %v542 = vunpack.c.l.b16 %v228
    %v543 = vunpack.c.h.b16 %v228
    %v544 = vunpack.c.l.b16 %v229
    %v545 = vunpack.c.h.b16 %v229
    %v546 = vunpack.c.l.b16 %v230
    %v547 = vunpack.c.h.b16 %v230
    %v548 = vunpack.c.l.b16 %v231
    %v549 = vunpack.c.h.b16 %v231
    %v550 = vunpack.c.l.b16 %v232
    %v551 = vunpack.c.h.b16 %v232
    %v552 = vunpack.c.l.b16 %v233
    %v553 = vunpack.c.h.b16 %v233
    %v554 = vpack.c.b16 %v368, %v362
    %v555 = vpack.c.b16 %v369, %v363
    %v556 = vpack.c.b16 %v370, %v364
    %v557 = vpack.c.b16 %v371, %v365
    %v558 = vpack.c.b16 %v372, %v366
    %v559 = vpack.c.b16 %v373, %v367
    %v560 = vpack.c.b16 %v380, %v374
    %v561 = vpack.c.b16 %v381, %v375
    %v562 = vpack.c.b16 %v382, %v376
    %v563 = vpack.c.b16 %v383, %v377
    %v564 = vpack.c.b16 %v384, %v378
    %v565 = vpack.c.b16 %v385, %v379
    %v566 = vpack.c.b16 %v392, %v386
    %v567 = vpack.c.b16 %v393, %v387
    %v568 = vpack.c.b16 %v394, %v388
    %v569 = vpack.c.b16 %v395, %v389
    %v570 = vpack.c.b16 %v396, %v390
    %v571 = vpack.c.b16 %v397, %v391
    %v572 = vpack.c.b16 %v404, %v398
    %v573 = vpack.c.b16 %v405, %v399
    %v574 = vpack.c.b16 %v406, %v400
    %v575 = vpack.c.b16 %v407, %v401
    %v576 = vpack.c.b16 %v408, %v402
    %v577 = vpack.c.b16 %v409, %v403
    %v578 = vpack.c.b16 %v416, %v410
    %v579 = vpack.c.b16 %v417, %v411
    %v580 = vpack.c.b16 %v418, %v412
    %v581 = vpack.c.b16 %v419, %v413
    %v582 = vpack.c.b16 %v420, %v414
    %v583 = vpack.c.b16 %v421, %v415
    %v584 = vpack.c.b16 %v428, %v422
    %v585 = vpack.c.b16 %v429, %v423
    %v586 = vpack.c.b16 %v430, %v424
    %v587 = vpack.c.b16 %v431, %v425
    %v588 = vpack.c.b16 %v432, %v426
    %v589 = vpack.c.b16 %v433, %v427
    %v590 = vpack.c.b16 %v440, %v434
    %v591 = vpack.c.b16 %v441, %v435
    %v592 = vpack.c.b16 %v442, %v436
    %v593 = vpack.c.b16 %v443, %v437
    %v594 = vpack.c.b16 %v444, %v438
    %v595 = vpack.c.b16 %v445, %v439
    %v596 = vpack.c.b16 %v452, %v446
    %v597 = vpack.c.b16 %v453, %v447
    %v598 = vpack.c.b16 %v454, %v448
    %v599 = vpack.c.b16 %v455, %v449
    %v600 = vpack.c.b16 %v456, %v450
    %v601 = vpack.c.b16 %v457, %v451
    %v602 = vpack.c.b16 %v464, %v458
    %v603 = vpack.c.b16 %v465, %v459
    %v604 = vpack.c.b16 %v466, %v460
    %v605 = vpack.c.b16 %v467, %v461
    %v606 = vpack.c.b16 %v468, %v462
    %v607 = vpack.c.b16 %v469, %v463
    %v608 = vpack.c.b16 %v476, %v470
    %v609 = vpack.c.b16 %v477, %v471
    %v610 = vpack.c.b16 %v478, %v472
    %v611 = vpack.c.b16 %v479, %v473
    %v612 = vpack.c.b16 %v480, %v474
    %v613 = vpack.c.b16 %v481, %v475
    %v614 = vpack.c.b16 %v488, %v482
    %v615 = vpack.c.b16 %v489, %v483
    %v616 = vpack.c.b16 %v490, %v484
    %v617 = vpack.c.b16 %v491, %v485
    %v618 = vpack.c.b16 %v492, %v486
    %v619 = vpack.c.b16 %v493, %v487
    %v620 = vpack.c.b16 %v500, %v494
    %v621 = vpack.c.b16 %v501, %v495
    %v622 = vpack.c.b16 %v502, %v496
    %v623 = vpack.c.b16 %v503, %v497
    %v624 = vpack.c.b16 %v504, %v498
    %v625 = vpack.c.b16 %v505, %v499
    %v626 = vpack.c.b16 %v512, %v506
    %v627 = vpack.c.b16 %v513, %v507
    %v628 = vpack.c.b16 %v514, %v508
    %v629 = vpack.c.b16 %v515, %v509
    %v630 = vpack.c.b16 %v516, %v510
    %v631 = vpack.c.b16 %v517, %v511
    %v632 = vpack.c.b16 %v524, %v518
    %v633 = vpack.c.b16 %v525, %v519
    %v634 = vpack.c.b16 %v526, %v520
    %v635 = vpack.c.b16 %v527, %v521
    %v636 = vpack.c.b16 %v528, %v522
    %v637 = vpack.c.b16 %v529, %v523
    %v638 = vpack.c.b16 %v536, %v530
    %v639 = vpack.c.b16 %v537, %v531
    %v640 = vpack.c.b16 %v538, %v532
    %v641 = vpack.c.b16 %v539, %v533
    %v642 = vpack.c.b16 %v540, %v534
    %v643 = vpack.c.b16 %v541, %v535
    %v644 = vpack.c.b16 %v548, %v542
    %v645 = vpack.c.b16 %v549, %v543
    %v646 = vpack.c.b16 %v550, %v544
    %v647 = vpack.c.b16 %v551, %v545
    %v648 = vpack.c.b16 %v552, %v546
    %v649 = vpack.c.b16 %v553, %v547
    %746 = vmatprep.subr.bf16.mxu0 %v555
    %747 = vmatpush1.bf16.msra.mxu0 %v554
    %748 = vmatprep.subr.bf16.mxu0 %v561
    %749 = vmatpush1.bf16.msra.mxu0 %v560
    %750 = vmatprep.subr.bf16.mxu0 %v567
    %751 = vmatpush1.bf16.msra.mxu0 %v566
    %752 = vmatprep.subr.bf16.mxu0 %v573
    %753 = vmatpush1.bf16.msra.mxu0 %v572
    %754 = vmatprep.subr.bf16.mxu0 %v579
    %755 = vmatpush1.bf16.msra.mxu0 %v578
    %756 = vmatprep.subr.bf16.mxu0 %v585
    %757 = vmatpush1.bf16.msra.mxu0 %v584
    %758 = vmatprep.subr.bf16.mxu0 %v591
    %759 = vmatpush1.bf16.msra.mxu0 %v590
    %760 = vmatprep.subr.bf16.mxu0 %v597
    %761 = vmatpush1.bf16.msra.mxu0 %v596
    %762 = vmatprep.subr.bf16.mxu0 %v603
    %763 = vmatpush1.bf16.msra.mxu0 %v602
    %764 = vmatprep.subr.bf16.mxu0 %v609
    %765 = vmatpush1.bf16.msra.mxu0 %v608
    %766 = vmatprep.subr.bf16.mxu0 %v615
    %767 = vmatpush1.bf16.msra.mxu0 %v614
    %768 = vmatprep.subr.bf16.mxu0 %v621
    %769 = vmatpush1.bf16.msra.mxu0 %v620
    %770 = vmatprep.subr.bf16.mxu0 %v627
    %771 = vmatpush1.bf16.msra.mxu0 %v626
    %772 = vmatprep.subr.bf16.mxu0 %v633
    %773 = vmatpush1.bf16.msra.mxu0 %v632
    %774 = vmatprep.subr.bf16.mxu0 %v639
    %775 = vmatpush1.bf16.msra.mxu0 %v638
    %776 = vmatprep.subr.bf16.mxu0 %v645
    %777 = vmatpush1.bf16.msra.mxu0 %v644
    %778 = vmatprep.mubr.bf16.mxu0 %v137
    %779 = vmatmul.mubr.bf16.gmra.mrb[0].mxu0 %v136
    %v780 = vpop.f32.mrb[0].mxu0
    %v781 = vadd.f32 %v239, %v780
    %v782 = vpop.f32.mrb[0].mxu0
    %v783 = vadd.f32 %v243, %v782
    %v784 = vpop.f32.mrb[0].mxu0
    %v785 = vadd.f32 %v239, %v784
    %v786 = vpop.f32.mrb[0].mxu0
    %v787 = vadd.f32 %v243, %v786
    %788 = vdwg.mxu0
    %789 = vmatprep.subr.bf16.mxu0 %v557
    %790 = vmatpush1.bf16.msra.mxu0 %v556
    %791 = vmatprep.subr.bf16.mxu0 %v563
    %792 = vmatpush1.bf16.msra.mxu0 %v562
    %793 = vmatprep.subr.bf16.mxu0 %v569
    %794 = vmatpush1.bf16.msra.mxu0 %v568
    %795 = vmatprep.subr.bf16.mxu0 %v575
    %796 = vmatpush1.bf16.msra.mxu0 %v574
    %797 = vmatprep.subr.bf16.mxu0 %v581
    %798 = vmatpush1.bf16.msra.mxu0 %v580
    %799 = vmatprep.subr.bf16.mxu0 %v587
    %800 = vmatpush1.bf16.msra.mxu0 %v586
    %801 = vmatprep.subr.bf16.mxu0 %v593
    %802 = vmatpush1.bf16.msra.mxu0 %v592
    %803 = vmatprep.subr.bf16.mxu0 %v599
    %804 = vmatpush1.bf16.msra.mxu0 %v598
    %805 = vmatprep.subr.bf16.mxu0 %v605
    %806 = vmatpush1.bf16.msra.mxu0 %v604
    %807 = vmatprep.subr.bf16.mxu0 %v611
    %808 = vmatpush1.bf16.msra.mxu0 %v610
    %809 = vmatprep.subr.bf16.mxu0 %v617
    %810 = vmatpush1.bf16.msra.mxu0 %v616
    %811 = vmatprep.subr.bf16.mxu0 %v623
    %812 = vmatpush1.bf16.msra.mxu0 %v622
    %813 = vmatprep.subr.bf16.mxu0 %v629
    %814 = vmatpush1.bf16.msra.mxu0 %v628
    %815 = vmatprep.subr.bf16.mxu0 %v635
    %816 = vmatpush1.bf16.msra.mxu0 %v634
    %817 = vmatprep.subr.bf16.mxu0 %v641
    %818 = vmatpush1.bf16.msra.mxu0 %v640
    %819 = vmatprep.subr.bf16.mxu0 %v647
    %820 = vmatpush1.bf16.msra.mxu0 %v646
    %821 = vmatprep.mubr.bf16.mxu0 %v137
    %822 = vmatmul.mubr.bf16.gmra.mrb[0].mxu0 %v136
    %v823 = vpop.f32.mrb[0].mxu0
    %v824 = vadd.f32 %v247, %v823
    %v825 = vpop.f32.mrb[0].mxu0
    %v826 = vadd.f32 %v251, %v825
    %v827 = vpop.f32.mrb[0].mxu0
    %v828 = vadd.f32 %v247, %v827
    %v829 = vpop.f32.mrb[0].mxu0
    %v830 = vadd.f32 %v251, %v829
    %831 = vdwg.mxu0
    %832 = vmatprep.subr.bf16.mxu0 %v559
    %833 = vmatpush1.bf16.msra.mxu0 %v558
    %834 = vmatprep.subr.bf16.mxu0 %v565
    %835 = vmatpush1.bf16.msra.mxu0 %v564
    %836 = vmatprep.subr.bf16.mxu0 %v571
    %837 = vmatpush1.bf16.msra.mxu0 %v570
    %838 = vmatprep.subr.bf16.mxu0 %v577
    %839 = vmatpush1.bf16.msra.mxu0 %v576
    %840 = vmatprep.subr.bf16.mxu0 %v583
    %841 = vmatpush1.bf16.msra.mxu0 %v582
    %842 = vmatprep.subr.bf16.mxu0 %v589
    %843 = vmatpush1.bf16.msra.mxu0 %v588
    %844 = vmatprep.subr.bf16.mxu0 %v595
    %845 = vmatpush1.bf16.msra.mxu0 %v594
    %846 = vmatprep.subr.bf16.mxu0 %v601
    %847 = vmatpush1.bf16.msra.mxu0 %v600
    %848 = vmatprep.subr.bf16.mxu0 %v607
    %849 = vmatpush1.bf16.msra.mxu0 %v606
    %850 = vmatprep.subr.bf16.mxu0 %v613
    %851 = vmatpush1.bf16.msra.mxu0 %v612
    %852 = vmatprep.subr.bf16.mxu0 %v619
    %853 = vmatpush1.bf16.msra.mxu0 %v618
    %854 = vmatprep.subr.bf16.mxu0 %v625
    %855 = vmatpush1.bf16.msra.mxu0 %v624
    %856 = vmatprep.subr.bf16.mxu0 %v631
    %857 = vmatpush1.bf16.msra.mxu0 %v630
    %858 = vmatprep.subr.bf16.mxu0 %v637
    %859 = vmatpush1.bf16.msra.mxu0 %v636
    %860 = vmatprep.subr.bf16.mxu0 %v643
    %861 = vmatpush1.bf16.msra.mxu0 %v642
    %862 = vmatprep.subr.bf16.mxu0 %v649
    %863 = vmatpush1.bf16.msra.mxu0 %v648
    %864 = vmatprep.mubr.bf16.mxu0 %v137
    %865 = vmatmul.mubr.bf16.gmra.mrb[0].mxu0 %v136
    %v866 = vpop.f32.mrb[0].mxu0
    %v867 = vadd.f32 %v255, %v866
    %v868 = vpop.f32.mrb[0].mxu0
    %v869 = vadd.f32 %v259, %v868
    %v870 = vpop.f32.mrb[0].mxu0
    %v871 = vadd.f32 %v255, %v870
    %v872 = vpop.f32.mrb[0].mxu0
    %v873 = vadd.f32 %v259, %v872
    %874 = vdwg.mxu0
    %v875 = vmul.f32 %v781, 0.17677669
    %v876 = vmul.f32 %v783, 0.17677669
    %v877 = vmul.f32 %v785, 0.17677669
    %v878 = vmul.f32 %v787, 0.17677669
    %v879 = vld [vmem:[%s9 + $0x6] sm:$0x3]
    %v880 = vpack.c.bf16 %v877, %v875
    %v881 = vpack.c.bf16 %v878, %v876
    %v882 = vpack.c.bf16 %v828, %v824
    %v883 = vpack.c.bf16 %v830, %v826
    %v884 = vpack.c.bf16 %v871, %v867
    %v885 = vpack.c.bf16 %v873, %v869
    %vm886 = vcmask 261120
    %v888 = vsel %vm886, %v880, 0
    %v891 = vsel %vm886, %v882, 0
    %893 = vmatprep.subr.bf16.mxu0 0
    %894 = vmatpush1.bf16.xpose.msra.mxu0 %v891
    %895 = vmatprep.subr.bf16.mxu0 0
    %896 = vmatpush1.bf16.xpose.msra.mxu0 0
    %897 = vmatprep.subr.bf16.mxu0 0
    %898 = vmatpush1.bf16.xpose.msra.mxu0 0
    %899 = vmatprep.subr.bf16.mxu0 0
    %900 = vmatpush1.bf16.xpose.msra.mxu0 0
    %901 = vmatprep.subr.bf16.mxu0 0
    %902 = vmatpush1.bf16.xpose.msra.mxu0 0
    %903 = vmatprep.subr.bf16.mxu0 0
    %904 = vmatpush1.bf16.xpose.msra.mxu0 0
    %905 = vmatprep.subr.bf16.mxu0 0
    %906 = vmatpush1.bf16.xpose.msra.mxu0 0
    %907 = vmatprep.subr.bf16.mxu0 0
    %908 = vmatpush1.bf16.xpose.msra.mxu0 0
    %909 = vmatprep.subr.bf16.mxu0 0
    %910 = vmatpush1.bf16.xpose.msra.mxu0 0
    %911 = vmatprep.subr.bf16.mxu0 0
    %912 = vmatpush1.bf16.xpose.msra.mxu0 0
    %913 = vmatprep.subr.bf16.mxu0 0
    %914 = vmatpush1.bf16.xpose.msra.mxu0 0
    %915 = vmatprep.subr.bf16.mxu0 0
    %916 = vmatpush1.bf16.xpose.msra.mxu0 0
    %917 = vmatprep.subr.bf16.mxu0 0
    %918 = vmatpush1.bf16.xpose.msra.mxu0 0
    %919 = vmatprep.subr.bf16.mxu0 0
    %920 = vmatpush1.bf16.xpose.msra.mxu0 0
    %921 = vmatprep.subr.bf16.mxu0 0
    %922 = vmatpush1.bf16.xpose.msra.mxu0 0
    %923 = vmatprep.subr.bf16.mxu0 0
    %924 = vmatpush1.bf16.xpose.msra.mxu0 0
    %925 = vmatprep.mubr.bf16.mxu0 0
    %926 = vmatmul.mubr.bf16.gmra.mrb[0].mxu0 %v888
    %v927 = vpop.f32.mrb[0].mxu0
    %v928 = vadd.f32 0.0, %v927
    %v929 = vpop.f32.mrb[0].mxu0
    %v930 = vpop.f32.mrb[0].mxu0
    %v931 = vpop.f32.mrb[0].mxu0
    %932 = vdwg.mxu0
    %vm933 = vcmask 64512
    %v934 = vsel %vm933, %v928, -inf
    %935 = vmax.xlane.f32.xlu0 %v934
    %v936 = vpop.xlane.xlu0 %935
    %v937 = vsub.f32 %v928, %v936
    %v938 = vmul.f32 %v937, 1.442695
    %v939 = vpow.pop %v938
    %v940 = vsel %vm933, %v939, 0.0
    %941 = vadd.xlane.f32.xlu0 %v940
    %v942 = vpop.xlane.xlu0 %941
    %v943 = vrcp.pop %v942
    %v944 = vmul.f32 %v939, %v943
    %v945 = vpack.c.bf16 %v944, %v944
    %v947 = vsel %vm933, %v945, 0
    %vm949 = vcmask 1043456
    %v951 = vsel %vm949, %v884, 0
    %953 = vmatprep.subr.bf16.mxu0 0
    %954 = vmatpush1.bf16.msra.mxu0 %v951
    %955 = vmatprep.subr.bf16.mxu0 0
    %956 = vmatpush1.bf16.msra.mxu0 0
    %957 = vmatprep.subr.bf16.mxu0 0
    %958 = vmatpush1.bf16.msra.mxu0 0
    %959 = vmatprep.subr.bf16.mxu0 0
    %960 = vmatpush1.bf16.msra.mxu0 0
    %961 = vmatprep.subr.bf16.mxu0 0
    %962 = vmatpush1.bf16.msra.mxu0 0
    %963 = vmatprep.subr.bf16.mxu0 0
    %964 = vmatpush1.bf16.msra.mxu0 0
    %965 = vmatprep.subr.bf16.mxu0 0
    %966 = vmatpush1.bf16.msra.mxu0 0
    %967 = vmatprep.subr.bf16.mxu0 0
    %968 = vmatpush1.bf16.msra.mxu0 0
    %969 = vmatprep.subr.bf16.mxu0 0
    %970 = vmatpush1.bf16.msra.mxu0 0
    %971 = vmatprep.subr.bf16.mxu0 0
    %972 = vmatpush1.bf16.msra.mxu0 0
    %973 = vmatprep.subr.bf16.mxu0 0
    %974 = vmatpush1.bf16.msra.mxu0 0
    %975 = vmatprep.subr.bf16.mxu0 0
    %976 = vmatpush1.bf16.msra.mxu0 0
    %977 = vmatprep.subr.bf16.mxu0 0
    %978 = vmatpush1.bf16.msra.mxu0 0
    %979 = vmatprep.subr.bf16.mxu0 0
    %980 = vmatpush1.bf16.msra.mxu0 0
    %981 = vmatprep.subr.bf16.mxu0 0
    %982 = vmatpush1.bf16.msra.mxu0 0
    %983 = vmatprep.subr.bf16.mxu0 0
    %984 = vmatpush1.bf16.msra.mxu0 0
    %985 = vmatprep.mubr.bf16.mxu0 0
    %986 = vmatmul.mubr.bf16.gmra.mrb[0].mxu0 %v947
    %v987 = vpop.f32.mrb[0].mxu0
    %v988 = vadd.f32 0.0, %v987
    %v989 = vpop.f32.mrb[0].mxu0
    %v990 = vpop.f32.mrb[0].mxu0
    %v991 = vpop.f32.mrb[0].mxu0
    %992 = vdwg.mxu0
    %994 = vrot.lane.b32.xlu0 %v880, 96
    %v995 = vpop.permute.xlu0 %994
    %997 = vrot.lane.b32.xlu0 %v882, 96
    %v998 = vpop.permute.xlu0 %997
    %v1000 = vsel %vm886, %v995, 0
    %v1003 = vsel %vm886, %v998, 0
    %1005 = vmatprep.subr.bf16.mxu0 0
    %1006 = vmatpush1.bf16.xpose.msra.mxu0 %v1003
    %1007 = vmatprep.subr.bf16.mxu0 0
    %1008 = vmatpush1.bf16.xpose.msra.mxu0 0
    %1009 = vmatprep.subr.bf16.mxu0 0
    %1010 = vmatpush1.bf16.xpose.msra.mxu0 0
    %1011 = vmatprep.subr.bf16.mxu0 0
    %1012 = vmatpush1.bf16.xpose.msra.mxu0 0
    %1013 = vmatprep.subr.bf16.mxu0 0
    %1014 = vmatpush1.bf16.xpose.msra.mxu0 0
    %1015 = vmatprep.subr.bf16.mxu0 0
    %1016 = vmatpush1.bf16.xpose.msra.mxu0 0
    %1017 = vmatprep.subr.bf16.mxu0 0
    %1018 = vmatpush1.bf16.xpose.msra.mxu0 0
    %1019 = vmatprep.subr.bf16.mxu0 0
    %1020 = vmatpush1.bf16.xpose.msra.mxu0 0
    %1021 = vmatprep.subr.bf16.mxu0 0
    %1022 = vmatpush1.bf16.xpose.msra.mxu0 0
    %1023 = vmatprep.subr.bf16.mxu0 0
    %1024 = vmatpush1.bf16.xpose.msra.mxu0 0
    %1025 = vmatprep.subr.bf16.mxu0 0
    %1026 = vmatpush1.bf16.xpose.msra.mxu0 0
    %1027 = vmatprep.subr.bf16.mxu0 0
    %1028 = vmatpush1.bf16.xpose.msra.mxu0 0
    %1029 = vmatprep.subr.bf16.mxu0 0
    %1030 = vmatpush1.bf16.xpose.msra.mxu0 0
    %1031 = vmatprep.subr.bf16.mxu0 0
    %1032 = vmatpush1.bf16.xpose.msra.mxu0 0
    %1033 = vmatprep.subr.bf16.mxu0 0
    %1034 = vmatpush1.bf16.xpose.msra.mxu0 0
    %1035 = vmatprep.subr.bf16.mxu0 0
    %1036 = vmatpush1.bf16.xpose.msra.mxu0 0
    %1037 = vmatprep.mubr.bf16.mxu0 0
    %1038 = vmatmul.mubr.bf16.gmra.mrb[0].mxu0 %v1000
    %v1039 = vpop.f32.mrb[0].mxu0
    %v1040 = vadd.f32 0.0, %v1039
    %v1041 = vpop.f32.mrb[0].mxu0
    %v1042 = vpop.f32.mrb[0].mxu0
    %v1043 = vpop.f32.mrb[0].mxu0
    %1044 = vdwg.mxu0
    %v1045 = vsel %vm933, %v1040, -inf
    %1046 = vmax.xlane.f32.xlu0 %v1045
    %v1047 = vpop.xlane.xlu0 %1046
    %v1048 = vsub.f32 %v1040, %v1047
    %v1049 = vmul.f32 %v1048, 1.442695
    %v1050 = vpow.pop %v1049
    %v1051 = vsel %vm933, %v1050, 0.0
    %1052 = vadd.xlane.f32.xlu0 %v1051
    %v1053 = vpop.xlane.xlu0 %1052
    %v1054 = vrcp.pop %v1053
    %v1055 = vmul.f32 %v1050, %v1054
    %v1056 = vpack.c.bf16 %v1055, %v1055
    %1058 = vrot.lane.b32.xlu0 %v884, 96
    %v1059 = vpop.permute.xlu0 %1058
    %v1061 = vsel %vm933, %v1056, 0
    %v1064 = vsel %vm949, %v1059, 0
    %1066 = vmatprep.subr.bf16.mxu0 0
    %1067 = vmatpush1.bf16.msra.mxu0 %v1064
    %1068 = vmatprep.subr.bf16.mxu0 0
    %1069 = vmatpush1.bf16.msra.mxu0 0
    %1070 = vmatprep.subr.bf16.mxu0 0
    %1071 = vmatpush1.bf16.msra.mxu0 0
    %1072 = vmatprep.subr.bf16.mxu0 0
    %1073 = vmatpush1.bf16.msra.mxu0 0
    %1074 = vmatprep.subr.bf16.mxu0 0
    %1075 = vmatpush1.bf16.msra.mxu0 0
    %1076 = vmatprep.subr.bf16.mxu0 0
    %1077 = vmatpush1.bf16.msra.mxu0 0
    %1078 = vmatprep.subr.bf16.mxu0 0
    %1079 = vmatpush1.bf16.msra.mxu0 0
    %1080 = vmatprep.subr.bf16.mxu0 0
    %1081 = vmatpush1.bf16.msra.mxu0 0
    %1082 = vmatprep.subr.bf16.mxu0 0
    %1083 = vmatpush1.bf16.msra.mxu0 0
    %1084 = vmatprep.subr.bf16.mxu0 0
    %1085 = vmatpush1.bf16.msra.mxu0 0
    %1086 = vmatprep.subr.bf16.mxu0 0
    %1087 = vmatpush1.bf16.msra.mxu0 0
    %1088 = vmatprep.subr.bf16.mxu0 0
    %1089 = vmatpush1.bf16.msra.mxu0 0
    %1090 = vmatprep.subr.bf16.mxu0 0
    %1091 = vmatpush1.bf16.msra.mxu0 0
    %1092 = vmatprep.subr.bf16.mxu0 0
    %1093 = vmatpush1.bf16.msra.mxu0 0
    %1094 = vmatprep.subr.bf16.mxu0 0
    %1095 = vmatpush1.bf16.msra.mxu0 0
    %1096 = vmatprep.subr.bf16.mxu0 0
    %1097 = vmatpush1.bf16.msra.mxu0 0
    %1098 = vmatprep.mubr.bf16.mxu0 0
    %1099 = vmatmul.mubr.bf16.gmra.mrb[0].mxu0 %v1061
    %v1100 = vpop.f32.mrb[0].mxu0
    %v1101 = vadd.f32 0.0, %v1100
    %v1102 = vpop.f32.mrb[0].mxu0
    %v1103 = vpop.f32.mrb[0].mxu0
    %v1104 = vpop.f32.mrb[0].mxu0
    %1105 = vdwg.mxu0
    %1106 = vrot.lane.b32.xlu0 %v880, 64
    %v1107 = vpop.permute.xlu0 %1106
    %1108 = vrot.lane.b32.xlu0 %v882, 64
    %v1109 = vpop.permute.xlu0 %1108
    %v1111 = vsel %vm886, %v1107, 0
    %v1114 = vsel %vm886, %v1109, 0
    %1116 = vmatprep.subr.bf16.mxu0 0
    %1117 = vmatpush1.bf16.xpose.msra.mxu0 %v1114
    %1118 = vmatprep.subr.bf16.mxu0 0
    %1119 = vmatpush1.bf16.xpose.msra.mxu0 0
    %1120 = vmatprep.subr.bf16.mxu0 0
    %1121 = vmatpush1.bf16.xpose.msra.mxu0 0
    %1122 = vmatprep.subr.bf16.mxu0 0
    %1123 = vmatpush1.bf16.xpose.msra.mxu0 0
    %1124 = vmatprep.subr.bf16.mxu0 0
    %1125 = vmatpush1.bf16.xpose.msra.mxu0 0
    %1126 = vmatprep.subr.bf16.mxu0 0
    %1127 = vmatpush1.bf16.xpose.msra.mxu0 0
    %1128 = vmatprep.subr.bf16.mxu0 0
    %1129 = vmatpush1.bf16.xpose.msra.mxu0 0
    %1130 = vmatprep.subr.bf16.mxu0 0
    %1131 = vmatpush1.bf16.xpose.msra.mxu0 0
    %1132 = vmatprep.subr.bf16.mxu0 0
    %1133 = vmatpush1.bf16.xpose.msra.mxu0 0
    %1134 = vmatprep.subr.bf16.mxu0 0
    %1135 = vmatpush1.bf16.xpose.msra.mxu0 0
    %1136 = vmatprep.subr.bf16.mxu0 0
    %1137 = vmatpush1.bf16.xpose.msra.mxu0 0
    %1138 = vmatprep.subr.bf16.mxu0 0
    %1139 = vmatpush1.bf16.xpose.msra.mxu0 0
    %1140 = vmatprep.subr.bf16.mxu0 0
    %1141 = vmatpush1.bf16.xpose.msra.mxu0 0
    %1142 = vmatprep.subr.bf16.mxu0 0
    %1143 = vmatpush1.bf16.xpose.msra.mxu0 0
    %1144 = vmatprep.subr.bf16.mxu0 0
    %1145 = vmatpush1.bf16.xpose.msra.mxu0 0
    %1146 = vmatprep.subr.bf16.mxu0 0
    %1147 = vmatpush1.bf16.xpose.msra.mxu0 0
    %1148 = vmatprep.mubr.bf16.mxu0 0
    %1149 = vmatmul.mubr.bf16.gmra.mrb[0].mxu0 %v1111
    %v1150 = vpop.f32.mrb[0].mxu0
    %v1151 = vadd.f32 0.0, %v1150
    %v1152 = vpop.f32.mrb[0].mxu0
    %v1153 = vpop.f32.mrb[0].mxu0
    %v1154 = vpop.f32.mrb[0].mxu0
    %1155 = vdwg.mxu0
    %v1156 = vsel %vm933, %v1151, -inf
    %1157 = vmax.xlane.f32.xlu0 %v1156
    %v1158 = vpop.xlane.xlu0 %1157
    %v1159 = vsub.f32 %v1151, %v1158
    %v1160 = vmul.f32 %v1159, 1.442695
    %v1161 = vpow.pop %v1160
    %v1162 = vsel %vm933, %v1161, 0.0
    %1163 = vadd.xlane.f32.xlu0 %v1162
    %v1164 = vpop.xlane.xlu0 %1163
    %v1165 = vrcp.pop %v1164
    %v1166 = vmul.f32 %v1161, %v1165
    %v1167 = vpack.c.bf16 %v1166, %v1166
    %1168 = vrot.lane.b32.xlu0 %v884, 64
    %v1169 = vpop.permute.xlu0 %1168
    %v1171 = vsel %vm933, %v1167, 0
    %v1174 = vsel %vm949, %v1169, 0
    %1176 = vmatprep.subr.bf16.mxu0 0
    %1177 = vmatpush1.bf16.msra.mxu0 %v1174
    %1178 = vmatprep.subr.bf16.mxu0 0
    %1179 = vmatpush1.bf16.msra.mxu0 0
    %1180 = vmatprep.subr.bf16.mxu0 0
    %1181 = vmatpush1.bf16.msra.mxu0 0
    %1182 = vmatprep.subr.bf16.mxu0 0
    %1183 = vmatpush1.bf16.msra.mxu0 0
    %1184 = vmatprep.subr.bf16.mxu0 0
    %1185 = vmatpush1.bf16.msra.mxu0 0
    %1186 = vmatprep.subr.bf16.mxu0 0
    %1187 = vmatpush1.bf16.msra.mxu0 0
    %1188 = vmatprep.subr.bf16.mxu0 0
    %1189 = vmatpush1.bf16.msra.mxu0 0
    %1190 = vmatprep.subr.bf16.mxu0 0
    %1191 = vmatpush1.bf16.msra.mxu0 0
    %1192 = vmatprep.subr.bf16.mxu0 0
    %1193 = vmatpush1.bf16.msra.mxu0 0
    %1194 = vmatprep.subr.bf16.mxu0 0
    %1195 = vmatpush1.bf16.msra.mxu0 0
    %1196 = vmatprep.subr.bf16.mxu0 0
    %1197 = vmatpush1.bf16.msra.mxu0 0
    %1198 = vmatprep.subr.bf16.mxu0 0
    %1199 = vmatpush1.bf16.msra.mxu0 0
    %1200 = vmatprep.subr.bf16.mxu0 0
    %1201 = vmatpush1.bf16.msra.mxu0 0
    %1202 = vmatprep.subr.bf16.mxu0 0
    %1203 = vmatpush1.bf16.msra.mxu0 0
    %1204 = vmatprep.subr.bf16.mxu0 0
    %1205 = vmatpush1.bf16.msra.mxu0 0
    %1206 = vmatprep.subr.bf16.mxu0 0
    %1207 = vmatpush1.bf16.msra.mxu0 0
    %1208 = vmatprep.mubr.bf16.mxu0 0
    %1209 = vmatmul.mubr.bf16.gmra.mrb[0].mxu0 %v1171
    %v1210 = vpop.f32.mrb[0].mxu0
    %v1211 = vadd.f32 0.0, %v1210
    %v1212 = vpop.f32.mrb[0].mxu0
    %v1213 = vpop.f32.mrb[0].mxu0
    %v1214 = vpop.f32.mrb[0].mxu0
    %1215 = vdwg.mxu0
    %1216 = vrot.lane.b32.xlu0 %v880, 32
    %v1217 = vpop.permute.xlu0 %1216
    %1218 = vrot.lane.b32.xlu0 %v882, 32
    %v1219 = vpop.permute.xlu0 %1218
    %v1221 = vsel %vm886, %v1217, 0
    %v1224 = vsel %vm886, %v1219, 0
    %1226 = vmatprep.subr.bf16.mxu0 0
    %1227 = vmatpush1.bf16.xpose.msra.mxu0 %v1224
    %1228 = vmatprep.subr.bf16.mxu0 0
    %1229 = vmatpush1.bf16.xpose.msra.mxu0 0
    %1230 = vmatprep.subr.bf16.mxu0 0
    %1231 = vmatpush1.bf16.xpose.msra.mxu0 0
    %1232 = vmatprep.subr.bf16.mxu0 0
    %1233 = vmatpush1.bf16.xpose.msra.mxu0 0
    %1234 = vmatprep.subr.bf16.mxu0 0
    %1235 = vmatpush1.bf16.xpose.msra.mxu0 0
    %1236 = vmatprep.subr.bf16.mxu0 0
    %1237 = vmatpush1.bf16.xpose.msra.mxu0 0
    %1238 = vmatprep.subr.bf16.mxu0 0
    %1239 = vmatpush1.bf16.xpose.msra.mxu0 0
    %1240 = vmatprep.subr.bf16.mxu0 0
    %1241 = vmatpush1.bf16.xpose.msra.mxu0 0
    %1242 = vmatprep.subr.bf16.mxu0 0
    %1243 = vmatpush1.bf16.xpose.msra.mxu0 0
    %1244 = vmatprep.subr.bf16.mxu0 0
    %1245 = vmatpush1.bf16.xpose.msra.mxu0 0
    %1246 = vmatprep.subr.bf16.mxu0 0
    %1247 = vmatpush1.bf16.xpose.msra.mxu0 0
    %1248 = vmatprep.subr.bf16.mxu0 0
    %1249 = vmatpush1.bf16.xpose.msra.mxu0 0
    %1250 = vmatprep.subr.bf16.mxu0 0
    %1251 = vmatpush1.bf16.xpose.msra.mxu0 0
    %1252 = vmatprep.subr.bf16.mxu0 0
    %1253 = vmatpush1.bf16.xpose.msra.mxu0 0
    %1254 = vmatprep.subr.bf16.mxu0 0
    %1255 = vmatpush1.bf16.xpose.msra.mxu0 0
    %1256 = vmatprep.subr.bf16.mxu0 0
    %1257 = vmatpush1.bf16.xpose.msra.mxu0 0
    %1258 = vmatprep.mubr.bf16.mxu0 0
    %1259 = vmatmul.mubr.bf16.gmra.mrb[0].mxu0 %v1221
    %v1260 = vpop.f32.mrb[0].mxu0
    %v1261 = vadd.f32 0.0, %v1260
    %v1262 = vpop.f32.mrb[0].mxu0
    %v1263 = vpop.f32.mrb[0].mxu0
    %v1264 = vpop.f32.mrb[0].mxu0
    %1265 = vdwg.mxu0
    %v1266 = vsel %vm933, %v1261, -inf
    %1267 = vmax.xlane.f32.xlu0 %v1266
    %v1268 = vpop.xlane.xlu0 %1267
    %v1269 = vsub.f32 %v1261, %v1268
    %v1270 = vmul.f32 %v1269, 1.442695
    %v1271 = vpow.pop %v1270
    %v1272 = vsel %vm933, %v1271, 0.0
    %1273 = vadd.xlane.f32.xlu0 %v1272
    %v1274 = vpop.xlane.xlu0 %1273
    %v1275 = vrcp.pop %v1274
    %v1276 = vmul.f32 %v1271, %v1275
    %v1277 = vpack.c.bf16 %v1276, %v1276
    %1278 = vrot.lane.b32.xlu0 %v884, 32
    %v1279 = vpop.permute.xlu0 %1278
    %v1281 = vsel %vm933, %v1277, 0
    %v1284 = vsel %vm949, %v1279, 0
    %1286 = vmatprep.subr.bf16.mxu0 0
    %1287 = vmatpush1.bf16.msra.mxu0 %v1284
    %1288 = vmatprep.subr.bf16.mxu0 0
    %1289 = vmatpush1.bf16.msra.mxu0 0
    %1290 = vmatprep.subr.bf16.mxu0 0
    %1291 = vmatpush1.bf16.msra.mxu0 0
    %1292 = vmatprep.subr.bf16.mxu0 0
    %1293 = vmatpush1.bf16.msra.mxu0 0
    %1294 = vmatprep.subr.bf16.mxu0 0
    %1295 = vmatpush1.bf16.msra.mxu0 0
    %1296 = vmatprep.subr.bf16.mxu0 0
    %1297 = vmatpush1.bf16.msra.mxu0 0
    %1298 = vmatprep.subr.bf16.mxu0 0
    %1299 = vmatpush1.bf16.msra.mxu0 0
    %1300 = vmatprep.subr.bf16.mxu0 0
    %1301 = vmatpush1.bf16.msra.mxu0 0
    %1302 = vmatprep.subr.bf16.mxu0 0
    %1303 = vmatpush1.bf16.msra.mxu0 0
    %1304 = vmatprep.subr.bf16.mxu0 0
    %1305 = vmatpush1.bf16.msra.mxu0 0
    %1306 = vmatprep.subr.bf16.mxu0 0
    %1307 = vmatpush1.bf16.msra.mxu0 0
    %1308 = vmatprep.subr.bf16.mxu0 0
    %1309 = vmatpush1.bf16.msra.mxu0 0
    %1310 = vmatprep.subr.bf16.mxu0 0
    %1311 = vmatpush1.bf16.msra.mxu0 0
    %1312 = vmatprep.subr.bf16.mxu0 0
    %1313 = vmatpush1.bf16.msra.mxu0 0
    %1314 = vmatprep.subr.bf16.mxu0 0
    %1315 = vmatpush1.bf16.msra.mxu0 0
    %1316 = vmatprep.subr.bf16.mxu0 0
    %1317 = vmatpush1.bf16.msra.mxu0 0
    %1318 = vmatprep.mubr.bf16.mxu0 0
    %1319 = vmatmul.mubr.bf16.gmra.mrb[0].mxu0 %v1281
    %v1320 = vpop.f32.mrb[0].mxu0
    %v1321 = vadd.f32 0.0, %v1320
    %v1322 = vpop.f32.mrb[0].mxu0
    %v1323 = vpop.f32.mrb[0].mxu0
    %v1324 = vpop.f32.mrb[0].mxu0
    %1325 = vdwg.mxu0
    %v1327 = vsel %vm886, %v881, 0
    %v1330 = vsel %vm886, %v883, 0
    %1332 = vmatprep.subr.bf16.mxu0 0
    %1333 = vmatpush1.bf16.xpose.msra.mxu0 %v1330
    %1334 = vmatprep.subr.bf16.mxu0 0
    %1335 = vmatpush1.bf16.xpose.msra.mxu0 0
    %1336 = vmatprep.subr.bf16.mxu0 0
    %1337 = vmatpush1.bf16.xpose.msra.mxu0 0
    %1338 = vmatprep.subr.bf16.mxu0 0
    %1339 = vmatpush1.bf16.xpose.msra.mxu0 0
    %1340 = vmatprep.subr.bf16.mxu0 0
    %1341 = vmatpush1.bf16.xpose.msra.mxu0 0
    %1342 = vmatprep.subr.bf16.mxu0 0
    %1343 = vmatpush1.bf16.xpose.msra.mxu0 0
    %1344 = vmatprep.subr.bf16.mxu0 0
    %1345 = vmatpush1.bf16.xpose.msra.mxu0 0
    %1346 = vmatprep.subr.bf16.mxu0 0
    %1347 = vmatpush1.bf16.xpose.msra.mxu0 0
    %1348 = vmatprep.subr.bf16.mxu0 0
    %1349 = vmatpush1.bf16.xpose.msra.mxu0 0
    %1350 = vmatprep.subr.bf16.mxu0 0
    %1351 = vmatpush1.bf16.xpose.msra.mxu0 0
    %1352 = vmatprep.subr.bf16.mxu0 0
    %1353 = vmatpush1.bf16.xpose.msra.mxu0 0
    %1354 = vmatprep.subr.bf16.mxu0 0
    %1355 = vmatpush1.bf16.xpose.msra.mxu0 0
    %1356 = vmatprep.subr.bf16.mxu0 0
    %1357 = vmatpush1.bf16.xpose.msra.mxu0 0
    %1358 = vmatprep.subr.bf16.mxu0 0
    %1359 = vmatpush1.bf16.xpose.msra.mxu0 0
    %1360 = vmatprep.subr.bf16.mxu0 0
    %1361 = vmatpush1.bf16.xpose.msra.mxu0 0
    %1362 = vmatprep.subr.bf16.mxu0 0
    %1363 = vmatpush1.bf16.xpose.msra.mxu0 0
    %1364 = vmatprep.mubr.bf16.mxu0 0
    %1365 = vmatmul.mubr.bf16.gmra.mrb[0].mxu0 %v1327
    %v1366 = vpop.f32.mrb[0].mxu0
    %v1367 = vadd.f32 0.0, %v1366
    %v1368 = vpop.f32.mrb[0].mxu0
    %v1369 = vpop.f32.mrb[0].mxu0
    %v1370 = vpop.f32.mrb[0].mxu0
    %1371 = vdwg.mxu0
    %v1372 = vsel %vm933, %v1367, -inf
    %1373 = vmax.xlane.f32.xlu0 %v1372
    %v1374 = vpop.xlane.xlu0 %1373
    %v1375 = vsub.f32 %v1367, %v1374
    %v1376 = vmul.f32 %v1375, 1.442695
    %v1377 = vpow.pop %v1376
    %v1378 = vsel %vm933, %v1377, 0.0
    %1379 = vadd.xlane.f32.xlu0 %v1378
    %v1380 = vpop.xlane.xlu0 %1379
    %v1381 = vrcp.pop %v1380
    %v1382 = vmul.f32 %v1377, %v1381
    %v1383 = vpack.c.bf16 %v1382, %v1382
    %v1385 = vsel %vm933, %v1383, 0
    %v1388 = vsel %vm949, %v885, 0
    %1390 = vmatprep.subr.bf16.mxu0 0
    %1391 = vmatpush1.bf16.msra.mxu0 %v1388
    %1392 = vmatprep.subr.bf16.mxu0 0
    %1393 = vmatpush1.bf16.msra.mxu0 0
    %1394 = vmatprep.subr.bf16.mxu0 0
    %1395 = vmatpush1.bf16.msra.mxu0 0
    %1396 = vmatprep.subr.bf16.mxu0 0
    %1397 = vmatpush1.bf16.msra.mxu0 0
    %1398 = vmatprep.subr.bf16.mxu0 0
    %1399 = vmatpush1.bf16.msra.mxu0 0
    %1400 = vmatprep.subr.bf16.mxu0 0
    %1401 = vmatpush1.bf16.msra.mxu0 0
    %1402 = vmatprep.subr.bf16.mxu0 0
    %1403 = vmatpush1.bf16.msra.mxu0 0
    %1404 = vmatprep.subr.bf16.mxu0 0
    %1405 = vmatpush1.bf16.msra.mxu0 0
    %1406 = vmatprep.subr.bf16.mxu0 0
    %1407 = vmatpush1.bf16.msra.mxu0 0
    %1408 = vmatprep.subr.bf16.mxu0 0
    %1409 = vmatpush1.bf16.msra.mxu0 0
    %1410 = vmatprep.subr.bf16.mxu0 0
    %1411 = vmatpush1.bf16.msra.mxu0 0
    %1412 = vmatprep.subr.bf16.mxu0 0
    %1413 = vmatpush1.bf16.msra.mxu0 0
    %1414 = vmatprep.subr.bf16.mxu0 0
    %1415 = vmatpush1.bf16.msra.mxu0 0
    %1416 = vmatprep.subr.bf16.mxu0 0
    %1417 = vmatpush1.bf16.msra.mxu0 0
    %1418 = vmatprep.subr.bf16.mxu0 0
    %1419 = vmatpush1.bf16.msra.mxu0 0
    %1420 = vmatprep.subr.bf16.mxu0 0
    %1421 = vmatpush1.bf16.msra.mxu0 0
    %1422 = vmatprep.mubr.bf16.mxu0 0
    %1423 = vmatmul.mubr.bf16.gmra.mrb[0].mxu0 %v1385
    %v1424 = vpop.f32.mrb[0].mxu0
    %v1425 = vadd.f32 0.0, %v1424
    %v1426 = vpop.f32.mrb[0].mxu0
    %v1427 = vpop.f32.mrb[0].mxu0
    %v1428 = vpop.f32.mrb[0].mxu0
    %1429 = vdwg.mxu0
    %1431 = vrot.lane.b32.xlu0 %v881, 96
    %v1432 = vpop.permute.xlu0 %1431
    %1434 = vrot.lane.b32.xlu0 %v883, 96
    %v1435 = vpop.permute.xlu0 %1434
    %v1437 = vsel %vm886, %v1432, 0
    %v1440 = vsel %vm886, %v1435, 0
    %1442 = vmatprep.subr.bf16.mxu0 0
    %1443 = vmatpush1.bf16.xpose.msra.mxu0 %v1440
    %1444 = vmatprep.subr.bf16.mxu0 0
    %1445 = vmatpush1.bf16.xpose.msra.mxu0 0
    %1446 = vmatprep.subr.bf16.mxu0 0
    %1447 = vmatpush1.bf16.xpose.msra.mxu0 0
    %1448 = vmatprep.subr.bf16.mxu0 0
    %1449 = vmatpush1.bf16.xpose.msra.mxu0 0
    %1450 = vmatprep.subr.bf16.mxu0 0
    %1451 = vmatpush1.bf16.xpose.msra.mxu0 0
    %1452 = vmatprep.subr.bf16.mxu0 0
    %1453 = vmatpush1.bf16.xpose.msra.mxu0 0
    %1454 = vmatprep.subr.bf16.mxu0 0
    %1455 = vmatpush1.bf16.xpose.msra.mxu0 0
    %1456 = vmatprep.subr.bf16.mxu0 0
    %1457 = vmatpush1.bf16.xpose.msra.mxu0 0
    %1458 = vmatprep.subr.bf16.mxu0 0
    %1459 = vmatpush1.bf16.xpose.msra.mxu0 0
    %1460 = vmatprep.subr.bf16.mxu0 0
    %1461 = vmatpush1.bf16.xpose.msra.mxu0 0
    %1462 = vmatprep.subr.bf16.mxu0 0
    %1463 = vmatpush1.bf16.xpose.msra.mxu0 0
    %1464 = vmatprep.subr.bf16.mxu0 0
    %1465 = vmatpush1.bf16.xpose.msra.mxu0 0
    %1466 = vmatprep.subr.bf16.mxu0 0
    %1467 = vmatpush1.bf16.xpose.msra.mxu0 0
    %1468 = vmatprep.subr.bf16.mxu0 0
    %1469 = vmatpush1.bf16.xpose.msra.mxu0 0
    %1470 = vmatprep.subr.bf16.mxu0 0
    %1471 = vmatpush1.bf16.xpose.msra.mxu0 0
    %1472 = vmatprep.subr.bf16.mxu0 0
    %1473 = vmatpush1.bf16.xpose.msra.mxu0 0
    %1474 = vmatprep.mubr.bf16.mxu0 0
    %1475 = vmatmul.mubr.bf16.gmra.mrb[0].mxu0 %v1437
    %v1476 = vpop.f32.mrb[0].mxu0
    %v1477 = vadd.f32 0.0, %v1476
    %v1478 = vpop.f32.mrb[0].mxu0
    %v1479 = vpop.f32.mrb[0].mxu0
    %v1480 = vpop.f32.mrb[0].mxu0
    %1481 = vdwg.mxu0
    %v1482 = vsel %vm933, %v1477, -inf
    %1483 = vmax.xlane.f32.xlu0 %v1482
    %v1484 = vpop.xlane.xlu0 %1483
    %v1485 = vsub.f32 %v1477, %v1484
    %v1486 = vmul.f32 %v1485, 1.442695
    %v1487 = vpow.pop %v1486
    %v1488 = vsel %vm933, %v1487, 0.0
    %1489 = vadd.xlane.f32.xlu0 %v1488
    %v1490 = vpop.xlane.xlu0 %1489
    %v1491 = vrcp.pop %v1490
    %v1492 = vmul.f32 %v1487, %v1491
    %v1493 = vpack.c.bf16 %v1492, %v1492
    %1495 = vrot.lane.b32.xlu0 %v885, 96
    %v1496 = vpop.permute.xlu0 %1495
    %v1498 = vsel %vm933, %v1493, 0
    %v1501 = vsel %vm949, %v1496, 0
    %1503 = vmatprep.subr.bf16.mxu0 0
    %1504 = vmatpush1.bf16.msra.mxu0 %v1501
    %1505 = vmatprep.subr.bf16.mxu0 0
    %1506 = vmatpush1.bf16.msra.mxu0 0
    %1507 = vmatprep.subr.bf16.mxu0 0
    %1508 = vmatpush1.bf16.msra.mxu0 0
    %1509 = vmatprep.subr.bf16.mxu0 0
    %1510 = vmatpush1.bf16.msra.mxu0 0
    %1511 = vmatprep.subr.bf16.mxu0 0
    %1512 = vmatpush1.bf16.msra.mxu0 0
    %1513 = vmatprep.subr.bf16.mxu0 0
    %1514 = vmatpush1.bf16.msra.mxu0 0
    %1515 = vmatprep.subr.bf16.mxu0 0
    %1516 = vmatpush1.bf16.msra.mxu0 0
    %1517 = vmatprep.subr.bf16.mxu0 0
    %1518 = vmatpush1.bf16.msra.mxu0 0
    %1519 = vmatprep.subr.bf16.mxu0 0
    %1520 = vmatpush1.bf16.msra.mxu0 0
    %1521 = vmatprep.subr.bf16.mxu0 0
    %1522 = vmatpush1.bf16.msra.mxu0 0
    %1523 = vmatprep.subr.bf16.mxu0 0
    %1524 = vmatpush1.bf16.msra.mxu0 0
    %1525 = vmatprep.subr.bf16.mxu0 0
    %1526 = vmatpush1.bf16.msra.mxu0 0
    %1527 = vmatprep.subr.bf16.mxu0 0
    %1528 = vmatpush1.bf16.msra.mxu0 0
    %1529 = vmatprep.subr.bf16.mxu0 0
    %1530 = vmatpush1.bf16.msra.mxu0 0
    %1531 = vmatprep.subr.bf16.mxu0 0
    %1532 = vmatpush1.bf16.msra.mxu0 0
    %1533 = vmatprep.subr.bf16.mxu0 0
    %1534 = vmatpush1.bf16.msra.mxu0 0
    %1535 = vmatprep.mubr.bf16.mxu0 0
    %1536 = vmatmul.mubr.bf16.gmra.mrb[0].mxu0 %v1498
    %v1537 = vpop.f32.mrb[0].mxu0
    %v1538 = vadd.f32 0.0, %v1537
    %v1539 = vpop.f32.mrb[0].mxu0
    %v1540 = vpop.f32.mrb[0].mxu0
    %v1541 = vpop.f32.mrb[0].mxu0
    %1542 = vdwg.mxu0
    %1543 = vrot.lane.b32.xlu0 %v881, 64
    %v1544 = vpop.permute.xlu0 %1543
    %1545 = vrot.lane.b32.xlu0 %v883, 64
    %v1546 = vpop.permute.xlu0 %1545
    %v1548 = vsel %vm886, %v1544, 0
    %v1551 = vsel %vm886, %v1546, 0
    %1553 = vmatprep.subr.bf16.mxu0 0
    %1554 = vmatpush1.bf16.xpose.msra.mxu0 %v1551
    %1555 = vmatprep.subr.bf16.mxu0 0
    %1556 = vmatpush1.bf16.xpose.msra.mxu0 0
    %1557 = vmatprep.subr.bf16.mxu0 0
    %1558 = vmatpush1.bf16.xpose.msra.mxu0 0
    %1559 = vmatprep.subr.bf16.mxu0 0
    %1560 = vmatpush1.bf16.xpose.msra.mxu0 0
    %1561 = vmatprep.subr.bf16.mxu0 0
    %1562 = vmatpush1.bf16.xpose.msra.mxu0 0
    %1563 = vmatprep.subr.bf16.mxu0 0
    %1564 = vmatpush1.bf16.xpose.msra.mxu0 0
    %1565 = vmatprep.subr.bf16.mxu0 0
    %1566 = vmatpush1.bf16.xpose.msra.mxu0 0
    %1567 = vmatprep.subr.bf16.mxu0 0
    %1568 = vmatpush1.bf16.xpose.msra.mxu0 0
    %1569 = vmatprep.subr.bf16.mxu0 0
    %1570 = vmatpush1.bf16.xpose.msra.mxu0 0
    %1571 = vmatprep.subr.bf16.mxu0 0
    %1572 = vmatpush1.bf16.xpose.msra.mxu0 0
    %1573 = vmatprep.subr.bf16.mxu0 0
    %1574 = vmatpush1.bf16.xpose.msra.mxu0 0
    %1575 = vmatprep.subr.bf16.mxu0 0
    %1576 = vmatpush1.bf16.xpose.msra.mxu0 0
    %1577 = vmatprep.subr.bf16.mxu0 0
    %1578 = vmatpush1.bf16.xpose.msra.mxu0 0
    %1579 = vmatprep.subr.bf16.mxu0 0
    %1580 = vmatpush1.bf16.xpose.msra.mxu0 0
    %1581 = vmatprep.subr.bf16.mxu0 0
    %1582 = vmatpush1.bf16.xpose.msra.mxu0 0
    %1583 = vmatprep.subr.bf16.mxu0 0
    %1584 = vmatpush1.bf16.xpose.msra.mxu0 0
    %1585 = vmatprep.mubr.bf16.mxu0 0
    %1586 = vmatmul.mubr.bf16.gmra.mrb[0].mxu0 %v1548
    %v1587 = vpop.f32.mrb[0].mxu0
    %v1588 = vadd.f32 0.0, %v1587
    %v1589 = vpop.f32.mrb[0].mxu0
    %v1590 = vpop.f32.mrb[0].mxu0
    %v1591 = vpop.f32.mrb[0].mxu0
    %1592 = vdwg.mxu0
    %v1593 = vsel %vm933, %v1588, -inf
    %1594 = vmax.xlane.f32.xlu0 %v1593
    %v1595 = vpop.xlane.xlu0 %1594
    %v1596 = vsub.f32 %v1588, %v1595
    %v1597 = vmul.f32 %v1596, 1.442695
    %v1598 = vpow.pop %v1597
    %v1599 = vsel %vm933, %v1598, 0.0
    %1600 = vadd.xlane.f32.xlu0 %v1599
    %v1601 = vpop.xlane.xlu0 %1600
    %v1602 = vrcp.pop %v1601
    %v1603 = vmul.f32 %v1598, %v1602
    %v1604 = vpack.c.bf16 %v1603, %v1603
    %1605 = vrot.lane.b32.xlu0 %v885, 64
    %v1606 = vpop.permute.xlu0 %1605
    %v1608 = vsel %vm933, %v1604, 0
    %v1611 = vsel %vm949, %v1606, 0
    %1613 = vmatprep.subr.bf16.mxu0 0
    %1614 = vmatpush1.bf16.msra.mxu0 %v1611
    %1615 = vmatprep.subr.bf16.mxu0 0
    %1616 = vmatpush1.bf16.msra.mxu0 0
    %1617 = vmatprep.subr.bf16.mxu0 0
    %1618 = vmatpush1.bf16.msra.mxu0 0
    %1619 = vmatprep.subr.bf16.mxu0 0
    %1620 = vmatpush1.bf16.msra.mxu0 0
    %1621 = vmatprep.subr.bf16.mxu0 0
    %1622 = vmatpush1.bf16.msra.mxu0 0
    %1623 = vmatprep.subr.bf16.mxu0 0
    %1624 = vmatpush1.bf16.msra.mxu0 0
    %1625 = vmatprep.subr.bf16.mxu0 0
    %1626 = vmatpush1.bf16.msra.mxu0 0
    %1627 = vmatprep.subr.bf16.mxu0 0
    %1628 = vmatpush1.bf16.msra.mxu0 0
    %1629 = vmatprep.subr.bf16.mxu0 0
    %1630 = vmatpush1.bf16.msra.mxu0 0
    %1631 = vmatprep.subr.bf16.mxu0 0
    %1632 = vmatpush1.bf16.msra.mxu0 0
    %1633 = vmatprep.subr.bf16.mxu0 0
    %1634 = vmatpush1.bf16.msra.mxu0 0
    %1635 = vmatprep.subr.bf16.mxu0 0
    %1636 = vmatpush1.bf16.msra.mxu0 0
    %1637 = vmatprep.subr.bf16.mxu0 0
    %1638 = vmatpush1.bf16.msra.mxu0 0
    %1639 = vmatprep.subr.bf16.mxu0 0
    %1640 = vmatpush1.bf16.msra.mxu0 0
    %1641 = vmatprep.subr.bf16.mxu0 0
    %1642 = vmatpush1.bf16.msra.mxu0 0
    %1643 = vmatprep.subr.bf16.mxu0 0
    %1644 = vmatpush1.bf16.msra.mxu0 0
    %1645 = vmatprep.mubr.bf16.mxu0 0
    %1646 = vmatmul.mubr.bf16.gmra.mrb[0].mxu0 %v1608
    %v1647 = vpop.f32.mrb[0].mxu0
    %v1648 = vadd.f32 0.0, %v1647
    %v1649 = vpop.f32.mrb[0].mxu0
    %v1650 = vpop.f32.mrb[0].mxu0
    %v1651 = vpop.f32.mrb[0].mxu0
    %1652 = vdwg.mxu0
    %1653 = vrot.lane.b32.xlu0 %v881, 32
    %v1654 = vpop.permute.xlu0 %1653
    %1655 = vrot.lane.b32.xlu0 %v883, 32
    %v1656 = vpop.permute.xlu0 %1655
    %v1658 = vsel %vm886, %v1654, 0
    %v1661 = vsel %vm886, %v1656, 0
    %1663 = vmatprep.subr.bf16.mxu0 0
    %1664 = vmatpush1.bf16.xpose.msra.mxu0 %v1661
    %1665 = vmatprep.subr.bf16.mxu0 0
    %1666 = vmatpush1.bf16.xpose.msra.mxu0 0
    %1667 = vmatprep.subr.bf16.mxu0 0
    %1668 = vmatpush1.bf16.xpose.msra.mxu0 0
    %1669 = vmatprep.subr.bf16.mxu0 0
    %1670 = vmatpush1.bf16.xpose.msra.mxu0 0
    %1671 = vmatprep.subr.bf16.mxu0 0
    %1672 = vmatpush1.bf16.xpose.msra.mxu0 0
    %1673 = vmatprep.subr.bf16.mxu0 0
    %1674 = vmatpush1.bf16.xpose.msra.mxu0 0
    %1675 = vmatprep.subr.bf16.mxu0 0
    %1676 = vmatpush1.bf16.xpose.msra.mxu0 0
    %1677 = vmatprep.subr.bf16.mxu0 0
    %1678 = vmatpush1.bf16.xpose.msra.mxu0 0
    %1679 = vmatprep.subr.bf16.mxu0 0
    %1680 = vmatpush1.bf16.xpose.msra.mxu0 0
    %1681 = vmatprep.subr.bf16.mxu0 0
    %1682 = vmatpush1.bf16.xpose.msra.mxu0 0
    %1683 = vmatprep.subr.bf16.mxu0 0
    %1684 = vmatpush1.bf16.xpose.msra.mxu0 0
    %1685 = vmatprep.subr.bf16.mxu0 0
    %1686 = vmatpush1.bf16.xpose.msra.mxu0 0
    %1687 = vmatprep.subr.bf16.mxu0 0
    %1688 = vmatpush1.bf16.xpose.msra.mxu0 0
    %1689 = vmatprep.subr.bf16.mxu0 0
    %1690 = vmatpush1.bf16.xpose.msra.mxu0 0
    %1691 = vmatprep.subr.bf16.mxu0 0
    %1692 = vmatpush1.bf16.xpose.msra.mxu0 0
    %1693 = vmatprep.subr.bf16.mxu0 0
    %1694 = vmatpush1.bf16.xpose.msra.mxu0 0
    %1695 = vmatprep.mubr.bf16.mxu0 0
    %1696 = vmatmul.mubr.bf16.gmra.mrb[0].mxu0 %v1658
    %v1697 = vpop.f32.mrb[0].mxu0
    %v1698 = vadd.f32 0.0, %v1697
    %v1699 = vpop.f32.mrb[0].mxu0
    %v1700 = vpop.f32.mrb[0].mxu0
    %v1701 = vpop.f32.mrb[0].mxu0
    %1702 = vdwg.mxu0
    %v1703 = vsel %vm933, %v1698, -inf
    %1704 = vmax.xlane.f32.xlu0 %v1703
    %v1705 = vpop.xlane.xlu0 %1704
    %v1706 = vsub.f32 %v1698, %v1705
    %v1707 = vmul.f32 %v1706, 1.442695
    %v1708 = vpow.pop %v1707
    %v1709 = vsel %vm933, %v1708, 0.0
    %1710 = vadd.xlane.f32.xlu0 %v1709
    %v1711 = vpop.xlane.xlu0 %1710
    %v1712 = vrcp.pop %v1711
    %v1713 = vmul.f32 %v1708, %v1712
    %v1714 = vpack.c.bf16 %v1713, %v1713
    %1715 = vrot.lane.b32.xlu0 %v885, 32
    %v1716 = vpop.permute.xlu0 %1715
    %v1718 = vsel %vm933, %v1714, 0
    %v1721 = vsel %vm949, %v1716, 0
    %1723 = vmatprep.subr.bf16.mxu0 0
    %1724 = vmatpush1.bf16.msra.mxu0 %v1721
    %1725 = vmatprep.subr.bf16.mxu0 0
    %1726 = vmatpush1.bf16.msra.mxu0 0
    %1727 = vmatprep.subr.bf16.mxu0 0
    %1728 = vmatpush1.bf16.msra.mxu0 0
    %1729 = vmatprep.subr.bf16.mxu0 0
    %1730 = vmatpush1.bf16.msra.mxu0 0
    %1731 = vmatprep.subr.bf16.mxu0 0
    %1732 = vmatpush1.bf16.msra.mxu0 0
    %1733 = vmatprep.subr.bf16.mxu0 0
    %1734 = vmatpush1.bf16.msra.mxu0 0
    %1735 = vmatprep.subr.bf16.mxu0 0
    %1736 = vmatpush1.bf16.msra.mxu0 0
    %1737 = vmatprep.subr.bf16.mxu0 0
    %1738 = vmatpush1.bf16.msra.mxu0 0
    %1739 = vmatprep.subr.bf16.mxu0 0
    %1740 = vmatpush1.bf16.msra.mxu0 0
    %1741 = vmatprep.subr.bf16.mxu0 0
    %1742 = vmatpush1.bf16.msra.mxu0 0
    %1743 = vmatprep.subr.bf16.mxu0 0
    %1744 = vmatpush1.bf16.msra.mxu0 0
    %1745 = vmatprep.subr.bf16.mxu0 0
    %1746 = vmatpush1.bf16.msra.mxu0 0
    %1747 = vmatprep.subr.bf16.mxu0 0
    %1748 = vmatpush1.bf16.msra.mxu0 0
    %1749 = vmatprep.subr.bf16.mxu0 0
    %1750 = vmatpush1.bf16.msra.mxu0 0
    %1751 = vmatprep.subr.bf16.mxu0 0
    %1752 = vmatpush1.bf16.msra.mxu0 0
    %1753 = vmatprep.subr.bf16.mxu0 0
    %1754 = vmatpush1.bf16.msra.mxu0 0
    %1755 = vmatprep.mubr.bf16.mxu0 0
    %1756 = vmatmul.mubr.bf16.gmra.mrb[0].mxu0 %v1718
    %v1757 = vpop.f32.mrb[0].mxu0
    %v1758 = vadd.f32 0.0, %v1757
    %v1759 = vpop.f32.mrb[0].mxu0
    %v1760 = vpop.f32.mrb[0].mxu0
    %v1761 = vpop.f32.mrb[0].mxu0
    %1762 = vdwg.mxu0
    %1764 = vrot.lane.b32.xlu0 %v1101, 32
    %v1765 = vpop.permute.xlu0 %1764
    %1768 = vrot.lane.b32.xlu0 %v1211, 64
    %v1769 = vpop.permute.xlu0 %1768
    %1772 = vrot.lane.b32.xlu0 %v1321, 96
    %v1773 = vpop.permute.xlu0 %1772
    %1776 = vrot.lane.b32.xlu0 %v1538, 32
    %v1777 = vpop.permute.xlu0 %1776
    %1780 = vrot.lane.b32.xlu0 %v1648, 64
    %v1781 = vpop.permute.xlu0 %1780
    %1784 = vrot.lane.b32.xlu0 %v1758, 96
    %v1785 = vpop.permute.xlu0 %1784
    %v1787 = vsel %vm886, %v988, %v1765
    %vm1788 = vcmask 523264
    %v1789 = vsel %vm1788, %v1787, %v1769
    %vm1790 = vcmask 785408
    %v1791 = vsel %vm1790, %v1789, %v1773
    %v1792 = vsel %vm886, %v1425, %v1777
    %v1793 = vsel %vm1788, %v1792, %v1781
    %v1794 = vsel %vm1790, %v1793, %v1785
    %v1795 = vrot.slane %v880, 4
    %v1796 = vrot.slane %v882, 4
    %v1798 = vsel %vm886, %v1795, 0
    %v1801 = vsel %vm886, %v1796, 0
    %1803 = vmatprep.subr.bf16.mxu0 0
    %1804 = vmatpush1.bf16.xpose.msra.mxu0 %v1801
    %1805 = vmatprep.subr.bf16.mxu0 0
    %1806 = vmatpush1.bf16.xpose.msra.mxu0 0
    %1807 = vmatprep.subr.bf16.mxu0 0
    %1808 = vmatpush1.bf16.xpose.msra.mxu0 0
    %1809 = vmatprep.subr.bf16.mxu0 0
    %1810 = vmatpush1.bf16.xpose.msra.mxu0 0
    %1811 = vmatprep.subr.bf16.mxu0 0
    %1812 = vmatpush1.bf16.xpose.msra.mxu0 0
    %1813 = vmatprep.subr.bf16.mxu0 0
    %1814 = vmatpush1.bf16.xpose.msra.mxu0 0
    %1815 = vmatprep.subr.bf16.mxu0 0
    %1816 = vmatpush1.bf16.xpose.msra.mxu0 0
    %1817 = vmatprep.subr.bf16.mxu0 0
    %1818 = vmatpush1.bf16.xpose.msra.mxu0 0
    %1819 = vmatprep.subr.bf16.mxu0 0
    %1820 = vmatpush1.bf16.xpose.msra.mxu0 0
    %1821 = vmatprep.subr.bf16.mxu0 0
    %1822 = vmatpush1.bf16.xpose.msra.mxu0 0
    %1823 = vmatprep.subr.bf16.mxu0 0
    %1824 = vmatpush1.bf16.xpose.msra.mxu0 0
    %1825 = vmatprep.subr.bf16.mxu0 0
    %1826 = vmatpush1.bf16.xpose.msra.mxu0 0
    %1827 = vmatprep.subr.bf16.mxu0 0
    %1828 = vmatpush1.bf16.xpose.msra.mxu0 0
    %1829 = vmatprep.subr.bf16.mxu0 0
    %1830 = vmatpush1.bf16.xpose.msra.mxu0 0
    %1831 = vmatprep.subr.bf16.mxu0 0
    %1832 = vmatpush1.bf16.xpose.msra.mxu0 0
    %1833 = vmatprep.subr.bf16.mxu0 0
    %1834 = vmatpush1.bf16.xpose.msra.mxu0 0
    %1835 = vmatprep.mubr.bf16.mxu0 0
    %1836 = vmatmul.mubr.bf16.gmra.mrb[0].mxu0 %v1798
    %v1837 = vpop.f32.mrb[0].mxu0
    %v1838 = vadd.f32 0.0, %v1837
    %v1839 = vpop.f32.mrb[0].mxu0
    %v1840 = vpop.f32.mrb[0].mxu0
    %v1841 = vpop.f32.mrb[0].mxu0
    %1842 = vdwg.mxu0
    %v1843 = vsel %vm933, %v1838, -inf
    %1844 = vmax.xlane.f32.xlu0 %v1843
    %v1845 = vpop.xlane.xlu0 %1844
    %v1846 = vsub.f32 %v1838, %v1845
    %v1847 = vmul.f32 %v1846, 1.442695
    %v1848 = vpow.pop %v1847
    %v1849 = vsel %vm933, %v1848, 0.0
    %1850 = vadd.xlane.f32.xlu0 %v1849
    %v1851 = vpop.xlane.xlu0 %1850
    %v1852 = vrcp.pop %v1851
    %v1853 = vmul.f32 %v1848, %v1852
    %v1854 = vpack.c.bf16 %v1853, %v1853
    %v1855 = vrot.slane %v884, 4
    %v1857 = vsel %vm933, %v1854, 0
    %v1860 = vsel %vm949, %v1855, 0
    %1862 = vmatprep.subr.bf16.mxu0 0
    %1863 = vmatpush1.bf16.msra.mxu0 %v1860
    %1864 = vmatprep.subr.bf16.mxu0 0
    %1865 = vmatpush1.bf16.msra.mxu0 0
    %1866 = vmatprep.subr.bf16.mxu0 0
    %1867 = vmatpush1.bf16.msra.mxu0 0
    %1868 = vmatprep.subr.bf16.mxu0 0
    %1869 = vmatpush1.bf16.msra.mxu0 0
    %1870 = vmatprep.subr.bf16.mxu0 0
    %1871 = vmatpush1.bf16.msra.mxu0 0
    %1872 = vmatprep.subr.bf16.mxu0 0
    %1873 = vmatpush1.bf16.msra.mxu0 0
    %1874 = vmatprep.subr.bf16.mxu0 0
    %1875 = vmatpush1.bf16.msra.mxu0 0
    %1876 = vmatprep.subr.bf16.mxu0 0
    %1877 = vmatpush1.bf16.msra.mxu0 0
    %1878 = vmatprep.subr.bf16.mxu0 0
    %1879 = vmatpush1.bf16.msra.mxu0 0
    %1880 = vmatprep.subr.bf16.mxu0 0
    %1881 = vmatpush1.bf16.msra.mxu0 0
    %1882 = vmatprep.subr.bf16.mxu0 0
    %1883 = vmatpush1.bf16.msra.mxu0 0
    %1884 = vmatprep.subr.bf16.mxu0 0
    %1885 = vmatpush1.bf16.msra.mxu0 0
    %1886 = vmatprep.subr.bf16.mxu0 0
    %1887 = vmatpush1.bf16.msra.mxu0 0
    %1888 = vmatprep.subr.bf16.mxu0 0
    %1889 = vmatpush1.bf16.msra.mxu0 0
    %1890 = vmatprep.subr.bf16.mxu0 0
    %1891 = vmatpush1.bf16.msra.mxu0 0
    %1892 = vmatprep.subr.bf16.mxu0 0
    %1893 = vmatpush1.bf16.msra.mxu0 0
    %1894 = vmatprep.mubr.bf16.mxu0 0
    %1895 = vmatmul.mubr.bf16.gmra.mrb[0].mxu0 %v1857
    %v1896 = vpop.f32.mrb[0].mxu0
    %v1897 = vadd.f32 0.0, %v1896
    %v1898 = vpop.f32.mrb[0].mxu0
    %v1899 = vpop.f32.mrb[0].mxu0
    %v1900 = vpop.f32.mrb[0].mxu0
    %1901 = vdwg.mxu0
    %1902 = vrot.lane.b32.xlu0 %v1795, 96
    %v1903 = vpop.permute.xlu0 %1902
    %1904 = vrot.lane.b32.xlu0 %v1796, 96
    %v1905 = vpop.permute.xlu0 %1904
    %v1907 = vsel %vm886, %v1903, 0
    %v1910 = vsel %vm886, %v1905, 0
    %1912 = vmatprep.subr.bf16.mxu0 0
    %1913 = vmatpush1.bf16.xpose.msra.mxu0 %v1910
    %1914 = vmatprep.subr.bf16.mxu0 0
    %1915 = vmatpush1.bf16.xpose.msra.mxu0 0
    %1916 = vmatprep.subr.bf16.mxu0 0
    %1917 = vmatpush1.bf16.xpose.msra.mxu0 0
    %1918 = vmatprep.subr.bf16.mxu0 0
    %1919 = vmatpush1.bf16.xpose.msra.mxu0 0
    %1920 = vmatprep.subr.bf16.mxu0 0
    %1921 = vmatpush1.bf16.xpose.msra.mxu0 0
    %1922 = vmatprep.subr.bf16.mxu0 0
    %1923 = vmatpush1.bf16.xpose.msra.mxu0 0
    %1924 = vmatprep.subr.bf16.mxu0 0
    %1925 = vmatpush1.bf16.xpose.msra.mxu0 0
    %1926 = vmatprep.subr.bf16.mxu0 0
    %1927 = vmatpush1.bf16.xpose.msra.mxu0 0
    %1928 = vmatprep.subr.bf16.mxu0 0
    %1929 = vmatpush1.bf16.xpose.msra.mxu0 0
    %1930 = vmatprep.subr.bf16.mxu0 0
    %1931 = vmatpush1.bf16.xpose.msra.mxu0 0
    %1932 = vmatprep.subr.bf16.mxu0 0
    %1933 = vmatpush1.bf16.xpose.msra.mxu0 0
    %1934 = vmatprep.subr.bf16.mxu0 0
    %1935 = vmatpush1.bf16.xpose.msra.mxu0 0
    %1936 = vmatprep.subr.bf16.mxu0 0
    %1937 = vmatpush1.bf16.xpose.msra.mxu0 0
    %1938 = vmatprep.subr.bf16.mxu0 0
    %1939 = vmatpush1.bf16.xpose.msra.mxu0 0
    %1940 = vmatprep.subr.bf16.mxu0 0
    %1941 = vmatpush1.bf16.xpose.msra.mxu0 0
    %1942 = vmatprep.subr.bf16.mxu0 0
    %1943 = vmatpush1.bf16.xpose.msra.mxu0 0
    %1944 = vmatprep.mubr.bf16.mxu0 0
    %1945 = vmatmul.mubr.bf16.gmra.mrb[0].mxu0 %v1907
    %v1946 = vpop.f32.mrb[0].mxu0
    %v1947 = vadd.f32 0.0, %v1946
    %v1948 = vpop.f32.mrb[0].mxu0
    %v1949 = vpop.f32.mrb[0].mxu0
    %v1950 = vpop.f32.mrb[0].mxu0
    %1951 = vdwg.mxu0
    %v1952 = vsel %vm933, %v1947, -inf
    %1953 = vmax.xlane.f32.xlu0 %v1952
    %v1954 = vpop.xlane.xlu0 %1953
    %v1955 = vsub.f32 %v1947, %v1954
    %v1956 = vmul.f32 %v1955, 1.442695
    %v1957 = vpow.pop %v1956
    %v1958 = vsel %vm933, %v1957, 0.0
    %1959 = vadd.xlane.f32.xlu0 %v1958
    %v1960 = vpop.xlane.xlu0 %1959
    %v1961 = vrcp.pop %v1960
    %v1962 = vmul.f32 %v1957, %v1961
    %v1963 = vpack.c.bf16 %v1962, %v1962
    %1964 = vrot.lane.b32.xlu0 %v1855, 96
    %v1965 = vpop.permute.xlu0 %1964
    %v1967 = vsel %vm933, %v1963, 0
    %v1970 = vsel %vm949, %v1965, 0
    %1972 = vmatprep.subr.bf16.mxu0 0
    %1973 = vmatpush1.bf16.msra.mxu0 %v1970
    %1974 = vmatprep.subr.bf16.mxu0 0
    %1975 = vmatpush1.bf16.msra.mxu0 0
    %1976 = vmatprep.subr.bf16.mxu0 0
    %1977 = vmatpush1.bf16.msra.mxu0 0
    %1978 = vmatprep.subr.bf16.mxu0 0
    %1979 = vmatpush1.bf16.msra.mxu0 0
    %1980 = vmatprep.subr.bf16.mxu0 0
    %1981 = vmatpush1.bf16.msra.mxu0 0
    %1982 = vmatprep.subr.bf16.mxu0 0
    %1983 = vmatpush1.bf16.msra.mxu0 0
    %1984 = vmatprep.subr.bf16.mxu0 0
    %1985 = vmatpush1.bf16.msra.mxu0 0
    %1986 = vmatprep.subr.bf16.mxu0 0
    %1987 = vmatpush1.bf16.msra.mxu0 0
    %1988 = vmatprep.subr.bf16.mxu0 0
    %1989 = vmatpush1.bf16.msra.mxu0 0
    %1990 = vmatprep.subr.bf16.mxu0 0
    %1991 = vmatpush1.bf16.msra.mxu0 0
    %1992 = vmatprep.subr.bf16.mxu0 0
    %1993 = vmatpush1.bf16.msra.mxu0 0
    %1994 = vmatprep.subr.bf16.mxu0 0
    %1995 = vmatpush1.bf16.msra.mxu0 0
    %1996 = vmatprep.subr.bf16.mxu0 0
    %1997 = vmatpush1.bf16.msra.mxu0 0
    %1998 = vmatprep.subr.bf16.mxu0 0
    %1999 = vmatpush1.bf16.msra.mxu0 0
    %2000 = vmatprep.subr.bf16.mxu0 0
    %2001 = vmatpush1.bf16.msra.mxu0 0
    %2002 = vmatprep.subr.bf16.mxu0 0
    %2003 = vmatpush1.bf16.msra.mxu0 0
    %2004 = vmatprep.mubr.bf16.mxu0 0
    %2005 = vmatmul.mubr.bf16.gmra.mrb[0].mxu0 %v1967
    %v2006 = vpop.f32.mrb[0].mxu0
    %v2007 = vadd.f32 0.0, %v2006
    %v2008 = vpop.f32.mrb[0].mxu0
    %v2009 = vpop.f32.mrb[0].mxu0
    %v2010 = vpop.f32.mrb[0].mxu0
    %2011 = vdwg.mxu0
    %2012 = vrot.lane.b32.xlu0 %v1795, 64
    %v2013 = vpop.permute.xlu0 %2012
    %2014 = vrot.lane.b32.xlu0 %v1796, 64
    %v2015 = vpop.permute.xlu0 %2014
    %v2017 = vsel %vm886, %v2013, 0
    %v2020 = vsel %vm886, %v2015, 0
    %2022 = vmatprep.subr.bf16.mxu0 0
    %2023 = vmatpush1.bf16.xpose.msra.mxu0 %v2020
    %2024 = vmatprep.subr.bf16.mxu0 0
    %2025 = vmatpush1.bf16.xpose.msra.mxu0 0
    %2026 = vmatprep.subr.bf16.mxu0 0
    %2027 = vmatpush1.bf16.xpose.msra.mxu0 0
    %2028 = vmatprep.subr.bf16.mxu0 0
    %2029 = vmatpush1.bf16.xpose.msra.mxu0 0
    %2030 = vmatprep.subr.bf16.mxu0 0
    %2031 = vmatpush1.bf16.xpose.msra.mxu0 0
    %2032 = vmatprep.subr.bf16.mxu0 0
    %2033 = vmatpush1.bf16.xpose.msra.mxu0 0
    %2034 = vmatprep.subr.bf16.mxu0 0
    %2035 = vmatpush1.bf16.xpose.msra.mxu0 0
    %2036 = vmatprep.subr.bf16.mxu0 0
    %2037 = vmatpush1.bf16.xpose.msra.mxu0 0
    %2038 = vmatprep.subr.bf16.mxu0 0
    %2039 = vmatpush1.bf16.xpose.msra.mxu0 0
    %2040 = vmatprep.subr.bf16.mxu0 0
    %2041 = vmatpush1.bf16.xpose.msra.mxu0 0
    %2042 = vmatprep.subr.bf16.mxu0 0
    %2043 = vmatpush1.bf16.xpose.msra.mxu0 0
    %2044 = vmatprep.subr.bf16.mxu0 0
    %2045 = vmatpush1.bf16.xpose.msra.mxu0 0
    %2046 = vmatprep.subr.bf16.mxu0 0
    %2047 = vmatpush1.bf16.xpose.msra.mxu0 0
    %2048 = vmatprep.subr.bf16.mxu0 0
    %2049 = vmatpush1.bf16.xpose.msra.mxu0 0
    %2050 = vmatprep.subr.bf16.mxu0 0
    %2051 = vmatpush1.bf16.xpose.msra.mxu0 0
    %2052 = vmatprep.subr.bf16.mxu0 0
    %2053 = vmatpush1.bf16.xpose.msra.mxu0 0
    %2054 = vmatprep.mubr.bf16.mxu0 0
    %2055 = vmatmul.mubr.bf16.gmra.mrb[0].mxu0 %v2017
    %v2056 = vpop.f32.mrb[0].mxu0
    %v2057 = vadd.f32 0.0, %v2056
    %v2058 = vpop.f32.mrb[0].mxu0
    %v2059 = vpop.f32.mrb[0].mxu0
    %v2060 = vpop.f32.mrb[0].mxu0
    %2061 = vdwg.mxu0
    %v2062 = vsel %vm933, %v2057, -inf
    %2063 = vmax.xlane.f32.xlu0 %v2062
    %v2064 = vpop.xlane.xlu0 %2063
    %v2065 = vsub.f32 %v2057, %v2064
    %v2066 = vmul.f32 %v2065, 1.442695
    %v2067 = vpow.pop %v2066
    %v2068 = vsel %vm933, %v2067, 0.0
    %2069 = vadd.xlane.f32.xlu0 %v2068
    %v2070 = vpop.xlane.xlu0 %2069
    %v2071 = vrcp.pop %v2070
    %v2072 = vmul.f32 %v2067, %v2071
    %v2073 = vpack.c.bf16 %v2072, %v2072
    %2074 = vrot.lane.b32.xlu0 %v1855, 64
    %v2075 = vpop.permute.xlu0 %2074
    %v2077 = vsel %vm933, %v2073, 0
    %v2080 = vsel %vm949, %v2075, 0
    %2082 = vmatprep.subr.bf16.mxu0 0
    %2083 = vmatpush1.bf16.msra.mxu0 %v2080
    %2084 = vmatprep.subr.bf16.mxu0 0
    %2085 = vmatpush1.bf16.msra.mxu0 0
    %2086 = vmatprep.subr.bf16.mxu0 0
    %2087 = vmatpush1.bf16.msra.mxu0 0
    %2088 = vmatprep.subr.bf16.mxu0 0
    %2089 = vmatpush1.bf16.msra.mxu0 0
    %2090 = vmatprep.subr.bf16.mxu0 0
    %2091 = vmatpush1.bf16.msra.mxu0 0
    %2092 = vmatprep.subr.bf16.mxu0 0
    %2093 = vmatpush1.bf16.msra.mxu0 0
    %2094 = vmatprep.subr.bf16.mxu0 0
    %2095 = vmatpush1.bf16.msra.mxu0 0
    %2096 = vmatprep.subr.bf16.mxu0 0
    %2097 = vmatpush1.bf16.msra.mxu0 0
    %2098 = vmatprep.subr.bf16.mxu0 0
    %2099 = vmatpush1.bf16.msra.mxu0 0
    %2100 = vmatprep.subr.bf16.mxu0 0
    %2101 = vmatpush1.bf16.msra.mxu0 0
    %2102 = vmatprep.subr.bf16.mxu0 0
    %2103 = vmatpush1.bf16.msra.mxu0 0
    %2104 = vmatprep.subr.bf16.mxu0 0
    %2105 = vmatpush1.bf16.msra.mxu0 0
    %2106 = vmatprep.subr.bf16.mxu0 0
    %2107 = vmatpush1.bf16.msra.mxu0 0
    %2108 = vmatprep.subr.bf16.mxu0 0
    %2109 = vmatpush1.bf16.msra.mxu0 0
    %2110 = vmatprep.subr.bf16.mxu0 0
    %2111 = vmatpush1.bf16.msra.mxu0 0
    %2112 = vmatprep.subr.bf16.mxu0 0
    %2113 = vmatpush1.bf16.msra.mxu0 0
    %2114 = vmatprep.mubr.bf16.mxu0 0
    %2115 = vmatmul.mubr.bf16.gmra.mrb[0].mxu0 %v2077
    %v2116 = vpop.f32.mrb[0].mxu0
    %v2117 = vadd.f32 0.0, %v2116
    %v2118 = vpop.f32.mrb[0].mxu0
    %v2119 = vpop.f32.mrb[0].mxu0
    %v2120 = vpop.f32.mrb[0].mxu0
    %2121 = vdwg.mxu0
    %2122 = vrot.lane.b32.xlu0 %v1795, 32
    %v2123 = vpop.permute.xlu0 %2122
    %2124 = vrot.lane.b32.xlu0 %v1796, 32
    %v2125 = vpop.permute.xlu0 %2124
    %v2127 = vsel %vm886, %v2123, 0
    %v2130 = vsel %vm886, %v2125, 0
    %2132 = vmatprep.subr.bf16.mxu0 0
    %2133 = vmatpush1.bf16.xpose.msra.mxu0 %v2130
    %2134 = vmatprep.subr.bf16.mxu0 0
    %2135 = vmatpush1.bf16.xpose.msra.mxu0 0
    %2136 = vmatprep.subr.bf16.mxu0 0
    %2137 = vmatpush1.bf16.xpose.msra.mxu0 0
    %2138 = vmatprep.subr.bf16.mxu0 0
    %2139 = vmatpush1.bf16.xpose.msra.mxu0 0
    %2140 = vmatprep.subr.bf16.mxu0 0
    %2141 = vmatpush1.bf16.xpose.msra.mxu0 0
    %2142 = vmatprep.subr.bf16.mxu0 0
    %2143 = vmatpush1.bf16.xpose.msra.mxu0 0
    %2144 = vmatprep.subr.bf16.mxu0 0
    %2145 = vmatpush1.bf16.xpose.msra.mxu0 0
    %2146 = vmatprep.subr.bf16.mxu0 0
    %2147 = vmatpush1.bf16.xpose.msra.mxu0 0
    %2148 = vmatprep.subr.bf16.mxu0 0
    %2149 = vmatpush1.bf16.xpose.msra.mxu0 0
    %2150 = vmatprep.subr.bf16.mxu0 0
    %2151 = vmatpush1.bf16.xpose.msra.mxu0 0
    %2152 = vmatprep.subr.bf16.mxu0 0
    %2153 = vmatpush1.bf16.xpose.msra.mxu0 0
    %2154 = vmatprep.subr.bf16.mxu0 0
    %2155 = vmatpush1.bf16.xpose.msra.mxu0 0
    %2156 = vmatprep.subr.bf16.mxu0 0
    %2157 = vmatpush1.bf16.xpose.msra.mxu0 0
    %2158 = vmatprep.subr.bf16.mxu0 0
    %2159 = vmatpush1.bf16.xpose.msra.mxu0 0
    %2160 = vmatprep.subr.bf16.mxu0 0
    %2161 = vmatpush1.bf16.xpose.msra.mxu0 0
    %2162 = vmatprep.subr.bf16.mxu0 0
    %2163 = vmatpush1.bf16.xpose.msra.mxu0 0
    %2164 = vmatprep.mubr.bf16.mxu0 0
    %2165 = vmatmul.mubr.bf16.gmra.mrb[0].mxu0 %v2127
    %v2166 = vpop.f32.mrb[0].mxu0
    %v2167 = vadd.f32 0.0, %v2166
    %v2168 = vpop.f32.mrb[0].mxu0
    %v2169 = vpop.f32.mrb[0].mxu0
    %v2170 = vpop.f32.mrb[0].mxu0
    %2171 = vdwg.mxu0
    %v2172 = vsel %vm933, %v2167, -inf
    %2173 = vmax.xlane.f32.xlu0 %v2172
    %v2174 = vpop.xlane.xlu0 %2173
    %v2175 = vsub.f32 %v2167, %v2174
    %v2176 = vmul.f32 %v2175, 1.442695
    %v2177 = vpow.pop %v2176
    %v2178 = vsel %vm933, %v2177, 0.0
    %2179 = vadd.xlane.f32.xlu0 %v2178
    %v2180 = vpop.xlane.xlu0 %2179
    %v2181 = vrcp.pop %v2180
    %v2182 = vmul.f32 %v2177, %v2181
    %v2183 = vpack.c.bf16 %v2182, %v2182
    %2184 = vrot.lane.b32.xlu0 %v1855, 32
    %v2185 = vpop.permute.xlu0 %2184
    %v2187 = vsel %vm933, %v2183, 0
    %v2190 = vsel %vm949, %v2185, 0
    %2192 = vmatprep.subr.bf16.mxu0 0
    %2193 = vmatpush1.bf16.msra.mxu0 %v2190
    %2194 = vmatprep.subr.bf16.mxu0 0
    %2195 = vmatpush1.bf16.msra.mxu0 0
    %2196 = vmatprep.subr.bf16.mxu0 0
    %2197 = vmatpush1.bf16.msra.mxu0 0
    %2198 = vmatprep.subr.bf16.mxu0 0
    %2199 = vmatpush1.bf16.msra.mxu0 0
    %2200 = vmatprep.subr.bf16.mxu0 0
    %2201 = vmatpush1.bf16.msra.mxu0 0
    %2202 = vmatprep.subr.bf16.mxu0 0
    %2203 = vmatpush1.bf16.msra.mxu0 0
    %2204 = vmatprep.subr.bf16.mxu0 0
    %2205 = vmatpush1.bf16.msra.mxu0 0
    %2206 = vmatprep.subr.bf16.mxu0 0
    %2207 = vmatpush1.bf16.msra.mxu0 0
    %2208 = vmatprep.subr.bf16.mxu0 0
    %2209 = vmatpush1.bf16.msra.mxu0 0
    %2210 = vmatprep.subr.bf16.mxu0 0
    %2211 = vmatpush1.bf16.msra.mxu0 0
    %2212 = vmatprep.subr.bf16.mxu0 0
    %2213 = vmatpush1.bf16.msra.mxu0 0
    %2214 = vmatprep.subr.bf16.mxu0 0
    %2215 = vmatpush1.bf16.msra.mxu0 0
    %2216 = vmatprep.subr.bf16.mxu0 0
    %2217 = vmatpush1.bf16.msra.mxu0 0
    %2218 = vmatprep.subr.bf16.mxu0 0
    %2219 = vmatpush1.bf16.msra.mxu0 0
    %2220 = vmatprep.subr.bf16.mxu0 0
    %2221 = vmatpush1.bf16.msra.mxu0 0
    %2222 = vmatprep.subr.bf16.mxu0 0
    %2223 = vmatpush1.bf16.msra.mxu0 0
    %2224 = vmatprep.mubr.bf16.mxu0 0
    %2225 = vmatmul.mubr.bf16.gmra.mrb[0].mxu0 %v2187
    %v2226 = vpop.f32.mrb[0].mxu0
    %v2227 = vadd.f32 0.0, %v2226
    %v2228 = vpop.f32.mrb[0].mxu0
    %v2229 = vpop.f32.mrb[0].mxu0
    %v2230 = vpop.f32.mrb[0].mxu0
    %2231 = vdwg.mxu0
    %v2232 = vrot.slane %v881, 4
    %v2233 = vrot.slane %v883, 4
    %v2235 = vsel %vm886, %v2232, 0
    %v2238 = vsel %vm886, %v2233, 0
    %2240 = vmatprep.subr.bf16.mxu0 0
    %2241 = vmatpush1.bf16.xpose.msra.mxu0 %v2238
    %2242 = vmatprep.subr.bf16.mxu0 0
    %2243 = vmatpush1.bf16.xpose.msra.mxu0 0
    %2244 = vmatprep.subr.bf16.mxu0 0
    %2245 = vmatpush1.bf16.xpose.msra.mxu0 0
    %2246 = vmatprep.subr.bf16.mxu0 0
    %2247 = vmatpush1.bf16.xpose.msra.mxu0 0
    %2248 = vmatprep.subr.bf16.mxu0 0
    %2249 = vmatpush1.bf16.xpose.msra.mxu0 0
    %2250 = vmatprep.subr.bf16.mxu0 0
    %2251 = vmatpush1.bf16.xpose.msra.mxu0 0
    %2252 = vmatprep.subr.bf16.mxu0 0
    %2253 = vmatpush1.bf16.xpose.msra.mxu0 0
    %2254 = vmatprep.subr.bf16.mxu0 0
    %2255 = vmatpush1.bf16.xpose.msra.mxu0 0
    %2256 = vmatprep.subr.bf16.mxu0 0
    %2257 = vmatpush1.bf16.xpose.msra.mxu0 0
    %2258 = vmatprep.subr.bf16.mxu0 0
    %2259 = vmatpush1.bf16.xpose.msra.mxu0 0
    %2260 = vmatprep.subr.bf16.mxu0 0
    %2261 = vmatpush1.bf16.xpose.msra.mxu0 0
    %2262 = vmatprep.subr.bf16.mxu0 0
    %2263 = vmatpush1.bf16.xpose.msra.mxu0 0
    %2264 = vmatprep.subr.bf16.mxu0 0
    %2265 = vmatpush1.bf16.xpose.msra.mxu0 0
    %2266 = vmatprep.subr.bf16.mxu0 0
    %2267 = vmatpush1.bf16.xpose.msra.mxu0 0
    %2268 = vmatprep.subr.bf16.mxu0 0
    %2269 = vmatpush1.bf16.xpose.msra.mxu0 0
    %2270 = vmatprep.subr.bf16.mxu0 0
    %2271 = vmatpush1.bf16.xpose.msra.mxu0 0
    %2272 = vmatprep.mubr.bf16.mxu0 0
    %2273 = vmatmul.mubr.bf16.gmra.mrb[0].mxu0 %v2235
    %v2274 = vpop.f32.mrb[0].mxu0
    %v2275 = vadd.f32 0.0, %v2274
    %v2276 = vpop.f32.mrb[0].mxu0
    %v2277 = vpop.f32.mrb[0].mxu0
    %v2278 = vpop.f32.mrb[0].mxu0
    %2279 = vdwg.mxu0
    %v2280 = vsel %vm933, %v2275, -inf
    %2281 = vmax.xlane.f32.xlu0 %v2280
    %v2282 = vpop.xlane.xlu0 %2281
    %v2283 = vsub.f32 %v2275, %v2282
    %v2284 = vmul.f32 %v2283, 1.442695
    %v2285 = vpow.pop %v2284
    %v2286 = vsel %vm933, %v2285, 0.0
    %2287 = vadd.xlane.f32.xlu0 %v2286
    %v2288 = vpop.xlane.xlu0 %2287
    %v2289 = vrcp.pop %v2288
    %v2290 = vmul.f32 %v2285, %v2289
    %v2291 = vpack.c.bf16 %v2290, %v2290
    %v2292 = vrot.slane %v885, 4
    %v2294 = vsel %vm933, %v2291, 0
    %v2297 = vsel %vm949, %v2292, 0
    %2299 = vmatprep.subr.bf16.mxu0 0
    %2300 = vmatpush1.bf16.msra.mxu0 %v2297
    %2301 = vmatprep.subr.bf16.mxu0 0
    %2302 = vmatpush1.bf16.msra.mxu0 0
    %2303 = vmatprep.subr.bf16.mxu0 0
    %2304 = vmatpush1.bf16.msra.mxu0 0
    %2305 = vmatprep.subr.bf16.mxu0 0
    %2306 = vmatpush1.bf16.msra.mxu0 0
    %2307 = vmatprep.subr.bf16.mxu0 0
    %2308 = vmatpush1.bf16.msra.mxu0 0
    %2309 = vmatprep.subr.bf16.mxu0 0
    %2310 = vmatpush1.bf16.msra.mxu0 0
    %2311 = vmatprep.subr.bf16.mxu0 0
    %2312 = vmatpush1.bf16.msra.mxu0 0
    %2313 = vmatprep.subr.bf16.mxu0 0
    %2314 = vmatpush1.bf16.msra.mxu0 0
    %2315 = vmatprep.subr.bf16.mxu0 0
    %2316 = vmatpush1.bf16.msra.mxu0 0
    %2317 = vmatprep.subr.bf16.mxu0 0
    %2318 = vmatpush1.bf16.msra.mxu0 0
    %2319 = vmatprep.subr.bf16.mxu0 0
    %2320 = vmatpush1.bf16.msra.mxu0 0
    %2321 = vmatprep.subr.bf16.mxu0 0
    %2322 = vmatpush1.bf16.msra.mxu0 0
    %2323 = vmatprep.subr.bf16.mxu0 0
    %2324 = vmatpush1.bf16.msra.mxu0 0
    %2325 = vmatprep.subr.bf16.mxu0 0
    %2326 = vmatpush1.bf16.msra.mxu0 0
    %2327 = vmatprep.subr.bf16.mxu0 0
    %2328 = vmatpush1.bf16.msra.mxu0 0
    %2329 = vmatprep.subr.bf16.mxu0 0
    %2330 = vmatpush1.bf16.msra.mxu0 0
    %2331 = vmatprep.mubr.bf16.mxu0 0
    %2332 = vmatmul.mubr.bf16.gmra.mrb[0].mxu0 %v2294
    %v2333 = vpop.f32.mrb[0].mxu0
    %v2334 = vadd.f32 0.0, %v2333
    %v2335 = vpop.f32.mrb[0].mxu0
    %v2336 = vpop.f32.mrb[0].mxu0
    %v2337 = vpop.f32.mrb[0].mxu0
    %2338 = vdwg.mxu0
    %2339 = vrot.lane.b32.xlu0 %v2232, 96
    %v2340 = vpop.permute.xlu0 %2339
    %2341 = vrot.lane.b32.xlu0 %v2233, 96
    %v2342 = vpop.permute.xlu0 %2341
    %v2344 = vsel %vm886, %v2340, 0
    %v2347 = vsel %vm886, %v2342, 0
    %2349 = vmatprep.subr.bf16.mxu0 0
    %2350 = vmatpush1.bf16.xpose.msra.mxu0 %v2347
    %2351 = vmatprep.subr.bf16.mxu0 0
    %2352 = vmatpush1.bf16.xpose.msra.mxu0 0
    %2353 = vmatprep.subr.bf16.mxu0 0
    %2354 = vmatpush1.bf16.xpose.msra.mxu0 0
    %2355 = vmatprep.subr.bf16.mxu0 0
    %2356 = vmatpush1.bf16.xpose.msra.mxu0 0
    %2357 = vmatprep.subr.bf16.mxu0 0
    %2358 = vmatpush1.bf16.xpose.msra.mxu0 0
    %2359 = vmatprep.subr.bf16.mxu0 0
    %2360 = vmatpush1.bf16.xpose.msra.mxu0 0
    %2361 = vmatprep.subr.bf16.mxu0 0
    %2362 = vmatpush1.bf16.xpose.msra.mxu0 0
    %2363 = vmatprep.subr.bf16.mxu0 0
    %2364 = vmatpush1.bf16.xpose.msra.mxu0 0
    %2365 = vmatprep.subr.bf16.mxu0 0
    %2366 = vmatpush1.bf16.xpose.msra.mxu0 0
    %2367 = vmatprep.subr.bf16.mxu0 0
    %2368 = vmatpush1.bf16.xpose.msra.mxu0 0
    %2369 = vmatprep.subr.bf16.mxu0 0
    %2370 = vmatpush1.bf16.xpose.msra.mxu0 0
    %2371 = vmatprep.subr.bf16.mxu0 0
    %2372 = vmatpush1.bf16.xpose.msra.mxu0 0
    %2373 = vmatprep.subr.bf16.mxu0 0
    %2374 = vmatpush1.bf16.xpose.msra.mxu0 0
    %2375 = vmatprep.subr.bf16.mxu0 0
    %2376 = vmatpush1.bf16.xpose.msra.mxu0 0
    %2377 = vmatprep.subr.bf16.mxu0 0
    %2378 = vmatpush1.bf16.xpose.msra.mxu0 0
    %2379 = vmatprep.subr.bf16.mxu0 0
    %2380 = vmatpush1.bf16.xpose.msra.mxu0 0
    %2381 = vmatprep.mubr.bf16.mxu0 0
    %2382 = vmatmul.mubr.bf16.gmra.mrb[0].mxu0 %v2344
    %v2383 = vpop.f32.mrb[0].mxu0
    %v2384 = vadd.f32 0.0, %v2383
    %v2385 = vpop.f32.mrb[0].mxu0
    %v2386 = vpop.f32.mrb[0].mxu0
    %v2387 = vpop.f32.mrb[0].mxu0
    %2388 = vdwg.mxu0
    %v2389 = vsel %vm933, %v2384, -inf
    %2390 = vmax.xlane.f32.xlu0 %v2389
    %v2391 = vpop.xlane.xlu0 %2390
    %v2392 = vsub.f32 %v2384, %v2391
    %v2393 = vmul.f32 %v2392, 1.442695
    %v2394 = vpow.pop %v2393
    %v2395 = vsel %vm933, %v2394, 0.0
    %2396 = vadd.xlane.f32.xlu0 %v2395
    %v2397 = vpop.xlane.xlu0 %2396
    %v2398 = vrcp.pop %v2397
    %v2399 = vmul.f32 %v2394, %v2398
    %v2400 = vpack.c.bf16 %v2399, %v2399
    %2401 = vrot.lane.b32.xlu0 %v2292, 96
    %v2402 = vpop.permute.xlu0 %2401
    %v2404 = vsel %vm933, %v2400, 0
    %v2407 = vsel %vm949, %v2402, 0
    %2409 = vmatprep.subr.bf16.mxu0 0
    %2410 = vmatpush1.bf16.msra.mxu0 %v2407
    %2411 = vmatprep.subr.bf16.mxu0 0
    %2412 = vmatpush1.bf16.msra.mxu0 0
    %2413 = vmatprep.subr.bf16.mxu0 0
    %2414 = vmatpush1.bf16.msra.mxu0 0
    %2415 = vmatprep.subr.bf16.mxu0 0
    %2416 = vmatpush1.bf16.msra.mxu0 0
    %2417 = vmatprep.subr.bf16.mxu0 0
    %2418 = vmatpush1.bf16.msra.mxu0 0
    %2419 = vmatprep.subr.bf16.mxu0 0
    %2420 = vmatpush1.bf16.msra.mxu0 0
    %2421 = vmatprep.subr.bf16.mxu0 0
    %2422 = vmatpush1.bf16.msra.mxu0 0
    %2423 = vmatprep.subr.bf16.mxu0 0
    %2424 = vmatpush1.bf16.msra.mxu0 0
    %2425 = vmatprep.subr.bf16.mxu0 0
    %2426 = vmatpush1.bf16.msra.mxu0 0
    %2427 = vmatprep.subr.bf16.mxu0 0
    %2428 = vmatpush1.bf16.msra.mxu0 0
    %2429 = vmatprep.subr.bf16.mxu0 0
    %2430 = vmatpush1.bf16.msra.mxu0 0
    %2431 = vmatprep.subr.bf16.mxu0 0
    %2432 = vmatpush1.bf16.msra.mxu0 0
    %2433 = vmatprep.subr.bf16.mxu0 0
    %2434 = vmatpush1.bf16.msra.mxu0 0
    %2435 = vmatprep.subr.bf16.mxu0 0
    %2436 = vmatpush1.bf16.msra.mxu0 0
    %2437 = vmatprep.subr.bf16.mxu0 0
    %2438 = vmatpush1.bf16.msra.mxu0 0
    %2439 = vmatprep.subr.bf16.mxu0 0
    %2440 = vmatpush1.bf16.msra.mxu0 0
    %2441 = vmatprep.mubr.bf16.mxu0 0
    %2442 = vmatmul.mubr.bf16.gmra.mrb[0].mxu0 %v2404
    %v2443 = vpop.f32.mrb[0].mxu0
    %v2444 = vadd.f32 0.0, %v2443
    %v2445 = vpop.f32.mrb[0].mxu0
    %v2446 = vpop.f32.mrb[0].mxu0
    %v2447 = vpop.f32.mrb[0].mxu0
    %2448 = vdwg.mxu0
    %2449 = vrot.lane.b32.xlu0 %v2232, 64
    %v2450 = vpop.permute.xlu0 %2449
    %2451 = vrot.lane.b32.xlu0 %v2233, 64
    %v2452 = vpop.permute.xlu0 %2451
    %v2454 = vsel %vm886, %v2450, 0
    %v2457 = vsel %vm886, %v2452, 0
    %2459 = vmatprep.subr.bf16.mxu0 0
    %2460 = vmatpush1.bf16.xpose.msra.mxu0 %v2457
    %2461 = vmatprep.subr.bf16.mxu0 0
    %2462 = vmatpush1.bf16.xpose.msra.mxu0 0
    %2463 = vmatprep.subr.bf16.mxu0 0
    %2464 = vmatpush1.bf16.xpose.msra.mxu0 0
    %2465 = vmatprep.subr.bf16.mxu0 0
    %2466 = vmatpush1.bf16.xpose.msra.mxu0 0
    %2467 = vmatprep.subr.bf16.mxu0 0
    %2468 = vmatpush1.bf16.xpose.msra.mxu0 0
    %2469 = vmatprep.subr.bf16.mxu0 0
    %2470 = vmatpush1.bf16.xpose.msra.mxu0 0
    %2471 = vmatprep.subr.bf16.mxu0 0
    %2472 = vmatpush1.bf16.xpose.msra.mxu0 0
    %2473 = vmatprep.subr.bf16.mxu0 0
    %2474 = vmatpush1.bf16.xpose.msra.mxu0 0
    %2475 = vmatprep.subr.bf16.mxu0 0
    %2476 = vmatpush1.bf16.xpose.msra.mxu0 0
    %2477 = vmatprep.subr.bf16.mxu0 0
    %2478 = vmatpush1.bf16.xpose.msra.mxu0 0
    %2479 = vmatprep.subr.bf16.mxu0 0
    %2480 = vmatpush1.bf16.xpose.msra.mxu0 0
    %2481 = vmatprep.subr.bf16.mxu0 0
    %2482 = vmatpush1.bf16.xpose.msra.mxu0 0
    %2483 = vmatprep.subr.bf16.mxu0 0
    %2484 = vmatpush1.bf16.xpose.msra.mxu0 0
    %2485 = vmatprep.subr.bf16.mxu0 0
    %2486 = vmatpush1.bf16.xpose.msra.mxu0 0
    %2487 = vmatprep.subr.bf16.mxu0 0
    %2488 = vmatpush1.bf16.xpose.msra.mxu0 0
    %2489 = vmatprep.subr.bf16.mxu0 0
    %2490 = vmatpush1.bf16.xpose.msra.mxu0 0
    %2491 = vmatprep.mubr.bf16.mxu0 0
    %2492 = vmatmul.mubr.bf16.gmra.mrb[0].mxu0 %v2454
    %v2493 = vpop.f32.mrb[0].mxu0
    %v2494 = vadd.f32 0.0, %v2493
    %v2495 = vpop.f32.mrb[0].mxu0
    %v2496 = vpop.f32.mrb[0].mxu0
    %v2497 = vpop.f32.mrb[0].mxu0
    %2498 = vdwg.mxu0
    %v2499 = vsel %vm933, %v2494, -inf
    %2500 = vmax.xlane.f32.xlu0 %v2499
    %v2501 = vpop.xlane.xlu0 %2500
    %v2502 = vsub.f32 %v2494, %v2501
    %v2503 = vmul.f32 %v2502, 1.442695
    %v2504 = vpow.pop %v2503
    %v2505 = vsel %vm933, %v2504, 0.0
    %2506 = vadd.xlane.f32.xlu0 %v2505
    %v2507 = vpop.xlane.xlu0 %2506
    %v2508 = vrcp.pop %v2507
    %v2509 = vmul.f32 %v2504, %v2508
    %v2510 = vpack.c.bf16 %v2509, %v2509
    %2511 = vrot.lane.b32.xlu0 %v2292, 64
    %v2512 = vpop.permute.xlu0 %2511
    %v2514 = vsel %vm933, %v2510, 0
    %v2517 = vsel %vm949, %v2512, 0
    %2519 = vmatprep.subr.bf16.mxu0 0
    %2520 = vmatpush1.bf16.msra.mxu0 %v2517
    %2521 = vmatprep.subr.bf16.mxu0 0
    %2522 = vmatpush1.bf16.msra.mxu0 0
    %2523 = vmatprep.subr.bf16.mxu0 0
    %2524 = vmatpush1.bf16.msra.mxu0 0
    %2525 = vmatprep.subr.bf16.mxu0 0
    %2526 = vmatpush1.bf16.msra.mxu0 0
    %2527 = vmatprep.subr.bf16.mxu0 0
    %2528 = vmatpush1.bf16.msra.mxu0 0
    %2529 = vmatprep.subr.bf16.mxu0 0
    %2530 = vmatpush1.bf16.msra.mxu0 0
    %2531 = vmatprep.subr.bf16.mxu0 0
    %2532 = vmatpush1.bf16.msra.mxu0 0
    %2533 = vmatprep.subr.bf16.mxu0 0
    %2534 = vmatpush1.bf16.msra.mxu0 0
    %2535 = vmatprep.subr.bf16.mxu0 0
    %2536 = vmatpush1.bf16.msra.mxu0 0
    %2537 = vmatprep.subr.bf16.mxu0 0
    %2538 = vmatpush1.bf16.msra.mxu0 0
    %2539 = vmatprep.subr.bf16.mxu0 0
    %2540 = vmatpush1.bf16.msra.mxu0 0
    %2541 = vmatprep.subr.bf16.mxu0 0
    %2542 = vmatpush1.bf16.msra.mxu0 0
    %2543 = vmatprep.subr.bf16.mxu0 0
    %2544 = vmatpush1.bf16.msra.mxu0 0
    %2545 = vmatprep.subr.bf16.mxu0 0
    %2546 = vmatpush1.bf16.msra.mxu0 0
    %2547 = vmatprep.subr.bf16.mxu0 0
    %2548 = vmatpush1.bf16.msra.mxu0 0
    %2549 = vmatprep.subr.bf16.mxu0 0
    %2550 = vmatpush1.bf16.msra.mxu0 0
    %2551 = vmatprep.mubr.bf16.mxu0 0
    %2552 = vmatmul.mubr.bf16.gmra.mrb[0].mxu0 %v2514
    %v2553 = vpop.f32.mrb[0].mxu0
    %v2554 = vadd.f32 0.0, %v2553
    %v2555 = vpop.f32.mrb[0].mxu0
    %v2556 = vpop.f32.mrb[0].mxu0
    %v2557 = vpop.f32.mrb[0].mxu0
    %2558 = vdwg.mxu0
    %2559 = vrot.lane.b32.xlu0 %v2232, 32
    %v2560 = vpop.permute.xlu0 %2559
    %2561 = vrot.lane.b32.xlu0 %v2233, 32
    %v2562 = vpop.permute.xlu0 %2561
    %v2564 = vsel %vm886, %v2560, 0
    %v2567 = vsel %vm886, %v2562, 0
    %2569 = vmatprep.subr.bf16.mxu0 0
    %2570 = vmatpush1.bf16.xpose.msra.mxu0 %v2567
    %2571 = vmatprep.subr.bf16.mxu0 0
    %2572 = vmatpush1.bf16.xpose.msra.mxu0 0
    %2573 = vmatprep.subr.bf16.mxu0 0
    %2574 = vmatpush1.bf16.xpose.msra.mxu0 0
    %2575 = vmatprep.subr.bf16.mxu0 0
    %2576 = vmatpush1.bf16.xpose.msra.mxu0 0
    %2577 = vmatprep.subr.bf16.mxu0 0
    %2578 = vmatpush1.bf16.xpose.msra.mxu0 0
    %2579 = vmatprep.subr.bf16.mxu0 0
    %2580 = vmatpush1.bf16.xpose.msra.mxu0 0
    %2581 = vmatprep.subr.bf16.mxu0 0
    %2582 = vmatpush1.bf16.xpose.msra.mxu0 0
    %2583 = vmatprep.subr.bf16.mxu0 0
    %2584 = vmatpush1.bf16.xpose.msra.mxu0 0
    %2585 = vmatprep.subr.bf16.mxu0 0
    %2586 = vmatpush1.bf16.xpose.msra.mxu0 0
    %2587 = vmatprep.subr.bf16.mxu0 0
    %2588 = vmatpush1.bf16.xpose.msra.mxu0 0
    %2589 = vmatprep.subr.bf16.mxu0 0
    %2590 = vmatpush1.bf16.xpose.msra.mxu0 0
    %2591 = vmatprep.subr.bf16.mxu0 0
    %2592 = vmatpush1.bf16.xpose.msra.mxu0 0
    %2593 = vmatprep.subr.bf16.mxu0 0
    %2594 = vmatpush1.bf16.xpose.msra.mxu0 0
    %2595 = vmatprep.subr.bf16.mxu0 0
    %2596 = vmatpush1.bf16.xpose.msra.mxu0 0
    %2597 = vmatprep.subr.bf16.mxu0 0
    %2598 = vmatpush1.bf16.xpose.msra.mxu0 0
    %2599 = vmatprep.subr.bf16.mxu0 0
    %2600 = vmatpush1.bf16.xpose.msra.mxu0 0
    %2601 = vmatprep.mubr.bf16.mxu0 0
    %2602 = vmatmul.mubr.bf16.gmra.mrb[0].mxu0 %v2564
    %v2603 = vpop.f32.mrb[0].mxu0
    %v2604 = vadd.f32 0.0, %v2603
    %v2605 = vpop.f32.mrb[0].mxu0
    %v2606 = vpop.f32.mrb[0].mxu0
    %v2607 = vpop.f32.mrb[0].mxu0
    %2608 = vdwg.mxu0
    %v2609 = vsel %vm933, %v2604, -inf
    %2610 = vmax.xlane.f32.xlu0 %v2609
    %v2611 = vpop.xlane.xlu0 %2610
    %v2612 = vsub.f32 %v2604, %v2611
    %v2613 = vmul.f32 %v2612, 1.442695
    %v2614 = vpow.pop %v2613
    %v2615 = vsel %vm933, %v2614, 0.0
    %2616 = vadd.xlane.f32.xlu0 %v2615
    %v2617 = vpop.xlane.xlu0 %2616
    %v2618 = vrcp.pop %v2617
    %v2619 = vmul.f32 %v2614, %v2618
    %v2620 = vpack.c.bf16 %v2619, %v2619
    %2621 = vrot.lane.b32.xlu0 %v2292, 32
    %v2622 = vpop.permute.xlu0 %2621
    %v2624 = vsel %vm933, %v2620, 0
    %v2627 = vsel %vm949, %v2622, 0
    %2629 = vmatprep.subr.bf16.mxu0 0
    %2630 = vmatpush1.bf16.msra.mxu0 %v2627
    %2631 = vmatprep.subr.bf16.mxu0 0
    %2632 = vmatpush1.bf16.msra.mxu0 0
    %2633 = vmatprep.subr.bf16.mxu0 0
    %2634 = vmatpush1.bf16.msra.mxu0 0
    %2635 = vmatprep.subr.bf16.mxu0 0
    %2636 = vmatpush1.bf16.msra.mxu0 0
    %2637 = vmatprep.subr.bf16.mxu0 0
    %2638 = vmatpush1.bf16.msra.mxu0 0
    %2639 = vmatprep.subr.bf16.mxu0 0
    %2640 = vmatpush1.bf16.msra.mxu0 0
    %2641 = vmatprep.subr.bf16.mxu0 0
    %2642 = vmatpush1.bf16.msra.mxu0 0
    %2643 = vmatprep.subr.bf16.mxu0 0
    %2644 = vmatpush1.bf16.msra.mxu0 0
    %2645 = vmatprep.subr.bf16.mxu0 0
    %2646 = vmatpush1.bf16.msra.mxu0 0
    %2647 = vmatprep.subr.bf16.mxu0 0
    %2648 = vmatpush1.bf16.msra.mxu0 0
    %2649 = vmatprep.subr.bf16.mxu0 0
    %2650 = vmatpush1.bf16.msra.mxu0 0
    %2651 = vmatprep.subr.bf16.mxu0 0
    %2652 = vmatpush1.bf16.msra.mxu0 0
    %2653 = vmatprep.subr.bf16.mxu0 0
    %2654 = vmatpush1.bf16.msra.mxu0 0
    %2655 = vmatprep.subr.bf16.mxu0 0
    %2656 = vmatpush1.bf16.msra.mxu0 0
    %2657 = vmatprep.subr.bf16.mxu0 0
    %2658 = vmatpush1.bf16.msra.mxu0 0
    %2659 = vmatprep.subr.bf16.mxu0 0
    %2660 = vmatpush1.bf16.msra.mxu0 0
    %2661 = vmatprep.mubr.bf16.mxu0 0
    %2662 = vmatmul.mubr.bf16.gmra.mrb[0].mxu0 %v2624
    %v2663 = vpop.f32.mrb[0].mxu0
    %v2664 = vadd.f32 0.0, %v2663
    %v2665 = vpop.f32.mrb[0].mxu0
    %v2666 = vpop.f32.mrb[0].mxu0
    %v2667 = vpop.f32.mrb[0].mxu0
    %2668 = vdwg.mxu0
    %2670 = vrot.lane.b32.xlu0 %v2007, 32
    %v2671 = vpop.permute.xlu0 %2670
    %2674 = vrot.lane.b32.xlu0 %v2117, 64
    %v2675 = vpop.permute.xlu0 %2674
    %2678 = vrot.lane.b32.xlu0 %v2227, 96
    %v2679 = vpop.permute.xlu0 %2678
    %2682 = vrot.lane.b32.xlu0 %v2444, 32
    %v2683 = vpop.permute.xlu0 %2682
    %2686 = vrot.lane.b32.xlu0 %v2554, 64
    %v2687 = vpop.permute.xlu0 %2686
    %2690 = vrot.lane.b32.xlu0 %v2664, 96
    %v2691 = vpop.permute.xlu0 %2690
    %v2693 = vsel %vm886, %v1897, %v2671
    %v2694 = vsel %vm1788, %v2693, %v2675
    %v2695 = vsel %vm1790, %v2694, %v2679
    %v2696 = vsel %vm886, %v2334, %v2683
    %v2697 = vsel %vm1788, %v2696, %v2687
    %v2698 = vsel %vm1790, %v2697, %v2691
    %v2699 = vpack.c.bf16 %v2695, %v1791
    %v2700 = vpack.c.bf16 %v2698, %v1794
    %v2701 = vld [vmem:[#allocation5] sm:$0xff]
    %v2702 = vld [vmem:[#allocation5 + $0x8] sm:$0xff]
    %v2703 = vld [vmem:[#allocation5 + $0x10] sm:$0xff]
    %v2704 = vld [vmem:[#allocation5 + $0x18] sm:$0xff]
    %v2705 = vld [vmem:[#allocation5 + $0x20] sm:$0xff]
    %v2706 = vld [vmem:[#allocation5 + $0x28] sm:$0xff]
    %v2707 = vld [vmem:[#allocation5 + $0x30] sm:$0xff]
    %v2708 = vld [vmem:[#allocation5 + $0x38] sm:$0xff]
    %v2709 = vld [vmem:[#allocation5 + $0x40] sm:$0xff]
    %v2710 = vld [vmem:[#allocation5 + $0x48] sm:$0xff]
    %v2711 = vld [vmem:[#allocation5 + $0x50] sm:$0xff]
    %v2712 = vld [vmem:[#allocation5 + $0x58] sm:$0xff]
    %v2713 = vld [vmem:[#allocation5 + $0x60] sm:$0xff]
    %v2714 = vld [vmem:[#allocation5 + $0x68] sm:$0xff]
    %v2715 = vld [vmem:[#allocation5 + $0x70] sm:$0xff]
    %v2716 = vld [vmem:[#allocation5 + $0x78] sm:$0xff]
    %v2717 = vld [vmem:[#allocation5 + $0x80] sm:$0xff]
    %v2718 = vld [vmem:[#allocation5 + $0x88] sm:$0xff]
    %v2719 = vld [vmem:[#allocation5 + $0x90] sm:$0xff]
    %v2720 = vld [vmem:[#allocation5 + $0x98] sm:$0xff]
    %v2721 = vld [vmem:[#allocation5 + $0xa0] sm:$0xff]
    %v2722 = vld [vmem:[#allocation5 + $0xa8] sm:$0xff]
    %v2723 = vld [vmem:[#allocation5 + $0xb0] sm:$0xff]
    %v2724 = vld [vmem:[#allocation5 + $0xb8] sm:$0xff]
    %v2725 = vld [vmem:[#allocation5 + $0xc0] sm:$0xff]
    %v2726 = vld [vmem:[#allocation5 + $0xc8] sm:$0xff]
    %v2727 = vld [vmem:[#allocation5 + $0xd0] sm:$0xff]
    %v2728 = vld [vmem:[#allocation5 + $0xd8] sm:$0xff]
    %v2729 = vld [vmem:[#allocation5 + $0xe0] sm:$0xff]
    %v2730 = vld [vmem:[#allocation5 + $0xe8] sm:$0xff]
    %v2731 = vld [vmem:[#allocation5 + $0xf0] sm:$0xff]
    %v2732 = vld [vmem:[#allocation5 + $0xf8] sm:$0xff]
    %v2734 = vlaneseq
    %v2735 = vshrl.u32 %v2734, 7
    %v2736 = vsub.s32 0, %v2735
    %v2737 = vrot.slane %v879, %v2736
    %v2738 = vlaneseq
    %v2739 = vshrl.u32 %v2738, 7
    %v2740 = vsub.s32 1, %v2739
    %v2741 = vrot.slane %v879, %v2740
    %v2776 = vunpack.c.l.b16 %v2701
    %v2777 = vunpack.c.h.b16 %v2701
    %v2778 = vunpack.c.l.b16 %v2702
    %v2779 = vunpack.c.h.b16 %v2702
    %v2780 = vunpack.c.l.b16 %v2703
    %v2781 = vunpack.c.h.b16 %v2703
    %v2782 = vunpack.c.l.b16 %v2704
    %v2783 = vunpack.c.h.b16 %v2704
    %v2784 = vunpack.c.l.b16 %v2705
    %v2785 = vunpack.c.h.b16 %v2705
    %v2786 = vunpack.c.l.b16 %v2706
    %v2787 = vunpack.c.h.b16 %v2706
    %v2788 = vunpack.c.l.b16 %v2707
    %v2789 = vunpack.c.h.b16 %v2707
    %v2790 = vunpack.c.l.b16 %v2708
    %v2791 = vunpack.c.h.b16 %v2708
    %v2792 = vunpack.c.l.b16 %v2709
    %v2793 = vunpack.c.h.b16 %v2709
    %v2794 = vunpack.c.l.b16 %v2710
    %v2795 = vunpack.c.h.b16 %v2710
    %v2796 = vunpack.c.l.b16 %v2711
    %v2797 = vunpack.c.h.b16 %v2711
    %v2798 = vunpack.c.l.b16 %v2712
    %v2799 = vunpack.c.h.b16 %v2712
    %v2800 = vunpack.c.l.b16 %v2713
    %v2801 = vunpack.c.h.b16 %v2713
    %v2802 = vunpack.c.l.b16 %v2714
    %v2803 = vunpack.c.h.b16 %v2714
    %v2804 = vunpack.c.l.b16 %v2715
    %v2805 = vunpack.c.h.b16 %v2715
    %v2806 = vunpack.c.l.b16 %v2716
    %v2807 = vunpack.c.h.b16 %v2716
    %v2808 = vunpack.c.l.b16 %v2717
    %v2809 = vunpack.c.h.b16 %v2717
    %v2810 = vunpack.c.l.b16 %v2718
    %v2811 = vunpack.c.h.b16 %v2718
    %v2812 = vunpack.c.l.b16 %v2719
    %v2813 = vunpack.c.h.b16 %v2719
    %v2814 = vunpack.c.l.b16 %v2720
    %v2815 = vunpack.c.h.b16 %v2720
    %v2816 = vunpack.c.l.b16 %v2721
    %v2817 = vunpack.c.h.b16 %v2721
    %v2818 = vunpack.c.l.b16 %v2722
    %v2819 = vunpack.c.h.b16 %v2722
    %v2820 = vunpack.c.l.b16 %v2723
    %v2821 = vunpack.c.h.b16 %v2723
    %v2822 = vunpack.c.l.b16 %v2724
    %v2823 = vunpack.c.h.b16 %v2724
    %v2824 = vunpack.c.l.b16 %v2725
    %v2825 = vunpack.c.h.b16 %v2725
    %v2826 = vunpack.c.l.b16 %v2726
    %v2827 = vunpack.c.h.b16 %v2726
    %v2828 = vunpack.c.l.b16 %v2727
    %v2829 = vunpack.c.h.b16 %v2727
    %v2830 = vunpack.c.l.b16 %v2728
    %v2831 = vunpack.c.h.b16 %v2728
    %v2832 = vunpack.c.l.b16 %v2729
    %v2833 = vunpack.c.h.b16 %v2729
    %v2834 = vunpack.c.l.b16 %v2730
    %v2835 = vunpack.c.h.b16 %v2730
    %v2836 = vunpack.c.l.b16 %v2731
    %v2837 = vunpack.c.h.b16 %v2731
    %v2838 = vunpack.c.l.b16 %v2732
    %v2839 = vunpack.c.h.b16 %v2732
    %v2840 = vpack.c.b16 %v2778, %v2776
    %v2841 = vpack.c.b16 %v2779, %v2777
    %v2842 = vpack.c.b16 %v2782, %v2780
    %v2843 = vpack.c.b16 %v2783, %v2781
    %v2844 = vpack.c.b16 %v2786, %v2784
    %v2845 = vpack.c.b16 %v2787, %v2785
    %v2846 = vpack.c.b16 %v2790, %v2788
    %v2847 = vpack.c.b16 %v2791, %v2789
    %v2848 = vpack.c.b16 %v2794, %v2792
    %v2849 = vpack.c.b16 %v2795, %v2793
    %v2850 = vpack.c.b16 %v2798, %v2796
    %v2851 = vpack.c.b16 %v2799, %v2797
    %v2852 = vpack.c.b16 %v2802, %v2800
    %v2853 = vpack.c.b16 %v2803, %v2801
    %v2854 = vpack.c.b16 %v2806, %v2804
    %v2855 = vpack.c.b16 %v2807, %v2805
    %v2856 = vpack.c.b16 %v2810, %v2808
    %v2857 = vpack.c.b16 %v2811, %v2809
    %v2858 = vpack.c.b16 %v2814, %v2812
    %v2859 = vpack.c.b16 %v2815, %v2813
    %v2860 = vpack.c.b16 %v2818, %v2816
    %v2861 = vpack.c.b16 %v2819, %v2817
    %v2862 = vpack.c.b16 %v2822, %v2820
    %v2863 = vpack.c.b16 %v2823, %v2821
    %v2864 = vpack.c.b16 %v2826, %v2824
    %v2865 = vpack.c.b16 %v2827, %v2825
    %v2866 = vpack.c.b16 %v2830, %v2828
    %v2867 = vpack.c.b16 %v2831, %v2829
    %v2868 = vpack.c.b16 %v2834, %v2832
    %v2869 = vpack.c.b16 %v2835, %v2833
    %v2870 = vpack.c.b16 %v2838, %v2836
    %v2871 = vpack.c.b16 %v2839, %v2837
    %2904 = vmatprep.subr.bf16.mxu0 %v2841
    %2905 = vmatpush1.bf16.msra.mxu0 %v2840
    %2906 = vmatprep.subr.bf16.mxu0 %v2843
    %2907 = vmatpush1.bf16.msra.mxu0 %v2842
    %2908 = vmatprep.subr.bf16.mxu0 %v2845
    %2909 = vmatpush1.bf16.msra.mxu0 %v2844
    %2910 = vmatprep.subr.bf16.mxu0 %v2847
    %2911 = vmatpush1.bf16.msra.mxu0 %v2846
    %2912 = vmatprep.subr.bf16.mxu0 %v2849
    %2913 = vmatpush1.bf16.msra.mxu0 %v2848
    %2914 = vmatprep.subr.bf16.mxu0 %v2851
    %2915 = vmatpush1.bf16.msra.mxu0 %v2850
    %2916 = vmatprep.subr.bf16.mxu0 %v2853
    %2917 = vmatpush1.bf16.msra.mxu0 %v2852
    %2918 = vmatprep.subr.bf16.mxu0 %v2855
    %2919 = vmatpush1.bf16.msra.mxu0 %v2854
    %2920 = vmatprep.subr.bf16.mxu0 %v2857
    %2921 = vmatpush1.bf16.msra.mxu0 %v2856
    %2922 = vmatprep.subr.bf16.mxu0 %v2859
    %2923 = vmatpush1.bf16.msra.mxu0 %v2858
    %2924 = vmatprep.subr.bf16.mxu0 %v2861
    %2925 = vmatpush1.bf16.msra.mxu0 %v2860
    %2926 = vmatprep.subr.bf16.mxu0 %v2863
    %2927 = vmatpush1.bf16.msra.mxu0 %v2862
    %2928 = vmatprep.subr.bf16.mxu0 %v2865
    %2929 = vmatpush1.bf16.msra.mxu0 %v2864
    %2930 = vmatprep.subr.bf16.mxu0 %v2867
    %2931 = vmatpush1.bf16.msra.mxu0 %v2866
    %2932 = vmatprep.subr.bf16.mxu0 %v2869
    %2933 = vmatpush1.bf16.msra.mxu0 %v2868
    %2934 = vmatprep.subr.bf16.mxu0 %v2871
    %2935 = vmatpush1.bf16.msra.mxu0 %v2870
    %2936 = vmatprep.mubr.bf16.mxu0 %v2700
    %2937 = vmatmul.mubr.bf16.gmra.mrb[0].mxu0 %v2699
    %v2938 = vpop.f32.mrb[0].mxu0
    %v2939 = vadd.f32 %v2737, %v2938
    %v2940 = vpop.f32.mrb[0].mxu0
    %v2941 = vadd.f32 %v2741, %v2940
    %v2942 = vpop.f32.mrb[0].mxu0
    %v2943 = vadd.f32 %v2737, %v2942
    %v2944 = vpop.f32.mrb[0].mxu0
    %v2945 = vadd.f32 %v2741, %v2944
    %2946 = vdwg.mxu0
    %v2947 = vadd.f32 %v132, %v2939
    %v2948 = vadd.f32 %v133, %v2941
    %v2949 = vadd.f32 %v134, %v2943
    %v2950 = vadd.f32 %v135, %v2945
    %v2951 = vld [vmem:[%s9 + $0x16] sm:$0x3]
    %v2952 = vld [vmem:[%s9 + $0x18] sm:$0x3]
    %v2953 = vadd.f32 %v2947, %v2948
    %2954 = vadd.xlane.f32.xlu0 %v2953
    %v2955 = vpop.xlane.xlu0 %2954
    %v2956 = vadd.f32 %v2949, %v2950
    %2957 = vadd.xlane.f32.xlu0 %v2956
    %v2958 = vpop.xlane.xlu0 %2957
    %v2959 = vrcp.pop 256.0
    %v2960 = vmul.f32 %v2955, %v2959
    %v2961 = vmul.f32 %v2958, %v2959
    %v2962 = vsub.f32 %v2947, %v2960
    %v2963 = vsub.f32 %v2948, %v2960
    %v2964 = vsub.f32 %v2949, %v2961
    %v2965 = vsub.f32 %v2950, %v2961
    %v2966 = vmul.f32 %v2962, %v2962
    %v2967 = vmul.f32 %v2963, %v2963
    %v2968 = vmul.f32 %v2964, %v2964
    %v2969 = vmul.f32 %v2965, %v2965
    %v2970 = vadd.f32 %v2966, %v2967
    %2971 = vadd.xlane.f32.xlu0 %v2970
    %v2972 = vpop.xlane.xlu0 %2971
    %v2973 = vadd.f32 %v2968, %v2969
    %2974 = vadd.xlane.f32.xlu0 %v2973
    %v2975 = vpop.xlane.xlu0 %2974
    %v2976 = vmul.f32 %v2972, %v2959
    %v2977 = vmul.f32 %v2975, %v2959
    %v2978 = vadd.f32 %v2976, 1e-05
    %v2979 = vadd.f32 %v2977, 1e-05
    %v2980 = vrsqrt.pop %v2978
    %v2981 = vrsqrt.pop %v2979
    %v2982 = vmul.f32 %v2962, %v2980
    %v2983 = vmul.f32 %v2963, %v2980
    %v2984 = vmul.f32 %v2964, %v2981
    %v2985 = vmul.f32 %v2965, %v2981
    %v2987 = vlaneseq
    %v2988 = vshrl.u32 %v2987, 7
    %v2989 = vsub.s32 0, %v2988
    %v2990 = vrot.slane %v2951, %v2989
    %v2991 = vlaneseq
    %v2992 = vshrl.u32 %v2991, 7
    %v2993 = vsub.s32 1, %v2992
    %v2994 = vrot.slane %v2951, %v2993
    %v2997 = vmul.f32 %v2982, %v2990
    %v2998 = vmul.f32 %v2983, %v2994
    %v2999 = vmul.f32 %v2984, %v2990
    %v3000 = vmul.f32 %v2985, %v2994
    %v3002 = vlaneseq
    %v3003 = vshrl.u32 %v3002, 7
    %v3004 = vsub.s32 0, %v3003
    %v3005 = vrot.slane %v2952, %v3004
    %v3006 = vlaneseq
    %v3007 = vshrl.u32 %v3006, 7
    %v3008 = vsub.s32 1, %v3007
    %v3009 = vrot.slane %v2952, %v3008
    %v3012 = vadd.f32 %v2997, %v3005
    %v3013 = vadd.f32 %v2998, %v3009
    %v3014 = vadd.f32 %v2999, %v3005
    %v3015 = vadd.f32 %v3000, %v3009
    %v3016 = vpack.c.bf16 %v3014, %v3012
    %v3017 = vpack.c.bf16 %v3015, %v3013
    %v3018 = vld [vmem:[#allocation7] sm:$0xff]
    %v3019 = vld [vmem:[#allocation7 + $0x8] sm:$0xff]
    %v3020 = vld [vmem:[#allocation7 + $0x10] sm:$0xff]
    %v3021 = vld [vmem:[#allocation7 + $0x18] sm:$0xff]
    %v3022 = vld [vmem:[#allocation7 + $0x20] sm:$0xff]
    %v3023 = vld [vmem:[#allocation7 + $0x28] sm:$0xff]
    %v3024 = vld [vmem:[#allocation7 + $0x30] sm:$0xff]
    %v3025 = vld [vmem:[#allocation7 + $0x38] sm:$0xff]
    %v3026 = vld [vmem:[#allocation7 + $0x40] sm:$0xff]
    %v3027 = vld [vmem:[#allocation7 + $0x48] sm:$0xff]
    %v3028 = vld [vmem:[#allocation7 + $0x50] sm:$0xff]
    %v3029 = vld [vmem:[#allocation7 + $0x58] sm:$0xff]
    %v3030 = vld [vmem:[#allocation7 + $0x60] sm:$0xff]
    %v3031 = vld [vmem:[#allocation7 + $0x68] sm:$0xff]
    %v3032 = vld [vmem:[#allocation7 + $0x70] sm:$0xff]
    %v3033 = vld [vmem:[#allocation7 + $0x78] sm:$0xff]
    %v3034 = vld [vmem:[#allocation7 + $0x80] sm:$0xff]
    %v3035 = vld [vmem:[#allocation7 + $0x88] sm:$0xff]
    %v3036 = vld [vmem:[#allocation7 + $0x90] sm:$0xff]
    %v3037 = vld [vmem:[#allocation7 + $0x98] sm:$0xff]
    %v3038 = vld [vmem:[#allocation7 + $0xa0] sm:$0xff]
    %v3039 = vld [vmem:[#allocation7 + $0xa8] sm:$0xff]
    %v3040 = vld [vmem:[#allocation7 + $0xb0] sm:$0xff]
    %v3041 = vld [vmem:[#allocation7 + $0xb8] sm:$0xff]
    %v3042 = vld [vmem:[#allocation7 + $0xc0] sm:$0xff]
    %v3043 = vld [vmem:[#allocation7 + $0xc8] sm:$0xff]
    %v3044 = vld [vmem:[#allocation7 + $0xd0] sm:$0xff]
    %v3045 = vld [vmem:[#allocation7 + $0xd8] sm:$0xff]
    %v3046 = vld [vmem:[#allocation7 + $0xe0] sm:$0xff]
    %v3047 = vld [vmem:[#allocation7 + $0xe8] sm:$0xff]
    %v3048 = vld [vmem:[#allocation7 + $0xf0] sm:$0xff]
    %v3049 = vld [vmem:[#allocation7 + $0xf8] sm:$0xff]
    %v3050 = vld [vmem:[%s9 + $0x8] sm:$0x3]
    %v3052 = vlaneseq
    %v3053 = vshrl.u32 %v3052, 7
    %v3054 = vsub.s32 0, %v3053
    %v3055 = vrot.slane %v3050, %v3054
    %v3056 = vlaneseq
    %v3057 = vshrl.u32 %v3056, 7
    %v3058 = vsub.s32 1, %v3057
    %v3059 = vrot.slane %v3050, %v3058
    %v3094 = vunpack.c.l.b16 %v3018
    %v3095 = vunpack.c.h.b16 %v3018
    %v3096 = vunpack.c.l.b16 %v3019
    %v3097 = vunpack.c.h.b16 %v3019
    %v3098 = vunpack.c.l.b16 %v3020
    %v3099 = vunpack.c.h.b16 %v3020
    %v3100 = vunpack.c.l.b16 %v3021
    %v3101 = vunpack.c.h.b16 %v3021
    %v3102 = vunpack.c.l.b16 %v3022
    %v3103 = vunpack.c.h.b16 %v3022
    %v3104 = vunpack.c.l.b16 %v3023
    %v3105 = vunpack.c.h.b16 %v3023
    %v3106 = vunpack.c.l.b16 %v3024
    %v3107 = vunpack.c.h.b16 %v3024
    %v3108 = vunpack.c.l.b16 %v3025
    %v3109 = vunpack.c.h.b16 %v3025
    %v3110 = vunpack.c.l.b16 %v3026
    %v3111 = vunpack.c.h.b16 %v3026
    %v3112 = vunpack.c.l.b16 %v3027
    %v3113 = vunpack.c.h.b16 %v3027
    %v3114 = vunpack.c.l.b16 %v3028
    %v3115 = vunpack.c.h.b16 %v3028
    %v3116 = vunpack.c.l.b16 %v3029
    %v3117 = vunpack.c.h.b16 %v3029
    %v3118 = vunpack.c.l.b16 %v3030
    %v3119 = vunpack.c.h.b16 %v3030
    %v3120 = vunpack.c.l.b16 %v3031
    %v3121 = vunpack.c.h.b16 %v3031
    %v3122 = vunpack.c.l.b16 %v3032
    %v3123 = vunpack.c.h.b16 %v3032
    %v3124 = vunpack.c.l.b16 %v3033
    %v3125 = vunpack.c.h.b16 %v3033
    %v3126 = vunpack.c.l.b16 %v3034
    %v3127 = vunpack.c.h.b16 %v3034
    %v3128 = vunpack.c.l.b16 %v3035
    %v3129 = vunpack.c.h.b16 %v3035
    %v3130 = vunpack.c.l.b16 %v3036
    %v3131 = vunpack.c.h.b16 %v3036
    %v3132 = vunpack.c.l.b16 %v3037
    %v3133 = vunpack.c.h.b16 %v3037
    %v3134 = vunpack.c.l.b16 %v3038
    %v3135 = vunpack.c.h.b16 %v3038
    %v3136 = vunpack.c.l.b16 %v3039
    %v3137 = vunpack.c.h.b16 %v3039
    %v3138 = vunpack.c.l.b16 %v3040
    %v3139 = vunpack.c.h.b16 %v3040
    %v3140 = vunpack.c.l.b16 %v3041
    %v3141 = vunpack.c.h.b16 %v3041
    %v3142 = vunpack.c.l.b16 %v3042
    %v3143 = vunpack.c.h.b16 %v3042
    %v3144 = vunpack.c.l.b16 %v3043
    %v3145 = vunpack.c.h.b16 %v3043
    %v3146 = vunpack.c.l.b16 %v3044
    %v3147 = vunpack.c.h.b16 %v3044
    %v3148 = vunpack.c.l.b16 %v3045
    %v3149 = vunpack.c.h.b16 %v3045
    %v3150 = vunpack.c.l.b16 %v3046
    %v3151 = vunpack.c.h.b16 %v3046
    %v3152 = vunpack.c.l.b16 %v3047
    %v3153 = vunpack.c.h.b16 %v3047
    %v3154 = vunpack.c.l.b16 %v3048
    %v3155 = vunpack.c.h.b16 %v3048
    %v3156 = vunpack.c.l.b16 %v3049
    %v3157 = vunpack.c.h.b16 %v3049
    %v3158 = vpack.c.b16 %v3096, %v3094
    %v3159 = vpack.c.b16 %v3097, %v3095
    %v3160 = vpack.c.b16 %v3100, %v3098
    %v3161 = vpack.c.b16 %v3101, %v3099
    %v3162 = vpack.c.b16 %v3104, %v3102
    %v3163 = vpack.c.b16 %v3105, %v3103
    %v3164 = vpack.c.b16 %v3108, %v3106
    %v3165 = vpack.c.b16 %v3109, %v3107
    %v3166 = vpack.c.b16 %v3112, %v3110
    %v3167 = vpack.c.b16 %v3113, %v3111
    %v3168 = vpack.c.b16 %v3116, %v3114
    %v3169 = vpack.c.b16 %v3117, %v3115
    %v3170 = vpack.c.b16 %v3120, %v3118
    %v3171 = vpack.c.b16 %v3121, %v3119
    %v3172 = vpack.c.b16 %v3124, %v3122
    %v3173 = vpack.c.b16 %v3125, %v3123
    %v3174 = vpack.c.b16 %v3128, %v3126
    %v3175 = vpack.c.b16 %v3129, %v3127
    %v3176 = vpack.c.b16 %v3132, %v3130
    %v3177 = vpack.c.b16 %v3133, %v3131
    %v3178 = vpack.c.b16 %v3136, %v3134
    %v3179 = vpack.c.b16 %v3137, %v3135
    %v3180 = vpack.c.b16 %v3140, %v3138
    %v3181 = vpack.c.b16 %v3141, %v3139
    %v3182 = vpack.c.b16 %v3144, %v3142
    %v3183 = vpack.c.b16 %v3145, %v3143
    %v3184 = vpack.c.b16 %v3148, %v3146
    %v3185 = vpack.c.b16 %v3149, %v3147
    %v3186 = vpack.c.b16 %v3152, %v3150
    %v3187 = vpack.c.b16 %v3153, %v3151
    %v3188 = vpack.c.b16 %v3156, %v3154
    %v3189 = vpack.c.b16 %v3157, %v3155
    %3222 = vmatprep.subr.bf16.mxu0 %v3159
    %3223 = vmatpush1.bf16.msra.mxu0 %v3158
    %3224 = vmatprep.subr.bf16.mxu0 %v3161
    %3225 = vmatpush1.bf16.msra.mxu0 %v3160
    %3226 = vmatprep.subr.bf16.mxu0 %v3163
    %3227 = vmatpush1.bf16.msra.mxu0 %v3162
    %3228 = vmatprep.subr.bf16.mxu0 %v3165
    %3229 = vmatpush1.bf16.msra.mxu0 %v3164
    %3230 = vmatprep.subr.bf16.mxu0 %v3167
    %3231 = vmatpush1.bf16.msra.mxu0 %v3166
    %3232 = vmatprep.subr.bf16.mxu0 %v3169
    %3233 = vmatpush1.bf16.msra.mxu0 %v3168
    %3234 = vmatprep.subr.bf16.mxu0 %v3171
    %3235 = vmatpush1.bf16.msra.mxu0 %v3170
    %3236 = vmatprep.subr.bf16.mxu0 %v3173
    %3237 = vmatpush1.bf16.msra.mxu0 %v3172
    %3238 = vmatprep.subr.bf16.mxu0 %v3175
    %3239 = vmatpush1.bf16.msra.mxu0 %v3174
    %3240 = vmatprep.subr.bf16.mxu0 %v3177
    %3241 = vmatpush1.bf16.msra.mxu0 %v3176
    %3242 = vmatprep.subr.bf16.mxu0 %v3179
    %3243 = vmatpush1.bf16.msra.mxu0 %v3178
    %3244 = vmatprep.subr.bf16.mxu0 %v3181
    %3245 = vmatpush1.bf16.msra.mxu0 %v3180
    %3246 = vmatprep.subr.bf16.mxu0 %v3183
    %3247 = vmatpush1.bf16.msra.mxu0 %v3182
    %3248 = vmatprep.subr.bf16.mxu0 %v3185
    %3249 = vmatpush1.bf16.msra.mxu0 %v3184
    %3250 = vmatprep.subr.bf16.mxu0 %v3187
    %3251 = vmatpush1.bf16.msra.mxu0 %v3186
    %3252 = vmatprep.subr.bf16.mxu0 %v3189
    %3253 = vmatpush1.bf16.msra.mxu0 %v3188
    %3254 = vmatprep.mubr.bf16.mxu0 %v3017
    %3255 = vmatmul.mubr.bf16.gmra.mrb[0].mxu0 %v3016
    %v3256 = vpop.f32.mrb[0].mxu0
    %v3257 = vadd.f32 %v3055, %v3256
    %v3258 = vpop.f32.mrb[0].mxu0
    %v3259 = vadd.f32 %v3059, %v3258
    %v3260 = vpop.f32.mrb[0].mxu0
    %v3261 = vadd.f32 %v3055, %v3260
    %v3262 = vpop.f32.mrb[0].mxu0
    %v3263 = vadd.f32 %v3059, %v3262
    %3264 = vdwg.mxu0
    %v3265 = vmul.f32 %v3257, 0.17677669
    %v3266 = vmul.f32 %v3259, 0.17677669
    %v3267 = vmul.f32 %v3261, 0.17677669
    %v3268 = vmul.f32 %v3263, 0.17677669
    %v3269 = vld [vmem:[%s1] sm:$0xff]
    %v3270 = vld [vmem:[%s1 + $0x8] sm:$0xff]
    %v3271 = vld [vmem:[%s1 + $0x10] sm:$0xff]
    %v3272 = vld [vmem:[%s1 + $0x18] sm:$0xff]
    %v3273 = vpack.c.bf16 %v3271, %v3269
    %v3274 = vpack.c.bf16 %v3272, %v3270
    %v3275 = vld [vmem:[#allocation8] sm:$0xff]
    %v3276 = vld [vmem:[#allocation8 + $0x8] sm:$0xff]
    %v3277 = vld [vmem:[#allocation8 + $0x10] sm:$0xff]
    %v3278 = vld [vmem:[#allocation8 + $0x18] sm:$0xff]
    %v3279 = vld [vmem:[#allocation8 + $0x20] sm:$0xff]
    %v3280 = vld [vmem:[#allocation8 + $0x28] sm:$0xff]
    %v3281 = vld [vmem:[#allocation8 + $0x30] sm:$0xff]
    %v3282 = vld [vmem:[#allocation8 + $0x38] sm:$0xff]
    %v3283 = vld [vmem:[#allocation8 + $0x40] sm:$0xff]
    %v3284 = vld [vmem:[#allocation8 + $0x48] sm:$0xff]
    %v3285 = vld [vmem:[#allocation8 + $0x50] sm:$0xff]
    %v3286 = vld [vmem:[#allocation8 + $0x58] sm:$0xff]
    %v3287 = vld [vmem:[#allocation8 + $0x60] sm:$0xff]
    %v3288 = vld [vmem:[#allocation8 + $0x68] sm:$0xff]
    %v3289 = vld [vmem:[#allocation8 + $0x70] sm:$0xff]
    %v3290 = vld [vmem:[#allocation8 + $0x78] sm:$0xff]
    %v3291 = vld [vmem:[#allocation8 + $0x80] sm:$0xff]
    %v3292 = vld [vmem:[#allocation8 + $0x88] sm:$0xff]
    %v3293 = vld [vmem:[#allocation8 + $0x90] sm:$0xff]
    %v3294 = vld [vmem:[#allocation8 + $0x98] sm:$0xff]
    %v3295 = vld [vmem:[#allocation8 + $0xa0] sm:$0xff]
    %v3296 = vld [vmem:[#allocation8 + $0xa8] sm:$0xff]
    %v3297 = vld [vmem:[#allocation8 + $0xb0] sm:$0xff]
    %v3298 = vld [vmem:[#allocation8 + $0xb8] sm:$0xff]
    %v3299 = vld [vmem:[#allocation8 + $0xc0] sm:$0xff]
    %v3300 = vld [vmem:[#allocation8 + $0xc8] sm:$0xff]
    %v3301 = vld [vmem:[#allocation8 + $0xd0] sm:$0xff]
    %v3302 = vld [vmem:[#allocation8 + $0xd8] sm:$0xff]
    %v3303 = vld [vmem:[#allocation8 + $0xe0] sm:$0xff]
    %v3304 = vld [vmem:[#allocation8 + $0xe8] sm:$0xff]
    %v3305 = vld [vmem:[#allocation8 + $0xf0] sm:$0xff]
    %v3306 = vld [vmem:[#allocation8 + $0xf8] sm:$0xff]
    %v3307 = vld [vmem:[#allocation8 + $0x100] sm:$0xff]
    %v3308 = vld [vmem:[#allocation8 + $0x108] sm:$0xff]
    %v3309 = vld [vmem:[#allocation8 + $0x110] sm:$0xff]
    %v3310 = vld [vmem:[#allocation8 + $0x118] sm:$0xff]
    %v3311 = vld [vmem:[#allocation8 + $0x120] sm:$0xff]
    %v3312 = vld [vmem:[#allocation8 + $0x128] sm:$0xff]
    %v3313 = vld [vmem:[#allocation8 + $0x130] sm:$0xff]
    %v3314 = vld [vmem:[#allocation8 + $0x138] sm:$0xff]
    %v3315 = vld [vmem:[#allocation8 + $0x140] sm:$0xff]
    %v3316 = vld [vmem:[#allocation8 + $0x148] sm:$0xff]
    %v3317 = vld [vmem:[#allocation8 + $0x150] sm:$0xff]
    %v3318 = vld [vmem:[#allocation8 + $0x158] sm:$0xff]
    %v3319 = vld [vmem:[#allocation8 + $0x160] sm:$0xff]
    %v3320 = vld [vmem:[#allocation8 + $0x168] sm:$0xff]
    %v3321 = vld [vmem:[#allocation8 + $0x170] sm:$0xff]
    %v3322 = vld [vmem:[#allocation8 + $0x178] sm:$0xff]
    %v3323 = vld [vmem:[#allocation8 + $0x180] sm:$0xff]
    %v3324 = vld [vmem:[#allocation8 + $0x188] sm:$0xff]
    %v3325 = vld [vmem:[#allocation8 + $0x190] sm:$0xff]
    %v3326 = vld [vmem:[#allocation8 + $0x198] sm:$0xff]
    %v3327 = vld [vmem:[#allocation8 + $0x1a0] sm:$0xff]
    %v3328 = vld [vmem:[#allocation8 + $0x1a8] sm:$0xff]
    %v3329 = vld [vmem:[#allocation8 + $0x1b0] sm:$0xff]
    %v3330 = vld [vmem:[#allocation8 + $0x1b8] sm:$0xff]
    %v3331 = vld [vmem:[#allocation8 + $0x1c0] sm:$0xff]
    %v3332 = vld [vmem:[#allocation8 + $0x1c8] sm:$0xff]
    %v3333 = vld [vmem:[#allocation8 + $0x1d0] sm:$0xff]
    %v3334 = vld [vmem:[#allocation8 + $0x1d8] sm:$0xff]
    %v3335 = vld [vmem:[#allocation8 + $0x1e0] sm:$0xff]
    %v3336 = vld [vmem:[#allocation8 + $0x1e8] sm:$0xff]
    %v3337 = vld [vmem:[#allocation8 + $0x1f0] sm:$0xff]
    %v3338 = vld [vmem:[#allocation8 + $0x1f8] sm:$0xff]
    %v3339 = vld [vmem:[%s9 + $0xa] sm:$0xf]
    %v3341 = vlaneseq
    %v3342 = vshrl.u32 %v3341, 7
    %v3343 = vsub.s32 0, %v3342
    %v3344 = vrot.slane %v3339, %v3343
    %v3345 = vlaneseq
    %v3346 = vshrl.u32 %v3345, 7
    %v3347 = vsub.s32 1, %v3346
    %v3348 = vrot.slane %v3339, %v3347
    %v3349 = vlaneseq
    %v3350 = vshrl.u32 %v3349, 7
    %v3351 = vsub.s32 2, %v3350
    %v3352 = vrot.slane %v3339, %v3351
    %v3353 = vlaneseq
    %v3354 = vshrl.u32 %v3353, 7
    %v3355 = vsub.s32 3, %v3354
    %v3356 = vrot.slane %v3339, %v3355
    %v3425 = vunpack.c.l.b16 %v3275
    %v3426 = vunpack.c.h.b16 %v3275
    %v3427 = vunpack.c.l.b16 %v3276
    %v3428 = vunpack.c.h.b16 %v3276
    %v3429 = vunpack.c.l.b16 %v3277
    %v3430 = vunpack.c.h.b16 %v3277
    %v3431 = vunpack.c.l.b16 %v3278
    %v3432 = vunpack.c.h.b16 %v3278
    %v3433 = vunpack.c.l.b16 %v3279
    %v3434 = vunpack.c.h.b16 %v3279
    %v3435 = vunpack.c.l.b16 %v3280
    %v3436 = vunpack.c.h.b16 %v3280
    %v3437 = vunpack.c.l.b16 %v3281
    %v3438 = vunpack.c.h.b16 %v3281
    %v3439 = vunpack.c.l.b16 %v3282
    %v3440 = vunpack.c.h.b16 %v3282
    %v3441 = vunpack.c.l.b16 %v3283
    %v3442 = vunpack.c.h.b16 %v3283
    %v3443 = vunpack.c.l.b16 %v3284
    %v3444 = vunpack.c.h.b16 %v3284
    %v3445 = vunpack.c.l.b16 %v3285
    %v3446 = vunpack.c.h.b16 %v3285
    %v3447 = vunpack.c.l.b16 %v3286
    %v3448 = vunpack.c.h.b16 %v3286
    %v3449 = vunpack.c.l.b16 %v3287
    %v3450 = vunpack.c.h.b16 %v3287
    %v3451 = vunpack.c.l.b16 %v3288
    %v3452 = vunpack.c.h.b16 %v3288
    %v3453 = vunpack.c.l.b16 %v3289
    %v3454 = vunpack.c.h.b16 %v3289
    %v3455 = vunpack.c.l.b16 %v3290
    %v3456 = vunpack.c.h.b16 %v3290
    %v3457 = vunpack.c.l.b16 %v3291
    %v3458 = vunpack.c.h.b16 %v3291
    %v3459 = vunpack.c.l.b16 %v3292
    %v3460 = vunpack.c.h.b16 %v3292
    %v3461 = vunpack.c.l.b16 %v3293
    %v3462 = vunpack.c.h.b16 %v3293
    %v3463 = vunpack.c.l.b16 %v3294
    %v3464 = vunpack.c.h.b16 %v3294
    %v3465 = vunpack.c.l.b16 %v3295
    %v3466 = vunpack.c.h.b16 %v3295
    %v3467 = vunpack.c.l.b16 %v3296
    %v3468 = vunpack.c.h.b16 %v3296
    %v3469 = vunpack.c.l.b16 %v3297
    %v3470 = vunpack.c.h.b16 %v3297
    %v3471 = vunpack.c.l.b16 %v3298
    %v3472 = vunpack.c.h.b16 %v3298
    %v3473 = vunpack.c.l.b16 %v3299
    %v3474 = vunpack.c.h.b16 %v3299
    %v3475 = vunpack.c.l.b16 %v3300
    %v3476 = vunpack.c.h.b16 %v3300
    %v3477 = vunpack.c.l.b16 %v3301
    %v3478 = vunpack.c.h.b16 %v3301
    %v3479 = vunpack.c.l.b16 %v3302
    %v3480 = vunpack.c.h.b16 %v3302
    %v3481 = vunpack.c.l.b16 %v3303
    %v3482 = vunpack.c.h.b16 %v3303
    %v3483 = vunpack.c.l.b16 %v3304
    %v3484 = vunpack.c.h.b16 %v3304
    %v3485 = vunpack.c.l.b16 %v3305
    %v3486 = vunpack.c.h.b16 %v3305
    %v3487 = vunpack.c.l.b16 %v3306
    %v3488 = vunpack.c.h.b16 %v3306
    %v3489 = vunpack.c.l.b16 %v3307
    %v3490 = vunpack.c.h.b16 %v3307
    %v3491 = vunpack.c.l.b16 %v3308
    %v3492 = vunpack.c.h.b16 %v3308
    %v3493 = vunpack.c.l.b16 %v3309
    %v3494 = vunpack.c.h.b16 %v3309
    %v3495 = vunpack.c.l.b16 %v3310
    %v3496 = vunpack.c.h.b16 %v3310
    %v3497 = vunpack.c.l.b16 %v3311
    %v3498 = vunpack.c.h.b16 %v3311
    %v3499 = vunpack.c.l.b16 %v3312
    %v3500 = vunpack.c.h.b16 %v3312
    %v3501 = vunpack.c.l.b16 %v3313
    %v3502 = vunpack.c.h.b16 %v3313
    %v3503 = vunpack.c.l.b16 %v3314
    %v3504 = vunpack.c.h.b16 %v3314
    %v3505 = vunpack.c.l.b16 %v3315
    %v3506 = vunpack.c.h.b16 %v3315
    %v3507 = vunpack.c.l.b16 %v3316
    %v3508 = vunpack.c.h.b16 %v3316
    %v3509 = vunpack.c.l.b16 %v3317
    %v3510 = vunpack.c.h.b16 %v3317
    %v3511 = vunpack.c.l.b16 %v3318
    %v3512 = vunpack.c.h.b16 %v3318
    %v3513 = vunpack.c.l.b16 %v3319
    %v3514 = vunpack.c.h.b16 %v3319
    %v3515 = vunpack.c.l.b16 %v3320
    %v3516 = vunpack.c.h.b16 %v3320
    %v3517 = vunpack.c.l.b16 %v3321
    %v3518 = vunpack.c.h.b16 %v3321
    %v3519 = vunpack.c.l.b16 %v3322
    %v3520 = vunpack.c.h.b16 %v3322
    %v3521 = vunpack.c.l.b16 %v3323
    %v3522 = vunpack.c.h.b16 %v3323
    %v3523 = vunpack.c.l.b16 %v3324
    %v3524 = vunpack.c.h.b16 %v3324
    %v3525 = vunpack.c.l.b16 %v3325
    %v3526 = vunpack.c.h.b16 %v3325
    %v3527 = vunpack.c.l.b16 %v3326
    %v3528 = vunpack.c.h.b16 %v3326
    %v3529 = vunpack.c.l.b16 %v3327
    %v3530 = vunpack.c.h.b16 %v3327
    %v3531 = vunpack.c.l.b16 %v3328
    %v3532 = vunpack.c.h.b16 %v3328
    %v3533 = vunpack.c.l.b16 %v3329
    %v3534 = vunpack.c.h.b16 %v3329
    %v3535 = vunpack.c.l.b16 %v3330
    %v3536 = vunpack.c.h.b16 %v3330
    %v3537 = vunpack.c.l.b16 %v3331
    %v3538 = vunpack.c.h.b16 %v3331
    %v3539 = vunpack.c.l.b16 %v3332
    %v3540 = vunpack.c.h.b16 %v3332
    %v3541 = vunpack.c.l.b16 %v3333
    %v3542 = vunpack.c.h.b16 %v3333
    %v3543 = vunpack.c.l.b16 %v3334
    %v3544 = vunpack.c.h.b16 %v3334
    %v3545 = vunpack.c.l.b16 %v3335
    %v3546 = vunpack.c.h.b16 %v3335
    %v3547 = vunpack.c.l.b16 %v3336
    %v3548 = vunpack.c.h.b16 %v3336
    %v3549 = vunpack.c.l.b16 %v3337
    %v3550 = vunpack.c.h.b16 %v3337
    %v3551 = vunpack.c.l.b16 %v3338
    %v3552 = vunpack.c.h.b16 %v3338
    %v3553 = vpack.c.b16 %v3429, %v3425
    %v3554 = vpack.c.b16 %v3430, %v3426
    %v3555 = vpack.c.b16 %v3431, %v3427
    %v3556 = vpack.c.b16 %v3432, %v3428
    %v3557 = vpack.c.b16 %v3437, %v3433
    %v3558 = vpack.c.b16 %v3438, %v3434
    %v3559 = vpack.c.b16 %v3439, %v3435
    %v3560 = vpack.c.b16 %v3440, %v3436
    %v3561 = vpack.c.b16 %v3445, %v3441
    %v3562 = vpack.c.b16 %v3446, %v3442
    %v3563 = vpack.c.b16 %v3447, %v3443
    %v3564 = vpack.c.b16 %v3448, %v3444
    %v3565 = vpack.c.b16 %v3453, %v3449
    %v3566 = vpack.c.b16 %v3454, %v3450
    %v3567 = vpack.c.b16 %v3455, %v3451
    %v3568 = vpack.c.b16 %v3456, %v3452
    %v3569 = vpack.c.b16 %v3461, %v3457
    %v3570 = vpack.c.b16 %v3462, %v3458
    %v3571 = vpack.c.b16 %v3463, %v3459
    %v3572 = vpack.c.b16 %v3464, %v3460
    %v3573 = vpack.c.b16 %v3469, %v3465
    %v3574 = vpack.c.b16 %v3470, %v3466
    %v3575 = vpack.c.b16 %v3471, %v3467
    %v3576 = vpack.c.b16 %v3472, %v3468
    %v3577 = vpack.c.b16 %v3477, %v3473
    %v3578 = vpack.c.b16 %v3478, %v3474
    %v3579 = vpack.c.b16 %v3479, %v3475
    %v3580 = vpack.c.b16 %v3480, %v3476
    %v3581 = vpack.c.b16 %v3485, %v3481
    %v3582 = vpack.c.b16 %v3486, %v3482
    %v3583 = vpack.c.b16 %v3487, %v3483
    %v3584 = vpack.c.b16 %v3488, %v3484
    %v3585 = vpack.c.b16 %v3493, %v3489
    %v3586 = vpack.c.b16 %v3494, %v3490
    %v3587 = vpack.c.b16 %v3495, %v3491
    %v3588 = vpack.c.b16 %v3496, %v3492
    %v3589 = vpack.c.b16 %v3501, %v3497
    %v3590 = vpack.c.b16 %v3502, %v3498
    %v3591 = vpack.c.b16 %v3503, %v3499
    %v3592 = vpack.c.b16 %v3504, %v3500
    %v3593 = vpack.c.b16 %v3509, %v3505
    %v3594 = vpack.c.b16 %v3510, %v3506
    %v3595 = vpack.c.b16 %v3511, %v3507
    %v3596 = vpack.c.b16 %v3512, %v3508
    %v3597 = vpack.c.b16 %v3517, %v3513
    %v3598 = vpack.c.b16 %v3518, %v3514
    %v3599 = vpack.c.b16 %v3519, %v3515
    %v3600 = vpack.c.b16 %v3520, %v3516
    %v3601 = vpack.c.b16 %v3525, %v3521
    %v3602 = vpack.c.b16 %v3526, %v3522
    %v3603 = vpack.c.b16 %v3527, %v3523
    %v3604 = vpack.c.b16 %v3528, %v3524
    %v3605 = vpack.c.b16 %v3533, %v3529
    %v3606 = vpack.c.b16 %v3534, %v3530
    %v3607 = vpack.c.b16 %v3535, %v3531
    %v3608 = vpack.c.b16 %v3536, %v3532
    %v3609 = vpack.c.b16 %v3541, %v3537
    %v3610 = vpack.c.b16 %v3542, %v3538
    %v3611 = vpack.c.b16 %v3543, %v3539
    %v3612 = vpack.c.b16 %v3544, %v3540
    %v3613 = vpack.c.b16 %v3549, %v3545
    %v3614 = vpack.c.b16 %v3550, %v3546
    %v3615 = vpack.c.b16 %v3551, %v3547
    %v3616 = vpack.c.b16 %v3552, %v3548
    %3681 = vmatprep.subr.bf16.mxu0 %v3554
    %3682 = vmatpush1.bf16.msra.mxu0 %v3553
    %3683 = vmatprep.subr.bf16.mxu0 %v3558
    %3684 = vmatpush1.bf16.msra.mxu0 %v3557
    %3685 = vmatprep.subr.bf16.mxu0 %v3562
    %3686 = vmatpush1.bf16.msra.mxu0 %v3561
    %3687 = vmatprep.subr.bf16.mxu0 %v3566
    %3688 = vmatpush1.bf16.msra.mxu0 %v3565
    %3689 = vmatprep.subr.bf16.mxu0 %v3570
    %3690 = vmatpush1.bf16.msra.mxu0 %v3569
    %3691 = vmatprep.subr.bf16.mxu0 %v3574
    %3692 = vmatpush1.bf16.msra.mxu0 %v3573
    %3693 = vmatprep.subr.bf16.mxu0 %v3578
    %3694 = vmatpush1.bf16.msra.mxu0 %v3577
    %3695 = vmatprep.subr.bf16.mxu0 %v3582
    %3696 = vmatpush1.bf16.msra.mxu0 %v3581
    %3697 = vmatprep.subr.bf16.mxu0 %v3586
    %3698 = vmatpush1.bf16.msra.mxu0 %v3585
    %3699 = vmatprep.subr.bf16.mxu0 %v3590
    %3700 = vmatpush1.bf16.msra.mxu0 %v3589
    %3701 = vmatprep.subr.bf16.mxu0 %v3594
    %3702 = vmatpush1.bf16.msra.mxu0 %v3593
    %3703 = vmatprep.subr.bf16.mxu0 %v3598
    %3704 = vmatpush1.bf16.msra.mxu0 %v3597
    %3705 = vmatprep.subr.bf16.mxu0 %v3602
    %3706 = vmatpush1.bf16.msra.mxu0 %v3601
    %3707 = vmatprep.subr.bf16.mxu0 %v3606
    %3708 = vmatpush1.bf16.msra.mxu0 %v3605
    %3709 = vmatprep.subr.bf16.mxu0 %v3610
    %3710 = vmatpush1.bf16.msra.mxu0 %v3609
    %3711 = vmatprep.subr.bf16.mxu0 %v3614
    %3712 = vmatpush1.bf16.msra.mxu0 %v3613
    %3713 = vmatprep.mubr.bf16.mxu0 %v3274
    %3714 = vmatmul.mubr.bf16.gmra.mrb[0].mxu0 %v3273
    %v3715 = vpop.f32.mrb[0].mxu0
    %v3716 = vadd.f32 %v3344, %v3715
    %v3717 = vpop.f32.mrb[0].mxu0
    %v3718 = vadd.f32 %v3348, %v3717
    %v3719 = vpop.f32.mrb[0].mxu0
    %v3720 = vadd.f32 %v3344, %v3719
    %v3721 = vpop.f32.mrb[0].mxu0
    %v3722 = vadd.f32 %v3348, %v3721
    %3723 = vdwg.mxu0
    %3724 = vmatprep.subr.bf16.mxu0 %v3556
    %3725 = vmatpush1.bf16.msra.mxu0 %v3555
    %3726 = vmatprep.subr.bf16.mxu0 %v3560
    %3727 = vmatpush1.bf16.msra.mxu0 %v3559
    %3728 = vmatprep.subr.bf16.mxu0 %v3564
    %3729 = vmatpush1.bf16.msra.mxu0 %v3563
    %3730 = vmatprep.subr.bf16.mxu0 %v3568
    %3731 = vmatpush1.bf16.msra.mxu0 %v3567
    %3732 = vmatprep.subr.bf16.mxu0 %v3572
    %3733 = vmatpush1.bf16.msra.mxu0 %v3571
    %3734 = vmatprep.subr.bf16.mxu0 %v3576
    %3735 = vmatpush1.bf16.msra.mxu0 %v3575
    %3736 = vmatprep.subr.bf16.mxu0 %v3580
    %3737 = vmatpush1.bf16.msra.mxu0 %v3579
    %3738 = vmatprep.subr.bf16.mxu0 %v3584
    %3739 = vmatpush1.bf16.msra.mxu0 %v3583
    %3740 = vmatprep.subr.bf16.mxu0 %v3588
    %3741 = vmatpush1.bf16.msra.mxu0 %v3587
    %3742 = vmatprep.subr.bf16.mxu0 %v3592
    %3743 = vmatpush1.bf16.msra.mxu0 %v3591
    %3744 = vmatprep.subr.bf16.mxu0 %v3596
    %3745 = vmatpush1.bf16.msra.mxu0 %v3595
    %3746 = vmatprep.subr.bf16.mxu0 %v3600
    %3747 = vmatpush1.bf16.msra.mxu0 %v3599
    %3748 = vmatprep.subr.bf16.mxu0 %v3604
    %3749 = vmatpush1.bf16.msra.mxu0 %v3603
    %3750 = vmatprep.subr.bf16.mxu0 %v3608
    %3751 = vmatpush1.bf16.msra.mxu0 %v3607
    %3752 = vmatprep.subr.bf16.mxu0 %v3612
    %3753 = vmatpush1.bf16.msra.mxu0 %v3611
    %3754 = vmatprep.subr.bf16.mxu0 %v3616
    %3755 = vmatpush1.bf16.msra.mxu0 %v3615
    %3756 = vmatprep.mubr.bf16.mxu0 %v3274
    %3757 = vmatmul.mubr.bf16.gmra.mrb[0].mxu0 %v3273
    %v3758 = vpop.f32.mrb[0].mxu0
    %v3759 = vadd.f32 %v3352, %v3758
    %v3760 = vpop.f32.mrb[0].mxu0
    %v3761 = vadd.f32 %v3356, %v3760
    %v3762 = vpop.f32.mrb[0].mxu0
    %v3763 = vadd.f32 %v3352, %v3762
    %v3764 = vpop.f32.mrb[0].mxu0
    %v3765 = vadd.f32 %v3356, %v3764
    %3766 = vdwg.mxu0
    %v3767 = vld [vmem:[%s9 + $0xe] sm:$0x3]
    %v3768 = vpack.c.bf16 %v3267, %v3265
    %v3769 = vpack.c.bf16 %v3268, %v3266
    %v3770 = vpack.c.bf16 %v3720, %v3716
    %v3771 = vpack.c.bf16 %v3722, %v3718
    %v3772 = vpack.c.bf16 %v3763, %v3759
    %v3773 = vpack.c.bf16 %v3765, %v3761
    %v3775 = vsel %vm886, %v3768, 0
    %v3778 = vsel %vm886, %v3770, 0
    %3780 = vmatprep.subr.bf16.mxu0 0
    %3781 = vmatpush1.bf16.xpose.msra.mxu0 %v3778
    %3782 = vmatprep.subr.bf16.mxu0 0
    %3783 = vmatpush1.bf16.xpose.msra.mxu0 0
    %3784 = vmatprep.subr.bf16.mxu0 0
    %3785 = vmatpush1.bf16.xpose.msra.mxu0 0
    %3786 = vmatprep.subr.bf16.mxu0 0
    %3787 = vmatpush1.bf16.xpose.msra.mxu0 0
    %3788 = vmatprep.subr.bf16.mxu0 0
    %3789 = vmatpush1.bf16.xpose.msra.mxu0 0
    %3790 = vmatprep.subr.bf16.mxu0 0
    %3791 = vmatpush1.bf16.xpose.msra.mxu0 0
    %3792 = vmatprep.subr.bf16.mxu0 0
    %3793 = vmatpush1.bf16.xpose.msra.mxu0 0
    %3794 = vmatprep.subr.bf16.mxu0 0
    %3795 = vmatpush1.bf16.xpose.msra.mxu0 0
    %3796 = vmatprep.subr.bf16.mxu0 0
    %3797 = vmatpush1.bf16.xpose.msra.mxu0 0
    %3798 = vmatprep.subr.bf16.mxu0 0
    %3799 = vmatpush1.bf16.xpose.msra.mxu0 0
    %3800 = vmatprep.subr.bf16.mxu0 0
    %3801 = vmatpush1.bf16.xpose.msra.mxu0 0
    %3802 = vmatprep.subr.bf16.mxu0 0
    %3803 = vmatpush1.bf16.xpose.msra.mxu0 0
    %3804 = vmatprep.subr.bf16.mxu0 0
    %3805 = vmatpush1.bf16.xpose.msra.mxu0 0
    %3806 = vmatprep.subr.bf16.mxu0 0
    %3807 = vmatpush1.bf16.xpose.msra.mxu0 0
    %3808 = vmatprep.subr.bf16.mxu0 0
    %3809 = vmatpush1.bf16.xpose.msra.mxu0 0
    %3810 = vmatprep.subr.bf16.mxu0 0
    %3811 = vmatpush1.bf16.xpose.msra.mxu0 0
    %3812 = vmatprep.mubr.bf16.mxu0 0
    %3813 = vmatmul.mubr.bf16.gmra.mrb[0].mxu0 %v3775
    %v3814 = vpop.f32.mrb[0].mxu0
    %v3815 = vadd.f32 0.0, %v3814
    %v3816 = vpop.f32.mrb[0].mxu0
    %v3817 = vpop.f32.mrb[0].mxu0
    %v3818 = vpop.f32.mrb[0].mxu0
    %3819 = vdwg.mxu0
    %v3820 = vsel %vm933, %v3815, -inf
    %3821 = vmax.xlane.f32.xlu0 %v3820
    %v3822 = vpop.xlane.xlu0 %3821
    %v3823 = vsub.f32 %v3815, %v3822
    %v3824 = vmul.f32 %v3823, 1.442695
    %v3825 = vpow.pop %v3824
    %v3826 = vsel %vm933, %v3825, 0.0
    %3827 = vadd.xlane.f32.xlu0 %v3826
    %v3828 = vpop.xlane.xlu0 %3827
    %v3829 = vrcp.pop %v3828
    %v3830 = vmul.f32 %v3825, %v3829
    %v3831 = vpack.c.bf16 %v3830, %v3830
    %v3833 = vsel %vm933, %v3831, 0
    %v3836 = vsel %vm949, %v3772, 0
    %3838 = vmatprep.subr.bf16.mxu0 0
    %3839 = vmatpush1.bf16.msra.mxu0 %v3836
    %3840 = vmatprep.subr.bf16.mxu0 0
    %3841 = vmatpush1.bf16.msra.mxu0 0
    %3842 = vmatprep.subr.bf16.mxu0 0
    %3843 = vmatpush1.bf16.msra.mxu0 0
    %3844 = vmatprep.subr.bf16.mxu0 0
    %3845 = vmatpush1.bf16.msra.mxu0 0
    %3846 = vmatprep.subr.bf16.mxu0 0
    %3847 = vmatpush1.bf16.msra.mxu0 0
    %3848 = vmatprep.subr.bf16.mxu0 0
    %3849 = vmatpush1.bf16.msra.mxu0 0
    %3850 = vmatprep.subr.bf16.mxu0 0
    %3851 = vmatpush1.bf16.msra.mxu0 0
    %3852 = vmatprep.subr.bf16.mxu0 0
    %3853 = vmatpush1.bf16.msra.mxu0 0
    %3854 = vmatprep.subr.bf16.mxu0 0
    %3855 = vmatpush1.bf16.msra.mxu0 0
    %3856 = vmatprep.subr.bf16.mxu0 0
    %3857 = vmatpush1.bf16.msra.mxu0 0
    %3858 = vmatprep.subr.bf16.mxu0 0
    %3859 = vmatpush1.bf16.msra.mxu0 0
    %3860 = vmatprep.subr.bf16.mxu0 0
    %3861 = vmatpush1.bf16.msra.mxu0 0
    %3862 = vmatprep.subr.bf16.mxu0 0
    %3863 = vmatpush1.bf16.msra.mxu0 0
    %3864 = vmatprep.subr.bf16.mxu0 0
    %3865 = vmatpush1.bf16.msra.mxu0 0
    %3866 = vmatprep.subr.bf16.mxu0 0
    %3867 = vmatpush1.bf16.msra.mxu0 0
    %3868 = vmatprep.subr.bf16.mxu0 0
    %3869 = vmatpush1.bf16.msra.mxu0 0
    %3870 = vmatprep.mubr.bf16.mxu0 0
    %3871 = vmatmul.mubr.bf16.gmra.mrb[0].mxu0 %v3833
    %v3872 = vpop.f32.mrb[0].mxu0
    %v3873 = vadd.f32 0.0, %v3872
    %v3874 = vpop.f32.mrb[0].mxu0
    %v3875 = vpop.f32.mrb[0].mxu0
    %v3876 = vpop.f32.mrb[0].mxu0
    %3877 = vdwg.mxu0
    %3879 = vrot.lane.b32.xlu0 %v3768, 96
    %v3880 = vpop.permute.xlu0 %3879
    %3882 = vrot.lane.b32.xlu0 %v3770, 96
    %v3883 = vpop.permute.xlu0 %3882
    %v3885 = vsel %vm886, %v3880, 0
    %v3888 = vsel %vm886, %v3883, 0
    %3890 = vmatprep.subr.bf16.mxu0 0
    %3891 = vmatpush1.bf16.xpose.msra.mxu0 %v3888
    %3892 = vmatprep.subr.bf16.mxu0 0
    %3893 = vmatpush1.bf16.xpose.msra.mxu0 0
    %3894 = vmatprep.subr.bf16.mxu0 0
    %3895 = vmatpush1.bf16.xpose.msra.mxu0 0
    %3896 = vmatprep.subr.bf16.mxu0 0
    %3897 = vmatpush1.bf16.xpose.msra.mxu0 0
    %3898 = vmatprep.subr.bf16.mxu0 0
    %3899 = vmatpush1.bf16.xpose.msra.mxu0 0
    %3900 = vmatprep.subr.bf16.mxu0 0
    %3901 = vmatpush1.bf16.xpose.msra.mxu0 0
    %3902 = vmatprep.subr.bf16.mxu0 0
    %3903 = vmatpush1.bf16.xpose.msra.mxu0 0
    %3904 = vmatprep.subr.bf16.mxu0 0
    %3905 = vmatpush1.bf16.xpose.msra.mxu0 0
    %3906 = vmatprep.subr.bf16.mxu0 0
    %3907 = vmatpush1.bf16.xpose.msra.mxu0 0
    %3908 = vmatprep.subr.bf16.mxu0 0
    %3909 = vmatpush1.bf16.xpose.msra.mxu0 0
    %3910 = vmatprep.subr.bf16.mxu0 0
    %3911 = vmatpush1.bf16.xpose.msra.mxu0 0
    %3912 = vmatprep.subr.bf16.mxu0 0
    %3913 = vmatpush1.bf16.xpose.msra.mxu0 0
    %3914 = vmatprep.subr.bf16.mxu0 0
    %3915 = vmatpush1.bf16.xpose.msra.mxu0 0
    %3916 = vmatprep.subr.bf16.mxu0 0
    %3917 = vmatpush1.bf16.xpose.msra.mxu0 0
    %3918 = vmatprep.subr.bf16.mxu0 0
    %3919 = vmatpush1.bf16.xpose.msra.mxu0 0
    %3920 = vmatprep.subr.bf16.mxu0 0
    %3921 = vmatpush1.bf16.xpose.msra.mxu0 0
    %3922 = vmatprep.mubr.bf16.mxu0 0
    %3923 = vmatmul.mubr.bf16.gmra.mrb[0].mxu0 %v3885
    %v3924 = vpop.f32.mrb[0].mxu0
    %v3925 = vadd.f32 0.0, %v3924
    %v3926 = vpop.f32.mrb[0].mxu0
    %v3927 = vpop.f32.mrb[0].mxu0
    %v3928 = vpop.f32.mrb[0].mxu0
    %3929 = vdwg.mxu0
    %v3930 = vsel %vm933, %v3925, -inf
    %3931 = vmax.xlane.f32.xlu0 %v3930
    %v3932 = vpop.xlane.xlu0 %3931
    %v3933 = vsub.f32 %v3925, %v3932
    %v3934 = vmul.f32 %v3933, 1.442695
    %v3935 = vpow.pop %v3934
    %v3936 = vsel %vm933, %v3935, 0.0
    %3937 = vadd.xlane.f32.xlu0 %v3936
    %v3938 = vpop.xlane.xlu0 %3937
    %v3939 = vrcp.pop %v3938
    %v3940 = vmul.f32 %v3935, %v3939
    %v3941 = vpack.c.bf16 %v3940, %v3940
    %3943 = vrot.lane.b32.xlu0 %v3772, 96
    %v3944 = vpop.permute.xlu0 %3943
    %v3946 = vsel %vm933, %v3941, 0
    %v3949 = vsel %vm949, %v3944, 0
    %3951 = vmatprep.subr.bf16.mxu0 0
    %3952 = vmatpush1.bf16.msra.mxu0 %v3949
    %3953 = vmatprep.subr.bf16.mxu0 0
    %3954 = vmatpush1.bf16.msra.mxu0 0
    %3955 = vmatprep.subr.bf16.mxu0 0
    %3956 = vmatpush1.bf16.msra.mxu0 0
    %3957 = vmatprep.subr.bf16.mxu0 0
    %3958 = vmatpush1.bf16.msra.mxu0 0
    %3959 = vmatprep.subr.bf16.mxu0 0
    %3960 = vmatpush1.bf16.msra.mxu0 0
    %3961 = vmatprep.subr.bf16.mxu0 0
    %3962 = vmatpush1.bf16.msra.mxu0 0
    %3963 = vmatprep.subr.bf16.mxu0 0
    %3964 = vmatpush1.bf16.msra.mxu0 0
    %3965 = vmatprep.subr.bf16.mxu0 0
    %3966 = vmatpush1.bf16.msra.mxu0 0
    %3967 = vmatprep.subr.bf16.mxu0 0
    %3968 = vmatpush1.bf16.msra.mxu0 0
    %3969 = vmatprep.subr.bf16.mxu0 0
    %3970 = vmatpush1.bf16.msra.mxu0 0
    %3971 = vmatprep.subr.bf16.mxu0 0
    %3972 = vmatpush1.bf16.msra.mxu0 0
    %3973 = vmatprep.subr.bf16.mxu0 0
    %3974 = vmatpush1.bf16.msra.mxu0 0
    %3975 = vmatprep.subr.bf16.mxu0 0
    %3976 = vmatpush1.bf16.msra.mxu0 0
    %3977 = vmatprep.subr.bf16.mxu0 0
    %3978 = vmatpush1.bf16.msra.mxu0 0
    %3979 = vmatprep.subr.bf16.mxu0 0
    %3980 = vmatpush1.bf16.msra.mxu0 0
    %3981 = vmatprep.subr.bf16.mxu0 0
    %3982 = vmatpush1.bf16.msra.mxu0 0
    %3983 = vmatprep.mubr.bf16.mxu0 0
    %3984 = vmatmul.mubr.bf16.gmra.mrb[0].mxu0 %v3946
    %v3985 = vpop.f32.mrb[0].mxu0
    %v3986 = vadd.f32 0.0, %v3985
    %v3987 = vpop.f32.mrb[0].mxu0
    %v3988 = vpop.f32.mrb[0].mxu0
    %v3989 = vpop.f32.mrb[0].mxu0
    %3990 = vdwg.mxu0
    %3991 = vrot.lane.b32.xlu0 %v3768, 64
    %v3992 = vpop.permute.xlu0 %3991
    %3993 = vrot.lane.b32.xlu0 %v3770, 64
    %v3994 = vpop.permute.xlu0 %3993
    %v3996 = vsel %vm886, %v3992, 0
    %v3999 = vsel %vm886, %v3994, 0
    %4001 = vmatprep.subr.bf16.mxu0 0
    %4002 = vmatpush1.bf16.xpose.msra.mxu0 %v3999
    %4003 = vmatprep.subr.bf16.mxu0 0
    %4004 = vmatpush1.bf16.xpose.msra.mxu0 0
    %4005 = vmatprep.subr.bf16.mxu0 0
    %4006 = vmatpush1.bf16.xpose.msra.mxu0 0
    %4007 = vmatprep.subr.bf16.mxu0 0
    %4008 = vmatpush1.bf16.xpose.msra.mxu0 0
    %4009 = vmatprep.subr.bf16.mxu0 0
    %4010 = vmatpush1.bf16.xpose.msra.mxu0 0
    %4011 = vmatprep.subr.bf16.mxu0 0
    %4012 = vmatpush1.bf16.xpose.msra.mxu0 0
    %4013 = vmatprep.subr.bf16.mxu0 0
    %4014 = vmatpush1.bf16.xpose.msra.mxu0 0
    %4015 = vmatprep.subr.bf16.mxu0 0
    %4016 = vmatpush1.bf16.xpose.msra.mxu0 0
    %4017 = vmatprep.subr.bf16.mxu0 0
    %4018 = vmatpush1.bf16.xpose.msra.mxu0 0
    %4019 = vmatprep.subr.bf16.mxu0 0
    %4020 = vmatpush1.bf16.xpose.msra.mxu0 0
    %4021 = vmatprep.subr.bf16.mxu0 0
    %4022 = vmatpush1.bf16.xpose.msra.mxu0 0
    %4023 = vmatprep.subr.bf16.mxu0 0
    %4024 = vmatpush1.bf16.xpose.msra.mxu0 0
    %4025 = vmatprep.subr.bf16.mxu0 0
    %4026 = vmatpush1.bf16.xpose.msra.mxu0 0
    %4027 = vmatprep.subr.bf16.mxu0 0
    %4028 = vmatpush1.bf16.xpose.msra.mxu0 0
    %4029 = vmatprep.subr.bf16.mxu0 0
    %4030 = vmatpush1.bf16.xpose.msra.mxu0 0
    %4031 = vmatprep.subr.bf16.mxu0 0
    %4032 = vmatpush1.bf16.xpose.msra.mxu0 0
    %4033 = vmatprep.mubr.bf16.mxu0 0
    %4034 = vmatmul.mubr.bf16.gmra.mrb[0].mxu0 %v3996
    %v4035 = vpop.f32.mrb[0].mxu0
    %v4036 = vadd.f32 0.0, %v4035
    %v4037 = vpop.f32.mrb[0].mxu0
    %v4038 = vpop.f32.mrb[0].mxu0
    %v4039 = vpop.f32.mrb[0].mxu0
    %4040 = vdwg.mxu0
    %v4041 = vsel %vm933, %v4036, -inf
    %4042 = vmax.xlane.f32.xlu0 %v4041
    %v4043 = vpop.xlane.xlu0 %4042
    %v4044 = vsub.f32 %v4036, %v4043
    %v4045 = vmul.f32 %v4044, 1.442695
    %v4046 = vpow.pop %v4045
    %v4047 = vsel %vm933, %v4046, 0.0
    %4048 = vadd.xlane.f32.xlu0 %v4047
    %v4049 = vpop.xlane.xlu0 %4048
    %v4050 = vrcp.pop %v4049
    %v4051 = vmul.f32 %v4046, %v4050
    %v4052 = vpack.c.bf16 %v4051, %v4051
    %4053 = vrot.lane.b32.xlu0 %v3772, 64
    %v4054 = vpop.permute.xlu0 %4053
    %v4056 = vsel %vm933, %v4052, 0
    %v4059 = vsel %vm949, %v4054, 0
    %4061 = vmatprep.subr.bf16.mxu0 0
    %4062 = vmatpush1.bf16.msra.mxu0 %v4059
    %4063 = vmatprep.subr.bf16.mxu0 0
    %4064 = vmatpush1.bf16.msra.mxu0 0
    %4065 = vmatprep.subr.bf16.mxu0 0
    %4066 = vmatpush1.bf16.msra.mxu0 0
    %4067 = vmatprep.subr.bf16.mxu0 0
    %4068 = vmatpush1.bf16.msra.mxu0 0
    %4069 = vmatprep.subr.bf16.mxu0 0
    %4070 = vmatpush1.bf16.msra.mxu0 0
    %4071 = vmatprep.subr.bf16.mxu0 0
    %4072 = vmatpush1.bf16.msra.mxu0 0
    %4073 = vmatprep.subr.bf16.mxu0 0
    %4074 = vmatpush1.bf16.msra.mxu0 0
    %4075 = vmatprep.subr.bf16.mxu0 0
    %4076 = vmatpush1.bf16.msra.mxu0 0
    %4077 = vmatprep.subr.bf16.mxu0 0
    %4078 = vmatpush1.bf16.msra.mxu0 0
    %4079 = vmatprep.subr.bf16.mxu0 0
    %4080 = vmatpush1.bf16.msra.mxu0 0
    %4081 = vmatprep.subr.bf16.mxu0 0
    %4082 = vmatpush1.bf16.msra.mxu0 0
    %4083 = vmatprep.subr.bf16.mxu0 0
    %4084 = vmatpush1.bf16.msra.mxu0 0
    %4085 = vmatprep.subr.bf16.mxu0 0
    %4086 = vmatpush1.bf16.msra.mxu0 0
    %4087 = vmatprep.subr.bf16.mxu0 0
    %4088 = vmatpush1.bf16.msra.mxu0 0
    %4089 = vmatprep.subr.bf16.mxu0 0
    %4090 = vmatpush1.bf16.msra.mxu0 0
    %4091 = vmatprep.subr.bf16.mxu0 0
    %4092 = vmatpush1.bf16.msra.mxu0 0
    %4093 = vmatprep.mubr.bf16.mxu0 0
    %4094 = vmatmul.mubr.bf16.gmra.mrb[0].mxu0 %v4056
    %v4095 = vpop.f32.mrb[0].mxu0
    %v4096 = vadd.f32 0.0, %v4095
    %v4097 = vpop.f32.mrb[0].mxu0
    %v4098 = vpop.f32.mrb[0].mxu0
    %v4099 = vpop.f32.mrb[0].mxu0
    %4100 = vdwg.mxu0
    %4101 = vrot.lane.b32.xlu0 %v3768, 32
    %v4102 = vpop.permute.xlu0 %4101
    %4103 = vrot.lane.b32.xlu0 %v3770, 32
    %v4104 = vpop.permute.xlu0 %4103
    %v4106 = vsel %vm886, %v4102, 0
    %v4109 = vsel %vm886, %v4104, 0
    %4111 = vmatprep.subr.bf16.mxu0 0
    %4112 = vmatpush1.bf16.xpose.msra.mxu0 %v4109
    %4113 = vmatprep.subr.bf16.mxu0 0
    %4114 = vmatpush1.bf16.xpose.msra.mxu0 0
    %4115 = vmatprep.subr.bf16.mxu0 0
    %4116 = vmatpush1.bf16.xpose.msra.mxu0 0
    %4117 = vmatprep.subr.bf16.mxu0 0
    %4118 = vmatpush1.bf16.xpose.msra.mxu0 0
    %4119 = vmatprep.subr.bf16.mxu0 0
    %4120 = vmatpush1.bf16.xpose.msra.mxu0 0
    %4121 = vmatprep.subr.bf16.mxu0 0
    %4122 = vmatpush1.bf16.xpose.msra.mxu0 0
    %4123 = vmatprep.subr.bf16.mxu0 0
    %4124 = vmatpush1.bf16.xpose.msra.mxu0 0
    %4125 = vmatprep.subr.bf16.mxu0 0
    %4126 = vmatpush1.bf16.xpose.msra.mxu0 0
    %4127 = vmatprep.subr.bf16.mxu0 0
    %4128 = vmatpush1.bf16.xpose.msra.mxu0 0
    %4129 = vmatprep.subr.bf16.mxu0 0
    %4130 = vmatpush1.bf16.xpose.msra.mxu0 0
    %4131 = vmatprep.subr.bf16.mxu0 0
    %4132 = vmatpush1.bf16.xpose.msra.mxu0 0
    %4133 = vmatprep.subr.bf16.mxu0 0
    %4134 = vmatpush1.bf16.xpose.msra.mxu0 0
    %4135 = vmatprep.subr.bf16.mxu0 0
    %4136 = vmatpush1.bf16.xpose.msra.mxu0 0
    %4137 = vmatprep.subr.bf16.mxu0 0
    %4138 = vmatpush1.bf16.xpose.msra.mxu0 0
    %4139 = vmatprep.subr.bf16.mxu0 0
    %4140 = vmatpush1.bf16.xpose.msra.mxu0 0
    %4141 = vmatprep.subr.bf16.mxu0 0
    %4142 = vmatpush1.bf16.xpose.msra.mxu0 0
    %4143 = vmatprep.mubr.bf16.mxu0 0
    %4144 = vmatmul.mubr.bf16.gmra.mrb[0].mxu0 %v4106
    %v4145 = vpop.f32.mrb[0].mxu0
    %v4146 = vadd.f32 0.0, %v4145
    %v4147 = vpop.f32.mrb[0].mxu0
    %v4148 = vpop.f32.mrb[0].mxu0
    %v4149 = vpop.f32.mrb[0].mxu0
    %4150 = vdwg.mxu0
    %v4151 = vsel %vm933, %v4146, -inf
    %4152 = vmax.xlane.f32.xlu0 %v4151
    %v4153 = vpop.xlane.xlu0 %4152
    %v4154 = vsub.f32 %v4146, %v4153
    %v4155 = vmul.f32 %v4154, 1.442695
    %v4156 = vpow.pop %v4155
    %v4157 = vsel %vm933, %v4156, 0.0
    %4158 = vadd.xlane.f32.xlu0 %v4157
    %v4159 = vpop.xlane.xlu0 %4158
    %v4160 = vrcp.pop %v4159
    %v4161 = vmul.f32 %v4156, %v4160
    %v4162 = vpack.c.bf16 %v4161, %v4161
    %4163 = vrot.lane.b32.xlu0 %v3772, 32
    %v4164 = vpop.permute.xlu0 %4163
    %v4166 = vsel %vm933, %v4162, 0
    %v4169 = vsel %vm949, %v4164, 0
    %4171 = vmatprep.subr.bf16.mxu0 0
    %4172 = vmatpush1.bf16.msra.mxu0 %v4169
    %4173 = vmatprep.subr.bf16.mxu0 0
    %4174 = vmatpush1.bf16.msra.mxu0 0
    %4175 = vmatprep.subr.bf16.mxu0 0
    %4176 = vmatpush1.bf16.msra.mxu0 0
    %4177 = vmatprep.subr.bf16.mxu0 0
    %4178 = vmatpush1.bf16.msra.mxu0 0
    %4179 = vmatprep.subr.bf16.mxu0 0
    %4180 = vmatpush1.bf16.msra.mxu0 0
    %4181 = vmatprep.subr.bf16.mxu0 0
    %4182 = vmatpush1.bf16.msra.mxu0 0
    %4183 = vmatprep.subr.bf16.mxu0 0
    %4184 = vmatpush1.bf16.msra.mxu0 0
    %4185 = vmatprep.subr.bf16.mxu0 0
    %4186 = vmatpush1.bf16.msra.mxu0 0
    %4187 = vmatprep.subr.bf16.mxu0 0
    %4188 = vmatpush1.bf16.msra.mxu0 0
    %4189 = vmatprep.subr.bf16.mxu0 0
    %4190 = vmatpush1.bf16.msra.mxu0 0
    %4191 = vmatprep.subr.bf16.mxu0 0
    %4192 = vmatpush1.bf16.msra.mxu0 0
    %4193 = vmatprep.subr.bf16.mxu0 0
    %4194 = vmatpush1.bf16.msra.mxu0 0
    %4195 = vmatprep.subr.bf16.mxu0 0
    %4196 = vmatpush1.bf16.msra.mxu0 0
    %4197 = vmatprep.subr.bf16.mxu0 0
    %4198 = vmatpush1.bf16.msra.mxu0 0
    %4199 = vmatprep.subr.bf16.mxu0 0
    %4200 = vmatpush1.bf16.msra.mxu0 0
    %4201 = vmatprep.subr.bf16.mxu0 0
    %4202 = vmatpush1.bf16.msra.mxu0 0
    %4203 = vmatprep.mubr.bf16.mxu0 0
    %4204 = vmatmul.mubr.bf16.gmra.mrb[0].mxu0 %v4166
    %v4205 = vpop.f32.mrb[0].mxu0
    %v4206 = vadd.f32 0.0, %v4205
    %v4207 = vpop.f32.mrb[0].mxu0
    %v4208 = vpop.f32.mrb[0].mxu0
    %v4209 = vpop.f32.mrb[0].mxu0
    %4210 = vdwg.mxu0
    %v4212 = vsel %vm886, %v3769, 0
    %v4215 = vsel %vm886, %v3771, 0
    %4217 = vmatprep.subr.bf16.mxu0 0
    %4218 = vmatpush1.bf16.xpose.msra.mxu0 %v4215
    %4219 = vmatprep.subr.bf16.mxu0 0
    %4220 = vmatpush1.bf16.xpose.msra.mxu0 0
    %4221 = vmatprep.subr.bf16.mxu0 0
    %4222 = vmatpush1.bf16.xpose.msra.mxu0 0
    %4223 = vmatprep.subr.bf16.mxu0 0
    %4224 = vmatpush1.bf16.xpose.msra.mxu0 0
    %4225 = vmatprep.subr.bf16.mxu0 0
    %4226 = vmatpush1.bf16.xpose.msra.mxu0 0
    %4227 = vmatprep.subr.bf16.mxu0 0
    %4228 = vmatpush1.bf16.xpose.msra.mxu0 0
    %4229 = vmatprep.subr.bf16.mxu0 0
    %4230 = vmatpush1.bf16.xpose.msra.mxu0 0
    %4231 = vmatprep.subr.bf16.mxu0 0
    %4232 = vmatpush1.bf16.xpose.msra.mxu0 0
    %4233 = vmatprep.subr.bf16.mxu0 0
    %4234 = vmatpush1.bf16.xpose.msra.mxu0 0
    %4235 = vmatprep.subr.bf16.mxu0 0
    %4236 = vmatpush1.bf16.xpose.msra.mxu0 0
    %4237 = vmatprep.subr.bf16.mxu0 0
    %4238 = vmatpush1.bf16.xpose.msra.mxu0 0
    %4239 = vmatprep.subr.bf16.mxu0 0
    %4240 = vmatpush1.bf16.xpose.msra.mxu0 0
    %4241 = vmatprep.subr.bf16.mxu0 0
    %4242 = vmatpush1.bf16.xpose.msra.mxu0 0
    %4243 = vmatprep.subr.bf16.mxu0 0
    %4244 = vmatpush1.bf16.xpose.msra.mxu0 0
    %4245 = vmatprep.subr.bf16.mxu0 0
    %4246 = vmatpush1.bf16.xpose.msra.mxu0 0
    %4247 = vmatprep.subr.bf16.mxu0 0
    %4248 = vmatpush1.bf16.xpose.msra.mxu0 0
    %4249 = vmatprep.mubr.bf16.mxu0 0
    %4250 = vmatmul.mubr.bf16.gmra.mrb[0].mxu0 %v4212
    %v4251 = vpop.f32.mrb[0].mxu0
    %v4252 = vadd.f32 0.0, %v4251
    %v4253 = vpop.f32.mrb[0].mxu0
    %v4254 = vpop.f32.mrb[0].mxu0
    %v4255 = vpop.f32.mrb[0].mxu0
    %4256 = vdwg.mxu0
    %v4257 = vsel %vm933, %v4252, -inf
    %4258 = vmax.xlane.f32.xlu0 %v4257
    %v4259 = vpop.xlane.xlu0 %4258
    %v4260 = vsub.f32 %v4252, %v4259
    %v4261 = vmul.f32 %v4260, 1.442695
    %v4262 = vpow.pop %v4261
    %v4263 = vsel %vm933, %v4262, 0.0
    %4264 = vadd.xlane.f32.xlu0 %v4263
    %v4265 = vpop.xlane.xlu0 %4264
    %v4266 = vrcp.pop %v4265
    %v4267 = vmul.f32 %v4262, %v4266
    %v4268 = vpack.c.bf16 %v4267, %v4267
    %v4270 = vsel %vm933, %v4268, 0
    %v4273 = vsel %vm949, %v3773, 0
    %4275 = vmatprep.subr.bf16.mxu0 0
    %4276 = vmatpush1.bf16.msra.mxu0 %v4273
    %4277 = vmatprep.subr.bf16.mxu0 0
    %4278 = vmatpush1.bf16.msra.mxu0 0
    %4279 = vmatprep.subr.bf16.mxu0 0
    %4280 = vmatpush1.bf16.msra.mxu0 0
    %4281 = vmatprep.subr.bf16.mxu0 0
    %4282 = vmatpush1.bf16.msra.mxu0 0
    %4283 = vmatprep.subr.bf16.mxu0 0
    %4284 = vmatpush1.bf16.msra.mxu0 0
    %4285 = vmatprep.subr.bf16.mxu0 0
    %4286 = vmatpush1.bf16.msra.mxu0 0
    %4287 = vmatprep.subr.bf16.mxu0 0
    %4288 = vmatpush1.bf16.msra.mxu0 0
    %4289 = vmatprep.subr.bf16.mxu0 0
    %4290 = vmatpush1.bf16.msra.mxu0 0
    %4291 = vmatprep.subr.bf16.mxu0 0
    %4292 = vmatpush1.bf16.msra.mxu0 0
    %4293 = vmatprep.subr.bf16.mxu0 0
    %4294 = vmatpush1.bf16.msra.mxu0 0
    %4295 = vmatprep.subr.bf16.mxu0 0
    %4296 = vmatpush1.bf16.msra.mxu0 0
    %4297 = vmatprep.subr.bf16.mxu0 0
    %4298 = vmatpush1.bf16.msra.mxu0 0
    %4299 = vmatprep.subr.bf16.mxu0 0
    %4300 = vmatpush1.bf16.msra.mxu0 0
    %4301 = vmatprep.subr.bf16.mxu0 0
    %4302 = vmatpush1.bf16.msra.mxu0 0
    %4303 = vmatprep.subr.bf16.mxu0 0
    %4304 = vmatpush1.bf16.msra.mxu0 0
    %4305 = vmatprep.subr.bf16.mxu0 0
    %4306 = vmatpush1.bf16.msra.mxu0 0
    %4307 = vmatprep.mubr.bf16.mxu0 0
    %4308 = vmatmul.mubr.bf16.gmra.mrb[0].mxu0 %v4270
    %v4309 = vpop.f32.mrb[0].mxu0
    %v4310 = vadd.f32 0.0, %v4309
    %v4311 = vpop.f32.mrb[0].mxu0
    %v4312 = vpop.f32.mrb[0].mxu0
    %v4313 = vpop.f32.mrb[0].mxu0
    %4314 = vdwg.mxu0
    %4316 = vrot.lane.b32.xlu0 %v3769, 96
    %v4317 = vpop.permute.xlu0 %4316
    %4319 = vrot.lane.b32.xlu0 %v3771, 96
    %v4320 = vpop.permute.xlu0 %4319
    %v4322 = vsel %vm886, %v4317, 0
    %v4325 = vsel %vm886, %v4320, 0
    %4327 = vmatprep.subr.bf16.mxu0 0
    %4328 = vmatpush1.bf16.xpose.msra.mxu0 %v4325
    %4329 = vmatprep.subr.bf16.mxu0 0
    %4330 = vmatpush1.bf16.xpose.msra.mxu0 0
    %4331 = vmatprep.subr.bf16.mxu0 0
    %4332 = vmatpush1.bf16.xpose.msra.mxu0 0
    %4333 = vmatprep.subr.bf16.mxu0 0
    %4334 = vmatpush1.bf16.xpose.msra.mxu0 0
    %4335 = vmatprep.subr.bf16.mxu0 0
    %4336 = vmatpush1.bf16.xpose.msra.mxu0 0
    %4337 = vmatprep.subr.bf16.mxu0 0
    %4338 = vmatpush1.bf16.xpose.msra.mxu0 0
    %4339 = vmatprep.subr.bf16.mxu0 0
    %4340 = vmatpush1.bf16.xpose.msra.mxu0 0
    %4341 = vmatprep.subr.bf16.mxu0 0
    %4342 = vmatpush1.bf16.xpose.msra.mxu0 0
    %4343 = vmatprep.subr.bf16.mxu0 0
    %4344 = vmatpush1.bf16.xpose.msra.mxu0 0
    %4345 = vmatprep.subr.bf16.mxu0 0
    %4346 = vmatpush1.bf16.xpose.msra.mxu0 0
    %4347 = vmatprep.subr.bf16.mxu0 0
    %4348 = vmatpush1.bf16.xpose.msra.mxu0 0
    %4349 = vmatprep.subr.bf16.mxu0 0
    %4350 = vmatpush1.bf16.xpose.msra.mxu0 0
    %4351 = vmatprep.subr.bf16.mxu0 0
    %4352 = vmatpush1.bf16.xpose.msra.mxu0 0
    %4353 = vmatprep.subr.bf16.mxu0 0
    %4354 = vmatpush1.bf16.xpose.msra.mxu0 0
    %4355 = vmatprep.subr.bf16.mxu0 0
    %4356 = vmatpush1.bf16.xpose.msra.mxu0 0
    %4357 = vmatprep.subr.bf16.mxu0 0
    %4358 = vmatpush1.bf16.xpose.msra.mxu0 0
    %4359 = vmatprep.mubr.bf16.mxu0 0
    %4360 = vmatmul.mubr.bf16.gmra.mrb[0].mxu0 %v4322
    %v4361 = vpop.f32.mrb[0].mxu0
    %v4362 = vadd.f32 0.0, %v4361
    %v4363 = vpop.f32.mrb[0].mxu0
    %v4364 = vpop.f32.mrb[0].mxu0
    %v4365 = vpop.f32.mrb[0].mxu0
    %4366 = vdwg.mxu0
    %v4367 = vsel %vm933, %v4362, -inf
    %4368 = vmax.xlane.f32.xlu0 %v4367
    %v4369 = vpop.xlane.xlu0 %4368
    %v4370 = vsub.f32 %v4362, %v4369
    %v4371 = vmul.f32 %v4370, 1.442695
    %v4372 = vpow.pop %v4371
    %v4373 = vsel %vm933, %v4372, 0.0
    %4374 = vadd.xlane.f32.xlu0 %v4373
    %v4375 = vpop.xlane.xlu0 %4374
    %v4376 = vrcp.pop %v4375
    %v4377 = vmul.f32 %v4372, %v4376
    %v4378 = vpack.c.bf16 %v4377, %v4377
    %4380 = vrot.lane.b32.xlu0 %v3773, 96
    %v4381 = vpop.permute.xlu0 %4380
    %v4383 = vsel %vm933, %v4378, 0
    %v4386 = vsel %vm949, %v4381, 0
    %4388 = vmatprep.subr.bf16.mxu0 0
    %4389 = vmatpush1.bf16.msra.mxu0 %v4386
    %4390 = vmatprep.subr.bf16.mxu0 0
    %4391 = vmatpush1.bf16.msra.mxu0 0
    %4392 = vmatprep.subr.bf16.mxu0 0
    %4393 = vmatpush1.bf16.msra.mxu0 0
    %4394 = vmatprep.subr.bf16.mxu0 0
    %4395 = vmatpush1.bf16.msra.mxu0 0
    %4396 = vmatprep.subr.bf16.mxu0 0
    %4397 = vmatpush1.bf16.msra.mxu0 0
    %4398 = vmatprep.subr.bf16.mxu0 0
    %4399 = vmatpush1.bf16.msra.mxu0 0
    %4400 = vmatprep.subr.bf16.mxu0 0
    %4401 = vmatpush1.bf16.msra.mxu0 0
    %4402 = vmatprep.subr.bf16.mxu0 0
    %4403 = vmatpush1.bf16.msra.mxu0 0
    %4404 = vmatprep.subr.bf16.mxu0 0
    %4405 = vmatpush1.bf16.msra.mxu0 0
    %4406 = vmatprep.subr.bf16.mxu0 0
    %4407 = vmatpush1.bf16.msra.mxu0 0
    %4408 = vmatprep.subr.bf16.mxu0 0
    %4409 = vmatpush1.bf16.msra.mxu0 0
    %4410 = vmatprep.subr.bf16.mxu0 0
    %4411 = vmatpush1.bf16.msra.mxu0 0
    %4412 = vmatprep.subr.bf16.mxu0 0
    %4413 = vmatpush1.bf16.msra.mxu0 0
    %4414 = vmatprep.subr.bf16.mxu0 0
    %4415 = vmatpush1.bf16.msra.mxu0 0
    %4416 = vmatprep.subr.bf16.mxu0 0
    %4417 = vmatpush1.bf16.msra.mxu0 0
    %4418 = vmatprep.subr.bf16.mxu0 0
    %4419 = vmatpush1.bf16.msra.mxu0 0
    %4420 = vmatprep.mubr.bf16.mxu0 0
    %4421 = vmatmul.mubr.bf16.gmra.mrb[0].mxu0 %v4383
    %v4422 = vpop.f32.mrb[0].mxu0
    %v4423 = vadd.f32 0.0, %v4422
    %v4424 = vpop.f32.mrb[0].mxu0
    %v4425 = vpop.f32.mrb[0].mxu0
    %v4426 = vpop.f32.mrb[0].mxu0
    %4427 = vdwg.mxu0
    %4428 = vrot.lane.b32.xlu0 %v3769, 64
    %v4429 = vpop.permute.xlu0 %4428
    %4430 = vrot.lane.b32.xlu0 %v3771, 64
    %v4431 = vpop.permute.xlu0 %4430
    %v4433 = vsel %vm886, %v4429, 0
    %v4436 = vsel %vm886, %v4431, 0
    %4438 = vmatprep.subr.bf16.mxu0 0
    %4439 = vmatpush1.bf16.xpose.msra.mxu0 %v4436
    %4440 = vmatprep.subr.bf16.mxu0 0
    %4441 = vmatpush1.bf16.xpose.msra.mxu0 0
    %4442 = vmatprep.subr.bf16.mxu0 0
    %4443 = vmatpush1.bf16.xpose.msra.mxu0 0
    %4444 = vmatprep.subr.bf16.mxu0 0
    %4445 = vmatpush1.bf16.xpose.msra.mxu0 0
    %4446 = vmatprep.subr.bf16.mxu0 0
    %4447 = vmatpush1.bf16.xpose.msra.mxu0 0
    %4448 = vmatprep.subr.bf16.mxu0 0
    %4449 = vmatpush1.bf16.xpose.msra.mxu0 0
    %4450 = vmatprep.subr.bf16.mxu0 0
    %4451 = vmatpush1.bf16.xpose.msra.mxu0 0
    %4452 = vmatprep.subr.bf16.mxu0 0
    %4453 = vmatpush1.bf16.xpose.msra.mxu0 0
    %4454 = vmatprep.subr.bf16.mxu0 0
    %4455 = vmatpush1.bf16.xpose.msra.mxu0 0
    %4456 = vmatprep.subr.bf16.mxu0 0
    %4457 = vmatpush1.bf16.xpose.msra.mxu0 0
    %4458 = vmatprep.subr.bf16.mxu0 0
    %4459 = vmatpush1.bf16.xpose.msra.mxu0 0
    %4460 = vmatprep.subr.bf16.mxu0 0
    %4461 = vmatpush1.bf16.xpose.msra.mxu0 0
    %4462 = vmatprep.subr.bf16.mxu0 0
    %4463 = vmatpush1.bf16.xpose.msra.mxu0 0
    %4464 = vmatprep.subr.bf16.mxu0 0
    %4465 = vmatpush1.bf16.xpose.msra.mxu0 0
    %4466 = vmatprep.subr.bf16.mxu0 0
    %4467 = vmatpush1.bf16.xpose.msra.mxu0 0
    %4468 = vmatprep.subr.bf16.mxu0 0
    %4469 = vmatpush1.bf16.xpose.msra.mxu0 0
    %4470 = vmatprep.mubr.bf16.mxu0 0
    %4471 = vmatmul.mubr.bf16.gmra.mrb[0].mxu0 %v4433
    %v4472 = vpop.f32.mrb[0].mxu0
    %v4473 = vadd.f32 0.0, %v4472
    %v4474 = vpop.f32.mrb[0].mxu0
    %v4475 = vpop.f32.mrb[0].mxu0
    %v4476 = vpop.f32.mrb[0].mxu0
    %4477 = vdwg.mxu0
    %v4478 = vsel %vm933, %v4473, -inf
    %4479 = vmax.xlane.f32.xlu0 %v4478
    %v4480 = vpop.xlane.xlu0 %4479
    %v4481 = vsub.f32 %v4473, %v4480
    %v4482 = vmul.f32 %v4481, 1.442695
    %v4483 = vpow.pop %v4482
    %v4484 = vsel %vm933, %v4483, 0.0
    %4485 = vadd.xlane.f32.xlu0 %v4484
    %v4486 = vpop.xlane.xlu0 %4485
    %v4487 = vrcp.pop %v4486
    %v4488 = vmul.f32 %v4483, %v4487
    %v4489 = vpack.c.bf16 %v4488, %v4488
    %4490 = vrot.lane.b32.xlu0 %v3773, 64
    %v4491 = vpop.permute.xlu0 %4490
    %v4493 = vsel %vm933, %v4489, 0
    %v4496 = vsel %vm949, %v4491, 0
    %4498 = vmatprep.subr.bf16.mxu0 0
    %4499 = vmatpush1.bf16.msra.mxu0 %v4496
    %4500 = vmatprep.subr.bf16.mxu0 0
    %4501 = vmatpush1.bf16.msra.mxu0 0
    %4502 = vmatprep.subr.bf16.mxu0 0
    %4503 = vmatpush1.bf16.msra.mxu0 0
    %4504 = vmatprep.subr.bf16.mxu0 0
    %4505 = vmatpush1.bf16.msra.mxu0 0
    %4506 = vmatprep.subr.bf16.mxu0 0
    %4507 = vmatpush1.bf16.msra.mxu0 0
    %4508 = vmatprep.subr.bf16.mxu0 0
    %4509 = vmatpush1.bf16.msra.mxu0 0
    %4510 = vmatprep.subr.bf16.mxu0 0
    %4511 = vmatpush1.bf16.msra.mxu0 0
    %4512 = vmatprep.subr.bf16.mxu0 0
    %4513 = vmatpush1.bf16.msra.mxu0 0
    %4514 = vmatprep.subr.bf16.mxu0 0
    %4515 = vmatpush1.bf16.msra.mxu0 0
    %4516 = vmatprep.subr.bf16.mxu0 0
    %4517 = vmatpush1.bf16.msra.mxu0 0
    %4518 = vmatprep.subr.bf16.mxu0 0
    %4519 = vmatpush1.bf16.msra.mxu0 0
    %4520 = vmatprep.subr.bf16.mxu0 0
    %4521 = vmatpush1.bf16.msra.mxu0 0
    %4522 = vmatprep.subr.bf16.mxu0 0
    %4523 = vmatpush1.bf16.msra.mxu0 0
    %4524 = vmatprep.subr.bf16.mxu0 0
    %4525 = vmatpush1.bf16.msra.mxu0 0
    %4526 = vmatprep.subr.bf16.mxu0 0
    %4527 = vmatpush1.bf16.msra.mxu0 0
    %4528 = vmatprep.subr.bf16.mxu0 0
    %4529 = vmatpush1.bf16.msra.mxu0 0
    %4530 = vmatprep.mubr.bf16.mxu0 0
    %4531 = vmatmul.mubr.bf16.gmra.mrb[0].mxu0 %v4493
    %v4532 = vpop.f32.mrb[0].mxu0
    %v4533 = vadd.f32 0.0, %v4532
    %v4534 = vpop.f32.mrb[0].mxu0
    %v4535 = vpop.f32.mrb[0].mxu0
    %v4536 = vpop.f32.mrb[0].mxu0
    %4537 = vdwg.mxu0
    %4538 = vrot.lane.b32.xlu0 %v3769, 32
    %v4539 = vpop.permute.xlu0 %4538
    %4540 = vrot.lane.b32.xlu0 %v3771, 32
    %v4541 = vpop.permute.xlu0 %4540
    %v4543 = vsel %vm886, %v4539, 0
    %v4546 = vsel %vm886, %v4541, 0
    %4548 = vmatprep.subr.bf16.mxu0 0
    %4549 = vmatpush1.bf16.xpose.msra.mxu0 %v4546
    %4550 = vmatprep.subr.bf16.mxu0 0
    %4551 = vmatpush1.bf16.xpose.msra.mxu0 0
    %4552 = vmatprep.subr.bf16.mxu0 0
    %4553 = vmatpush1.bf16.xpose.msra.mxu0 0
    %4554 = vmatprep.subr.bf16.mxu0 0
    %4555 = vmatpush1.bf16.xpose.msra.mxu0 0
    %4556 = vmatprep.subr.bf16.mxu0 0
    %4557 = vmatpush1.bf16.xpose.msra.mxu0 0
    %4558 = vmatprep.subr.bf16.mxu0 0
    %4559 = vmatpush1.bf16.xpose.msra.mxu0 0
    %4560 = vmatprep.subr.bf16.mxu0 0
    %4561 = vmatpush1.bf16.xpose.msra.mxu0 0
    %4562 = vmatprep.subr.bf16.mxu0 0
    %4563 = vmatpush1.bf16.xpose.msra.mxu0 0
    %4564 = vmatprep.subr.bf16.mxu0 0
    %4565 = vmatpush1.bf16.xpose.msra.mxu0 0
    %4566 = vmatprep.subr.bf16.mxu0 0
    %4567 = vmatpush1.bf16.xpose.msra.mxu0 0
    %4568 = vmatprep.subr.bf16.mxu0 0
    %4569 = vmatpush1.bf16.xpose.msra.mxu0 0
    %4570 = vmatprep.subr.bf16.mxu0 0
    %4571 = vmatpush1.bf16.xpose.msra.mxu0 0
    %4572 = vmatprep.subr.bf16.mxu0 0
    %4573 = vmatpush1.bf16.xpose.msra.mxu0 0
    %4574 = vmatprep.subr.bf16.mxu0 0
    %4575 = vmatpush1.bf16.xpose.msra.mxu0 0
    %4576 = vmatprep.subr.bf16.mxu0 0
    %4577 = vmatpush1.bf16.xpose.msra.mxu0 0
    %4578 = vmatprep.subr.bf16.mxu0 0
    %4579 = vmatpush1.bf16.xpose.msra.mxu0 0
    %4580 = vmatprep.mubr.bf16.mxu0 0
    %4581 = vmatmul.mubr.bf16.gmra.mrb[0].mxu0 %v4543
    %v4582 = vpop.f32.mrb[0].mxu0
    %v4583 = vadd.f32 0.0, %v4582
    %v4584 = vpop.f32.mrb[0].mxu0
    %v4585 = vpop.f32.mrb[0].mxu0
    %v4586 = vpop.f32.mrb[0].mxu0
    %4587 = vdwg.mxu0
    %v4588 = vsel %vm933, %v4583, -inf
    %4589 = vmax.xlane.f32.xlu0 %v4588
    %v4590 = vpop.xlane.xlu0 %4589
    %v4591 = vsub.f32 %v4583, %v4590
    %v4592 = vmul.f32 %v4591, 1.442695
    %v4593 = vpow.pop %v4592
    %v4594 = vsel %vm933, %v4593, 0.0
    %4595 = vadd.xlane.f32.xlu0 %v4594
    %v4596 = vpop.xlane.xlu0 %4595
    %v4597 = vrcp.pop %v4596
    %v4598 = vmul.f32 %v4593, %v4597
    %v4599 = vpack.c.bf16 %v4598, %v4598
    %4600 = vrot.lane.b32.xlu0 %v3773, 32
    %v4601 = vpop.permute.xlu0 %4600
    %v4603 = vsel %vm933, %v4599, 0
    %v4606 = vsel %vm949, %v4601, 0
    %4608 = vmatprep.subr.bf16.mxu0 0
    %4609 = vmatpush1.bf16.msra.mxu0 %v4606
    %4610 = vmatprep.subr.bf16.mxu0 0
    %4611 = vmatpush1.bf16.msra.mxu0 0
    %4612 = vmatprep.subr.bf16.mxu0 0
    %4613 = vmatpush1.bf16.msra.mxu0 0
    %4614 = vmatprep.subr.bf16.mxu0 0
    %4615 = vmatpush1.bf16.msra.mxu0 0
    %4616 = vmatprep.subr.bf16.mxu0 0
    %4617 = vmatpush1.bf16.msra.mxu0 0
    %4618 = vmatprep.subr.bf16.mxu0 0
    %4619 = vmatpush1.bf16.msra.mxu0 0
    %4620 = vmatprep.subr.bf16.mxu0 0
    %4621 = vmatpush1.bf16.msra.mxu0 0
    %4622 = vmatprep.subr.bf16.mxu0 0
    %4623 = vmatpush1.bf16.msra.mxu0 0
    %4624 = vmatprep.subr.bf16.mxu0 0
    %4625 = vmatpush1.bf16.msra.mxu0 0
    %4626 = vmatprep.subr.bf16.mxu0 0
    %4627 = vmatpush1.bf16.msra.mxu0 0
    %4628 = vmatprep.subr.bf16.mxu0 0
    %4629 = vmatpush1.bf16.msra.mxu0 0
    %4630 = vmatprep.subr.bf16.mxu0 0
    %4631 = vmatpush1.bf16.msra.mxu0 0
    %4632 = vmatprep.subr.bf16.mxu0 0
    %4633 = vmatpush1.bf16.msra.mxu0 0
    %4634 = vmatprep.subr.bf16.mxu0 0
    %4635 = vmatpush1.bf16.msra.mxu0 0
    %4636 = vmatprep.subr.bf16.mxu0 0
    %4637 = vmatpush1.bf16.msra.mxu0 0
    %4638 = vmatprep.subr.bf16.mxu0 0
    %4639 = vmatpush1.bf16.msra.mxu0 0
    %4640 = vmatprep.mubr.bf16.mxu0 0
    %4641 = vmatmul.mubr.bf16.gmra.mrb[0].mxu0 %v4603
    %v4642 = vpop.f32.mrb[0].mxu0
    %v4643 = vadd.f32 0.0, %v4642
    %v4644 = vpop.f32.mrb[0].mxu0
    %v4645 = vpop.f32.mrb[0].mxu0
    %v4646 = vpop.f32.mrb[0].mxu0
    %4647 = vdwg.mxu0
    %4649 = vrot.lane.b32.xlu0 %v3986, 32
    %v4650 = vpop.permute.xlu0 %4649
    %4653 = vrot.lane.b32.xlu0 %v4096, 64
    %v4654 = vpop.permute.xlu0 %4653
    %4657 = vrot.lane.b32.xlu0 %v4206, 96
    %v4658 = vpop.permute.xlu0 %4657
    %4661 = vrot.lane.b32.xlu0 %v4423, 32
    %v4662 = vpop.permute.xlu0 %4661
    %4665 = vrot.lane.b32.xlu0 %v4533, 64
    %v4666 = vpop.permute.xlu0 %4665
    %4669 = vrot.lane.b32.xlu0 %v4643, 96
    %v4670 = vpop.permute.xlu0 %4669
    %v4672 = vsel %vm886, %v3873, %v4650
    %v4673 = vsel %vm1788, %v4672, %v4654
    %v4674 = vsel %vm1790, %v4673, %v4658
    %v4675 = vsel %vm886, %v4310, %v4662
    %v4676 = vsel %vm1788, %v4675, %v4666
    %v4677 = vsel %vm1790, %v4676, %v4670
    %v4678 = vrot.slane %v3768, 4
    %v4679 = vrot.slane %v3770, 4
    %v4681 = vsel %vm886, %v4678, 0
    %v4684 = vsel %vm886, %v4679, 0
    %4686 = vmatprep.subr.bf16.mxu0 0
    %4687 = vmatpush1.bf16.xpose.msra.mxu0 %v4684
    %4688 = vmatprep.subr.bf16.mxu0 0
    %4689 = vmatpush1.bf16.xpose.msra.mxu0 0
    %4690 = vmatprep.subr.bf16.mxu0 0
    %4691 = vmatpush1.bf16.xpose.msra.mxu0 0
    %4692 = vmatprep.subr.bf16.mxu0 0
    %4693 = vmatpush1.bf16.xpose.msra.mxu0 0
    %4694 = vmatprep.subr.bf16.mxu0 0
    %4695 = vmatpush1.bf16.xpose.msra.mxu0 0
    %4696 = vmatprep.subr.bf16.mxu0 0
    %4697 = vmatpush1.bf16.xpose.msra.mxu0 0
    %4698 = vmatprep.subr.bf16.mxu0 0
    %4699 = vmatpush1.bf16.xpose.msra.mxu0 0
    %4700 = vmatprep.subr.bf16.mxu0 0
    %4701 = vmatpush1.bf16.xpose.msra.mxu0 0
    %4702 = vmatprep.subr.bf16.mxu0 0
    %4703 = vmatpush1.bf16.xpose.msra.mxu0 0
    %4704 = vmatprep.subr.bf16.mxu0 0
    %4705 = vmatpush1.bf16.xpose.msra.mxu0 0
    %4706 = vmatprep.subr.bf16.mxu0 0
    %4707 = vmatpush1.bf16.xpose.msra.mxu0 0
    %4708 = vmatprep.subr.bf16.mxu0 0
    %4709 = vmatpush1.bf16.xpose.msra.mxu0 0
    %4710 = vmatprep.subr.bf16.mxu0 0
    %4711 = vmatpush1.bf16.xpose.msra.mxu0 0
    %4712 = vmatprep.subr.bf16.mxu0 0
    %4713 = vmatpush1.bf16.xpose.msra.mxu0 0
    %4714 = vmatprep.subr.bf16.mxu0 0
    %4715 = vmatpush1.bf16.xpose.msra.mxu0 0
    %4716 = vmatprep.subr.bf16.mxu0 0
    %4717 = vmatpush1.bf16.xpose.msra.mxu0 0
    %4718 = vmatprep.mubr.bf16.mxu0 0
    %4719 = vmatmul.mubr.bf16.gmra.mrb[0].mxu0 %v4681
    %v4720 = vpop.f32.mrb[0].mxu0
    %v4721 = vadd.f32 0.0, %v4720
    %v4722 = vpop.f32.mrb[0].mxu0
    %v4723 = vpop.f32.mrb[0].mxu0
    %v4724 = vpop.f32.mrb[0].mxu0
    %4725 = vdwg.mxu0
    %v4726 = vsel %vm933, %v4721, -inf
    %4727 = vmax.xlane.f32.xlu0 %v4726
    %v4728 = vpop.xlane.xlu0 %4727
    %v4729 = vsub.f32 %v4721, %v4728
    %v4730 = vmul.f32 %v4729, 1.442695
    %v4731 = vpow.pop %v4730
    %v4732 = vsel %vm933, %v4731, 0.0
    %4733 = vadd.xlane.f32.xlu0 %v4732
    %v4734 = vpop.xlane.xlu0 %4733
    %v4735 = vrcp.pop %v4734
    %v4736 = vmul.f32 %v4731, %v4735
    %v4737 = vpack.c.bf16 %v4736, %v4736
    %v4738 = vrot.slane %v3772, 4
    %v4740 = vsel %vm933, %v4737, 0
    %v4743 = vsel %vm949, %v4738, 0
    %4745 = vmatprep.subr.bf16.mxu0 0
    %4746 = vmatpush1.bf16.msra.mxu0 %v4743
    %4747 = vmatprep.subr.bf16.mxu0 0
    %4748 = vmatpush1.bf16.msra.mxu0 0
    %4749 = vmatprep.subr.bf16.mxu0 0
    %4750 = vmatpush1.bf16.msra.mxu0 0
    %4751 = vmatprep.subr.bf16.mxu0 0
    %4752 = vmatpush1.bf16.msra.mxu0 0
    %4753 = vmatprep.subr.bf16.mxu0 0
    %4754 = vmatpush1.bf16.msra.mxu0 0
    %4755 = vmatprep.subr.bf16.mxu0 0
    %4756 = vmatpush1.bf16.msra.mxu0 0
    %4757 = vmatprep.subr.bf16.mxu0 0
    %4758 = vmatpush1.bf16.msra.mxu0 0
    %4759 = vmatprep.subr.bf16.mxu0 0
    %4760 = vmatpush1.bf16.msra.mxu0 0
    %4761 = vmatprep.subr.bf16.mxu0 0
    %4762 = vmatpush1.bf16.msra.mxu0 0
    %4763 = vmatprep.subr.bf16.mxu0 0
    %4764 = vmatpush1.bf16.msra.mxu0 0
    %4765 = vmatprep.subr.bf16.mxu0 0
    %4766 = vmatpush1.bf16.msra.mxu0 0
    %4767 = vmatprep.subr.bf16.mxu0 0
    %4768 = vmatpush1.bf16.msra.mxu0 0
    %4769 = vmatprep.subr.bf16.mxu0 0
    %4770 = vmatpush1.bf16.msra.mxu0 0
    %4771 = vmatprep.subr.bf16.mxu0 0
    %4772 = vmatpush1.bf16.msra.mxu0 0
    %4773 = vmatprep.subr.bf16.mxu0 0
    %4774 = vmatpush1.bf16.msra.mxu0 0
    %4775 = vmatprep.subr.bf16.mxu0 0
    %4776 = vmatpush1.bf16.msra.mxu0 0
    %4777 = vmatprep.mubr.bf16.mxu0 0
    %4778 = vmatmul.mubr.bf16.gmra.mrb[0].mxu0 %v4740
    %v4779 = vpop.f32.mrb[0].mxu0
    %v4780 = vadd.f32 0.0, %v4779
    %v4781 = vpop.f32.mrb[0].mxu0
    %v4782 = vpop.f32.mrb[0].mxu0
    %v4783 = vpop.f32.mrb[0].mxu0
    %4784 = vdwg.mxu0
    %4785 = vrot.lane.b32.xlu0 %v4678, 96
    %v4786 = vpop.permute.xlu0 %4785
    %4787 = vrot.lane.b32.xlu0 %v4679, 96
    %v4788 = vpop.permute.xlu0 %4787
    %v4790 = vsel %vm886, %v4786, 0
    %v4793 = vsel %vm886, %v4788, 0
    %4795 = vmatprep.subr.bf16.mxu0 0
    %4796 = vmatpush1.bf16.xpose.msra.mxu0 %v4793
    %4797 = vmatprep.subr.bf16.mxu0 0
    %4798 = vmatpush1.bf16.xpose.msra.mxu0 0
    %4799 = vmatprep.subr.bf16.mxu0 0
    %4800 = vmatpush1.bf16.xpose.msra.mxu0 0
    %4801 = vmatprep.subr.bf16.mxu0 0
    %4802 = vmatpush1.bf16.xpose.msra.mxu0 0
    %4803 = vmatprep.subr.bf16.mxu0 0
    %4804 = vmatpush1.bf16.xpose.msra.mxu0 0
    %4805 = vmatprep.subr.bf16.mxu0 0
    %4806 = vmatpush1.bf16.xpose.msra.mxu0 0
    %4807 = vmatprep.subr.bf16.mxu0 0
    %4808 = vmatpush1.bf16.xpose.msra.mxu0 0
    %4809 = vmatprep.subr.bf16.mxu0 0
    %4810 = vmatpush1.bf16.xpose.msra.mxu0 0
    %4811 = vmatprep.subr.bf16.mxu0 0
    %4812 = vmatpush1.bf16.xpose.msra.mxu0 0
    %4813 = vmatprep.subr.bf16.mxu0 0
    %4814 = vmatpush1.bf16.xpose.msra.mxu0 0
    %4815 = vmatprep.subr.bf16.mxu0 0
    %4816 = vmatpush1.bf16.xpose.msra.mxu0 0
    %4817 = vmatprep.subr.bf16.mxu0 0
    %4818 = vmatpush1.bf16.xpose.msra.mxu0 0
    %4819 = vmatprep.subr.bf16.mxu0 0
    %4820 = vmatpush1.bf16.xpose.msra.mxu0 0
    %4821 = vmatprep.subr.bf16.mxu0 0
    %4822 = vmatpush1.bf16.xpose.msra.mxu0 0
    %4823 = vmatprep.subr.bf16.mxu0 0
    %4824 = vmatpush1.bf16.xpose.msra.mxu0 0
    %4825 = vmatprep.subr.bf16.mxu0 0
    %4826 = vmatpush1.bf16.xpose.msra.mxu0 0
    %4827 = vmatprep.mubr.bf16.mxu0 0
    %4828 = vmatmul.mubr.bf16.gmra.mrb[0].mxu0 %v4790
    %v4829 = vpop.f32.mrb[0].mxu0
    %v4830 = vadd.f32 0.0, %v4829
    %v4831 = vpop.f32.mrb[0].mxu0
    %v4832 = vpop.f32.mrb[0].mxu0
    %v4833 = vpop.f32.mrb[0].mxu0
    %4834 = vdwg.mxu0
    %v4835 = vsel %vm933, %v4830, -inf
    %4836 = vmax.xlane.f32.xlu0 %v4835
    %v4837 = vpop.xlane.xlu0 %4836
    %v4838 = vsub.f32 %v4830, %v4837
    %v4839 = vmul.f32 %v4838, 1.442695
    %v4840 = vpow.pop %v4839
    %v4841 = vsel %vm933, %v4840, 0.0
    %4842 = vadd.xlane.f32.xlu0 %v4841
    %v4843 = vpop.xlane.xlu0 %4842
    %v4844 = vrcp.pop %v4843
    %v4845 = vmul.f32 %v4840, %v4844
    %v4846 = vpack.c.bf16 %v4845, %v4845
    %4847 = vrot.lane.b32.xlu0 %v4738, 96
    %v4848 = vpop.permute.xlu0 %4847
    %v4850 = vsel %vm933, %v4846, 0
    %v4853 = vsel %vm949, %v4848, 0
    %4855 = vmatprep.subr.bf16.mxu0 0
    %4856 = vmatpush1.bf16.msra.mxu0 %v4853
    %4857 = vmatprep.subr.bf16.mxu0 0
    %4858 = vmatpush1.bf16.msra.mxu0 0
    %4859 = vmatprep.subr.bf16.mxu0 0
    %4860 = vmatpush1.bf16.msra.mxu0 0
    %4861 = vmatprep.subr.bf16.mxu0 0
    %4862 = vmatpush1.bf16.msra.mxu0 0
    %4863 = vmatprep.subr.bf16.mxu0 0
    %4864 = vmatpush1.bf16.msra.mxu0 0
    %4865 = vmatprep.subr.bf16.mxu0 0
    %4866 = vmatpush1.bf16.msra.mxu0 0
    %4867 = vmatprep.subr.bf16.mxu0 0
    %4868 = vmatpush1.bf16.msra.mxu0 0
    %4869 = vmatprep.subr.bf16.mxu0 0
    %4870 = vmatpush1.bf16.msra.mxu0 0
    %4871 = vmatprep.subr.bf16.mxu0 0
    %4872 = vmatpush1.bf16.msra.mxu0 0
    %4873 = vmatprep.subr.bf16.mxu0 0
    %4874 = vmatpush1.bf16.msra.mxu0 0
    %4875 = vmatprep.subr.bf16.mxu0 0
    %4876 = vmatpush1.bf16.msra.mxu0 0
    %4877 = vmatprep.subr.bf16.mxu0 0
    %4878 = vmatpush1.bf16.msra.mxu0 0
    %4879 = vmatprep.subr.bf16.mxu0 0
    %4880 = vmatpush1.bf16.msra.mxu0 0
    %4881 = vmatprep.subr.bf16.mxu0 0
    %4882 = vmatpush1.bf16.msra.mxu0 0
    %4883 = vmatprep.subr.bf16.mxu0 0
    %4884 = vmatpush1.bf16.msra.mxu0 0
    %4885 = vmatprep.subr.bf16.mxu0 0
    %4886 = vmatpush1.bf16.msra.mxu0 0
    %4887 = vmatprep.mubr.bf16.mxu0 0
    %4888 = vmatmul.mubr.bf16.gmra.mrb[0].mxu0 %v4850
    %v4889 = vpop.f32.mrb[0].mxu0
    %v4890 = vadd.f32 0.0, %v4889
    %v4891 = vpop.f32.mrb[0].mxu0
    %v4892 = vpop.f32.mrb[0].mxu0
    %v4893 = vpop.f32.mrb[0].mxu0
    %4894 = vdwg.mxu0
    %4895 = vrot.lane.b32.xlu0 %v4678, 64
    %v4896 = vpop.permute.xlu0 %4895
    %4897 = vrot.lane.b32.xlu0 %v4679, 64
    %v4898 = vpop.permute.xlu0 %4897
    %v4900 = vsel %vm886, %v4896, 0
    %v4903 = vsel %vm886, %v4898, 0
    %4905 = vmatprep.subr.bf16.mxu0 0
    %4906 = vmatpush1.bf16.xpose.msra.mxu0 %v4903
    %4907 = vmatprep.subr.bf16.mxu0 0
    %4908 = vmatpush1.bf16.xpose.msra.mxu0 0
    %4909 = vmatprep.subr.bf16.mxu0 0
    %4910 = vmatpush1.bf16.xpose.msra.mxu0 0
    %4911 = vmatprep.subr.bf16.mxu0 0
    %4912 = vmatpush1.bf16.xpose.msra.mxu0 0
    %4913 = vmatprep.subr.bf16.mxu0 0
    %4914 = vmatpush1.bf16.xpose.msra.mxu0 0
    %4915 = vmatprep.subr.bf16.mxu0 0
    %4916 = vmatpush1.bf16.xpose.msra.mxu0 0
    %4917 = vmatprep.subr.bf16.mxu0 0
    %4918 = vmatpush1.bf16.xpose.msra.mxu0 0
    %4919 = vmatprep.subr.bf16.mxu0 0
    %4920 = vmatpush1.bf16.xpose.msra.mxu0 0
    %4921 = vmatprep.subr.bf16.mxu0 0
    %4922 = vmatpush1.bf16.xpose.msra.mxu0 0
    %4923 = vmatprep.subr.bf16.mxu0 0
    %4924 = vmatpush1.bf16.xpose.msra.mxu0 0
    %4925 = vmatprep.subr.bf16.mxu0 0
    %4926 = vmatpush1.bf16.xpose.msra.mxu0 0
    %4927 = vmatprep.subr.bf16.mxu0 0
    %4928 = vmatpush1.bf16.xpose.msra.mxu0 0
    %4929 = vmatprep.subr.bf16.mxu0 0
    %4930 = vmatpush1.bf16.xpose.msra.mxu0 0
    %4931 = vmatprep.subr.bf16.mxu0 0
    %4932 = vmatpush1.bf16.xpose.msra.mxu0 0
    %4933 = vmatprep.subr.bf16.mxu0 0
    %4934 = vmatpush1.bf16.xpose.msra.mxu0 0
    %4935 = vmatprep.subr.bf16.mxu0 0
    %4936 = vmatpush1.bf16.xpose.msra.mxu0 0
    %4937 = vmatprep.mubr.bf16.mxu0 0
    %4938 = vmatmul.mubr.bf16.gmra.mrb[0].mxu0 %v4900
    %v4939 = vpop.f32.mrb[0].mxu0
    %v4940 = vadd.f32 0.0, %v4939
    %v4941 = vpop.f32.mrb[0].mxu0
    %v4942 = vpop.f32.mrb[0].mxu0
    %v4943 = vpop.f32.mrb[0].mxu0
    %4944 = vdwg.mxu0
    %v4945 = vsel %vm933, %v4940, -inf
    %4946 = vmax.xlane.f32.xlu0 %v4945
    %v4947 = vpop.xlane.xlu0 %4946
    %v4948 = vsub.f32 %v4940, %v4947
    %v4949 = vmul.f32 %v4948, 1.442695
    %v4950 = vpow.pop %v4949
    %v4951 = vsel %vm933, %v4950, 0.0
    %4952 = vadd.xlane.f32.xlu0 %v4951
    %v4953 = vpop.xlane.xlu0 %4952
    %v4954 = vrcp.pop %v4953
    %v4955 = vmul.f32 %v4950, %v4954
    %v4956 = vpack.c.bf16 %v4955, %v4955
    %4957 = vrot.lane.b32.xlu0 %v4738, 64
    %v4958 = vpop.permute.xlu0 %4957
    %v4960 = vsel %vm933, %v4956, 0
    %v4963 = vsel %vm949, %v4958, 0
    %4965 = vmatprep.subr.bf16.mxu0 0
    %4966 = vmatpush1.bf16.msra.mxu0 %v4963
    %4967 = vmatprep.subr.bf16.mxu0 0
    %4968 = vmatpush1.bf16.msra.mxu0 0
    %4969 = vmatprep.subr.bf16.mxu0 0
    %4970 = vmatpush1.bf16.msra.mxu0 0
    %4971 = vmatprep.subr.bf16.mxu0 0
    %4972 = vmatpush1.bf16.msra.mxu0 0
    %4973 = vmatprep.subr.bf16.mxu0 0
    %4974 = vmatpush1.bf16.msra.mxu0 0
    %4975 = vmatprep.subr.bf16.mxu0 0
    %4976 = vmatpush1.bf16.msra.mxu0 0
    %4977 = vmatprep.subr.bf16.mxu0 0
    %4978 = vmatpush1.bf16.msra.mxu0 0
    %4979 = vmatprep.subr.bf16.mxu0 0
    %4980 = vmatpush1.bf16.msra.mxu0 0
    %4981 = vmatprep.subr.bf16.mxu0 0
    %4982 = vmatpush1.bf16.msra.mxu0 0
    %4983 = vmatprep.subr.bf16.mxu0 0
    %4984 = vmatpush1.bf16.msra.mxu0 0
    %4985 = vmatprep.subr.bf16.mxu0 0
    %4986 = vmatpush1.bf16.msra.mxu0 0
    %4987 = vmatprep.subr.bf16.mxu0 0
    %4988 = vmatpush1.bf16.msra.mxu0 0
    %4989 = vmatprep.subr.bf16.mxu0 0
    %4990 = vmatpush1.bf16.msra.mxu0 0
    %4991 = vmatprep.subr.bf16.mxu0 0
    %4992 = vmatpush1.bf16.msra.mxu0 0
    %4993 = vmatprep.subr.bf16.mxu0 0
    %4994 = vmatpush1.bf16.msra.mxu0 0
    %4995 = vmatprep.subr.bf16.mxu0 0
    %4996 = vmatpush1.bf16.msra.mxu0 0
    %4997 = vmatprep.mubr.bf16.mxu0 0
    %4998 = vmatmul.mubr.bf16.gmra.mrb[0].mxu0 %v4960
    %v4999 = vpop.f32.mrb[0].mxu0
    %v5000 = vadd.f32 0.0, %v4999
    %v5001 = vpop.f32.mrb[0].mxu0
    %v5002 = vpop.f32.mrb[0].mxu0
    %v5003 = vpop.f32.mrb[0].mxu0
    %5004 = vdwg.mxu0
    %5005 = vrot.lane.b32.xlu0 %v4678, 32
    %v5006 = vpop.permute.xlu0 %5005
    %5007 = vrot.lane.b32.xlu0 %v4679, 32
    %v5008 = vpop.permute.xlu0 %5007
    %v5010 = vsel %vm886, %v5006, 0
    %v5013 = vsel %vm886, %v5008, 0
    %5015 = vmatprep.subr.bf16.mxu0 0
    %5016 = vmatpush1.bf16.xpose.msra.mxu0 %v5013
    %5017 = vmatprep.subr.bf16.mxu0 0
    %5018 = vmatpush1.bf16.xpose.msra.mxu0 0
    %5019 = vmatprep.subr.bf16.mxu0 0
    %5020 = vmatpush1.bf16.xpose.msra.mxu0 0
    %5021 = vmatprep.subr.bf16.mxu0 0
    %5022 = vmatpush1.bf16.xpose.msra.mxu0 0
    %5023 = vmatprep.subr.bf16.mxu0 0
    %5024 = vmatpush1.bf16.xpose.msra.mxu0 0
    %5025 = vmatprep.subr.bf16.mxu0 0
    %5026 = vmatpush1.bf16.xpose.msra.mxu0 0
    %5027 = vmatprep.subr.bf16.mxu0 0
    %5028 = vmatpush1.bf16.xpose.msra.mxu0 0
    %5029 = vmatprep.subr.bf16.mxu0 0
    %5030 = vmatpush1.bf16.xpose.msra.mxu0 0
    %5031 = vmatprep.subr.bf16.mxu0 0
    %5032 = vmatpush1.bf16.xpose.msra.mxu0 0
    %5033 = vmatprep.subr.bf16.mxu0 0
    %5034 = vmatpush1.bf16.xpose.msra.mxu0 0
    %5035 = vmatprep.subr.bf16.mxu0 0
    %5036 = vmatpush1.bf16.xpose.msra.mxu0 0
    %5037 = vmatprep.subr.bf16.mxu0 0
    %5038 = vmatpush1.bf16.xpose.msra.mxu0 0
    %5039 = vmatprep.subr.bf16.mxu0 0
    %5040 = vmatpush1.bf16.xpose.msra.mxu0 0
    %5041 = vmatprep.subr.bf16.mxu0 0
    %5042 = vmatpush1.bf16.xpose.msra.mxu0 0
    %5043 = vmatprep.subr.bf16.mxu0 0
    %5044 = vmatpush1.bf16.xpose.msra.mxu0 0
    %5045 = vmatprep.subr.bf16.mxu0 0
    %5046 = vmatpush1.bf16.xpose.msra.mxu0 0
    %5047 = vmatprep.mubr.bf16.mxu0 0
    %5048 = vmatmul.mubr.bf16.gmra.mrb[0].mxu0 %v5010
    %v5049 = vpop.f32.mrb[0].mxu0
    %v5050 = vadd.f32 0.0, %v5049
    %v5051 = vpop.f32.mrb[0].mxu0
    %v5052 = vpop.f32.mrb[0].mxu0
    %v5053 = vpop.f32.mrb[0].mxu0
    %5054 = vdwg.mxu0
    %v5055 = vsel %vm933, %v5050, -inf
    %5056 = vmax.xlane.f32.xlu0 %v5055
    %v5057 = vpop.xlane.xlu0 %5056
    %v5058 = vsub.f32 %v5050, %v5057
    %v5059 = vmul.f32 %v5058, 1.442695
    %v5060 = vpow.pop %v5059
    %v5061 = vsel %vm933, %v5060, 0.0
    %5062 = vadd.xlane.f32.xlu0 %v5061
    %v5063 = vpop.xlane.xlu0 %5062
    %v5064 = vrcp.pop %v5063
    %v5065 = vmul.f32 %v5060, %v5064
    %v5066 = vpack.c.bf16 %v5065, %v5065
    %5067 = vrot.lane.b32.xlu0 %v4738, 32
    %v5068 = vpop.permute.xlu0 %5067
    %v5070 = vsel %vm933, %v5066, 0
    %v5073 = vsel %vm949, %v5068, 0
    %5075 = vmatprep.subr.bf16.mxu0 0
    %5076 = vmatpush1.bf16.msra.mxu0 %v5073
    %5077 = vmatprep.subr.bf16.mxu0 0
    %5078 = vmatpush1.bf16.msra.mxu0 0
    %5079 = vmatprep.subr.bf16.mxu0 0
    %5080 = vmatpush1.bf16.msra.mxu0 0
    %5081 = vmatprep.subr.bf16.mxu0 0
    %5082 = vmatpush1.bf16.msra.mxu0 0
    %5083 = vmatprep.subr.bf16.mxu0 0
    %5084 = vmatpush1.bf16.msra.mxu0 0
    %5085 = vmatprep.subr.bf16.mxu0 0
    %5086 = vmatpush1.bf16.msra.mxu0 0
    %5087 = vmatprep.subr.bf16.mxu0 0
    %5088 = vmatpush1.bf16.msra.mxu0 0
    %5089 = vmatprep.subr.bf16.mxu0 0
    %5090 = vmatpush1.bf16.msra.mxu0 0
    %5091 = vmatprep.subr.bf16.mxu0 0
    %5092 = vmatpush1.bf16.msra.mxu0 0
    %5093 = vmatprep.subr.bf16.mxu0 0
    %5094 = vmatpush1.bf16.msra.mxu0 0
    %5095 = vmatprep.subr.bf16.mxu0 0
    %5096 = vmatpush1.bf16.msra.mxu0 0
    %5097 = vmatprep.subr.bf16.mxu0 0
    %5098 = vmatpush1.bf16.msra.mxu0 0
    %5099 = vmatprep.subr.bf16.mxu0 0
    %5100 = vmatpush1.bf16.msra.mxu0 0
    %5101 = vmatprep.subr.bf16.mxu0 0
    %5102 = vmatpush1.bf16.msra.mxu0 0
    %5103 = vmatprep.subr.bf16.mxu0 0
    %5104 = vmatpush1.bf16.msra.mxu0 0
    %5105 = vmatprep.subr.bf16.mxu0 0
    %5106 = vmatpush1.bf16.msra.mxu0 0
    %5107 = vmatprep.mubr.bf16.mxu0 0
    %5108 = vmatmul.mubr.bf16.gmra.mrb[0].mxu0 %v5070
    %v5109 = vpop.f32.mrb[0].mxu0
    %v5110 = vadd.f32 0.0, %v5109
    %v5111 = vpop.f32.mrb[0].mxu0
    %v5112 = vpop.f32.mrb[0].mxu0
    %v5113 = vpop.f32.mrb[0].mxu0
    %5114 = vdwg.mxu0
    %v5115 = vrot.slane %v3769, 4
    %v5116 = vrot.slane %v3771, 4
    %v5118 = vsel %vm886, %v5115, 0
    %v5121 = vsel %vm886, %v5116, 0
    %5123 = vmatprep.subr.bf16.mxu0 0
    %5124 = vmatpush1.bf16.xpose.msra.mxu0 %v5121
    %5125 = vmatprep.subr.bf16.mxu0 0
    %5126 = vmatpush1.bf16.xpose.msra.mxu0 0
    %5127 = vmatprep.subr.bf16.mxu0 0
    %5128 = vmatpush1.bf16.xpose.msra.mxu0 0
    %5129 = vmatprep.subr.bf16.mxu0 0
    %5130 = vmatpush1.bf16.xpose.msra.mxu0 0
    %5131 = vmatprep.subr.bf16.mxu0 0
    %5132 = vmatpush1.bf16.xpose.msra.mxu0 0
    %5133 = vmatprep.subr.bf16.mxu0 0
    %5134 = vmatpush1.bf16.xpose.msra.mxu0 0
    %5135 = vmatprep.subr.bf16.mxu0 0
    %5136 = vmatpush1.bf16.xpose.msra.mxu0 0
    %5137 = vmatprep.subr.bf16.mxu0 0
    %5138 = vmatpush1.bf16.xpose.msra.mxu0 0
    %5139 = vmatprep.subr.bf16.mxu0 0
    %5140 = vmatpush1.bf16.xpose.msra.mxu0 0
    %5141 = vmatprep.subr.bf16.mxu0 0
    %5142 = vmatpush1.bf16.xpose.msra.mxu0 0
    %5143 = vmatprep.subr.bf16.mxu0 0
    %5144 = vmatpush1.bf16.xpose.msra.mxu0 0
    %5145 = vmatprep.subr.bf16.mxu0 0
    %5146 = vmatpush1.bf16.xpose.msra.mxu0 0
    %5147 = vmatprep.subr.bf16.mxu0 0
    %5148 = vmatpush1.bf16.xpose.msra.mxu0 0
    %5149 = vmatprep.subr.bf16.mxu0 0
    %5150 = vmatpush1.bf16.xpose.msra.mxu0 0
    %5151 = vmatprep.subr.bf16.mxu0 0
    %5152 = vmatpush1.bf16.xpose.msra.mxu0 0
    %5153 = vmatprep.subr.bf16.mxu0 0
    %5154 = vmatpush1.bf16.xpose.msra.mxu0 0
    %5155 = vmatprep.mubr.bf16.mxu0 0
    %5156 = vmatmul.mubr.bf16.gmra.mrb[0].mxu0 %v5118
    %v5157 = vpop.f32.mrb[0].mxu0
    %v5158 = vadd.f32 0.0, %v5157
    %v5159 = vpop.f32.mrb[0].mxu0
    %v5160 = vpop.f32.mrb[0].mxu0
    %v5161 = vpop.f32.mrb[0].mxu0
    %5162 = vdwg.mxu0
    %v5163 = vsel %vm933, %v5158, -inf
    %5164 = vmax.xlane.f32.xlu0 %v5163
    %v5165 = vpop.xlane.xlu0 %5164
    %v5166 = vsub.f32 %v5158, %v5165
    %v5167 = vmul.f32 %v5166, 1.442695
    %v5168 = vpow.pop %v5167
    %v5169 = vsel %vm933, %v5168, 0.0
    %5170 = vadd.xlane.f32.xlu0 %v5169
    %v5171 = vpop.xlane.xlu0 %5170
    %v5172 = vrcp.pop %v5171
    %v5173 = vmul.f32 %v5168, %v5172
    %v5174 = vpack.c.bf16 %v5173, %v5173
    %v5175 = vrot.slane %v3773, 4
    %v5177 = vsel %vm933, %v5174, 0
    %v5180 = vsel %vm949, %v5175, 0
    %5182 = vmatprep.subr.bf16.mxu0 0
    %5183 = vmatpush1.bf16.msra.mxu0 %v5180
    %5184 = vmatprep.subr.bf16.mxu0 0
    %5185 = vmatpush1.bf16.msra.mxu0 0
    %5186 = vmatprep.subr.bf16.mxu0 0
    %5187 = vmatpush1.bf16.msra.mxu0 0
    %5188 = vmatprep.subr.bf16.mxu0 0
    %5189 = vmatpush1.bf16.msra.mxu0 0
    %5190 = vmatprep.subr.bf16.mxu0 0
    %5191 = vmatpush1.bf16.msra.mxu0 0
    %5192 = vmatprep.subr.bf16.mxu0 0
    %5193 = vmatpush1.bf16.msra.mxu0 0
    %5194 = vmatprep.subr.bf16.mxu0 0
    %5195 = vmatpush1.bf16.msra.mxu0 0
    %5196 = vmatprep.subr.bf16.mxu0 0
    %5197 = vmatpush1.bf16.msra.mxu0 0
    %5198 = vmatprep.subr.bf16.mxu0 0
    %5199 = vmatpush1.bf16.msra.mxu0 0
    %5200 = vmatprep.subr.bf16.mxu0 0
    %5201 = vmatpush1.bf16.msra.mxu0 0
    %5202 = vmatprep.subr.bf16.mxu0 0
    %5203 = vmatpush1.bf16.msra.mxu0 0
    %5204 = vmatprep.subr.bf16.mxu0 0
    %5205 = vmatpush1.bf16.msra.mxu0 0
    %5206 = vmatprep.subr.bf16.mxu0 0
    %5207 = vmatpush1.bf16.msra.mxu0 0
    %5208 = vmatprep.subr.bf16.mxu0 0
    %5209 = vmatpush1.bf16.msra.mxu0 0
    %5210 = vmatprep.subr.bf16.mxu0 0
    %5211 = vmatpush1.bf16.msra.mxu0 0
    %5212 = vmatprep.subr.bf16.mxu0 0
    %5213 = vmatpush1.bf16.msra.mxu0 0
    %5214 = vmatprep.mubr.bf16.mxu0 0
    %5215 = vmatmul.mubr.bf16.gmra.mrb[0].mxu0 %v5177
    %v5216 = vpop.f32.mrb[0].mxu0
    %v5217 = vadd.f32 0.0, %v5216
    %v5218 = vpop.f32.mrb[0].mxu0
    %v5219 = vpop.f32.mrb[0].mxu0
    %v5220 = vpop.f32.mrb[0].mxu0
    %5221 = vdwg.mxu0
    %5222 = vrot.lane.b32.xlu0 %v5115, 96
    %v5223 = vpop.permute.xlu0 %5222
    %5224 = vrot.lane.b32.xlu0 %v5116, 96
    %v5225 = vpop.permute.xlu0 %5224
    %v5227 = vsel %vm886, %v5223, 0
    %v5230 = vsel %vm886, %v5225, 0
    %5232 = vmatprep.subr.bf16.mxu0 0
    %5233 = vmatpush1.bf16.xpose.msra.mxu0 %v5230
    %5234 = vmatprep.subr.bf16.mxu0 0
    %5235 = vmatpush1.bf16.xpose.msra.mxu0 0
    %5236 = vmatprep.subr.bf16.mxu0 0
    %5237 = vmatpush1.bf16.xpose.msra.mxu0 0
    %5238 = vmatprep.subr.bf16.mxu0 0
    %5239 = vmatpush1.bf16.xpose.msra.mxu0 0
    %5240 = vmatprep.subr.bf16.mxu0 0
    %5241 = vmatpush1.bf16.xpose.msra.mxu0 0
    %5242 = vmatprep.subr.bf16.mxu0 0
    %5243 = vmatpush1.bf16.xpose.msra.mxu0 0
    %5244 = vmatprep.subr.bf16.mxu0 0
    %5245 = vmatpush1.bf16.xpose.msra.mxu0 0
    %5246 = vmatprep.subr.bf16.mxu0 0
    %5247 = vmatpush1.bf16.xpose.msra.mxu0 0
    %5248 = vmatprep.subr.bf16.mxu0 0
    %5249 = vmatpush1.bf16.xpose.msra.mxu0 0
    %5250 = vmatprep.subr.bf16.mxu0 0
    %5251 = vmatpush1.bf16.xpose.msra.mxu0 0
    %5252 = vmatprep.subr.bf16.mxu0 0
    %5253 = vmatpush1.bf16.xpose.msra.mxu0 0
    %5254 = vmatprep.subr.bf16.mxu0 0
    %5255 = vmatpush1.bf16.xpose.msra.mxu0 0
    %5256 = vmatprep.subr.bf16.mxu0 0
    %5257 = vmatpush1.bf16.xpose.msra.mxu0 0
    %5258 = vmatprep.subr.bf16.mxu0 0
    %5259 = vmatpush1.bf16.xpose.msra.mxu0 0
    %5260 = vmatprep.subr.bf16.mxu0 0
    %5261 = vmatpush1.bf16.xpose.msra.mxu0 0
    %5262 = vmatprep.subr.bf16.mxu0 0
    %5263 = vmatpush1.bf16.xpose.msra.mxu0 0
    %5264 = vmatprep.mubr.bf16.mxu0 0
    %5265 = vmatmul.mubr.bf16.gmra.mrb[0].mxu0 %v5227
    %v5266 = vpop.f32.mrb[0].mxu0
    %v5267 = vadd.f32 0.0, %v5266
    %v5268 = vpop.f32.mrb[0].mxu0
    %v5269 = vpop.f32.mrb[0].mxu0
    %v5270 = vpop.f32.mrb[0].mxu0
    %5271 = vdwg.mxu0
    %v5272 = vsel %vm933, %v5267, -inf
    %5273 = vmax.xlane.f32.xlu0 %v5272
    %v5274 = vpop.xlane.xlu0 %5273
    %v5275 = vsub.f32 %v5267, %v5274
    %v5276 = vmul.f32 %v5275, 1.442695
    %v5277 = vpow.pop %v5276
    %v5278 = vsel %vm933, %v5277, 0.0
    %5279 = vadd.xlane.f32.xlu0 %v5278
    %v5280 = vpop.xlane.xlu0 %5279
    %v5281 = vrcp.pop %v5280
    %v5282 = vmul.f32 %v5277, %v5281
    %v5283 = vpack.c.bf16 %v5282, %v5282
    %5284 = vrot.lane.b32.xlu0 %v5175, 96
    %v5285 = vpop.permute.xlu0 %5284
    %v5287 = vsel %vm933, %v5283, 0
    %v5290 = vsel %vm949, %v5285, 0
    %5292 = vmatprep.subr.bf16.mxu0 0
    %5293 = vmatpush1.bf16.msra.mxu0 %v5290
    %5294 = vmatprep.subr.bf16.mxu0 0
    %5295 = vmatpush1.bf16.msra.mxu0 0
    %5296 = vmatprep.subr.bf16.mxu0 0
    %5297 = vmatpush1.bf16.msra.mxu0 0
    %5298 = vmatprep.subr.bf16.mxu0 0
    %5299 = vmatpush1.bf16.msra.mxu0 0
    %5300 = vmatprep.subr.bf16.mxu0 0
    %5301 = vmatpush1.bf16.msra.mxu0 0
    %5302 = vmatprep.subr.bf16.mxu0 0
    %5303 = vmatpush1.bf16.msra.mxu0 0
    %5304 = vmatprep.subr.bf16.mxu0 0
    %5305 = vmatpush1.bf16.msra.mxu0 0
    %5306 = vmatprep.subr.bf16.mxu0 0
    %5307 = vmatpush1.bf16.msra.mxu0 0
    %5308 = vmatprep.subr.bf16.mxu0 0
    %5309 = vmatpush1.bf16.msra.mxu0 0
    %5310 = vmatprep.subr.bf16.mxu0 0
    %5311 = vmatpush1.bf16.msra.mxu0 0
    %5312 = vmatprep.subr.bf16.mxu0 0
    %5313 = vmatpush1.bf16.msra.mxu0 0
    %5314 = vmatprep.subr.bf16.mxu0 0
    %5315 = vmatpush1.bf16.msra.mxu0 0
    %5316 = vmatprep.subr.bf16.mxu0 0
    %5317 = vmatpush1.bf16.msra.mxu0 0
    %5318 = vmatprep.subr.bf16.mxu0 0
    %5319 = vmatpush1.bf16.msra.mxu0 0
    %5320 = vmatprep.subr.bf16.mxu0 0
    %5321 = vmatpush1.bf16.msra.mxu0 0
    %5322 = vmatprep.subr.bf16.mxu0 0
    %5323 = vmatpush1.bf16.msra.mxu0 0
    %5324 = vmatprep.mubr.bf16.mxu0 0
    %5325 = vmatmul.mubr.bf16.gmra.mrb[0].mxu0 %v5287
    %v5326 = vpop.f32.mrb[0].mxu0
    %v5327 = vadd.f32 0.0, %v5326
    %v5328 = vpop.f32.mrb[0].mxu0
    %v5329 = vpop.f32.mrb[0].mxu0
    %v5330 = vpop.f32.mrb[0].mxu0
    %5331 = vdwg.mxu0
    %5332 = vrot.lane.b32.xlu0 %v5115, 64
    %v5333 = vpop.permute.xlu0 %5332
    %5334 = vrot.lane.b32.xlu0 %v5116, 64
    %v5335 = vpop.permute.xlu0 %5334
    %v5337 = vsel %vm886, %v5333, 0
    %v5340 = vsel %vm886, %v5335, 0
    %5342 = vmatprep.subr.bf16.mxu0 0
    %5343 = vmatpush1.bf16.xpose.msra.mxu0 %v5340
    %5344 = vmatprep.subr.bf16.mxu0 0
    %5345 = vmatpush1.bf16.xpose.msra.mxu0 0
    %5346 = vmatprep.subr.bf16.mxu0 0
    %5347 = vmatpush1.bf16.xpose.msra.mxu0 0
    %5348 = vmatprep.subr.bf16.mxu0 0
    %5349 = vmatpush1.bf16.xpose.msra.mxu0 0
    %5350 = vmatprep.subr.bf16.mxu0 0
    %5351 = vmatpush1.bf16.xpose.msra.mxu0 0
    %5352 = vmatprep.subr.bf16.mxu0 0
    %5353 = vmatpush1.bf16.xpose.msra.mxu0 0
    %5354 = vmatprep.subr.bf16.mxu0 0
    %5355 = vmatpush1.bf16.xpose.msra.mxu0 0
    %5356 = vmatprep.subr.bf16.mxu0 0
    %5357 = vmatpush1.bf16.xpose.msra.mxu0 0
    %5358 = vmatprep.subr.bf16.mxu0 0
    %5359 = vmatpush1.bf16.xpose.msra.mxu0 0
    %5360 = vmatprep.subr.bf16.mxu0 0
    %5361 = vmatpush1.bf16.xpose.msra.mxu0 0
    %5362 = vmatprep.subr.bf16.mxu0 0
    %5363 = vmatpush1.bf16.xpose.msra.mxu0 0
    %5364 = vmatprep.subr.bf16.mxu0 0
    %5365 = vmatpush1.bf16.xpose.msra.mxu0 0
    %5366 = vmatprep.subr.bf16.mxu0 0
    %5367 = vmatpush1.bf16.xpose.msra.mxu0 0
    %5368 = vmatprep.subr.bf16.mxu0 0
    %5369 = vmatpush1.bf16.xpose.msra.mxu0 0
    %5370 = vmatprep.subr.bf16.mxu0 0
    %5371 = vmatpush1.bf16.xpose.msra.mxu0 0
    %5372 = vmatprep.subr.bf16.mxu0 0
    %5373 = vmatpush1.bf16.xpose.msra.mxu0 0
    %5374 = vmatprep.mubr.bf16.mxu0 0
    %5375 = vmatmul.mubr.bf16.gmra.mrb[0].mxu0 %v5337
    %v5376 = vpop.f32.mrb[0].mxu0
    %v5377 = vadd.f32 0.0, %v5376
    %v5378 = vpop.f32.mrb[0].mxu0
    %v5379 = vpop.f32.mrb[0].mxu0
    %v5380 = vpop.f32.mrb[0].mxu0
    %5381 = vdwg.mxu0
    %v5382 = vsel %vm933, %v5377, -inf
    %5383 = vmax.xlane.f32.xlu0 %v5382
    %v5384 = vpop.xlane.xlu0 %5383
    %v5385 = vsub.f32 %v5377, %v5384
    %v5386 = vmul.f32 %v5385, 1.442695
    %v5387 = vpow.pop %v5386
    %v5388 = vsel %vm933, %v5387, 0.0
    %5389 = vadd.xlane.f32.xlu0 %v5388
    %v5390 = vpop.xlane.xlu0 %5389
    %v5391 = vrcp.pop %v5390
    %v5392 = vmul.f32 %v5387, %v5391
    %v5393 = vpack.c.bf16 %v5392, %v5392
    %5394 = vrot.lane.b32.xlu0 %v5175, 64
    %v5395 = vpop.permute.xlu0 %5394
    %v5397 = vsel %vm933, %v5393, 0
    %v5400 = vsel %vm949, %v5395, 0
    %5402 = vmatprep.subr.bf16.mxu0 0
    %5403 = vmatpush1.bf16.msra.mxu0 %v5400
    %5404 = vmatprep.subr.bf16.mxu0 0
    %5405 = vmatpush1.bf16.msra.mxu0 0
    %5406 = vmatprep.subr.bf16.mxu0 0
    %5407 = vmatpush1.bf16.msra.mxu0 0
    %5408 = vmatprep.subr.bf16.mxu0 0
    %5409 = vmatpush1.bf16.msra.mxu0 0
    %5410 = vmatprep.subr.bf16.mxu0 0
    %5411 = vmatpush1.bf16.msra.mxu0 0
    %5412 = vmatprep.subr.bf16.mxu0 0
    %5413 = vmatpush1.bf16.msra.mxu0 0
    %5414 = vmatprep.subr.bf16.mxu0 0
    %5415 = vmatpush1.bf16.msra.mxu0 0
    %5416 = vmatprep.subr.bf16.mxu0 0
    %5417 = vmatpush1.bf16.msra.mxu0 0
    %5418 = vmatprep.subr.bf16.mxu0 0
    %5419 = vmatpush1.bf16.msra.mxu0 0
    %5420 = vmatprep.subr.bf16.mxu0 0
    %5421 = vmatpush1.bf16.msra.mxu0 0
    %5422 = vmatprep.subr.bf16.mxu0 0
    %5423 = vmatpush1.bf16.msra.mxu0 0
    %5424 = vmatprep.subr.bf16.mxu0 0
    %5425 = vmatpush1.bf16.msra.mxu0 0
    %5426 = vmatprep.subr.bf16.mxu0 0
    %5427 = vmatpush1.bf16.msra.mxu0 0
    %5428 = vmatprep.subr.bf16.mxu0 0
    %5429 = vmatpush1.bf16.msra.mxu0 0
    %5430 = vmatprep.subr.bf16.mxu0 0
    %5431 = vmatpush1.bf16.msra.mxu0 0
    %5432 = vmatprep.subr.bf16.mxu0 0
    %5433 = vmatpush1.bf16.msra.mxu0 0
    %5434 = vmatprep.mubr.bf16.mxu0 0
    %5435 = vmatmul.mubr.bf16.gmra.mrb[0].mxu0 %v5397
    %v5436 = vpop.f32.mrb[0].mxu0
    %v5437 = vadd.f32 0.0, %v5436
    %v5438 = vpop.f32.mrb[0].mxu0
    %v5439 = vpop.f32.mrb[0].mxu0
    %v5440 = vpop.f32.mrb[0].mxu0
    %5441 = vdwg.mxu0
    %5442 = vrot.lane.b32.xlu0 %v5115, 32
    %v5443 = vpop.permute.xlu0 %5442
    %5444 = vrot.lane.b32.xlu0 %v5116, 32
    %v5445 = vpop.permute.xlu0 %5444
    %v5447 = vsel %vm886, %v5443, 0
    %v5450 = vsel %vm886, %v5445, 0
    %5452 = vmatprep.subr.bf16.mxu0 0
    %5453 = vmatpush1.bf16.xpose.msra.mxu0 %v5450
    %5454 = vmatprep.subr.bf16.mxu0 0
    %5455 = vmatpush1.bf16.xpose.msra.mxu0 0
    %5456 = vmatprep.subr.bf16.mxu0 0
    %5457 = vmatpush1.bf16.xpose.msra.mxu0 0
    %5458 = vmatprep.subr.bf16.mxu0 0
    %5459 = vmatpush1.bf16.xpose.msra.mxu0 0
    %5460 = vmatprep.subr.bf16.mxu0 0
    %5461 = vmatpush1.bf16.xpose.msra.mxu0 0
    %5462 = vmatprep.subr.bf16.mxu0 0
    %5463 = vmatpush1.bf16.xpose.msra.mxu0 0
    %5464 = vmatprep.subr.bf16.mxu0 0
    %5465 = vmatpush1.bf16.xpose.msra.mxu0 0
    %5466 = vmatprep.subr.bf16.mxu0 0
    %5467 = vmatpush1.bf16.xpose.msra.mxu0 0
    %5468 = vmatprep.subr.bf16.mxu0 0
    %5469 = vmatpush1.bf16.xpose.msra.mxu0 0
    %5470 = vmatprep.subr.bf16.mxu0 0
    %5471 = vmatpush1.bf16.xpose.msra.mxu0 0
    %5472 = vmatprep.subr.bf16.mxu0 0
    %5473 = vmatpush1.bf16.xpose.msra.mxu0 0
    %5474 = vmatprep.subr.bf16.mxu0 0
    %5475 = vmatpush1.bf16.xpose.msra.mxu0 0
    %5476 = vmatprep.subr.bf16.mxu0 0
    %5477 = vmatpush1.bf16.xpose.msra.mxu0 0
    %5478 = vmatprep.subr.bf16.mxu0 0
    %5479 = vmatpush1.bf16.xpose.msra.mxu0 0
    %5480 = vmatprep.subr.bf16.mxu0 0
    %5481 = vmatpush1.bf16.xpose.msra.mxu0 0
    %5482 = vmatprep.subr.bf16.mxu0 0
    %5483 = vmatpush1.bf16.xpose.msra.mxu0 0
    %5484 = vmatprep.mubr.bf16.mxu0 0
    %5485 = vmatmul.mubr.bf16.gmra.mrb[0].mxu0 %v5447
    %v5486 = vpop.f32.mrb[0].mxu0
    %v5487 = vadd.f32 0.0, %v5486
    %v5488 = vpop.f32.mrb[0].mxu0
    %v5489 = vpop.f32.mrb[0].mxu0
    %v5490 = vpop.f32.mrb[0].mxu0
    %5491 = vdwg.mxu0
    %v5492 = vsel %vm933, %v5487, -inf
    %5493 = vmax.xlane.f32.xlu0 %v5492
    %v5494 = vpop.xlane.xlu0 %5493
    %v5495 = vsub.f32 %v5487, %v5494
    %v5496 = vmul.f32 %v5495, 1.442695
    %v5497 = vpow.pop %v5496
    %v5498 = vsel %vm933, %v5497, 0.0
    %5499 = vadd.xlane.f32.xlu0 %v5498
    %v5500 = vpop.xlane.xlu0 %5499
    %v5501 = vrcp.pop %v5500
    %v5502 = vmul.f32 %v5497, %v5501
    %v5503 = vpack.c.bf16 %v5502, %v5502
    %5504 = vrot.lane.b32.xlu0 %v5175, 32
    %v5505 = vpop.permute.xlu0 %5504
    %v5507 = vsel %vm933, %v5503, 0
    %v5510 = vsel %vm949, %v5505, 0
    %5512 = vmatprep.subr.bf16.mxu0 0
    %5513 = vmatpush1.bf16.msra.mxu0 %v5510
    %5514 = vmatprep.subr.bf16.mxu0 0
    %5515 = vmatpush1.bf16.msra.mxu0 0
    %5516 = vmatprep.subr.bf16.mxu0 0
    %5517 = vmatpush1.bf16.msra.mxu0 0
    %5518 = vmatprep.subr.bf16.mxu0 0
    %5519 = vmatpush1.bf16.msra.mxu0 0
    %5520 = vmatprep.subr.bf16.mxu0 0
    %5521 = vmatpush1.bf16.msra.mxu0 0
    %5522 = vmatprep.subr.bf16.mxu0 0
    %5523 = vmatpush1.bf16.msra.mxu0 0
    %5524 = vmatprep.subr.bf16.mxu0 0
    %5525 = vmatpush1.bf16.msra.mxu0 0
    %5526 = vmatprep.subr.bf16.mxu0 0
    %5527 = vmatpush1.bf16.msra.mxu0 0
    %5528 = vmatprep.subr.bf16.mxu0 0
    %5529 = vmatpush1.bf16.msra.mxu0 0
    %5530 = vmatprep.subr.bf16.mxu0 0
    %5531 = vmatpush1.bf16.msra.mxu0 0
    %5532 = vmatprep.subr.bf16.mxu0 0
    %5533 = vmatpush1.bf16.msra.mxu0 0
    %5534 = vmatprep.subr.bf16.mxu0 0
    %5535 = vmatpush1.bf16.msra.mxu0 0
    %5536 = vmatprep.subr.bf16.mxu0 0
    %5537 = vmatpush1.bf16.msra.mxu0 0
    %5538 = vmatprep.subr.bf16.mxu0 0
    %5539 = vmatpush1.bf16.msra.mxu0 0
    %5540 = vmatprep.subr.bf16.mxu0 0
    %5541 = vmatpush1.bf16.msra.mxu0 0
    %5542 = vmatprep.subr.bf16.mxu0 0
    %5543 = vmatpush1.bf16.msra.mxu0 0
    %5544 = vmatprep.mubr.bf16.mxu0 0
    %5545 = vmatmul.mubr.bf16.gmra.mrb[0].mxu0 %v5507
    %v5546 = vpop.f32.mrb[0].mxu0
    %v5547 = vadd.f32 0.0, %v5546
    %v5548 = vpop.f32.mrb[0].mxu0
    %v5549 = vpop.f32.mrb[0].mxu0
    %v5550 = vpop.f32.mrb[0].mxu0
    %5551 = vdwg.mxu0
    %5553 = vrot.lane.b32.xlu0 %v4890, 32
    %v5554 = vpop.permute.xlu0 %5553
    %5557 = vrot.lane.b32.xlu0 %v5000, 64
    %v5558 = vpop.permute.xlu0 %5557
    %5561 = vrot.lane.b32.xlu0 %v5110, 96
    %v5562 = vpop.permute.xlu0 %5561
    %5565 = vrot.lane.b32.xlu0 %v5327, 32
    %v5566 = vpop.permute.xlu0 %5565
    %5569 = vrot.lane.b32.xlu0 %v5437, 64
    %v5570 = vpop.permute.xlu0 %5569
    %5573 = vrot.lane.b32.xlu0 %v5547, 96
    %v5574 = vpop.permute.xlu0 %5573
    %v5576 = vsel %vm886, %v4780, %v5554
    %v5577 = vsel %vm1788, %v5576, %v5558
    %v5578 = vsel %vm1790, %v5577, %v5562
    %v5579 = vsel %vm886, %v5217, %v5566
    %v5580 = vsel %vm1788, %v5579, %v5570
    %v5581 = vsel %vm1790, %v5580, %v5574
    %v5582 = vpack.c.bf16 %v5578, %v4674
    %v5583 = vpack.c.bf16 %v5581, %v4677
    %v5584 = vld [vmem:[#allocation10] sm:$0xff]
    %v5585 = vld [vmem:[#allocation10 + $0x8] sm:$0xff]
    %v5586 = vld [vmem:[#allocation10 + $0x10] sm:$0xff]
    %v5587 = vld [vmem:[#allocation10 + $0x18] sm:$0xff]
    %v5588 = vld [vmem:[#allocation10 + $0x20] sm:$0xff]
    %v5589 = vld [vmem:[#allocation10 + $0x28] sm:$0xff]
    %v5590 = vld [vmem:[#allocation10 + $0x30] sm:$0xff]
    %v5591 = vld [vmem:[#allocation10 + $0x38] sm:$0xff]
    %v5592 = vld [vmem:[#allocation10 + $0x40] sm:$0xff]
    %v5593 = vld [vmem:[#allocation10 + $0x48] sm:$0xff]
    %v5594 = vld [vmem:[#allocation10 + $0x50] sm:$0xff]
    %v5595 = vld [vmem:[#allocation10 + $0x58] sm:$0xff]
    %v5596 = vld [vmem:[#allocation10 + $0x60] sm:$0xff]
    %v5597 = vld [vmem:[#allocation10 + $0x68] sm:$0xff]
    %v5598 = vld [vmem:[#allocation10 + $0x70] sm:$0xff]
    %v5599 = vld [vmem:[#allocation10 + $0x78] sm:$0xff]
    %v5600 = vld [vmem:[#allocation10 + $0x80] sm:$0xff]
    %v5601 = vld [vmem:[#allocation10 + $0x88] sm:$0xff]
    %v5602 = vld [vmem:[#allocation10 + $0x90] sm:$0xff]
    %v5603 = vld [vmem:[#allocation10 + $0x98] sm:$0xff]
    %v5604 = vld [vmem:[#allocation10 + $0xa0] sm:$0xff]
    %v5605 = vld [vmem:[#allocation10 + $0xa8] sm:$0xff]
    %v5606 = vld [vmem:[#allocation10 + $0xb0] sm:$0xff]
    %v5607 = vld [vmem:[#allocation10 + $0xb8] sm:$0xff]
    %v5608 = vld [vmem:[#allocation10 + $0xc0] sm:$0xff]
    %v5609 = vld [vmem:[#allocation10 + $0xc8] sm:$0xff]
    %v5610 = vld [vmem:[#allocation10 + $0xd0] sm:$0xff]
    %v5611 = vld [vmem:[#allocation10 + $0xd8] sm:$0xff]
    %v5612 = vld [vmem:[#allocation10 + $0xe0] sm:$0xff]
    %v5613 = vld [vmem:[#allocation10 + $0xe8] sm:$0xff]
    %v5614 = vld [vmem:[#allocation10 + $0xf0] sm:$0xff]
    %v5615 = vld [vmem:[#allocation10 + $0xf8] sm:$0xff]
    %v5617 = vlaneseq
    %v5618 = vshrl.u32 %v5617, 7
    %v5619 = vsub.s32 0, %v5618
    %v5620 = vrot.slane %v3767, %v5619
    %v5621 = vlaneseq
    %v5622 = vshrl.u32 %v5621, 7
    %v5623 = vsub.s32 1, %v5622
    %v5624 = vrot.slane %v3767, %v5623
    %v5659 = vunpack.c.l.b16 %v5584
    %v5660 = vunpack.c.h.b16 %v5584
    %v5661 = vunpack.c.l.b16 %v5585
    %v5662 = vunpack.c.h.b16 %v5585
    %v5663 = vunpack.c.l.b16 %v5586
    %v5664 = vunpack.c.h.b16 %v5586
    %v5665 = vunpack.c.l.b16 %v5587
    %v5666 = vunpack.c.h.b16 %v5587
    %v5667 = vunpack.c.l.b16 %v5588
    %v5668 = vunpack.c.h.b16 %v5588
    %v5669 = vunpack.c.l.b16 %v5589
    %v5670 = vunpack.c.h.b16 %v5589
    %v5671 = vunpack.c.l.b16 %v5590
    %v5672 = vunpack.c.h.b16 %v5590
    %v5673 = vunpack.c.l.b16 %v5591
    %v5674 = vunpack.c.h.b16 %v5591
    %v5675 = vunpack.c.l.b16 %v5592
    %v5676 = vunpack.c.h.b16 %v5592
    %v5677 = vunpack.c.l.b16 %v5593
    %v5678 = vunpack.c.h.b16 %v5593
    %v5679 = vunpack.c.l.b16 %v5594
    %v5680 = vunpack.c.h.b16 %v5594
    %v5681 = vunpack.c.l.b16 %v5595
    %v5682 = vunpack.c.h.b16 %v5595
    %v5683 = vunpack.c.l.b16 %v5596
    %v5684 = vunpack.c.h.b16 %v5596
    %v5685 = vunpack.c.l.b16 %v5597
    %v5686 = vunpack.c.h.b16 %v5597
    %v5687 = vunpack.c.l.b16 %v5598
    %v5688 = vunpack.c.h.b16 %v5598
    %v5689 = vunpack.c.l.b16 %v5599
    %v5690 = vunpack.c.h.b16 %v5599
    %v5691 = vunpack.c.l.b16 %v5600
    %v5692 = vunpack.c.h.b16 %v5600
    %v5693 = vunpack.c.l.b16 %v5601
    %v5694 = vunpack.c.h.b16 %v5601
    %v5695 = vunpack.c.l.b16 %v5602
    %v5696 = vunpack.c.h.b16 %v5602
    %v5697 = vunpack.c.l.b16 %v5603
    %v5698 = vunpack.c.h.b16 %v5603
    %v5699 = vunpack.c.l.b16 %v5604
    %v5700 = vunpack.c.h.b16 %v5604
    %v5701 = vunpack.c.l.b16 %v5605
    %v5702 = vunpack.c.h.b16 %v5605
    %v5703 = vunpack.c.l.b16 %v5606
    %v5704 = vunpack.c.h.b16 %v5606
    %v5705 = vunpack.c.l.b16 %v5607
    %v5706 = vunpack.c.h.b16 %v5607
    %v5707 = vunpack.c.l.b16 %v5608
    %v5708 = vunpack.c.h.b16 %v5608
    %v5709 = vunpack.c.l.b16 %v5609
    %v5710 = vunpack.c.h.b16 %v5609
    %v5711 = vunpack.c.l.b16 %v5610
    %v5712 = vunpack.c.h.b16 %v5610
    %v5713 = vunpack.c.l.b16 %v5611
    %v5714 = vunpack.c.h.b16 %v5611
    %v5715 = vunpack.c.l.b16 %v5612
    %v5716 = vunpack.c.h.b16 %v5612
    %v5717 = vunpack.c.l.b16 %v5613
    %v5718 = vunpack.c.h.b16 %v5613
    %v5719 = vunpack.c.l.b16 %v5614
    %v5720 = vunpack.c.h.b16 %v5614
    %v5721 = vunpack.c.l.b16 %v5615
    %v5722 = vunpack.c.h.b16 %v5615
    %v5723 = vpack.c.b16 %v5661, %v5659
    %v5724 = vpack.c.b16 %v5662, %v5660
    %v5725 = vpack.c.b16 %v5665, %v5663
    %v5726 = vpack.c.b16 %v5666, %v5664
    %v5727 = vpack.c.b16 %v5669, %v5667
    %v5728 = vpack.c.b16 %v5670, %v5668
    %v5729 = vpack.c.b16 %v5673, %v5671
    %v5730 = vpack.c.b16 %v5674, %v5672
    %v5731 = vpack.c.b16 %v5677, %v5675
    %v5732 = vpack.c.b16 %v5678, %v5676
    %v5733 = vpack.c.b16 %v5681, %v5679
    %v5734 = vpack.c.b16 %v5682, %v5680
    %v5735 = vpack.c.b16 %v5685, %v5683
    %v5736 = vpack.c.b16 %v5686, %v5684
    %v5737 = vpack.c.b16 %v5689, %v5687
    %v5738 = vpack.c.b16 %v5690, %v5688
    %v5739 = vpack.c.b16 %v5693, %v5691
    %v5740 = vpack.c.b16 %v5694, %v5692
    %v5741 = vpack.c.b16 %v5697, %v5695
    %v5742 = vpack.c.b16 %v5698, %v5696
    %v5743 = vpack.c.b16 %v5701, %v5699
    %v5744 = vpack.c.b16 %v5702, %v5700
    %v5745 = vpack.c.b16 %v5705, %v5703
    %v5746 = vpack.c.b16 %v5706, %v5704
    %v5747 = vpack.c.b16 %v5709, %v5707
    %v5748 = vpack.c.b16 %v5710, %v5708
    %v5749 = vpack.c.b16 %v5713, %v5711
    %v5750 = vpack.c.b16 %v5714, %v5712
    %v5751 = vpack.c.b16 %v5717, %v5715
    %v5752 = vpack.c.b16 %v5718, %v5716
    %v5753 = vpack.c.b16 %v5721, %v5719
    %v5754 = vpack.c.b16 %v5722, %v5720
    %5787 = vmatprep.subr.bf16.mxu0 %v5724
    %5788 = vmatpush1.bf16.msra.mxu0 %v5723
    %5789 = vmatprep.subr.bf16.mxu0 %v5726
    %5790 = vmatpush1.bf16.msra.mxu0 %v5725
    %5791 = vmatprep.subr.bf16.mxu0 %v5728
    %5792 = vmatpush1.bf16.msra.mxu0 %v5727
    %5793 = vmatprep.subr.bf16.mxu0 %v5730
    %5794 = vmatpush1.bf16.msra.mxu0 %v5729
    %5795 = vmatprep.subr.bf16.mxu0 %v5732
    %5796 = vmatpush1.bf16.msra.mxu0 %v5731
    %5797 = vmatprep.subr.bf16.mxu0 %v5734
    %5798 = vmatpush1.bf16.msra.mxu0 %v5733
    %5799 = vmatprep.subr.bf16.mxu0 %v5736
    %5800 = vmatpush1.bf16.msra.mxu0 %v5735
    %5801 = vmatprep.subr.bf16.mxu0 %v5738
    %5802 = vmatpush1.bf16.msra.mxu0 %v5737
    %5803 = vmatprep.subr.bf16.mxu0 %v5740
    %5804 = vmatpush1.bf16.msra.mxu0 %v5739
    %5805 = vmatprep.subr.bf16.mxu0 %v5742
    %5806 = vmatpush1.bf16.msra.mxu0 %v5741
    %5807 = vmatprep.subr.bf16.mxu0 %v5744
    %5808 = vmatpush1.bf16.msra.mxu0 %v5743
    %5809 = vmatprep.subr.bf16.mxu0 %v5746
    %5810 = vmatpush1.bf16.msra.mxu0 %v5745
    %5811 = vmatprep.subr.bf16.mxu0 %v5748
    %5812 = vmatpush1.bf16.msra.mxu0 %v5747
    %5813 = vmatprep.subr.bf16.mxu0 %v5750
    %5814 = vmatpush1.bf16.msra.mxu0 %v5749
    %5815 = vmatprep.subr.bf16.mxu0 %v5752
    %5816 = vmatpush1.bf16.msra.mxu0 %v5751
    %5817 = vmatprep.subr.bf16.mxu0 %v5754
    %5818 = vmatpush1.bf16.msra.mxu0 %v5753
    %5819 = vmatprep.mubr.bf16.mxu0 %v5583
    %5820 = vmatmul.mubr.bf16.gmra.mrb[0].mxu0 %v5582
    %v5821 = vpop.f32.mrb[0].mxu0
    %v5822 = vadd.f32 %v5620, %v5821
    %v5823 = vpop.f32.mrb[0].mxu0
    %v5824 = vadd.f32 %v5624, %v5823
    %v5825 = vpop.f32.mrb[0].mxu0
    %v5826 = vadd.f32 %v5620, %v5825
    %v5827 = vpop.f32.mrb[0].mxu0
    %v5828 = vadd.f32 %v5624, %v5827
    %5829 = vdwg.mxu0
    %v5830 = vadd.f32 %v3012, %v5822
    %v5831 = vadd.f32 %v3013, %v5824
    %v5832 = vadd.f32 %v3014, %v5826
    %v5833 = vadd.f32 %v3015, %v5828
    %v5834 = vld [vmem:[%s9 + $0x1a] sm:$0x3]
    %v5835 = vld [vmem:[%s9 + $0x1c] sm:$0x3]
    %v5836 = vadd.f32 %v5830, %v5831
    %5837 = vadd.xlane.f32.xlu0 %v5836
    %v5838 = vpop.xlane.xlu0 %5837
    %v5839 = vadd.f32 %v5832, %v5833
    %5840 = vadd.xlane.f32.xlu0 %v5839
    %v5841 = vpop.xlane.xlu0 %5840
    %v5842 = vmul.f32 %v5838, %v2959
    %v5843 = vmul.f32 %v5841, %v2959
    %v5844 = vsub.f32 %v5830, %v5842
    %v5845 = vsub.f32 %v5831, %v5842
    %v5846 = vsub.f32 %v5832, %v5843
    %v5847 = vsub.f32 %v5833, %v5843
    %v5848 = vmul.f32 %v5844, %v5844
    %v5849 = vmul.f32 %v5845, %v5845
    %v5850 = vmul.f32 %v5846, %v5846
    %v5851 = vmul.f32 %v5847, %v5847
    %v5852 = vadd.f32 %v5848, %v5849
    %5853 = vadd.xlane.f32.xlu0 %v5852
    %v5854 = vpop.xlane.xlu0 %5853
    %v5855 = vadd.f32 %v5850, %v5851
    %5856 = vadd.xlane.f32.xlu0 %v5855
    %v5857 = vpop.xlane.xlu0 %5856
    %v5858 = vmul.f32 %v5854, %v2959
    %v5859 = vmul.f32 %v5857, %v2959
    %v5860 = vadd.f32 %v5858, 1e-05
    %v5861 = vadd.f32 %v5859, 1e-05
    %v5862 = vrsqrt.pop %v5860
    %v5863 = vrsqrt.pop %v5861
    %v5864 = vmul.f32 %v5844, %v5862
    %v5865 = vmul.f32 %v5845, %v5862
    %v5866 = vmul.f32 %v5846, %v5863
    %v5867 = vmul.f32 %v5847, %v5863
    %v5869 = vlaneseq
    %v5870 = vshrl.u32 %v5869, 7
    %v5871 = vsub.s32 0, %v5870
    %v5872 = vrot.slane %v5834, %v5871
    %v5873 = vlaneseq
    %v5874 = vshrl.u32 %v5873, 7
    %v5875 = vsub.s32 1, %v5874
    %v5876 = vrot.slane %v5834, %v5875
    %v5879 = vmul.f32 %v5864, %v5872
    %v5880 = vmul.f32 %v5865, %v5876
    %v5881 = vmul.f32 %v5866, %v5872
    %v5882 = vmul.f32 %v5867, %v5876
    %v5884 = vlaneseq
    %v5885 = vshrl.u32 %v5884, 7
    %v5886 = vsub.s32 0, %v5885
    %v5887 = vrot.slane %v5835, %v5886
    %v5888 = vlaneseq
    %v5889 = vshrl.u32 %v5888, 7
    %v5890 = vsub.s32 1, %v5889
    %v5891 = vrot.slane %v5835, %v5890
    %v5894 = vadd.f32 %v5879, %v5887
    %v5895 = vadd.f32 %v5880, %v5891
    %v5896 = vadd.f32 %v5881, %v5887
    %v5897 = vadd.f32 %v5882, %v5891
    %v5898 = vpack.c.bf16 %v5896, %v5894
    %v5899 = vpack.c.bf16 %v5897, %v5895
    %v5900 = vld [vmem:[#allocation11] sm:$0xff]
    %v5901 = vld [vmem:[#allocation11 + $0x8] sm:$0xff]
    %v5902 = vld [vmem:[#allocation11 + $0x10] sm:$0xff]
    %v5903 = vld [vmem:[#allocation11 + $0x18] sm:$0xff]
    %v5904 = vld [vmem:[#allocation11 + $0x20] sm:$0xff]
    %v5905 = vld [vmem:[#allocation11 + $0x28] sm:$0xff]
    %v5906 = vld [vmem:[#allocation11 + $0x30] sm:$0xff]
    %v5907 = vld [vmem:[#allocation11 + $0x38] sm:$0xff]
    %v5908 = vld [vmem:[#allocation11 + $0x40] sm:$0xff]
    %v5909 = vld [vmem:[#allocation11 + $0x48] sm:$0xff]
    %v5910 = vld [vmem:[#allocation11 + $0x50] sm:$0xff]
    %v5911 = vld [vmem:[#allocation11 + $0x58] sm:$0xff]
    %v5912 = vld [vmem:[#allocation11 + $0x60] sm:$0xff]
    %v5913 = vld [vmem:[#allocation11 + $0x68] sm:$0xff]
    %v5914 = vld [vmem:[#allocation11 + $0x70] sm:$0xff]
    %v5915 = vld [vmem:[#allocation11 + $0x78] sm:$0xff]
    %v5916 = vld [vmem:[#allocation11 + $0x80] sm:$0xff]
    %v5917 = vld [vmem:[#allocation11 + $0x88] sm:$0xff]
    %v5918 = vld [vmem:[#allocation11 + $0x90] sm:$0xff]
    %v5919 = vld [vmem:[#allocation11 + $0x98] sm:$0xff]
    %v5920 = vld [vmem:[#allocation11 + $0xa0] sm:$0xff]
    %v5921 = vld [vmem:[#allocation11 + $0xa8] sm:$0xff]
    %v5922 = vld [vmem:[#allocation11 + $0xb0] sm:$0xff]
    %v5923 = vld [vmem:[#allocation11 + $0xb8] sm:$0xff]
    %v5924 = vld [vmem:[#allocation11 + $0xc0] sm:$0xff]
    %v5925 = vld [vmem:[#allocation11 + $0xc8] sm:$0xff]
    %v5926 = vld [vmem:[#allocation11 + $0xd0] sm:$0xff]
    %v5927 = vld [vmem:[#allocation11 + $0xd8] sm:$0xff]
    %v5928 = vld [vmem:[#allocation11 + $0xe0] sm:$0xff]
    %v5929 = vld [vmem:[#allocation11 + $0xe8] sm:$0xff]
    %v5930 = vld [vmem:[#allocation11 + $0xf0] sm:$0xff]
    %v5931 = vld [vmem:[#allocation11 + $0xf8] sm:$0xff]
    %v5932 = vld [vmem:[#allocation11 + $0x100] sm:$0xff]
    %v5933 = vld [vmem:[#allocation11 + $0x108] sm:$0xff]
    %v5934 = vld [vmem:[#allocation11 + $0x110] sm:$0xff]
    %v5935 = vld [vmem:[#allocation11 + $0x118] sm:$0xff]
    %v5936 = vld [vmem:[#allocation11 + $0x120] sm:$0xff]
    %v5937 = vld [vmem:[#allocation11 + $0x128] sm:$0xff]
    %v5938 = vld [vmem:[#allocation11 + $0x130] sm:$0xff]
    %v5939 = vld [vmem:[#allocation11 + $0x138] sm:$0xff]
    %v5940 = vld [vmem:[#allocation11 + $0x140] sm:$0xff]
    %v5941 = vld [vmem:[#allocation11 + $0x148] sm:$0xff]
    %v5942 = vld [vmem:[#allocation11 + $0x150] sm:$0xff]
    %v5943 = vld [vmem:[#allocation11 + $0x158] sm:$0xff]
    %v5944 = vld [vmem:[#allocation11 + $0x160] sm:$0xff]
    %v5945 = vld [vmem:[#allocation11 + $0x168] sm:$0xff]
    %v5946 = vld [vmem:[#allocation11 + $0x170] sm:$0xff]
    %v5947 = vld [vmem:[#allocation11 + $0x178] sm:$0xff]
    %v5948 = vld [vmem:[#allocation11 + $0x180] sm:$0xff]
    %v5949 = vld [vmem:[#allocation11 + $0x188] sm:$0xff]
    %v5950 = vld [vmem:[#allocation11 + $0x190] sm:$0xff]
    %v5951 = vld [vmem:[#allocation11 + $0x198] sm:$0xff]
    %v5952 = vld [vmem:[#allocation11 + $0x1a0] sm:$0xff]
    %v5953 = vld [vmem:[#allocation11 + $0x1a8] sm:$0xff]
    %v5954 = vld [vmem:[#allocation11 + $0x1b0] sm:$0xff]
    %v5955 = vld [vmem:[#allocation11 + $0x1b8] sm:$0xff]
    %v5956 = vld [vmem:[#allocation11 + $0x1c0] sm:$0xff]
    %v5957 = vld [vmem:[#allocation11 + $0x1c8] sm:$0xff]
    %v5958 = vld [vmem:[#allocation11 + $0x1d0] sm:$0xff]
    %v5959 = vld [vmem:[#allocation11 + $0x1d8] sm:$0xff]
    %v5960 = vld [vmem:[#allocation11 + $0x1e0] sm:$0xff]
    %v5961 = vld [vmem:[#allocation11 + $0x1e8] sm:$0xff]
    %v5962 = vld [vmem:[#allocation11 + $0x1f0] sm:$0xff]
    %v5963 = vld [vmem:[#allocation11 + $0x1f8] sm:$0xff]
    %v5964 = vld [vmem:[%s9 + $0x10] sm:$0xf]
    %v5966 = vlaneseq
    %v5967 = vshrl.u32 %v5966, 7
    %v5968 = vsub.s32 0, %v5967
    %v5969 = vrot.slane %v5964, %v5968
    %v5970 = vlaneseq
    %v5971 = vshrl.u32 %v5970, 7
    %v5972 = vsub.s32 1, %v5971
    %v5973 = vrot.slane %v5964, %v5972
    %v5974 = vlaneseq
    %v5975 = vshrl.u32 %v5974, 7
    %v5976 = vsub.s32 2, %v5975
    %v5977 = vrot.slane %v5964, %v5976
    %v5978 = vlaneseq
    %v5979 = vshrl.u32 %v5978, 7
    %v5980 = vsub.s32 3, %v5979
    %v5981 = vrot.slane %v5964, %v5980
    %v6050 = vunpack.c.l.b16 %v5900
    %v6051 = vunpack.c.h.b16 %v5900
    %v6052 = vunpack.c.l.b16 %v5901
    %v6053 = vunpack.c.h.b16 %v5901
    %v6054 = vunpack.c.l.b16 %v5902
    %v6055 = vunpack.c.h.b16 %v5902
    %v6056 = vunpack.c.l.b16 %v5903
    %v6057 = vunpack.c.h.b16 %v5903
    %v6058 = vunpack.c.l.b16 %v5904
    %v6059 = vunpack.c.h.b16 %v5904
    %v6060 = vunpack.c.l.b16 %v5905
    %v6061 = vunpack.c.h.b16 %v5905
    %v6062 = vunpack.c.l.b16 %v5906
    %v6063 = vunpack.c.h.b16 %v5906
    %v6064 = vunpack.c.l.b16 %v5907
    %v6065 = vunpack.c.h.b16 %v5907
    %v6066 = vunpack.c.l.b16 %v5908
    %v6067 = vunpack.c.h.b16 %v5908
    %v6068 = vunpack.c.l.b16 %v5909
    %v6069 = vunpack.c.h.b16 %v5909
    %v6070 = vunpack.c.l.b16 %v5910
    %v6071 = vunpack.c.h.b16 %v5910
    %v6072 = vunpack.c.l.b16 %v5911
    %v6073 = vunpack.c.h.b16 %v5911
    %v6074 = vunpack.c.l.b16 %v5912
    %v6075 = vunpack.c.h.b16 %v5912
    %v6076 = vunpack.c.l.b16 %v5913
    %v6077 = vunpack.c.h.b16 %v5913
    %v6078 = vunpack.c.l.b16 %v5914
    %v6079 = vunpack.c.h.b16 %v5914
    %v6080 = vunpack.c.l.b16 %v5915
    %v6081 = vunpack.c.h.b16 %v5915
    %v6082 = vunpack.c.l.b16 %v5916
    %v6083 = vunpack.c.h.b16 %v5916
    %v6084 = vunpack.c.l.b16 %v5917
    %v6085 = vunpack.c.h.b16 %v5917
    %v6086 = vunpack.c.l.b16 %v5918
    %v6087 = vunpack.c.h.b16 %v5918
    %v6088 = vunpack.c.l.b16 %v5919
    %v6089 = vunpack.c.h.b16 %v5919
    %v6090 = vunpack.c.l.b16 %v5920
    %v6091 = vunpack.c.h.b16 %v5920
    %v6092 = vunpack.c.l.b16 %v5921
    %v6093 = vunpack.c.h.b16 %v5921
    %v6094 = vunpack.c.l.b16 %v5922
    %v6095 = vunpack.c.h.b16 %v5922
    %v6096 = vunpack.c.l.b16 %v5923
    %v6097 = vunpack.c.h.b16 %v5923
    %v6098 = vunpack.c.l.b16 %v5924
    %v6099 = vunpack.c.h.b16 %v5924
    %v6100 = vunpack.c.l.b16 %v5925
    %v6101 = vunpack.c.h.b16 %v5925
    %v6102 = vunpack.c.l.b16 %v5926
    %v6103 = vunpack.c.h.b16 %v5926
    %v6104 = vunpack.c.l.b16 %v5927
    %v6105 = vunpack.c.h.b16 %v5927
    %v6106 = vunpack.c.l.b16 %v5928
    %v6107 = vunpack.c.h.b16 %v5928
    %v6108 = vunpack.c.l.b16 %v5929
    %v6109 = vunpack.c.h.b16 %v5929
    %v6110 = vunpack.c.l.b16 %v5930
    %v6111 = vunpack.c.h.b16 %v5930
    %v6112 = vunpack.c.l.b16 %v5931
    %v6113 = vunpack.c.h.b16 %v5931
    %v6114 = vunpack.c.l.b16 %v5932
    %v6115 = vunpack.c.h.b16 %v5932
    %v6116 = vunpack.c.l.b16 %v5933
    %v6117 = vunpack.c.h.b16 %v5933
    %v6118 = vunpack.c.l.b16 %v5934
    %v6119 = vunpack.c.h.b16 %v5934
    %v6120 = vunpack.c.l.b16 %v5935
    %v6121 = vunpack.c.h.b16 %v5935
    %v6122 = vunpack.c.l.b16 %v5936
    %v6123 = vunpack.c.h.b16 %v5936
    %v6124 = vunpack.c.l.b16 %v5937
    %v6125 = vunpack.c.h.b16 %v5937
    %v6126 = vunpack.c.l.b16 %v5938
    %v6127 = vunpack.c.h.b16 %v5938
    %v6128 = vunpack.c.l.b16 %v5939
    %v6129 = vunpack.c.h.b16 %v5939
    %v6130 = vunpack.c.l.b16 %v5940
    %v6131 = vunpack.c.h.b16 %v5940
    %v6132 = vunpack.c.l.b16 %v5941
    %v6133 = vunpack.c.h.b16 %v5941
    %v6134 = vunpack.c.l.b16 %v5942
    %v6135 = vunpack.c.h.b16 %v5942
    %v6136 = vunpack.c.l.b16 %v5943
    %v6137 = vunpack.c.h.b16 %v5943
    %v6138 = vunpack.c.l.b16 %v5944
    %v6139 = vunpack.c.h.b16 %v5944
    %v6140 = vunpack.c.l.b16 %v5945
    %v6141 = vunpack.c.h.b16 %v5945
    %v6142 = vunpack.c.l.b16 %v5946
    %v6143 = vunpack.c.h.b16 %v5946
    %v6144 = vunpack.c.l.b16 %v5947
    %v6145 = vunpack.c.h.b16 %v5947
    %v6146 = vunpack.c.l.b16 %v5948
    %v6147 = vunpack.c.h.b16 %v5948
    %v6148 = vunpack.c.l.b16 %v5949
    %v6149 = vunpack.c.h.b16 %v5949
    %v6150 = vunpack.c.l.b16 %v5950
    %v6151 = vunpack.c.h.b16 %v5950
    %v6152 = vunpack.c.l.b16 %v5951
    %v6153 = vunpack.c.h.b16 %v5951
    %v6154 = vunpack.c.l.b16 %v5952
    %v6155 = vunpack.c.h.b16 %v5952
    %v6156 = vunpack.c.l.b16 %v5953
    %v6157 = vunpack.c.h.b16 %v5953
    %v6158 = vunpack.c.l.b16 %v5954
    %v6159 = vunpack.c.h.b16 %v5954
    %v6160 = vunpack.c.l.b16 %v5955
    %v6161 = vunpack.c.h.b16 %v5955
    %v6162 = vunpack.c.l.b16 %v5956
    %v6163 = vunpack.c.h.b16 %v5956
    %v6164 = vunpack.c.l.b16 %v5957
    %v6165 = vunpack.c.h.b16 %v5957
    %v6166 = vunpack.c.l.b16 %v5958
    %v6167 = vunpack.c.h.b16 %v5958
    %v6168 = vunpack.c.l.b16 %v5959
    %v6169 = vunpack.c.h.b16 %v5959
    %v6170 = vunpack.c.l.b16 %v5960
    %v6171 = vunpack.c.h.b16 %v5960
    %v6172 = vunpack.c.l.b16 %v5961
    %v6173 = vunpack.c.h.b16 %v5961
    %v6174 = vunpack.c.l.b16 %v5962
    %v6175 = vunpack.c.h.b16 %v5962
    %v6176 = vunpack.c.l.b16 %v5963
    %v6177 = vunpack.c.h.b16 %v5963
    %v6178 = vpack.c.b16 %v6054, %v6050
    %v6179 = vpack.c.b16 %v6055, %v6051
    %v6180 = vpack.c.b16 %v6056, %v6052
    %v6181 = vpack.c.b16 %v6057, %v6053
    %v6182 = vpack.c.b16 %v6062, %v6058
    %v6183 = vpack.c.b16 %v6063, %v6059
    %v6184 = vpack.c.b16 %v6064, %v6060
    %v6185 = vpack.c.b16 %v6065, %v6061
    %v6186 = vpack.c.b16 %v6070, %v6066
    %v6187 = vpack.c.b16 %v6071, %v6067
    %v6188 = vpack.c.b16 %v6072, %v6068
    %v6189 = vpack.c.b16 %v6073, %v6069
    %v6190 = vpack.c.b16 %v6078, %v6074
    %v6191 = vpack.c.b16 %v6079, %v6075
    %v6192 = vpack.c.b16 %v6080, %v6076
    %v6193 = vpack.c.b16 %v6081, %v6077
    %v6194 = vpack.c.b16 %v6086, %v6082
    %v6195 = vpack.c.b16 %v6087, %v6083
    %v6196 = vpack.c.b16 %v6088, %v6084
    %v6197 = vpack.c.b16 %v6089, %v6085
    %v6198 = vpack.c.b16 %v6094, %v6090
    %v6199 = vpack.c.b16 %v6095, %v6091
    %v6200 = vpack.c.b16 %v6096, %v6092
    %v6201 = vpack.c.b16 %v6097, %v6093
    %v6202 = vpack.c.b16 %v6102, %v6098
    %v6203 = vpack.c.b16 %v6103, %v6099
    %v6204 = vpack.c.b16 %v6104, %v6100
    %v6205 = vpack.c.b16 %v6105, %v6101
    %v6206 = vpack.c.b16 %v6110, %v6106
    %v6207 = vpack.c.b16 %v6111, %v6107
    %v6208 = vpack.c.b16 %v6112, %v6108
    %v6209 = vpack.c.b16 %v6113, %v6109
    %v6210 = vpack.c.b16 %v6118, %v6114
    %v6211 = vpack.c.b16 %v6119, %v6115
    %v6212 = vpack.c.b16 %v6120, %v6116
    %v6213 = vpack.c.b16 %v6121, %v6117
    %v6214 = vpack.c.b16 %v6126, %v6122
    %v6215 = vpack.c.b16 %v6127, %v6123
    %v6216 = vpack.c.b16 %v6128, %v6124
    %v6217 = vpack.c.b16 %v6129, %v6125
    %v6218 = vpack.c.b16 %v6134, %v6130
    %v6219 = vpack.c.b16 %v6135, %v6131
    %v6220 = vpack.c.b16 %v6136, %v6132
    %v6221 = vpack.c.b16 %v6137, %v6133
    %v6222 = vpack.c.b16 %v6142, %v6138
    %v6223 = vpack.c.b16 %v6143, %v6139
    %v6224 = vpack.c.b16 %v6144, %v6140
    %v6225 = vpack.c.b16 %v6145, %v6141
    %v6226 = vpack.c.b16 %v6150, %v6146
    %v6227 = vpack.c.b16 %v6151, %v6147
    %v6228 = vpack.c.b16 %v6152, %v6148
    %v6229 = vpack.c.b16 %v6153, %v6149
    %v6230 = vpack.c.b16 %v6158, %v6154
    %v6231 = vpack.c.b16 %v6159, %v6155
    %v6232 = vpack.c.b16 %v6160, %v6156
    %v6233 = vpack.c.b16 %v6161, %v6157
    %v6234 = vpack.c.b16 %v6166, %v6162
    %v6235 = vpack.c.b16 %v6167, %v6163
    %v6236 = vpack.c.b16 %v6168, %v6164
    %v6237 = vpack.c.b16 %v6169, %v6165
    %v6238 = vpack.c.b16 %v6174, %v6170
    %v6239 = vpack.c.b16 %v6175, %v6171
    %v6240 = vpack.c.b16 %v6176, %v6172
    %v6241 = vpack.c.b16 %v6177, %v6173
    %6306 = vmatprep.subr.bf16.mxu0 %v6179
    %6307 = vmatpush1.bf16.msra.mxu0 %v6178
    %6308 = vmatprep.subr.bf16.mxu0 %v6183
    %6309 = vmatpush1.bf16.msra.mxu0 %v6182
    %6310 = vmatprep.subr.bf16.mxu0 %v6187
    %6311 = vmatpush1.bf16.msra.mxu0 %v6186
    %6312 = vmatprep.subr.bf16.mxu0 %v6191
    %6313 = vmatpush1.bf16.msra.mxu0 %v6190
    %6314 = vmatprep.subr.bf16.mxu0 %v6195
    %6315 = vmatpush1.bf16.msra.mxu0 %v6194
    %6316 = vmatprep.subr.bf16.mxu0 %v6199
    %6317 = vmatpush1.bf16.msra.mxu0 %v6198
    %6318 = vmatprep.subr.bf16.mxu0 %v6203
    %6319 = vmatpush1.bf16.msra.mxu0 %v6202
    %6320 = vmatprep.subr.bf16.mxu0 %v6207
    %6321 = vmatpush1.bf16.msra.mxu0 %v6206
    %6322 = vmatprep.subr.bf16.mxu0 %v6211
    %6323 = vmatpush1.bf16.msra.mxu0 %v6210
    %6324 = vmatprep.subr.bf16.mxu0 %v6215
    %6325 = vmatpush1.bf16.msra.mxu0 %v6214
    %6326 = vmatprep.subr.bf16.mxu0 %v6219
    %6327 = vmatpush1.bf16.msra.mxu0 %v6218
    %6328 = vmatprep.subr.bf16.mxu0 %v6223
    %6329 = vmatpush1.bf16.msra.mxu0 %v6222
    %6330 = vmatprep.subr.bf16.mxu0 %v6227
    %6331 = vmatpush1.bf16.msra.mxu0 %v6226
    %6332 = vmatprep.subr.bf16.mxu0 %v6231
    %6333 = vmatpush1.bf16.msra.mxu0 %v6230
    %6334 = vmatprep.subr.bf16.mxu0 %v6235
    %6335 = vmatpush1.bf16.msra.mxu0 %v6234
    %6336 = vmatprep.subr.bf16.mxu0 %v6239
    %6337 = vmatpush1.bf16.msra.mxu0 %v6238
    %6338 = vmatprep.mubr.bf16.mxu0 %v5899
    %6339 = vmatmul.mubr.bf16.gmra.mrb[0].mxu0 %v5898
    %v6340 = vpop.f32.mrb[0].mxu0
    %v6341 = vadd.f32 %v5969, %v6340
    %v6342 = vpop.f32.mrb[0].mxu0
    %v6343 = vadd.f32 %v5973, %v6342
    %v6344 = vpop.f32.mrb[0].mxu0
    %v6345 = vadd.f32 %v5969, %v6344
    %v6346 = vpop.f32.mrb[0].mxu0
    %v6347 = vadd.f32 %v5973, %v6346
    %6348 = vdwg.mxu0
    %6349 = vmatprep.subr.bf16.mxu0 %v6181
    %6350 = vmatpush1.bf16.msra.mxu0 %v6180
    %6351 = vmatprep.subr.bf16.mxu0 %v6185
    %6352 = vmatpush1.bf16.msra.mxu0 %v6184
    %6353 = vmatprep.subr.bf16.mxu0 %v6189
    %6354 = vmatpush1.bf16.msra.mxu0 %v6188
    %6355 = vmatprep.subr.bf16.mxu0 %v6193
    %6356 = vmatpush1.bf16.msra.mxu0 %v6192
    %6357 = vmatprep.subr.bf16.mxu0 %v6197
    %6358 = vmatpush1.bf16.msra.mxu0 %v6196
    %6359 = vmatprep.subr.bf16.mxu0 %v6201
    %6360 = vmatpush1.bf16.msra.mxu0 %v6200
    %6361 = vmatprep.subr.bf16.mxu0 %v6205
    %6362 = vmatpush1.bf16.msra.mxu0 %v6204
    %6363 = vmatprep.subr.bf16.mxu0 %v6209
    %6364 = vmatpush1.bf16.msra.mxu0 %v6208
    %6365 = vmatprep.subr.bf16.mxu0 %v6213
    %6366 = vmatpush1.bf16.msra.mxu0 %v6212
    %6367 = vmatprep.subr.bf16.mxu0 %v6217
    %6368 = vmatpush1.bf16.msra.mxu0 %v6216
    %6369 = vmatprep.subr.bf16.mxu0 %v6221
    %6370 = vmatpush1.bf16.msra.mxu0 %v6220
    %6371 = vmatprep.subr.bf16.mxu0 %v6225
    %6372 = vmatpush1.bf16.msra.mxu0 %v6224
    %6373 = vmatprep.subr.bf16.mxu0 %v6229
    %6374 = vmatpush1.bf16.msra.mxu0 %v6228
    %6375 = vmatprep.subr.bf16.mxu0 %v6233
    %6376 = vmatpush1.bf16.msra.mxu0 %v6232
    %6377 = vmatprep.subr.bf16.mxu0 %v6237
    %6378 = vmatpush1.bf16.msra.mxu0 %v6236
    %6379 = vmatprep.subr.bf16.mxu0 %v6241
    %6380 = vmatpush1.bf16.msra.mxu0 %v6240
    %6381 = vmatprep.mubr.bf16.mxu0 %v5899
    %6382 = vmatmul.mubr.bf16.gmra.mrb[0].mxu0 %v5898
    %v6383 = vpop.f32.mrb[0].mxu0
    %v6384 = vadd.f32 %v5977, %v6383
    %v6385 = vpop.f32.mrb[0].mxu0
    %v6386 = vadd.f32 %v5981, %v6385
    %v6387 = vpop.f32.mrb[0].mxu0
    %v6388 = vadd.f32 %v5977, %v6387
    %v6389 = vpop.f32.mrb[0].mxu0
    %v6390 = vadd.f32 %v5981, %v6389
    %6391 = vdwg.mxu0
    %v6392 = vmax.f32 %v6341, 0.0
    %v6393 = vmax.f32 %v6343, 0.0
    %v6394 = vmax.f32 %v6384, 0.0
    %v6395 = vmax.f32 %v6386, 0.0
    %v6396 = vmax.f32 %v6345, 0.0
    %v6397 = vmax.f32 %v6347, 0.0
    %v6398 = vmax.f32 %v6388, 0.0
    %v6399 = vmax.f32 %v6390, 0.0
    %v6400 = vpack.c.bf16 %v6396, %v6392
    %v6401 = vpack.c.bf16 %v6397, %v6393
    %v6402 = vpack.c.bf16 %v6398, %v6394
    %v6403 = vpack.c.bf16 %v6399, %v6395
    %v6404 = vld [vmem:[#allocation13] sm:$0xff]
    %v6405 = vld [vmem:[#allocation13 + $0x8] sm:$0xff]
    %v6406 = vld [vmem:[#allocation13 + $0x10] sm:$0xff]
    %v6407 = vld [vmem:[#allocation13 + $0x18] sm:$0xff]
    %v6408 = vld [vmem:[#allocation13 + $0x20] sm:$0xff]
    %v6409 = vld [vmem:[#allocation13 + $0x28] sm:$0xff]
    %v6410 = vld [vmem:[#allocation13 + $0x30] sm:$0xff]
    %v6411 = vld [vmem:[#allocation13 + $0x38] sm:$0xff]
    %v6412 = vld [vmem:[#allocation13 + $0x40] sm:$0xff]
    %v6413 = vld [vmem:[#allocation13 + $0x48] sm:$0xff]
    %v6414 = vld [vmem:[#allocation13 + $0x50] sm:$0xff]
    %v6415 = vld [vmem:[#allocation13 + $0x58] sm:$0xff]
    %v6416 = vld [vmem:[#allocation13 + $0x60] sm:$0xff]
    %v6417 = vld [vmem:[#allocation13 + $0x68] sm:$0xff]
    %v6418 = vld [vmem:[#allocation13 + $0x70] sm:$0xff]
    %v6419 = vld [vmem:[#allocation13 + $0x78] sm:$0xff]
    %v6420 = vld [vmem:[#allocation13 + $0x80] sm:$0xff]
    %v6421 = vld [vmem:[#allocation13 + $0x88] sm:$0xff]
    %v6422 = vld [vmem:[#allocation13 + $0x90] sm:$0xff]
    %v6423 = vld [vmem:[#allocation13 + $0x98] sm:$0xff]
    %v6424 = vld [vmem:[#allocation13 + $0xa0] sm:$0xff]
    %v6425 = vld [vmem:[#allocation13 + $0xa8] sm:$0xff]
    %v6426 = vld [vmem:[#allocation13 + $0xb0] sm:$0xff]
    %v6427 = vld [vmem:[#allocation13 + $0xb8] sm:$0xff]
    %v6428 = vld [vmem:[#allocation13 + $0xc0] sm:$0xff]
    %v6429 = vld [vmem:[#allocation13 + $0xc8] sm:$0xff]
    %v6430 = vld [vmem:[#allocation13 + $0xd0] sm:$0xff]
    %v6431 = vld [vmem:[#allocation13 + $0xd8] sm:$0xff]
    %v6432 = vld [vmem:[#allocation13 + $0xe0] sm:$0xff]
    %v6433 = vld [vmem:[#allocation13 + $0xe8] sm:$0xff]
    %v6434 = vld [vmem:[#allocation13 + $0xf0] sm:$0xff]
    %v6435 = vld [vmem:[#allocation13 + $0xf8] sm:$0xff]
    %v6436 = vld [vmem:[#allocation13 + $0x100] sm:$0xff]
    %v6437 = vld [vmem:[#allocation13 + $0x108] sm:$0xff]
    %v6438 = vld [vmem:[#allocation13 + $0x110] sm:$0xff]
    %v6439 = vld [vmem:[#allocation13 + $0x118] sm:$0xff]
    %v6440 = vld [vmem:[#allocation13 + $0x120] sm:$0xff]
    %v6441 = vld [vmem:[#allocation13 + $0x128] sm:$0xff]
    %v6442 = vld [vmem:[#allocation13 + $0x130] sm:$0xff]
    %v6443 = vld [vmem:[#allocation13 + $0x138] sm:$0xff]
    %v6444 = vld [vmem:[#allocation13 + $0x140] sm:$0xff]
    %v6445 = vld [vmem:[#allocation13 + $0x148] sm:$0xff]
    %v6446 = vld [vmem:[#allocation13 + $0x150] sm:$0xff]
    %v6447 = vld [vmem:[#allocation13 + $0x158] sm:$0xff]
    %v6448 = vld [vmem:[#allocation13 + $0x160] sm:$0xff]
    %v6449 = vld [vmem:[#allocation13 + $0x168] sm:$0xff]
    %v6450 = vld [vmem:[#allocation13 + $0x170] sm:$0xff]
    %v6451 = vld [vmem:[#allocation13 + $0x178] sm:$0xff]
    %v6452 = vld [vmem:[#allocation13 + $0x180] sm:$0xff]
    %v6453 = vld [vmem:[#allocation13 + $0x188] sm:$0xff]
    %v6454 = vld [vmem:[#allocation13 + $0x190] sm:$0xff]
    %v6455 = vld [vmem:[#allocation13 + $0x198] sm:$0xff]
    %v6456 = vld [vmem:[#allocation13 + $0x1a0] sm:$0xff]
    %v6457 = vld [vmem:[#allocation13 + $0x1a8] sm:$0xff]
    %v6458 = vld [vmem:[#allocation13 + $0x1b0] sm:$0xff]
    %v6459 = vld [vmem:[#allocation13 + $0x1b8] sm:$0xff]
    %v6460 = vld [vmem:[#allocation13 + $0x1c0] sm:$0xff]
    %v6461 = vld [vmem:[#allocation13 + $0x1c8] sm:$0xff]
    %v6462 = vld [vmem:[#allocation13 + $0x1d0] sm:$0xff]
    %v6463 = vld [vmem:[#allocation13 + $0x1d8] sm:$0xff]
    %v6464 = vld [vmem:[#allocation13 + $0x1e0] sm:$0xff]
    %v6465 = vld [vmem:[#allocation13 + $0x1e8] sm:$0xff]
    %v6466 = vld [vmem:[#allocation13 + $0x1f0] sm:$0xff]
    %v6467 = vld [vmem:[#allocation13 + $0x1f8] sm:$0xff]
    %v6468 = vld [vmem:[%s9 + $0x14] sm:$0x3]
    %v6470 = vlaneseq
    %v6471 = vshrl.u32 %v6470, 7
    %v6472 = vsub.s32 0, %v6471
    %v6473 = vrot.slane %v6468, %v6472
    %v6474 = vlaneseq
    %v6475 = vshrl.u32 %v6474, 7
    %v6476 = vsub.s32 1, %v6475
    %v6477 = vrot.slane %v6468, %v6476
    %v6544 = vunpack.c.l.b16 %v6404
    %v6545 = vunpack.c.h.b16 %v6404
    %v6546 = vunpack.c.l.b16 %v6405
    %v6547 = vunpack.c.h.b16 %v6405
    %v6548 = vunpack.c.l.b16 %v6406
    %v6549 = vunpack.c.h.b16 %v6406
    %v6550 = vunpack.c.l.b16 %v6407
    %v6551 = vunpack.c.h.b16 %v6407
    %v6552 = vunpack.c.l.b16 %v6408
    %v6553 = vunpack.c.h.b16 %v6408
    %v6554 = vunpack.c.l.b16 %v6409
    %v6555 = vunpack.c.h.b16 %v6409
    %v6556 = vunpack.c.l.b16 %v6410
    %v6557 = vunpack.c.h.b16 %v6410
    %v6558 = vunpack.c.l.b16 %v6411
    %v6559 = vunpack.c.h.b16 %v6411
    %v6560 = vunpack.c.l.b16 %v6412
    %v6561 = vunpack.c.h.b16 %v6412
    %v6562 = vunpack.c.l.b16 %v6413
    %v6563 = vunpack.c.h.b16 %v6413
    %v6564 = vunpack.c.l.b16 %v6414
    %v6565 = vunpack.c.h.b16 %v6414
    %v6566 = vunpack.c.l.b16 %v6415
    %v6567 = vunpack.c.h.b16 %v6415
    %v6568 = vunpack.c.l.b16 %v6416
    %v6569 = vunpack.c.h.b16 %v6416
    %v6570 = vunpack.c.l.b16 %v6417
    %v6571 = vunpack.c.h.b16 %v6417
    %v6572 = vunpack.c.l.b16 %v6418
    %v6573 = vunpack.c.h.b16 %v6418
    %v6574 = vunpack.c.l.b16 %v6419
    %v6575 = vunpack.c.h.b16 %v6419
    %v6576 = vunpack.c.l.b16 %v6420
    %v6577 = vunpack.c.h.b16 %v6420
    %v6578 = vunpack.c.l.b16 %v6421
    %v6579 = vunpack.c.h.b16 %v6421
    %v6580 = vunpack.c.l.b16 %v6422
    %v6581 = vunpack.c.h.b16 %v6422
    %v6582 = vunpack.c.l.b16 %v6423
    %v6583 = vunpack.c.h.b16 %v6423
    %v6584 = vunpack.c.l.b16 %v6424
    %v6585 = vunpack.c.h.b16 %v6424
    %v6586 = vunpack.c.l.b16 %v6425
    %v6587 = vunpack.c.h.b16 %v6425
    %v6588 = vunpack.c.l.b16 %v6426
    %v6589 = vunpack.c.h.b16 %v6426
    %v6590 = vunpack.c.l.b16 %v6427
    %v6591 = vunpack.c.h.b16 %v6427
    %v6592 = vunpack.c.l.b16 %v6428
    %v6593 = vunpack.c.h.b16 %v6428
    %v6594 = vunpack.c.l.b16 %v6429
    %v6595 = vunpack.c.h.b16 %v6429
    %v6596 = vunpack.c.l.b16 %v6430
    %v6597 = vunpack.c.h.b16 %v6430
    %v6598 = vunpack.c.l.b16 %v6431
    %v6599 = vunpack.c.h.b16 %v6431
    %v6600 = vunpack.c.l.b16 %v6432
    %v6601 = vunpack.c.h.b16 %v6432
    %v6602 = vunpack.c.l.b16 %v6433
    %v6603 = vunpack.c.h.b16 %v6433
    %v6604 = vunpack.c.l.b16 %v6434
    %v6605 = vunpack.c.h.b16 %v6434
    %v6606 = vunpack.c.l.b16 %v6435
    %v6607 = vunpack.c.h.b16 %v6435
    %v6608 = vunpack.c.l.b16 %v6436
    %v6609 = vunpack.c.h.b16 %v6436
    %v6610 = vunpack.c.l.b16 %v6437
    %v6611 = vunpack.c.h.b16 %v6437
    %v6612 = vunpack.c.l.b16 %v6438
    %v6613 = vunpack.c.h.b16 %v6438
    %v6614 = vunpack.c.l.b16 %v6439
    %v6615 = vunpack.c.h.b16 %v6439
    %v6616 = vunpack.c.l.b16 %v6440
    %v6617 = vunpack.c.h.b16 %v6440
    %v6618 = vunpack.c.l.b16 %v6441
    %v6619 = vunpack.c.h.b16 %v6441
    %v6620 = vunpack.c.l.b16 %v6442
    %v6621 = vunpack.c.h.b16 %v6442
    %v6622 = vunpack.c.l.b16 %v6443
    %v6623 = vunpack.c.h.b16 %v6443
    %v6624 = vunpack.c.l.b16 %v6444
    %v6625 = vunpack.c.h.b16 %v6444
    %v6626 = vunpack.c.l.b16 %v6445
    %v6627 = vunpack.c.h.b16 %v6445
    %v6628 = vunpack.c.l.b16 %v6446
    %v6629 = vunpack.c.h.b16 %v6446
    %v6630 = vunpack.c.l.b16 %v6447
    %v6631 = vunpack.c.h.b16 %v6447
    %v6632 = vunpack.c.l.b16 %v6448
    %v6633 = vunpack.c.h.b16 %v6448
    %v6634 = vunpack.c.l.b16 %v6449
    %v6635 = vunpack.c.h.b16 %v6449
    %v6636 = vunpack.c.l.b16 %v6450
    %v6637 = vunpack.c.h.b16 %v6450
    %v6638 = vunpack.c.l.b16 %v6451
    %v6639 = vunpack.c.h.b16 %v6451
    %v6640 = vunpack.c.l.b16 %v6452
    %v6641 = vunpack.c.h.b16 %v6452
    %v6642 = vunpack.c.l.b16 %v6453
    %v6643 = vunpack.c.h.b16 %v6453
    %v6644 = vunpack.c.l.b16 %v6454
    %v6645 = vunpack.c.h.b16 %v6454
    %v6646 = vunpack.c.l.b16 %v6455
    %v6647 = vunpack.c.h.b16 %v6455
    %v6648 = vunpack.c.l.b16 %v6456
    %v6649 = vunpack.c.h.b16 %v6456
    %v6650 = vunpack.c.l.b16 %v6457
    %v6651 = vunpack.c.h.b16 %v6457
    %v6652 = vunpack.c.l.b16 %v6458
    %v6653 = vunpack.c.h.b16 %v6458
    %v6654 = vunpack.c.l.b16 %v6459
    %v6655 = vunpack.c.h.b16 %v6459
    %v6656 = vunpack.c.l.b16 %v6460
    %v6657 = vunpack.c.h.b16 %v6460
    %v6658 = vunpack.c.l.b16 %v6461
    %v6659 = vunpack.c.h.b16 %v6461
    %v6660 = vunpack.c.l.b16 %v6462
    %v6661 = vunpack.c.h.b16 %v6462
    %v6662 = vunpack.c.l.b16 %v6463
    %v6663 = vunpack.c.h.b16 %v6463
    %v6664 = vunpack.c.l.b16 %v6464
    %v6665 = vunpack.c.h.b16 %v6464
    %v6666 = vunpack.c.l.b16 %v6465
    %v6667 = vunpack.c.h.b16 %v6465
    %v6668 = vunpack.c.l.b16 %v6466
    %v6669 = vunpack.c.h.b16 %v6466
    %v6670 = vunpack.c.l.b16 %v6467
    %v6671 = vunpack.c.h.b16 %v6467
    %v6672 = vpack.c.b16 %v6546, %v6544
    %v6673 = vpack.c.b16 %v6547, %v6545
    %v6674 = vpack.c.b16 %v6550, %v6548
    %v6675 = vpack.c.b16 %v6551, %v6549
    %v6676 = vpack.c.b16 %v6554, %v6552
    %v6677 = vpack.c.b16 %v6555, %v6553
    %v6678 = vpack.c.b16 %v6558, %v6556
    %v6679 = vpack.c.b16 %v6559, %v6557
    %v6680 = vpack.c.b16 %v6562, %v6560
    %v6681 = vpack.c.b16 %v6563, %v6561
    %v6682 = vpack.c.b16 %v6566, %v6564
    %v6683 = vpack.c.b16 %v6567, %v6565
    %v6684 = vpack.c.b16 %v6570, %v6568
    %v6685 = vpack.c.b16 %v6571, %v6569
    %v6686 = vpack.c.b16 %v6574, %v6572
    %v6687 = vpack.c.b16 %v6575, %v6573
    %v6688 = vpack.c.b16 %v6578, %v6576
    %v6689 = vpack.c.b16 %v6579, %v6577
    %v6690 = vpack.c.b16 %v6582, %v6580
    %v6691 = vpack.c.b16 %v6583, %v6581
    %v6692 = vpack.c.b16 %v6586, %v6584
    %v6693 = vpack.c.b16 %v6587, %v6585
    %v6694 = vpack.c.b16 %v6590, %v6588
    %v6695 = vpack.c.b16 %v6591, %v6589
    %v6696 = vpack.c.b16 %v6594, %v6592
    %v6697 = vpack.c.b16 %v6595, %v6593
    %v6698 = vpack.c.b16 %v6598, %v6596
    %v6699 = vpack.c.b16 %v6599, %v6597
    %v6700 = vpack.c.b16 %v6602, %v6600
    %v6701 = vpack.c.b16 %v6603, %v6601
    %v6702 = vpack.c.b16 %v6606, %v6604
    %v6703 = vpack.c.b16 %v6607, %v6605
    %v6704 = vpack.c.b16 %v6610, %v6608
    %v6705 = vpack.c.b16 %v6611, %v6609
    %v6706 = vpack.c.b16 %v6614, %v6612
    %v6707 = vpack.c.b16 %v6615, %v6613
    %v6708 = vpack.c.b16 %v6618, %v6616
    %v6709 = vpack.c.b16 %v6619, %v6617
    %v6710 = vpack.c.b16 %v6622, %v6620
    %v6711 = vpack.c.b16 %v6623, %v6621
    %v6712 = vpack.c.b16 %v6626, %v6624
    %v6713 = vpack.c.b16 %v6627, %v6625
    %v6714 = vpack.c.b16 %v6630, %v6628
    %v6715 = vpack.c.b16 %v6631, %v6629
    %v6716 = vpack.c.b16 %v6634, %v6632
    %v6717 = vpack.c.b16 %v6635, %v6633
    %v6718 = vpack.c.b16 %v6638, %v6636
    %v6719 = vpack.c.b16 %v6639, %v6637
    %v6720 = vpack.c.b16 %v6642, %v6640
    %v6721 = vpack.c.b16 %v6643, %v6641
    %v6722 = vpack.c.b16 %v6646, %v6644
    %v6723 = vpack.c.b16 %v6647, %v6645
    %v6724 = vpack.c.b16 %v6650, %v6648
    %v6725 = vpack.c.b16 %v6651, %v6649
    %v6726 = vpack.c.b16 %v6654, %v6652
    %v6727 = vpack.c.b16 %v6655, %v6653
    %v6728 = vpack.c.b16 %v6658, %v6656
    %v6729 = vpack.c.b16 %v6659, %v6657
    %v6730 = vpack.c.b16 %v6662, %v6660
    %v6731 = vpack.c.b16 %v6663, %v6661
    %v6732 = vpack.c.b16 %v6666, %v6664
    %v6733 = vpack.c.b16 %v6667, %v6665
    %v6734 = vpack.c.b16 %v6670, %v6668
    %v6735 = vpack.c.b16 %v6671, %v6669
    %6800 = vmatprep.subr.bf16.mxu0 %v6673
    %6801 = vmatpush1.bf16.msra.mxu0 %v6672
    %6802 = vmatprep.subr.bf16.mxu0 %v6675
    %6803 = vmatpush1.bf16.msra.mxu0 %v6674
    %6804 = vmatprep.subr.bf16.mxu0 %v6677
    %6805 = vmatpush1.bf16.msra.mxu0 %v6676
    %6806 = vmatprep.subr.bf16.mxu0 %v6679
    %6807 = vmatpush1.bf16.msra.mxu0 %v6678
    %6808 = vmatprep.subr.bf16.mxu0 %v6681
    %6809 = vmatpush1.bf16.msra.mxu0 %v6680
    %6810 = vmatprep.subr.bf16.mxu0 %v6683
    %6811 = vmatpush1.bf16.msra.mxu0 %v6682
    %6812 = vmatprep.subr.bf16.mxu0 %v6685
    %6813 = vmatpush1.bf16.msra.mxu0 %v6684
    %6814 = vmatprep.subr.bf16.mxu0 %v6687
    %6815 = vmatpush1.bf16.msra.mxu0 %v6686
    %6816 = vmatprep.subr.bf16.mxu0 %v6689
    %6817 = vmatpush1.bf16.msra.mxu0 %v6688
    %6818 = vmatprep.subr.bf16.mxu0 %v6691
    %6819 = vmatpush1.bf16.msra.mxu0 %v6690
    %6820 = vmatprep.subr.bf16.mxu0 %v6693
    %6821 = vmatpush1.bf16.msra.mxu0 %v6692
    %6822 = vmatprep.subr.bf16.mxu0 %v6695
    %6823 = vmatpush1.bf16.msra.mxu0 %v6694
    %6824 = vmatprep.subr.bf16.mxu0 %v6697
    %6825 = vmatpush1.bf16.msra.mxu0 %v6696
    %6826 = vmatprep.subr.bf16.mxu0 %v6699
    %6827 = vmatpush1.bf16.msra.mxu0 %v6698
    %6828 = vmatprep.subr.bf16.mxu0 %v6701
    %6829 = vmatpush1.bf16.msra.mxu0 %v6700
    %6830 = vmatprep.subr.bf16.mxu0 %v6703
    %6831 = vmatpush1.bf16.msra.mxu0 %v6702
    %6832 = vmatprep.mubr.bf16.mxu0 %v6401
    %6833 = vmatmul.mubr.bf16.gmra.mrb[0].mxu0 %v6400
    %v6834 = vpop.f32.mrb[0].mxu0
    %v6835 = vadd.f32 %v6473, %v6834
    %v6836 = vpop.f32.mrb[0].mxu0
    %v6837 = vadd.f32 %v6477, %v6836
    %v6838 = vpop.f32.mrb[0].mxu0
    %v6839 = vadd.f32 %v6473, %v6838
    %v6840 = vpop.f32.mrb[0].mxu0
    %v6841 = vadd.f32 %v6477, %v6840
    %6842 = vdwg.mxu0
    %6843 = vmatprep.subr.bf16.mxu0 %v6705
    %6844 = vmatpush1.bf16.msra.mxu0 %v6704
    %6845 = vmatprep.subr.bf16.mxu0 %v6707
    %6846 = vmatpush1.bf16.msra.mxu0 %v6706
    %6847 = vmatprep.subr.bf16.mxu0 %v6709
    %6848 = vmatpush1.bf16.msra.mxu0 %v6708
    %6849 = vmatprep.subr.bf16.mxu0 %v6711
    %6850 = vmatpush1.bf16.msra.mxu0 %v6710
    %6851 = vmatprep.subr.bf16.mxu0 %v6713
    %6852 = vmatpush1.bf16.msra.mxu0 %v6712
    %6853 = vmatprep.subr.bf16.mxu0 %v6715
    %6854 = vmatpush1.bf16.msra.mxu0 %v6714
    %6855 = vmatprep.subr.bf16.mxu0 %v6717
    %6856 = vmatpush1.bf16.msra.mxu0 %v6716
    %6857 = vmatprep.subr.bf16.mxu0 %v6719
    %6858 = vmatpush1.bf16.msra.mxu0 %v6718
    %6859 = vmatprep.subr.bf16.mxu0 %v6721
    %6860 = vmatpush1.bf16.msra.mxu0 %v6720
    %6861 = vmatprep.subr.bf16.mxu0 %v6723
    %6862 = vmatpush1.bf16.msra.mxu0 %v6722
    %6863 = vmatprep.subr.bf16.mxu0 %v6725
    %6864 = vmatpush1.bf16.msra.mxu0 %v6724
    %6865 = vmatprep.subr.bf16.mxu0 %v6727
    %6866 = vmatpush1.bf16.msra.mxu0 %v6726
    %6867 = vmatprep.subr.bf16.mxu0 %v6729
    %6868 = vmatpush1.bf16.msra.mxu0 %v6728
    %6869 = vmatprep.subr.bf16.mxu0 %v6731
    %6870 = vmatpush1.bf16.msra.mxu0 %v6730
    %6871 = vmatprep.subr.bf16.mxu0 %v6733
    %6872 = vmatpush1.bf16.msra.mxu0 %v6732
    %6873 = vmatprep.subr.bf16.mxu0 %v6735
    %6874 = vmatpush1.bf16.msra.mxu0 %v6734
    %6875 = vmatprep.mubr.bf16.mxu0 %v6403
    %6876 = vmatmul.mubr.bf16.gmra.mrb[0].mxu0 %v6402
    %v6877 = vpop.f32.mrb[0].mxu0
    %v6878 = vadd.f32 %v6835, %v6877
    %v6879 = vpop.f32.mrb[0].mxu0
    %v6880 = vadd.f32 %v6837, %v6879
    %v6881 = vpop.f32.mrb[0].mxu0
    %v6882 = vadd.f32 %v6839, %v6881
    %v6883 = vpop.f32.mrb[0].mxu0
    %v6884 = vadd.f32 %v6841, %v6883
    %6885 = vdwg.mxu0
    %v6886 = vadd.f32 %v5894, %v6878
    %v6887 = vadd.f32 %v5895, %v6880
    %v6888 = vadd.f32 %v5896, %v6882
    %v6889 = vadd.f32 %v5897, %v6884
    %v6890 = vld [vmem:[%s9 + $0x1e] sm:$0x3]
    %v6891 = vld [vmem:[%s9 + $0x20] sm:$0x3]
    %v6892 = vadd.f32 %v6886, %v6887
    %6893 = vadd.xlane.f32.xlu0 %v6892
    %v6894 = vpop.xlane.xlu0 %6893
    %v6895 = vadd.f32 %v6888, %v6889
    %6896 = vadd.xlane.f32.xlu0 %v6895
    %v6897 = vpop.xlane.xlu0 %6896
    %v6898 = vmul.f32 %v6894, %v2959
    %v6899 = vmul.f32 %v6897, %v2959
    %v6900 = vsub.f32 %v6886, %v6898
    %v6901 = vsub.f32 %v6887, %v6898
    %v6902 = vsub.f32 %v6888, %v6899
    %v6903 = vsub.f32 %v6889, %v6899
    %v6904 = vmul.f32 %v6900, %v6900
    %v6905 = vmul.f32 %v6901, %v6901
    %v6906 = vmul.f32 %v6902, %v6902
    %v6907 = vmul.f32 %v6903, %v6903
    %v6908 = vadd.f32 %v6904, %v6905
    %6909 = vadd.xlane.f32.xlu0 %v6908
    %v6910 = vpop.xlane.xlu0 %6909
    %v6911 = vadd.f32 %v6906, %v6907
    %6912 = vadd.xlane.f32.xlu0 %v6911
    %v6913 = vpop.xlane.xlu0 %6912
    %v6914 = vmul.f32 %v6910, %v2959
    %v6915 = vmul.f32 %v6913, %v2959
    %v6916 = vadd.f32 %v6914, 1e-05
    %v6917 = vadd.f32 %v6915, 1e-05
    %v6918 = vrsqrt.pop %v6916
    %v6919 = vrsqrt.pop %v6917
    %v6920 = vmul.f32 %v6900, %v6918
    %v6921 = vmul.f32 %v6901, %v6918
    %v6922 = vmul.f32 %v6902, %v6919
    %v6923 = vmul.f32 %v6903, %v6919
    %v6925 = vlaneseq
    %v6926 = vshrl.u32 %v6925, 7
    %v6927 = vsub.s32 0, %v6926
    %v6928 = vrot.slane %v6890, %v6927
    %v6929 = vlaneseq
    %v6930 = vshrl.u32 %v6929, 7
    %v6931 = vsub.s32 1, %v6930
    %v6932 = vrot.slane %v6890, %v6931
    %v6935 = vmul.f32 %v6920, %v6928
    %v6936 = vmul.f32 %v6921, %v6932
    %v6937 = vmul.f32 %v6922, %v6928
    %v6938 = vmul.f32 %v6923, %v6932
    %v6940 = vlaneseq
    %v6941 = vshrl.u32 %v6940, 7
    %v6942 = vsub.s32 0, %v6941
    %v6943 = vrot.slane %v6891, %v6942
    %v6944 = vlaneseq
    %v6945 = vshrl.u32 %v6944, 7
    %v6946 = vsub.s32 1, %v6945
    %v6947 = vrot.slane %v6891, %v6946
    %v6950 = vadd.f32 %v6935, %v6943
    %v6951 = vadd.f32 %v6936, %v6947
    %v6952 = vadd.f32 %v6937, %v6943
    %v6953 = vadd.f32 %v6938, %v6947
    %6954 = vst [vmem:[#allocation14] sm:$0xff] %v6950
    %6955 = vst [vmem:[#allocation14 + $0x8] sm:$0xff] %v6951
    %6956 = vst [vmem:[#allocation14 + $0x10] sm:$0xff] %v6952
    %6957 = vst [vmem:[#allocation14 + $0x18] sm:$0xff] %v6953
    // Predicated region
    $region70: #{decoder_forward.1} parent=1 // pred_check
      _
    $region71: #{decoder_forward.1} parent=1 // pred_check_branch
      %6959 = sbr.rel (0) target = $region73
    $region72: #{decoder_forward.1} parent=1 // pred_region
      %s6961 = ssub.s32 512, 512
      %6962 = vsyncadd [#allocation4], %s6961
      %s6963 = sshll.u32 [#allocation14], 4
      %s6964 = int_to_ptr.vmem [resolvable:$true] %s6963
      %6969 = dma.vmem_to_hbm [thread:$0]  %s6964, 512, %s10, [#allocation4], 256, 256, 16
    $region73: #{decoder_forward.1} parent=1 // pred_fallthru
      _
    // Predicated region
    $region74: #{decoder_forward.1} parent=1 // pred_check
      _
    $region75: #{decoder_forward.1} parent=1 // pred_check_branch
      %6971 = sbr.rel (0) target = $region77
    $region76: #{decoder_forward.1} parent=1 // pred_region
      %6972 = dma.done [#allocation4], 512
    $region77: #{decoder_forward.1} parent=1 // pred_fallthru
      _
    %6973 = vsyncpa [#allocation3], 1
    %6974 = vsyncpa [#allocation6], 1
    %6975 = vsyncpa [#allocation9], 1
    %6976 = vsyncpa [#allocation12], 1
    %6977 = vsyncpa [#allocation4], 1

</llo_original>
